<compile_context>
chip_gen: v7x
topology: tpu7x:2x2x1
jax: 0.10.0
libtpu: 0.0.40
codegen_flags: <defaults>
</compile_context>

<pallas_src>
import functools
import math

import jax
import jax.numpy as jnp
from jax.experimental import pallas as pl
from jax.experimental.pallas import tpu as pltpu

_NEG_INF = -1e30       # finite "minus infinity" for the running max
_MASK_VALUE = -9e15    # matches the PyTorch module's masked_fill value


def _pick_tile(size, target, dtype):
    """Largest divisor of `size` <= target, aligned to the dtype's sublane packing."""
    if size <= target:
        return size
    itemsize = jnp.dtype(dtype).itemsize
    align = 8 * max(1, 4 // max(1, itemsize))   # 8 rows f32, 16 bf16, 32 int8/fp8
    for a in (align, 8, 1):
        for cand in range(min(target, size), 0, -1):
            if size % cand == 0 and cand % a == 0:
                return cand
    return size


# --------------------------------------------------------------------------- #
# Projection kernels (hoisted out of the flash loop; lane-dense N = d_model). #
# --------------------------------------------------------------------------- #
def _linear_kernel(x_ref, w_ref, b_ref, o_ref):
    y = jnp.dot(x_ref[0], w_ref[...], preferred_element_type=jnp.float32)
    o_ref[0] = (y + b_ref[...]).astype(o_ref.dtype)


def _kv_linear_kernel(x_ref, wk_ref, bk_ref, wv_ref, bv_ref, k_ref, v_ref):
    x = x_ref[0]                                                   # [ts, Din]
    k = jnp.dot(x, wk_ref[...], preferred_element_type=jnp.float32) + bk_ref[...]
    v = jnp.dot(x, wv_ref[...], preferred_element_type=jnp.float32) + bv_ref[...]
    k_ref[0] = k.astype(k_ref.dtype)
    v_ref[0] = v.astype(v_ref.dtype)


def _linear(x, w, b, *, block_s, out_dtype):
    B, S, Din = x.shape
    Dout = w.shape[1]
    ts = _pick_tile(S, block_s, x.dtype)
    return pl.pallas_call(
        _linear_kernel,
        out_shape=jax.ShapeDtypeStruct((B, S, Dout), out_dtype),
        grid=(B, S // ts),
        in_specs=[
            pl.BlockSpec((1, ts, Din), lambda b, s: (b, s, 0)),
            pl.BlockSpec((Din, Dout), lambda b, s: (0, 0)),
            pl.BlockSpec((1, Dout), lambda b, s: (0, 0)),
        ],
        out_specs=pl.BlockSpec((1, ts, Dout), lambda b, s: (b, s, 0)),
        compiler_params=pltpu.CompilerParams(
            dimension_semantics=("parallel", "parallel")),
    )(x, w, b)


def _kv_linear(x, wk, bk, wv, bv, *, block_s, out_dtype):
    B, S, Din = x.shape
    Dout = wk.shape[1]
    ts = _pick_tile(S, block_s, x.dtype)
    kv_struct = jax.ShapeDtypeStruct((B, S, Dout), out_dtype)
    return pl.pallas_call(
        _kv_linear_kernel,
        out_shape=(kv_struct, kv_struct),
        grid=(B, S // ts),
        in_specs=[
            pl.BlockSpec((1, ts, Din), lambda b, s: (b, s, 0)),
            pl.BlockSpec((Din, Dout), lambda b, s: (0, 0)),
            pl.BlockSpec((1, Dout), lambda b, s: (0, 0)),
            pl.BlockSpec((Din, Dout), lambda b, s: (0, 0)),
            pl.BlockSpec((1, Dout), lambda b, s: (0, 0)),
        ],
        out_specs=(pl.BlockSpec((1, ts, Dout), lambda b, s: (b, s, 0)),
                   pl.BlockSpec((1, ts, Dout), lambda b, s: (b, s, 0))),
        compiler_params=pltpu.CompilerParams(
            dimension_semantics=("parallel", "parallel")),
    )(x, wk, bk, wv, bv)


# --------------------------------------------------------------------------- #
# Flash attention + fused output projection.                                  #
# --------------------------------------------------------------------------- #
def _flash_attn_kernel(q_ref, k_ref, v_ref, wo_ref, bo_ref, out_ref,
                       m_scr, l_scr, acc_scr, *, block_q, block_k, causal):
    qi = pl.program_id(1)
    ki = pl.program_id(2)
    nk = pl.num_programs(2)

    # ---- once per (batch, q-tile): reset the online-softmax state ----
    @pl.when(ki == 0)
    def _init():
        m_scr[...] = jnp.full(m_scr.shape, _NEG_INF, m_scr.dtype)
        l_scr[...] = jnp.zeros(l_scr.shape, l_scr.dtype)
        acc_scr[...] = jnp.zeros(acc_scr.shape, acc_scr.dtype)

    # ---- per key tile: scores + online softmax update ----
    def _update():
        q = q_ref[0]                                   # [H, tq, hd] (already scaled)
        k = k_ref[0]                                   # [H, tk, hd]
        v = v_ref[0]                                   # [H, tk, hd]
        # head-batched q @ k^T: contract head_dim, no explicit transpose.
        s = jax.lax.dot_general(q, k, (((2,), (2,)), ((0,), (0,))),
                                preferred_element_type=jnp.float32)   # [H, tq, tk]
        if causal:
            # torch.tril semantics on the full [S_de, S_en] score matrix;
            # mask is head-invariant and computed once per (q-tile, k-tile).
            rows = jax.lax.broadcasted_iota(jnp.int32, (block_q, block_k), 0) \
                + qi * block_q
            cols = jax.lax.broadcasted_iota(jnp.int32, (block_q, block_k), 1) \
                + ki * block_k
            s = jnp.where((cols <= rows)[None], s, jnp.float32(_MASK_VALUE))

        m_prev = m_scr[...]                                            # [H, tq, 1]
        m_new = jnp.maximum(m_prev, jnp.max(s, axis=-1, keepdims=True))
        alpha = jnp.exp(m_prev - m_new)
        p = jnp.exp(s - m_new)                                         # [H, tq, tk]
        l_scr[...] = alpha * l_scr[...] + jnp.sum(p, axis=-1, keepdims=True)
        pv = jax.lax.dot_general(p.astype(v.dtype), v, (((2,), (1,)), ((0,), (0,))),
                                 preferred_element_type=jnp.float32)   # [H, tq, hd]
        acc_scr[...] = alpha * acc_scr[...] + pv
        m_scr[...] = m_new

    if causal:
        # Skip key tiles that lie entirely above the diagonal (no visible columns).
        pl.when(ki * block_k <= qi * block_q + (block_q - 1))(_update)
    else:
        _update()

    # ---- finalize on the last key tile: normalize + fused output projection ----
    @pl.when(ki == nk - 1)
    def _finalize():
        # Exact normalization (once-per-q-tile epilogue, negligible cost).
        ctx = (acc_scr[...] / l_scr[...]).astype(wo_ref.dtype)          # [H, tq, hd]
        per_head = jax.lax.dot_general(ctx, wo_ref[...],
                                       (((2,), (1,)), ((0,), (0,))),
                                       preferred_element_type=jnp.float32)  # [H, tq, dm]
        out = jnp.sum(per_head, axis=0) + bo_ref[...]
        out_ref[0] = out.astype(out_ref.dtype)


def _flash_attention(q, k, v, wo_h, bo, *, causal, block_q, block_k, out_dtype):
    B, H, S_de, hd = q.shape
    S_en = k.shape[2]
    d_model = wo_h.shape[-1]
    tq = _pick_tile(S_de, block_q, q.dtype)
    tk = _pick_tile(S_en, block_k, k.dtype)
    grid = (B, S_de // tq, S_en // tk)

    kernel = functools.partial(_flash_attn_kernel,
                               block_q=tq, block_k=tk, causal=causal)

    return pl.pallas_call(
        kernel,
        out_shape=jax.ShapeDtypeStruct((B, S_de, d_model), out_dtype),
        grid=grid,
        in_specs=[
            pl.BlockSpec((1, H, tq, hd), lambda b, qi, ki: (b, 0, qi, 0)),  # Q (resident over ki)
            pl.BlockSpec((1, H, tk, hd), lambda b, qi, ki: (b, 0, ki, 0)),  # K (streamed)
            pl.BlockSpec((1, H, tk, hd), lambda b, qi, ki: (b, 0, ki, 0)),  # V (streamed)
            pl.BlockSpec((H, hd, d_model), lambda b, qi, ki: (0, 0, 0)),    # Wo (resident)
            pl.BlockSpec((1, d_model), lambda b, qi, ki: (0, 0)),           # bo
        ],
        out_specs=pl.BlockSpec((1, tq, d_model), lambda b, qi, ki: (b, qi, 0)),
        scratch_shapes=[
            pltpu.VMEM((H, tq, 1), jnp.float32),    # running max m
            pltpu.VMEM((H, tq, 1), jnp.float32),    # running denom l
            pltpu.VMEM((H, tq, hd), jnp.float32),   # running context accumulator
        ],
        compiler_params=pltpu.CompilerParams(
            dimension_semantics=("parallel", "parallel", "arbitrary")),
    )(q, k, v, wo_h, bo)


# --------------------------------------------------------------------------- #
# Top-level wrapper (matches MultiHeadEncoderDecoderAttention.forward).       #
# --------------------------------------------------------------------------- #
@functools.partial(jax.jit, static_argnames=("num_heads", "causal", "compute_dtype",
                                             "block_q", "block_k", "block_proj"))
def multi_head_enc_dec_attention(en, de, params, *, num_heads, causal=False,
                                 compute_dtype=jnp.bfloat16,
                                 block_q=256, block_k=256, block_proj=256):
    """en: [B, S_en, input_dim], de: [B, S_de, input_dim] -> [B, S_de, d_model]."""
    B, S_en, Din = en.shape
    _, S_de, _ = de.shape
    d_model = params["wq"].shape[1]
    if d_model % num_heads != 0:
        raise Exception("d_model % num_heads != 0")
    H = num_heads
    hd = d_model // H
    out_dtype = de.dtype
    scale = 1.0 / math.sqrt(hd)
    f32 = jnp.float32

    # wrapper-side layout / precision plumbing; 1/sqrt(hd) folded into Wq/bq.
    wq = (params["wq"].astype(f32) * scale).astype(compute_dtype)
    bq = params["bq"].reshape(1, d_model).astype(f32) * scale
    wk = params["wk"].astype(compute_dtype)
    bk = params["bk"].reshape(1, d_model).astype(f32)
    wv = params["wv"].astype(compute_dtype)
    bv = params["bv"].reshape(1, d_model).astype(f32)
    wo_h = params["wo"].reshape(H, hd, d_model).astype(compute_dtype)
    bo = params["bo"].reshape(1, d_model).astype(f32)

    en_c = en.astype(compute_dtype)
    de_c = de.astype(compute_dtype)

    # hoisted projections: computed once, lane-dense N = d_model matmuls.
    q = _linear(de_c, wq, bq, block_s=block_proj, out_dtype=compute_dtype)
    k, v = _kv_linear(en_c, wk, bk, wv, bv, block_s=block_proj, out_dtype=compute_dtype)

    # head split [B, H, S, hd] -- pure layout plumbing, handled by XLA.
    q = q.reshape(B, S_de, H, hd).transpose(0, 2, 1, 3)
    k = k.reshape(B, S_en, H, hd).transpose(0, 2, 1, 3)
    v = v.reshape(B, S_en, H, hd).transpose(0, 2, 1, 3)

    return _flash_attention(q, k, v, wo_h, bo, causal=causal,
                            block_q=block_q, block_k=block_k, out_dtype=out_dtype)


# --------------------------------------------------------------------------- #
# Parameter init + plain-JAX reference (mirrors the PyTorch module).          #
# --------------------------------------------------------------------------- #
def _xavier_uniform(key, fan_in, fan_out, dtype=jnp.float32):
    bound = math.sqrt(6.0 / (fan_in + fan_out))
    return jax.random.uniform(key, (fan_in, fan_out), dtype, minval=-bound, maxval=bound)


def init_params(key, input_dim, d_model):
    kq, kk, kv, ko = jax.random.split(key, 4)
    zeros_b = jnp.zeros((1, d_model), jnp.float32)
    return {
        "wq": _xavier_uniform(kq, input_dim, d_model), "bq": zeros_b,
        "wk": _xavier_uniform(kk, input_dim, d_model), "bk": zeros_b,
        "wv": _xavier_uniform(kv, input_dim, d_model), "bv": zeros_b,
        "wo": _xavier_uniform(ko, d_model, d_model),   "bo": zeros_b,
    }


def _reference(en, de, params, num_heads, causal=False):
    B, S_en, _ = en.shape
    _, S_de, _ = de.shape
    d_model = params["wq"].shape[1]
    hd = d_model // num_heads
    q = de @ params["wq"] + params["bq"]
    k = en @ params["wk"] + params["bk"]
    v = en @ params["wv"] + params["bv"]
    q = q.reshape(B, S_de, num_heads, hd).transpose(0, 2, 1, 3)
    k = k.reshape(B, S_en, num_heads, hd).transpose(0, 2, 1, 3)
    v = v.reshape(B, S_en, num_heads, hd).transpose(0, 2, 1, 3)
    s = jnp.einsum("bhqd,bhkd->bhqk", q, k) / math.sqrt(hd)
    if causal:
        mask = jnp.tril(jnp.ones((S_de, S_en), jnp.float32))
        s = jnp.where(mask == 0, jnp.float32(_MASK_VALUE), s)
    p = jax.nn.softmax(s, axis=-1)
    wv = jnp.einsum("bhqk,bhkd->bhqd", p, v)
    wv = wv.transpose(0, 2, 1, 3).reshape(B, S_de, d_model)
    return wv @ params["wo"] + params["bo"]


if __name__ == "__main__":
    B, S_en, S_de = 2, 256, 256
    input_dim, d_model, num_heads = 64, 128, 4

    key = jax.random.PRNGKey(0)
    k_en, k_de, k_p, k_b = jax.random.split(key, 4)
    en = jax.random.normal(k_en, (B, S_en, input_dim), jnp.float32)
    de = jax.random.normal(k_de, (B, S_de, input_dim), jnp.float32)
    params = init_params(k_p, input_dim, d_model)
    # The module inits biases to 0; use small non-zero biases to exercise the bias path.
    for name, bkey in zip(("bq", "bk", "bv", "bo"), jax.random.split(k_b, 4)):
        params[name] = 0.1 * jax.random.normal(bkey, (1, d_model), jnp.float32)

    ref = _reference(en, de, params, num_heads, causal=False)
    ref_c = _reference(en, de, params, num_heads, causal=True)

    # f32 compute path, 2x2x2 flash grid (exercises init / accumulate / finalize).
    out = jax.block_until_ready(multi_head_enc_dec_attention(
        en, de, params, num_heads=num_heads, causal=False,
        compute_dtype=jnp.float32, block_q=128, block_k=128))
    assert out.shape == (B, S_de, d_model)
    assert jnp.allclose(out, ref, atol=5e-3, rtol=5e-3), "f32 mismatch vs reference"

    # causal (tril) path: also exercises the fully-masked-tile skip.
    out_c = jax.block_until_ready(multi_head_enc_dec_attention(
        en, de, params, num_heads=num_heads, causal=True,
        compute_dtype=jnp.float32, block_q=128, block_k=128))
    assert jnp.allclose(out_c, ref_c, atol=5e-3, rtol=5e-3), "causal mismatch vs reference"

    # bf16 compute path (perf config; loose check against the f32 reference).
    out_bf16 = jax.block_until_ready(multi_head_enc_dec_attention(
        en, de, params, num_heads=num_heads, causal=False,
        compute_dtype=jnp.bfloat16, block_q=128, block_k=128))
    assert jnp.allclose(out_bf16.astype(jnp.float32), ref, atol=2e-1, rtol=2e-1), \
        "bf16 mismatch vs reference"

    print("KERNEL_OK")
</pallas_src>

<mosaic_0001>
module attributes {stable_mosaic.version = 11 : i64} {
  func.func @_linear_kernel(%arg0: i32, %arg1: i32, %arg2: memref<1x256x64xf32, #tpu.memory_space<vmem>>, %arg3: memref<64x128xf32, #tpu.memory_space<vmem>>, %arg4: memref<1x128xf32, #tpu.memory_space<vmem>>, %arg5: memref<1x256x128xf32, #tpu.memory_space<vmem>>) attributes {dimension_semantics = [#tpu.dimension_semantics<parallel>, #tpu.dimension_semantics<parallel>], iteration_bounds = array<i64: 2, 1>, scalar_prefetch = 0 : i64, scratch_operands = 0 : i64, tpu.core_type = #tpu.core_type<tc>, window_params = [{transform_indices = @transform_0, window_bounds = array<i64: 1, 256, 64>}, {pipeline_mode = #tpu.pipeline_mode<synchronous>, transform_indices = @transform_1, window_bounds = array<i64: 64, 128>}, {pipeline_mode = #tpu.pipeline_mode<synchronous>, transform_indices = @transform_2, window_bounds = array<i64: 1, 128>}, {transform_indices = @transform_3, window_bounds = array<i64: 1, 256, 128>}]} {
    %c0 = arith.constant 0 : index
    %c0_0 = arith.constant 0 : index
    %c0_1 = arith.constant 0 : index
    %0 = vector.load %arg2[%c0, %c0_0, %c0_1] : memref<1x256x64xf32, #tpu.memory_space<vmem>>, vector<1x256x64xf32>
    %1 = vector.shape_cast %0 : vector<1x256x64xf32> to vector<256x64xf32>
    %c0_2 = arith.constant 0 : index
    %c0_3 = arith.constant 0 : index
    %2 = vector.load %arg3[%c0_2, %c0_3] : memref<64x128xf32, #tpu.memory_space<vmem>>, vector<64x128xf32>
    %cst = arith.constant dense<0.000000e+00> : vector<256x128xf32>
    %3 = tpu.matmul %1, %2, %cst {dimension_numbers = #tpu.dot_dimension_numbers<[1], [0], [0], [1], [0, 0, 1, 1], [], []>} : vector<256x64xf32>, vector<64x128xf32>, vector<256x128xf32> -> vector<256x128xf32>
    %c0_4 = arith.constant 0 : index
    %c0_5 = arith.constant 0 : index
    %4 = vector.load %arg4[%c0_4, %c0_5] : memref<1x128xf32, #tpu.memory_space<vmem>>, vector<1x128xf32>
    %5 = vector.broadcast %4 : vector<1x128xf32> to vector<256x128xf32>
    %6 = arith.addf %3, %5 : vector<256x128xf32>
    %c0_6 = arith.constant 0 : index
    %c0_7 = arith.constant 0 : index
    %c0_8 = arith.constant 0 : index
    %7 = vector.load %arg5[%c0_6, %c0_7, %c0_8] : memref<1x256x128xf32, #tpu.memory_space<vmem>>, vector<1x256x128xf32>
    %8 = vector.shape_cast %7 : vector<1x256x128xf32> to vector<256x128xf32>
    %9 = vector.shape_cast %6 : vector<256x128xf32> to vector<1x256x128xf32>
    tpu.vector_store %arg5[%c0_6, %c0_7, %c0_8], %9 {strides = array<i32>} : memref<1x256x128xf32, #tpu.memory_space<vmem>>, vector<1x256x128xf32>,
    return
  }
  func.func @transform_0(%arg0: i32, %arg1: i32) -> (i32, i32, i32) {
    %c0_i32 = arith.constant 0 : i32
    %c0_i32_0 = arith.constant 0 : i32
    return %arg0, %arg1, %c0_i32 : i32, i32, i32
  }
  func.func @transform_1(%arg0: i32, %arg1: i32) -> (i32, i32) {
    %c0_i32 = arith.constant 0 : i32
    %c0_i32_0 = arith.constant 0 : i32
    %c0_i32_1 = arith.constant 0 : i32
    return %c0_i32, %c0_i32_0 : i32, i32
  }
  func.func @transform_2(%arg0: i32, %arg1: i32) -> (i32, i32) {
    %c0_i32 = arith.constant 0 : i32
    %c0_i32_0 = arith.constant 0 : i32
    %c0_i32_1 = arith.constant 0 : i32
    return %c0_i32, %c0_i32_0 : i32, i32
  }
  func.func @transform_3(%arg0: i32, %arg1: i32) -> (i32, i32, i32) {
    %c0_i32 = arith.constant 0 : i32
    %c0_i32_0 = arith.constant 0 : i32
    return %arg0, %arg1, %c0_i32 : i32, i32, i32
  }
}

module attributes {stable_mosaic.version = 11 : i64} {
  func.func @_kv_linear_kernel(%arg0: i32, %arg1: i32, %arg2: memref<1x256x64xf32, #tpu.memory_space<vmem>>, %arg3: memref<64x128xf32, #tpu.memory_space<vmem>>, %arg4: memref<1x128xf32, #tpu.memory_space<vmem>>, %arg5: memref<64x128xf32, #tpu.memory_space<vmem>>, %arg6: memref<1x128xf32, #tpu.memory_space<vmem>>, %arg7: memref<1x256x128xf32, #tpu.memory_space<vmem>>, %arg8: memref<1x256x128xf32, #tpu.memory_space<vmem>>) attributes {dimension_semantics = [#tpu.dimension_semantics<parallel>, #tpu.dimension_semantics<parallel>], iteration_bounds = array<i64: 2, 1>, scalar_prefetch = 0 : i64, scratch_operands = 0 : i64, tpu.core_type = #tpu.core_type<tc>, window_params = [{transform_indices = @transform_0, window_bounds = array<i64: 1, 256, 64>}, {pipeline_mode = #tpu.pipeline_mode<synchronous>, transform_indices = @transform_1, window_bounds = array<i64: 64, 128>}, {pipeline_mode = #tpu.pipeline_mode<synchronous>, transform_indices = @transform_2, window_bounds = array<i64: 1, 128>}, {pipeline_mode = #tpu.pipeline_mode<synchronous>, transform_indices = @transform_3, window_bounds = array<i64: 64, 128>}, {pipeline_mode = #tpu.pipeline_mode<synchronous>, transform_indices = @transform_4, window_bounds = array<i64: 1, 128>}, {transform_indices = @transform_5, window_bounds = array<i64: 1, 256, 128>}, {transform_indices = @transform_6, window_bounds = array<i64: 1, 256, 128>}]} {
    %c0 = arith.constant 0 : index
    %c0_0 = arith.constant 0 : index
    %c0_1 = arith.constant 0 : index
    %0 = vector.load %arg2[%c0, %c0_0, %c0_1] : memref<1x256x64xf32, #tpu.memory_space<vmem>>, vector<1x256x64xf32>
    %1 = vector.shape_cast %0 : vector<1x256x64xf32> to vector<256x64xf32>
    %c0_2 = arith.constant 0 : index
    %c0_3 = arith.constant 0 : index
    %2 = vector.load %arg3[%c0_2, %c0_3] : memref<64x128xf32, #tpu.memory_space<vmem>>, vector<64x128xf32>
    %cst = arith.constant dense<0.000000e+00> : vector<256x128xf32>
    %3 = tpu.matmul %1, %2, %cst {dimension_numbers = #tpu.dot_dimension_numbers<[1], [0], [0], [1], [0, 0, 1, 1], [], []>} : vector<256x64xf32>, vector<64x128xf32>, vector<256x128xf32> -> vector<256x128xf32>
    %c0_4 = arith.constant 0 : index
    %c0_5 = arith.constant 0 : index
    %4 = vector.load %arg4[%c0_4, %c0_5] : memref<1x128xf32, #tpu.memory_space<vmem>>, vector<1x128xf32>
    %5 = vector.broadcast %4 : vector<1x128xf32> to vector<256x128xf32>
    %6 = arith.addf %3, %5 : vector<256x128xf32>
    %c0_6 = arith.constant 0 : index
    %c0_7 = arith.constant 0 : index
    %7 = vector.load %arg5[%c0_6, %c0_7] : memref<64x128xf32, #tpu.memory_space<vmem>>, vector<64x128xf32>
    %cst_8 = arith.constant dense<0.000000e+00> : vector<256x128xf32>
    %8 = tpu.matmul %1, %7, %cst_8 {dimension_numbers = #tpu.dot_dimension_numbers<[1], [0], [0], [1], [0, 0, 1, 1], [], []>} : vector<256x64xf32>, vector<64x128xf32>, vector<256x128xf32> -> vector<256x128xf32>
    %c0_9 = arith.constant 0 : index
    %c0_10 = arith.constant 0 : index
    %9 = vector.load %arg6[%c0_9, %c0_10] : memref<1x128xf32, #tpu.memory_space<vmem>>, vector<1x128xf32>
    %10 = vector.broadcast %9 : vector<1x128xf32> to vector<256x128xf32>
    %11 = arith.addf %8, %10 : vector<256x128xf32>
    %c0_11 = arith.constant 0 : index
    %c0_12 = arith.constant 0 : index
    %c0_13 = arith.constant 0 : index
    %12 = vector.load %arg7[%c0_11, %c0_12, %c0_13] : memref<1x256x128xf32, #tpu.memory_space<vmem>>, vector<1x256x128xf32>
    %13 = vector.shape_cast %12 : vector<1x256x128xf32> to vector<256x128xf32>
    %14 = vector.shape_cast %6 : vector<256x128xf32> to vector<1x256x128xf32>
    tpu.vector_store %arg7[%c0_11, %c0_12, %c0_13], %14 {strides = array<i32>} : memref<1x256x128xf32, #tpu.memory_space<vmem>>, vector<1x256x128xf32>,
    %c0_14 = arith.constant 0 : index
    %c0_15 = arith.constant 0 : index
    %c0_16 = arith.constant 0 : index
    %15 = vector.load %arg8[%c0_14, %c0_15, %c0_16] : memref<1x256x128xf32, #tpu.memory_space<vmem>>, vector<1x256x128xf32>
    %16 = vector.shape_cast %15 : vector<1x256x128xf32> to vector<256x128xf32>
    %17 = vector.shape_cast %11 : vector<256x128xf32> to vector<1x256x128xf32>
    tpu.vector_store %arg8[%c0_14, %c0_15, %c0_16], %17 {strides = array<i32>} : memref<1x256x128xf32, #tpu.memory_space<vmem>>, vector<1x256x128xf32>,
    return
  }
  func.func @transform_0(%arg0: i32, %arg1: i32) -> (i32, i32, i32) {
    %c0_i32 = arith.constant 0 : i32
    %c0_i32_0 = arith.constant 0 : i32
    return %arg0, %arg1, %c0_i32 : i32, i32, i32
  }
  func.func @transform_1(%arg0: i32, %arg1: i32) -> (i32, i32) {
    %c0_i32 = arith.constant 0 : i32
    %c0_i32_0 = arith.constant 0 : i32
    %c0_i32_1 = arith.constant 0 : i32
    return %c0_i32, %c0_i32_0 : i32, i32
  }
  func.func @transform_2(%arg0: i32, %arg1: i32) -> (i32, i32) {
    %c0_i32 = arith.constant 0 : i32
    %c0_i32_0 = arith.constant 0 : i32
    %c0_i32_1 = arith.constant 0 : i32
    return %c0_i32, %c0_i32_0 : i32, i32
  }
  func.func @transform_3(%arg0: i32, %arg1: i32) -> (i32, i32) {
    %c0_i32 = arith.constant 0 : i32
    %c0_i32_0 = arith.constant 0 : i32
    %c0_i32_1 = arith.constant 0 : i32
    return %c0_i32, %c0_i32_0 : i32, i32
  }
  func.func @transform_4(%arg0: i32, %arg1: i32) -> (i32, i32) {
    %c0_i32 = arith.constant 0 : i32
    %c0_i32_0 = arith.constant 0 : i32
    %c0_i32_1 = arith.constant 0 : i32
    return %c0_i32, %c0_i32_0 : i32, i32
  }
  func.func @transform_5(%arg0: i32, %arg1: i32) -> (i32, i32, i32) {
    %c0_i32 = arith.constant 0 : i32
    %c0_i32_0 = arith.constant 0 : i32
    return %arg0, %arg1, %c0_i32 : i32, i32, i32
  }
  func.func @transform_6(%arg0: i32, %arg1: i32) -> (i32, i32, i32) {
    %c0_i32 = arith.constant 0 : i32
    %c0_i32_0 = arith.constant 0 : i32
    return %arg0, %arg1, %c0_i32 : i32, i32, i32
  }
}

module attributes {stable_mosaic.version = 11 : i64} {
  func.func @_flash_attn_kernel(%arg0: i32, %arg1: i32, %arg2: i32, %arg3: memref<1x4x128x32xf32, #tpu.memory_space<vmem>>, %arg4: memref<1x4x128x32xf32, #tpu.memory_space<vmem>>, %arg5: memref<1x4x128x32xf32, #tpu.memory_space<vmem>>, %arg6: memref<4x32x128xf32, #tpu.memory_space<vmem>>, %arg7: memref<1x128xf32, #tpu.memory_space<vmem>>, %arg8: memref<1x128x128xf32, #tpu.memory_space<vmem>>, %arg9: memref<4x128x1xf32, #tpu.memory_space<vmem>>, %arg10: memref<4x128x1xf32, #tpu.memory_space<vmem>>, %arg11: memref<4x128x32xf32, #tpu.memory_space<vmem>>) attributes {dimension_semantics = [#tpu.dimension_semantics<parallel>, #tpu.dimension_semantics<parallel>, #tpu.dimension_semantics<arbitrary>], iteration_bounds = array<i64: 2, 2, 2>, scalar_prefetch = 0 : i64, scratch_operands = 3 : i64, tpu.core_type = #tpu.core_type<tc>, window_params = [{transform_indices = @transform_0, window_bounds = array<i64: 1, 4, 128, 32>}, {transform_indices = @transform_1, window_bounds = array<i64: 1, 4, 128, 32>}, {transform_indices = @transform_2, window_bounds = array<i64: 1, 4, 128, 32>}, {pipeline_mode = #tpu.pipeline_mode<synchronous>, transform_indices = @transform_3, window_bounds = array<i64: 4, 32, 128>}, {pipeline_mode = #tpu.pipeline_mode<synchronous>, transform_indices = @transform_4, window_bounds = array<i64: 1, 128>}, {transform_indices = @transform_5, window_bounds = array<i64: 1, 128, 128>}]} {
    %c0_i32 = arith.constant 0 : i32
    %0 = arith.cmpi eq, %arg2, %c0_i32 : i32
    %1 = arith.extui %0 : i1 to i32
    %c0_i32_0 = arith.constant 0 : i32
    %2 = arith.cmpi ne, %1, %c0_i32_0 : i32
    scf.if %2 {
      %cst_34 = arith.constant -1.000000e+30 : f32
      %35 = vector.broadcast %cst_34 : f32 to vector<4x128x1xf32>
      %c0_35 = arith.constant 0 : index
      %c0_36 = arith.constant 0 : index
      %c0_37 = arith.constant 0 : index
      %36 = vector.load %arg9[%c0_35, %c0_36, %c0_37] : memref<4x128x1xf32, #tpu.memory_space<vmem>>, vector<4x128x1xf32>
      tpu.vector_store %arg9[%c0_35, %c0_36, %c0_37], %35 {strides = array<i32>} : memref<4x128x1xf32, #tpu.memory_space<vmem>>, vector<4x128x1xf32>,
      %cst_38 = arith.constant 0.000000e+00 : f32
      %37 = vector.broadcast %cst_38 : f32 to vector<4x128x1xf32>
      %c0_39 = arith.constant 0 : index
      %c0_40 = arith.constant 0 : index
      %c0_41 = arith.constant 0 : index
      %38 = vector.load %arg10[%c0_39, %c0_40, %c0_41] : memref<4x128x1xf32, #tpu.memory_space<vmem>>, vector<4x128x1xf32>
      tpu.vector_store %arg10[%c0_39, %c0_40, %c0_41], %37 {strides = array<i32>} : memref<4x128x1xf32, #tpu.memory_space<vmem>>, vector<4x128x1xf32>,
      %cst_42 = arith.constant 0.000000e+00 : f32
      %39 = vector.broadcast %cst_42 : f32 to vector<4x128x32xf32>
      %c0_43 = arith.constant 0 : index
      %c0_44 = arith.constant 0 : index
      %c0_45 = arith.constant 0 : index
      %40 = vector.load %arg11[%c0_43, %c0_44, %c0_45] : memref<4x128x32xf32, #tpu.memory_space<vmem>>, vector<4x128x32xf32>
      tpu.vector_store %arg11[%c0_43, %c0_44, %c0_45], %39 {strides = array<i32>} : memref<4x128x32xf32, #tpu.memory_space<vmem>>, vector<4x128x32xf32>,
    } else {
    }
    %c0 = arith.constant 0 : index
    %c0_1 = arith.constant 0 : index
    %c0_2 = arith.constant 0 : index
    %c0_3 = arith.constant 0 : index
    %3 = vector.load %arg3[%c0, %c0_1, %c0_2, %c0_3] : memref<1x4x128x32xf32, #tpu.memory_space<vmem>>, vector<1x4x128x32xf32>
    %4 = vector.shape_cast %3 : vector<1x4x128x32xf32> to vector<4x128x32xf32>
    %c0_4 = arith.constant 0 : index
    %c0_5 = arith.constant 0 : index
    %c0_6 = arith.constant 0 : index
    %c0_7 = arith.constant 0 : index
    %5 = vector.load %arg4[%c0_4, %c0_5, %c0_6, %c0_7] : memref<1x4x128x32xf32, #tpu.memory_space<vmem>>, vector<1x4x128x32xf32>
    %6 = vector.shape_cast %5 : vector<1x4x128x32xf32> to vector<4x128x32xf32>
    %c0_8 = arith.constant 0 : index
    %c0_9 = arith.constant 0 : index
    %c0_10 = arith.constant 0 : index
    %c0_11 = arith.constant 0 : index
    %7 = vector.load %arg5[%c0_8, %c0_9, %c0_10, %c0_11] : memref<1x4x128x32xf32, #tpu.memory_space<vmem>>, vector<1x4x128x32xf32>
    %8 = vector.shape_cast %7 : vector<1x4x128x32xf32> to vector<4x128x32xf32>
    %cst = arith.constant dense<0.000000e+00> : vector<4x128x128xf32>
    %9 = tpu.matmul %4, %6, %cst {dimension_numbers = #tpu.dot_dimension_numbers<[2], [2], [1], [1], [0, 0, 0, 1, 1, 1], [0], [0]>} : vector<4x128x32xf32>, vector<4x128x32xf32>, vector<4x128x128xf32> -> vector<4x128x128xf32>
    %c0_12 = arith.constant 0 : index
    %c0_13 = arith.constant 0 : index
    %c0_14 = arith.constant 0 : index
    %10 = vector.load %arg9[%c0_12, %c0_13, %c0_14] : memref<4x128x1xf32, #tpu.memory_space<vmem>>, vector<4x128x1xf32>
    %cst_15 = arith.constant dense<0xFF800000> : vector<4x128xf32>
    %11 = vector.multi_reduction <maximumf>, %9, %cst_15 [2] : vector<4x128x128xf32> to vector<4x128xf32>
    %12 = vector.shape_cast %11 : vector<4x128xf32> to vector<4x128x1xf32>
    %13 = arith.maximumf %10, %12 : vector<4x128x1xf32>
    %14 = arith.subf %10, %13 : vector<4x128x1xf32>
    %15 = math.exp %14 : vector<4x128x1xf32>
    %16 = vector.broadcast %13 : vector<4x128x1xf32> to vector<4x128x128xf32>
    %17 = arith.subf %9, %16 : vector<4x128x128xf32>
    %18 = math.exp %17 : vector<4x128x128xf32>
    %c0_16 = arith.constant 0 : index
    %c0_17 = arith.constant 0 : index
    %c0_18 = arith.constant 0 : index
    %19 = vector.load %arg10[%c0_16, %c0_17, %c0_18] : memref<4x128x1xf32, #tpu.memory_space<vmem>>, vector<4x128x1xf32>
    %20 = arith.mulf %15, %19 : vector<4x128x1xf32>
    %cst_19 = arith.constant dense<0.000000e+00> : vector<4x128xf32>
    %21 = vector.multi_reduction <add>, %18, %cst_19 [2] : vector<4x128x128xf32> to vector<4x128xf32>
    %22 = vector.shape_cast %21 : vector<4x128xf32> to vector<4x128x1xf32>
    %23 = arith.addf %20, %22 : vector<4x128x1xf32>
    %c0_20 = arith.constant 0 : index
    %c0_21 = arith.constant 0 : index
    %c0_22 = arith.constant 0 : index
    %24 = vector.load %arg10[%c0_20, %c0_21, %c0_22] : memref<4x128x1xf32, #tpu.memory_space<vmem>>, vector<4x128x1xf32>
    tpu.vector_store %arg10[%c0_20, %c0_21, %c0_22], %23 {strides = array<i32>} : memref<4x128x1xf32, #tpu.memory_space<vmem>>, vector<4x128x1xf32>,
    %cst_23 = arith.constant dense<0.000000e+00> : vector<4x128x32xf32>
    %25 = tpu.matmul %18, %8, %cst_23 {dimension_numbers = #tpu.dot_dimension_numbers<[2], [1], [1], [2], [0, 0, 0, 1, 1, 2], [0], [0]>} : vector<4x128x128xf32>, vector<4x128x32xf32>, vector<4x128x32xf32> -> vector<4x128x32xf32>
    %c0_24 = arith.constant 0 : index
    %c0_25 = arith.constant 0 : index
    %c0_26 = arith.constant 0 : index
    %26 = vector.load %arg11[%c0_24, %c0_25, %c0_26] : memref<4x128x32xf32, #tpu.memory_space<vmem>>, vector<4x128x32xf32>
    %27 = vector.broadcast %15 : vector<4x128x1xf32> to vector<4x128x32xf32>
    %28 = arith.mulf %27, %26 : vector<4x128x32xf32>
    %29 = arith.addf %28, %25 : vector<4x128x32xf32>
    %c0_27 = arith.constant 0 : index
    %c0_28 = arith.constant 0 : index
    %c0_29 = arith.constant 0 : index
    %30 = vector.load %arg11[%c0_27, %c0_28, %c0_29] : memref<4x128x32xf32, #tpu.memory_space<vmem>>, vector<4x128x32xf32>
    tpu.vector_store %arg11[%c0_27, %c0_28, %c0_29], %29 {strides = array<i32>} : memref<4x128x32xf32, #tpu.memory_space<vmem>>, vector<4x128x32xf32>,
    %c0_30 = arith.constant 0 : index
    %c0_31 = arith.constant 0 : index
    %c0_32 = arith.constant 0 : index
    %31 = vector.load %arg9[%c0_30, %c0_31, %c0_32] : memref<4x128x1xf32, #tpu.memory_space<vmem>>, vector<4x128x1xf32>
    tpu.vector_store %arg9[%c0_30, %c0_31, %c0_32], %13 {strides = array<i32>} : memref<4x128x1xf32, #tpu.memory_space<vmem>>, vector<4x128x1xf32>,
    %c1_i32 = arith.constant 1 : i32
    %32 = arith.cmpi eq, %arg2, %c1_i32 : i32
    %33 = arith.extui %32 : i1 to i32
    %c0_i32_33 = arith.constant 0 : i32
    %34 = arith.cmpi ne, %33, %c0_i32_33 : i32
    scf.if %34 {
      %c0_34 = arith.constant 0 : index
      %c0_35 = arith.constant 0 : index
      %c0_36 = arith.constant 0 : index
      %35 = vector.load %arg11[%c0_34, %c0_35, %c0_36] : memref<4x128x32xf32, #tpu.memory_space<vmem>>, vector<4x128x32xf32>
      %c0_37 = arith.constant 0 : index
      %c0_38 = arith.constant 0 : index
      %c0_39 = arith.constant 0 : index
      %36 = vector.load %arg10[%c0_37, %c0_38, %c0_39] : memref<4x128x1xf32, #tpu.memory_space<vmem>>, vector<4x128x1xf32>
      %37 = vector.broadcast %36 : vector<4x128x1xf32> to vector<4x128x32xf32>
      %38 = arith.divf %35, %37 : vector<4x128x32xf32>
      %c0_40 = arith.constant 0 : index
      %c0_41 = arith.constant 0 : index
      %c0_42 = arith.constant 0 : index
      %39 = vector.load %arg6[%c0_40, %c0_41, %c0_42] : memref<4x32x128xf32, #tpu.memory_space<vmem>>, vector<4x32x128xf32>
      %cst_43 = arith.constant dense<0.000000e+00> : vector<4x128x128xf32>
      %40 = tpu.matmul %38, %39, %cst_43 {dimension_numbers = #tpu.dot_dimension_numbers<[2], [1], [1], [2], [0, 0, 0, 1, 1, 2], [0], [0]>} : vector<4x128x32xf32>, vector<4x32x128xf32>, vector<4x128x128xf32> -> vector<4x128x128xf32>
      %cst_44 = arith.constant dense<0.000000e+00> : vector<128x128xf32>
      %41 = vector.multi_reduction <add>, %40, %cst_44 [0] : vector<4x128x128xf32> to vector<128x128xf32>
      %c0_45 = arith.constant 0 : index
      %c0_46 = arith.constant 0 : index
      %42 = vector.load %arg7[%c0_45, %c0_46] : memref<1x128xf32, #tpu.memory_space<vmem>>, vector<1x128xf32>
      %43 = vector.broadcast %42 : vector<1x128xf32> to vector<128x128xf32>
      %44 = arith.addf %41, %43 : vector<128x128xf32>
      %c0_47 = arith.constant 0 : index
      %c0_48 = arith.constant 0 : index
      %c0_49 = arith.constant 0 : index
      %45 = vector.load %arg8[%c0_47, %c0_48, %c0_49] : memref<1x128x128xf32, #tpu.memory_space<vmem>>, vector<1x128x128xf32>
      %46 = vector.shape_cast %45 : vector<1x128x128xf32> to vector<128x128xf32>
      %47 = vector.shape_cast %44 : vector<128x128xf32> to vector<1x128x128xf32>
      tpu.vector_store %arg8[%c0_47, %c0_48, %c0_49], %47 {strides = array<i32>} : memref<1x128x128xf32, #tpu.memory_space<vmem>>, vector<1x128x128xf32>,
    } else {
    }
    return
  }
  func.func @transform_0(%arg0: i32, %arg1: i32, %arg2: i32) -> (i32, i32, i32, i32) {
    %c0_i32 = arith.constant 0 : i32
    %c0_i32_0 = arith.constant 0 : i32
    %c0_i32_1 = arith.constant 0 : i32
    return %arg0, %c0_i32, %arg1, %c0_i32_0 : i32, i32, i32, i32
  }
  func.func @transform_1(%arg0: i32, %arg1: i32, %arg2: i32) -> (i32, i32, i32, i32) {
    %c0_i32 = arith.constant 0 : i32
    %c0_i32_0 = arith.constant 0 : i32
    %c0_i32_1 = arith.constant 0 : i32
    return %arg0, %c0_i32, %arg2, %c0_i32_0 : i32, i32, i32, i32
  }
  func.func @transform_2(%arg0: i32, %arg1: i32, %arg2: i32) -> (i32, i32, i32, i32) {
    %c0_i32 = arith.constant 0 : i32
    %c0_i32_0 = arith.constant 0 : i32
    %c0_i32_1 = arith.constant 0 : i32
    return %arg0, %c0_i32, %arg2, %c0_i32_0 : i32, i32, i32, i32
  }
  func.func @transform_3(%arg0: i32, %arg1: i32, %arg2: i32) -> (i32, i32, i32) {
    %c0_i32 = arith.constant 0 : i32
    %c0_i32_0 = arith.constant 0 : i32
    %c0_i32_1 = arith.constant 0 : i32
    %c0_i32_2 = arith.constant 0 : i32
    return %c0_i32, %c0_i32_0, %c0_i32_1 : i32, i32, i32
  }
  func.func @transform_4(%arg0: i32, %arg1: i32, %arg2: i32) -> (i32, i32) {
    %c0_i32 = arith.constant 0 : i32
    %c0_i32_0 = arith.constant 0 : i32
    %c0_i32_1 = arith.constant 0 : i32
    return %c0_i32, %c0_i32_0 : i32, i32
  }
  func.func @transform_5(%arg0: i32, %arg1: i32, %arg2: i32) -> (i32, i32, i32) {
    %c0_i32 = arith.constant 0 : i32
    %c0_i32_0 = arith.constant 0 : i32
    return %arg0, %arg1, %c0_i32 : i32, i32, i32
  }
}

</mosaic_0001>

<llo_original>
// kernel: multi_head_enc_dec_attention.3
$region0: #{multi_head_enc_dec_attention.3}
  #allocation0 [shape = 'u32[]', space=smem, size = 0x4, offset = 0x4, fixed_abs, tag = 'smem constant byte address 0x4 - core index']
  #allocation1 [shape = 'u32[144,128]{1,0:T(1,128)}', space=vmem, size = 0x12000, scoped, tag = 'internal scratch']
  %s0 = inlined_call_operand.vmem [shape: f32[2,256,64], index: 0, kind: input, shape index: {}]
  %s1 = inlined_call_operand.vmem [shape: f32[64,128], index: 1, kind: input, shape index: {}]
  %s2 = inlined_call_operand.vmem [shape: f32[1,128], index: 2, kind: input, shape index: {}]
  %s3 = inlined_call_operand.vmem [shape: f32[2,256,128], index: 3, kind: output, shape index: {}]
  %s4 = sld [smem:[#allocation0]]
  $region45: #{multi_head_enc_dec_attention.3} parent=0
    _
  %s6 = ssub.s32 1, %s4
  %s7 = scalar_select 0, %s6, %s4
  loop: start=0, step=1, limit=4
  $region2: #{multi_head_enc_dec_attention.3} parent=0 // loop_pre_header
    _
  $region3: #{multi_head_enc_dec_attention.3} parent=0 // loop_header
    %s9 = sphi 0, %s13
    %p10 = scmp.ge.s32.totalorder %s9, 4
    %s16 = sphi 0, %s28
    %s17 = sphi 0, %s24
    %s18 = sphi 0, %s16
    %s19 = sphi 0, %s17
    %s20 = sphi 0, %s18
    %s21 = sphi 0, %s19
    %s33 = sphi 0, %s35
    %s36 = sphi 0, %s33
    %s37 = sphi 0, %s36
    %s53 = sphi 0, %s37
    %s57 = sphi 0, %s57
    %s59 = sphi 0, %s57
    %s60 = sphi 0, %s59
    %s74 = sphi 0, %s60
    %s78 = sphi 0, %s78
    %s80 = sphi 0, %s78
    %s81 = sphi 0, %s80
    %s95 = sphi 0, %s81
    %s103 = sphi 0, %s105
    %s106 = sphi 0, %s103
    %s107 = sphi 0, %s106
    %s123 = sphi 0, %s107
  $region4: #{multi_head_enc_dec_attention.3} parent=0 // loop_header_branch
    %12 = sbr.rel (%p10) target = $region8
  $region5: #{multi_head_enc_dec_attention.3} parent=0 // loop_body
    %s14 = ssub.s32 %s9, 1
    %s15 = ssub.s32 %s9, 2
    %s22 = sadd.s32 1, %s17
    %p23 = scmp.ge.s32.totalorder %s22, 1
    %s24 = scalar_select %p23, 0, %s22
    %s25 = sadd.s32 1, %s16
    %s26 = scalar_select %p23, %s25, %s16
    %p27 = scmp.ge.s32.totalorder %s26, 2
    %s28 = scalar_select %p27, 0, %s26
    %s29 = ssub.s32 %s16, %s28
    %s30 = ssub.s32 %s17, %s24
    %s31 = sor.u32 %s29, %s30
    %p32 = scmp.eq.s32.totalorder %s31, 0
    %s34 = sadd.s32 %s33, 1
    %s35 = scalar_select %p32, %s33, %s34
    %p38 = pneg %p32
    %p39 = scmp.eq.s32.totalorder %s9, 1
    %p40 = por %p38, %p39
    %p41 = scmp.ne.s32.totalorder %s33, %s36
    %p42 = scmp.eq.s32.totalorder %s9, 0
    %p43 = por %p41, %p42
    %p44 = scmp.ne.s32.totalorder %s33, %s36
    %p45 = scmp.eq.s32.totalorder %s14, 1
    %p46 = por %p44, %p45
    %p47 = scmp.ne.s32.totalorder %s36, %s37
    %p48 = scmp.eq.s32.totalorder %s14, 0
    %p49 = por %p47, %p48
    %p50 = scmp.ne.s32.totalorder %s36, %s37
    %p51 = scmp.eq.s32.totalorder %s15, 1
    %p52 = por %p50, %p51
    %p54 = scmp.ne.s32.totalorder %s37, %s53
    %p55 = scmp.eq.s32.totalorder %s15, 0
    %p56 = por %p54, %p55
    %s58 = sadd.s32 %s57, 1
    %p61 = scmp.eq.s32.totalorder %s9, 1
    %p62 = scmp.ne.s32.totalorder %s57, %s59
    %p63 = scmp.eq.s32.totalorder %s9, 0
    %p64 = por %p62, %p63
    %p65 = scmp.ne.s32.totalorder %s57, %s59
    %p66 = scmp.eq.s32.totalorder %s14, 1
    %p67 = por %p65, %p66
    %p68 = scmp.ne.s32.totalorder %s59, %s60
    %p69 = scmp.eq.s32.totalorder %s14, 0
    %p70 = por %p68, %p69
    %p71 = scmp.ne.s32.totalorder %s59, %s60
    %p72 = scmp.eq.s32.totalorder %s15, 1
    %p73 = por %p71, %p72
    %p75 = scmp.ne.s32.totalorder %s60, %s74
    %p76 = scmp.eq.s32.totalorder %s15, 0
    %p77 = por %p75, %p76
    %s79 = sadd.s32 %s78, 1
    %p82 = scmp.eq.s32.totalorder %s9, 1
    %p83 = scmp.ne.s32.totalorder %s78, %s80
    %p84 = scmp.eq.s32.totalorder %s9, 0
    %p85 = por %p83, %p84
    %p86 = scmp.ne.s32.totalorder %s78, %s80
    %p87 = scmp.eq.s32.totalorder %s14, 1
    %p88 = por %p86, %p87
    %p89 = scmp.ne.s32.totalorder %s80, %s81
    %p90 = scmp.eq.s32.totalorder %s14, 0
    %p91 = por %p89, %p90
    %p92 = scmp.ne.s32.totalorder %s80, %s81
    %p93 = scmp.eq.s32.totalorder %s15, 1
    %p94 = por %p92, %p93
    %p96 = scmp.ne.s32.totalorder %s81, %s95
    %p97 = scmp.eq.s32.totalorder %s15, 0
    %p98 = por %p96, %p97
    %s99 = ssub.s32 %s16, %s28
    %s100 = ssub.s32 %s17, %s24
    %s101 = sor.u32 %s99, %s100
    %p102 = scmp.eq.s32.totalorder %s101, 0
    %s104 = sadd.s32 %s103, 1
    %s105 = scalar_select %p102, %s103, %s104
    %p108 = pneg %p102
    %p109 = scmp.eq.s32.totalorder %s9, 1
    %p110 = por %p108, %p109
    %p111 = scmp.ne.s32.totalorder %s103, %s106
    %p112 = scmp.eq.s32.totalorder %s9, 0
    %p113 = por %p111, %p112
    %p114 = scmp.ne.s32.totalorder %s103, %s106
    %p115 = scmp.eq.s32.totalorder %s14, 1
    %p116 = por %p114, %p115
    %p117 = scmp.ne.s32.totalorder %s106, %s107
    %p118 = scmp.eq.s32.totalorder %s14, 0
    %p119 = por %p117, %p118
    %p120 = scmp.ne.s32.totalorder %s106, %s107
    %p121 = scmp.eq.s32.totalorder %s15, 1
    %p122 = por %p120, %p121
    %p124 = scmp.ne.s32.totalorder %s107, %s123
    %p125 = scmp.eq.s32.totalorder %s15, 0
    %p126 = por %p124, %p125
    %p127 = scmp.le.s32.totalorder 1, %s9
    %p128 = scmp.lt.s32.totalorder %s9, 3
    %p129 = pnand %p127, %p128
    %p130 = pneg %p129
    // Predicated region
    $region9: #{multi_head_enc_dec_attention.3} parent=5 // pred_check
      _
    $region10: #{multi_head_enc_dec_attention.3} parent=5 // pred_check_branch
      %132 = sbr.rel (%p129) target = $region12
    $region11: #{multi_head_enc_dec_attention.3} parent=5 // pred_region
      %s133 = ssub.s32 %s9, 1
      // Predicated region
      $region13: #{multi_head_enc_dec_attention.3} parent=11 // pred_check
        %p134 = pneg %p70
      $region14: #{multi_head_enc_dec_attention.3} parent=11 // pred_check_branch
        %136 = sbr.rel (%p134) target = $region16
      $region15: #{multi_head_enc_dec_attention.3} parent=11 // pred_region
        _
      $region16: #{multi_head_enc_dec_attention.3} parent=11 // pred_fallthru
        _
      // Predicated region
      $region17: #{multi_head_enc_dec_attention.3} parent=11 // pred_check
        %p137 = pneg %p91
      $region18: #{multi_head_enc_dec_attention.3} parent=11 // pred_check_branch
        %139 = sbr.rel (%p137) target = $region20
      $region19: #{multi_head_enc_dec_attention.3} parent=11 // pred_region
        _
      $region20: #{multi_head_enc_dec_attention.3} parent=11 // pred_fallthru
        _
    $region12: #{multi_head_enc_dec_attention.3} parent=5 // pred_fallthru
      _
    %p140 = scmp.lt.s32.totalorder %s9, 2
    // Predicated region
    $region21: #{multi_head_enc_dec_attention.3} parent=5 // pred_check
      %p141 = pneg %p140
    $region22: #{multi_head_enc_dec_attention.3} parent=5 // pred_check_branch
      %143 = sbr.rel (%p141) target = $region24
    $region23: #{multi_head_enc_dec_attention.3} parent=5 // pred_region
      // Predicated region
      $region25: #{multi_head_enc_dec_attention.3} parent=23 // pred_check
        %p144 = pneg %p43
      $region26: #{multi_head_enc_dec_attention.3} parent=23 // pred_check_branch
        %146 = sbr.rel (%p144) target = $region28
      $region27: #{multi_head_enc_dec_attention.3} parent=23 // pred_region
        %s147 = smul.u32 32, %s17
        %p148 = scmp.lt.s32.totalorder %s16, 1
        %s149 = scalar_select %p148, %s16, 1
        %p150 = scmp.lt.s32.totalorder %s147, 31
        %s151 = scalar_select %p150, %s147, 31
        %s152 = smul.addr %s149, 32
        %s153 = sadd.s32 %s151, %s152
        %s154 = smul.addr %s153, 8
        %s155 = scalar_lea.vmem %s0, %s154
        %s156 = smul.u32 32, %s17
      $region28: #{multi_head_enc_dec_attention.3} parent=23 // pred_fallthru
        _
    $region24: #{multi_head_enc_dec_attention.3} parent=5 // pred_fallthru
      _
    %p157 = scmp.le.s32.totalorder 1, %s9
    %p158 = scmp.lt.s32.totalorder %s9, 3
    %p159 = pnand %p157, %p158
    %p160 = pneg %p159
    // Predicated region
    $region29: #{multi_head_enc_dec_attention.3} parent=5 // pred_check
      _
    $region30: #{multi_head_enc_dec_attention.3} parent=5 // pred_check_branch
      %162 = sbr.rel (%p159) target = $region32
    $region31: #{multi_head_enc_dec_attention.3} parent=5 // pred_region
      %s163 = ssub.s32 %s9, 1
      %s164 = smul.u32 32, %s19
      %p165 = scmp.lt.s32.totalorder %s18, 1
      %s166 = scalar_select %p165, %s18, 1
      %p167 = scmp.lt.s32.totalorder %s164, 31
      %s168 = scalar_select %p167, %s164, 31
      %s169 = smul.addr %s166, 32
      %s170 = sadd.s32 %s168, %s169
      %s171 = smul.addr %s170, 8
      %s172 = scalar_lea.vmem %s0, %s171
      %p173 = pneg %p49
      %p174 = pneg %p46
      %p175 = pneg %p70
      %p176 = pneg %p67
      %p177 = pneg %p91
      %p178 = pneg %p88
      %p179 = pneg %p119
      %p180 = pneg %p116
      %s181 = smul.u32 32, %s19
      %p182 = scmp.lt.s32.totalorder %s18, 1
      %s183 = scalar_select %p182, %s18, 1
      %p184 = scmp.lt.s32.totalorder %s181, 31
      %s185 = scalar_select %p184, %s181, 31
      %s186 = smul.addr %s183, 32
      %s187 = sadd.s32 %s185, %s186
      %s188 = smul.addr %s187, 8
      %s189 = scalar_lea.vmem %s3, %s188
      %s190 = smul.u32 32, %s19
      %p191 = scmp.lt.s32.totalorder %s18, 1
      %s192 = scalar_select %p191, %s18, 1
      %p193 = scmp.lt.s32.totalorder %s190, 31
      %s194 = scalar_select %p193, %s190, 31
      %s195 = smul.addr %s192, 32
      %s196 = sadd.s32 %s194, %s195
      %s197 = smul.addr %s196, 8
      %s198 = scalar_lea.vmem %s0, %s197
      %s199 = smul.u32 32, %s19
      %s200 = smul.u32 32, %s19
      %p201 = scmp.lt.s32.totalorder %s18, 1
      %s202 = scalar_select %p201, %s18, 1
      %p203 = scmp.lt.s32.totalorder %s200, 31
      %s204 = scalar_select %p203, %s200, 31
      %s205 = smul.addr %s202, 32
      %s206 = sadd.s32 %s204, %s205
      %s207 = smul.addr %s206, 8
      %s208 = scalar_lea.vmem %s3, %s207
      %s209 = smul.u32 32, %s19
      %v210 = vld [vmem:[%s198] sm:$0xff]
      %v211 = vld [vmem:[%s198 + $0x8] sm:$0xff]
      %v212 = vld [vmem:[%s198 + $0x10] sm:$0xff]
      %v213 = vld [vmem:[%s198 + $0x18] sm:$0xff]
      %v214 = vld [vmem:[%s198 + $0x20] sm:$0xff]
      %v215 = vld [vmem:[%s198 + $0x28] sm:$0xff]
      %v216 = vld [vmem:[%s198 + $0x30] sm:$0xff]
      %v217 = vld [vmem:[%s198 + $0x38] sm:$0xff]
      %v218 = vld [vmem:[%s198 + $0x40] sm:$0xff]
      %v219 = vld [vmem:[%s198 + $0x48] sm:$0xff]
      %v220 = vld [vmem:[%s198 + $0x50] sm:$0xff]
      %v221 = vld [vmem:[%s198 + $0x58] sm:$0xff]
      %v222 = vld [vmem:[%s198 + $0x60] sm:$0xff]
      %v223 = vld [vmem:[%s198 + $0x68] sm:$0xff]
      %v224 = vld [vmem:[%s198 + $0x70] sm:$0xff]
      %v225 = vld [vmem:[%s198 + $0x78] sm:$0xff]
      %v226 = vld [vmem:[%s198 + $0x80] sm:$0xff]
      %v227 = vld [vmem:[%s198 + $0x88] sm:$0xff]
      %v228 = vld [vmem:[%s198 + $0x90] sm:$0xff]
      %v229 = vld [vmem:[%s198 + $0x98] sm:$0xff]
      %v230 = vld [vmem:[%s198 + $0xa0] sm:$0xff]
      %v231 = vld [vmem:[%s198 + $0xa8] sm:$0xff]
      %v232 = vld [vmem:[%s198 + $0xb0] sm:$0xff]
      %v233 = vld [vmem:[%s198 + $0xb8] sm:$0xff]
      %v234 = vld [vmem:[%s198 + $0xc0] sm:$0xff]
      %v235 = vld [vmem:[%s198 + $0xc8] sm:$0xff]
      %v236 = vld [vmem:[%s198 + $0xd0] sm:$0xff]
      %v237 = vld [vmem:[%s198 + $0xd8] sm:$0xff]
      %v238 = vld [vmem:[%s198 + $0xe0] sm:$0xff]
      %v239 = vld [vmem:[%s198 + $0xe8] sm:$0xff]
      %v240 = vld [vmem:[%s198 + $0xf0] sm:$0xff]
      %v241 = vld [vmem:[%s198 + $0xf8] sm:$0xff]
      %v242 = vld [vmem:[%s1] sm:$0xff]
      %v243 = vld [vmem:[%s1 + $0x8] sm:$0xff]
      %v244 = vld [vmem:[%s1 + $0x10] sm:$0xff]
      %v245 = vld [vmem:[%s1 + $0x18] sm:$0xff]
      %v246 = vld [vmem:[%s1 + $0x20] sm:$0xff]
      %v247 = vld [vmem:[%s1 + $0x28] sm:$0xff]
      %v248 = vld [vmem:[%s1 + $0x30] sm:$0xff]
      %v249 = vld [vmem:[%s1 + $0x38] sm:$0xff]
      %v250 = vld [vmem:[%s2] sm:$0x1]
      %v252 = vlaneseq
      %v253 = vshrl.u32 %v252, 7
      %v254 = vsub.s32 0, %v253
      %v255 = vrot.slane %v250, %v254
      %vm257 = vcmask 523264
      %v259 = vsel %vm257, %v210, 0
      %v262 = vsel %vm257, %v211, 0
      %v265 = vsel %vm257, %v212, 0
      %v268 = vsel %vm257, %v213, 0
      %v271 = vsel %vm257, %v214, 0
      %v274 = vsel %vm257, %v215, 0
      %v277 = vsel %vm257, %v216, 0
      %v280 = vsel %vm257, %v217, 0
      %v283 = vsel %vm257, %v218, 0
      %v286 = vsel %vm257, %v219, 0
      %v289 = vsel %vm257, %v220, 0
      %v292 = vsel %vm257, %v221, 0
      %v295 = vsel %vm257, %v222, 0
      %v298 = vsel %vm257, %v223, 0
      %v301 = vsel %vm257, %v224, 0
      %v304 = vsel %vm257, %v225, 0
      %v307 = vsel %vm257, %v226, 0
      %v310 = vsel %vm257, %v227, 0
      %v313 = vsel %vm257, %v228, 0
      %v316 = vsel %vm257, %v229, 0
      %v319 = vsel %vm257, %v230, 0
      %v322 = vsel %vm257, %v231, 0
      %v325 = vsel %vm257, %v232, 0
      %v328 = vsel %vm257, %v233, 0
      %v331 = vsel %vm257, %v234, 0
      %v334 = vsel %vm257, %v235, 0
      %v337 = vsel %vm257, %v236, 0
      %v340 = vsel %vm257, %v237, 0
      %v343 = vsel %vm257, %v238, 0
      %v346 = vsel %vm257, %v239, 0
      %v349 = vsel %vm257, %v240, 0
      %v352 = vsel %vm257, %v241, 0
      %354 = vmatprep.subr.mxu0 0.0
      %355 = vmatpush1.msra.mxu0 %v242
      %356 = vmatprep.subr.mxu0 0.0
      %357 = vmatpush1.msra.mxu0 %v243
      %358 = vmatprep.subr.mxu0 0.0
      %359 = vmatpush1.msra.mxu0 %v244
      %360 = vmatprep.subr.mxu0 0.0
      %361 = vmatpush1.msra.mxu0 %v245
      %362 = vmatprep.subr.mxu0 0.0
      %363 = vmatpush1.msra.mxu0 %v246
      %364 = vmatprep.subr.mxu0 0.0
      %365 = vmatpush1.msra.mxu0 %v247
      %366 = vmatprep.subr.mxu0 0.0
      %367 = vmatpush1.msra.mxu0 %v248
      %368 = vmatprep.subr.mxu0 0.0
      %369 = vmatpush1.msra.mxu0 %v249
      %370 = vmatprep.subr.mxu0 0.0
      %371 = vmatpush1.msra.mxu0 0.0
      %372 = vmatprep.subr.mxu0 0.0
      %373 = vmatpush1.msra.mxu0 0.0
      %374 = vmatprep.subr.mxu0 0.0
      %375 = vmatpush1.msra.mxu0 0.0
      %376 = vmatprep.subr.mxu0 0.0
      %377 = vmatpush1.msra.mxu0 0.0
      %378 = vmatprep.subr.mxu0 0.0
      %379 = vmatpush1.msra.mxu0 0.0
      %380 = vmatprep.subr.mxu0 0.0
      %381 = vmatpush1.msra.mxu0 0.0
      %382 = vmatprep.subr.mxu0 0.0
      %383 = vmatpush1.msra.mxu0 0.0
      %384 = vmatprep.subr.mxu0 0.0
      %385 = vmatpush1.msra.mxu0 0.0
      %386 = vmatprep.subr.mxu0 0.0
      %387 = vmatpush1.msra.mxu0 0.0
      %388 = vmatprep.subr.mxu0 0.0
      %389 = vmatpush1.msra.mxu0 0.0
      %390 = vmatprep.subr.mxu0 0.0
      %391 = vmatpush1.msra.mxu0 0.0
      %392 = vmatprep.subr.mxu0 0.0
      %393 = vmatpush1.msra.mxu0 0.0
      %394 = vmatprep.subr.mxu0 0.0
      %395 = vmatpush1.msra.mxu0 0.0
      %396 = vmatprep.subr.mxu0 0.0
      %397 = vmatpush1.msra.mxu0 0.0
      %398 = vmatprep.subr.mxu0 0.0
      %399 = vmatpush1.msra.mxu0 0.0
      %400 = vmatprep.subr.mxu0 0.0
      %401 = vmatpush1.msra.mxu0 0.0
      %402 = vmatprep.subr.mxu0 0.0
      %403 = vmatpush1.msra.mxu0 0.0
      %404 = vmatprep.subr.mxu0 0.0
      %405 = vmatpush1.msra.mxu0 0.0
      %406 = vmatprep.subr.mxu0 0.0
      %407 = vmatpush1.msra.mxu0 0.0
      %408 = vmatprep.subr.mxu0 0.0
      %409 = vmatpush1.msra.mxu0 0.0
      %410 = vmatprep.subr.mxu0 0.0
      %411 = vmatpush1.msra.mxu0 0.0
      %412 = vmatprep.subr.mxu0 0.0
      %413 = vmatpush1.msra.mxu0 0.0
      %414 = vmatprep.subr.mxu0 0.0
      %415 = vmatpush1.msra.mxu0 0.0
      %416 = vmatprep.subr.mxu0 0.0
      %417 = vmatpush1.msra.mxu0 0.0
      %418 = vmatprep.mubr.f32.mxu0 0.0
      %419 = vmatmul.mubr.f32.gmra.mrb[0].mxu0 %v259
      %v420 = vpop.f32.mrb[0].mxu0
      %v421 = vadd.f32 %v255, %v420
      %v422 = vpop.f32.mrb[0].mxu0
      %423 = vmatprep.mubr.f32.mxu0 0.0
      %424 = vmatmul.mubr.f32.gmra.mrb[0].mxu0 %v262
      %v425 = vpop.f32.mrb[0].mxu0
      %v426 = vadd.f32 %v255, %v425
      %v427 = vpop.f32.mrb[0].mxu0
      %428 = vmatprep.mubr.f32.mxu0 0.0
      %429 = vmatmul.mubr.f32.gmra.mrb[0].mxu0 %v265
      %v430 = vpop.f32.mrb[0].mxu0
      %v431 = vadd.f32 %v255, %v430
      %v432 = vpop.f32.mrb[0].mxu0
      %433 = vmatprep.mubr.f32.mxu0 0.0
      %434 = vmatmul.mubr.f32.gmra.mrb[0].mxu0 %v268
      %v435 = vpop.f32.mrb[0].mxu0
      %v436 = vadd.f32 %v255, %v435
      %v437 = vpop.f32.mrb[0].mxu0
      %438 = vmatprep.mubr.f32.mxu0 0.0
      %439 = vmatmul.mubr.f32.gmra.mrb[0].mxu0 %v271
      %v440 = vpop.f32.mrb[0].mxu0
      %v441 = vadd.f32 %v255, %v440
      %v442 = vpop.f32.mrb[0].mxu0
      %443 = vmatprep.mubr.f32.mxu0 0.0
      %444 = vmatmul.mubr.f32.gmra.mrb[0].mxu0 %v274
      %v445 = vpop.f32.mrb[0].mxu0
      %v446 = vadd.f32 %v255, %v445
      %v447 = vpop.f32.mrb[0].mxu0
      %448 = vmatprep.mubr.f32.mxu0 0.0
      %449 = vmatmul.mubr.f32.gmra.mrb[0].mxu0 %v277
      %v450 = vpop.f32.mrb[0].mxu0
      %v451 = vadd.f32 %v255, %v450
      %v452 = vpop.f32.mrb[0].mxu0
      %453 = vmatprep.mubr.f32.mxu0 0.0
      %454 = vmatmul.mubr.f32.gmra.mrb[0].mxu0 %v280
      %v455 = vpop.f32.mrb[0].mxu0
      %v456 = vadd.f32 %v255, %v455
      %v457 = vpop.f32.mrb[0].mxu0
      %458 = vmatprep.mubr.f32.mxu0 0.0
      %459 = vmatmul.mubr.f32.gmra.mrb[0].mxu0 %v283
      %v460 = vpop.f32.mrb[0].mxu0
      %v461 = vadd.f32 %v255, %v460
      %v462 = vpop.f32.mrb[0].mxu0
      %463 = vmatprep.mubr.f32.mxu0 0.0
      %464 = vmatmul.mubr.f32.gmra.mrb[0].mxu0 %v286
      %v465 = vpop.f32.mrb[0].mxu0
      %v466 = vadd.f32 %v255, %v465
      %v467 = vpop.f32.mrb[0].mxu0
      %468 = vmatprep.mubr.f32.mxu0 0.0
      %469 = vmatmul.mubr.f32.gmra.mrb[0].mxu0 %v289
      %v470 = vpop.f32.mrb[0].mxu0
      %v471 = vadd.f32 %v255, %v470
      %v472 = vpop.f32.mrb[0].mxu0
      %473 = vmatprep.mubr.f32.mxu0 0.0
      %474 = vmatmul.mubr.f32.gmra.mrb[0].mxu0 %v292
      %v475 = vpop.f32.mrb[0].mxu0
      %v476 = vadd.f32 %v255, %v475
      %v477 = vpop.f32.mrb[0].mxu0
      %478 = vmatprep.mubr.f32.mxu0 0.0
      %479 = vmatmul.mubr.f32.gmra.mrb[0].mxu0 %v295
      %v480 = vpop.f32.mrb[0].mxu0
      %v481 = vadd.f32 %v255, %v480
      %v482 = vpop.f32.mrb[0].mxu0
      %483 = vmatprep.mubr.f32.mxu0 0.0
      %484 = vmatmul.mubr.f32.gmra.mrb[0].mxu0 %v298
      %v485 = vpop.f32.mrb[0].mxu0
      %v486 = vadd.f32 %v255, %v485
      %v487 = vpop.f32.mrb[0].mxu0
      %488 = vmatprep.mubr.f32.mxu0 0.0
      %489 = vmatmul.mubr.f32.gmra.mrb[0].mxu0 %v301
      %v490 = vpop.f32.mrb[0].mxu0
      %v491 = vadd.f32 %v255, %v490
      %v492 = vpop.f32.mrb[0].mxu0
      %493 = vmatprep.mubr.f32.mxu0 0.0
      %494 = vmatmul.mubr.f32.gmra.mrb[0].mxu0 %v304
      %v495 = vpop.f32.mrb[0].mxu0
      %v496 = vadd.f32 %v255, %v495
      %v497 = vpop.f32.mrb[0].mxu0
      %498 = vmatprep.mubr.f32.mxu0 0.0
      %499 = vmatmul.mubr.f32.gmra.mrb[0].mxu0 %v307
      %v500 = vpop.f32.mrb[0].mxu0
      %v501 = vadd.f32 %v255, %v500
      %v502 = vpop.f32.mrb[0].mxu0
      %503 = vmatprep.mubr.f32.mxu0 0.0
      %504 = vmatmul.mubr.f32.gmra.mrb[0].mxu0 %v310
      %v505 = vpop.f32.mrb[0].mxu0
      %v506 = vadd.f32 %v255, %v505
      %v507 = vpop.f32.mrb[0].mxu0
      %508 = vmatprep.mubr.f32.mxu0 0.0
      %509 = vmatmul.mubr.f32.gmra.mrb[0].mxu0 %v313
      %v510 = vpop.f32.mrb[0].mxu0
      %v511 = vadd.f32 %v255, %v510
      %v512 = vpop.f32.mrb[0].mxu0
      %513 = vmatprep.mubr.f32.mxu0 0.0
      %514 = vmatmul.mubr.f32.gmra.mrb[0].mxu0 %v316
      %v515 = vpop.f32.mrb[0].mxu0
      %v516 = vadd.f32 %v255, %v515
      %v517 = vpop.f32.mrb[0].mxu0
      %518 = vmatprep.mubr.f32.mxu0 0.0
      %519 = vmatmul.mubr.f32.gmra.mrb[0].mxu0 %v319
      %v520 = vpop.f32.mrb[0].mxu0
      %v521 = vadd.f32 %v255, %v520
      %v522 = vpop.f32.mrb[0].mxu0
      %523 = vmatprep.mubr.f32.mxu0 0.0
      %524 = vmatmul.mubr.f32.gmra.mrb[0].mxu0 %v322
      %v525 = vpop.f32.mrb[0].mxu0
      %v526 = vadd.f32 %v255, %v525
      %v527 = vpop.f32.mrb[0].mxu0
      %528 = vmatprep.mubr.f32.mxu0 0.0
      %529 = vmatmul.mubr.f32.gmra.mrb[0].mxu0 %v325
      %v530 = vpop.f32.mrb[0].mxu0
      %v531 = vadd.f32 %v255, %v530
      %v532 = vpop.f32.mrb[0].mxu0
      %533 = vmatprep.mubr.f32.mxu0 0.0
      %534 = vmatmul.mubr.f32.gmra.mrb[0].mxu0 %v328
      %v535 = vpop.f32.mrb[0].mxu0
      %v536 = vadd.f32 %v255, %v535
      %v537 = vpop.f32.mrb[0].mxu0
      %538 = vmatprep.mubr.f32.mxu0 0.0
      %539 = vmatmul.mubr.f32.gmra.mrb[0].mxu0 %v331
      %v540 = vpop.f32.mrb[0].mxu0
      %v541 = vadd.f32 %v255, %v540
      %v542 = vpop.f32.mrb[0].mxu0
      %543 = vmatprep.mubr.f32.mxu0 0.0
      %544 = vmatmul.mubr.f32.gmra.mrb[0].mxu0 %v334
      %v545 = vpop.f32.mrb[0].mxu0
      %v546 = vadd.f32 %v255, %v545
      %v547 = vpop.f32.mrb[0].mxu0
      %548 = vmatprep.mubr.f32.mxu0 0.0
      %549 = vmatmul.mubr.f32.gmra.mrb[0].mxu0 %v337
      %v550 = vpop.f32.mrb[0].mxu0
      %v551 = vadd.f32 %v255, %v550
      %v552 = vpop.f32.mrb[0].mxu0
      %553 = vmatprep.mubr.f32.mxu0 0.0
      %554 = vmatmul.mubr.f32.gmra.mrb[0].mxu0 %v340
      %v555 = vpop.f32.mrb[0].mxu0
      %v556 = vadd.f32 %v255, %v555
      %v557 = vpop.f32.mrb[0].mxu0
      %558 = vmatprep.mubr.f32.mxu0 0.0
      %559 = vmatmul.mubr.f32.gmra.mrb[0].mxu0 %v343
      %v560 = vpop.f32.mrb[0].mxu0
      %v561 = vadd.f32 %v255, %v560
      %v562 = vpop.f32.mrb[0].mxu0
      %563 = vmatprep.mubr.f32.mxu0 0.0
      %564 = vmatmul.mubr.f32.gmra.mrb[0].mxu0 %v346
      %v565 = vpop.f32.mrb[0].mxu0
      %v566 = vadd.f32 %v255, %v565
      %v567 = vpop.f32.mrb[0].mxu0
      %568 = vmatprep.mubr.f32.mxu0 0.0
      %569 = vmatmul.mubr.f32.gmra.mrb[0].mxu0 %v349
      %v570 = vpop.f32.mrb[0].mxu0
      %v571 = vadd.f32 %v255, %v570
      %v572 = vpop.f32.mrb[0].mxu0
      %573 = vmatprep.mubr.f32.mxu0 0.0
      %574 = vmatmul.mubr.f32.gmra.mrb[0].mxu0 %v352
      %v575 = vpop.f32.mrb[0].mxu0
      %v576 = vadd.f32 %v255, %v575
      %v577 = vpop.f32.mrb[0].mxu0
      %578 = vdwg.mxu0
      %579 = vst [vmem:[%s208] sm:$0xff] %v421
      %580 = vst [vmem:[%s208 + $0x8] sm:$0xff] %v426
      %581 = vst [vmem:[%s208 + $0x10] sm:$0xff] %v431
      %582 = vst [vmem:[%s208 + $0x18] sm:$0xff] %v436
      %583 = vst [vmem:[%s208 + $0x20] sm:$0xff] %v441
      %584 = vst [vmem:[%s208 + $0x28] sm:$0xff] %v446
      %585 = vst [vmem:[%s208 + $0x30] sm:$0xff] %v451
      %586 = vst [vmem:[%s208 + $0x38] sm:$0xff] %v456
      %587 = vst [vmem:[%s208 + $0x40] sm:$0xff] %v461
      %588 = vst [vmem:[%s208 + $0x48] sm:$0xff] %v466
      %589 = vst [vmem:[%s208 + $0x50] sm:$0xff] %v471
      %590 = vst [vmem:[%s208 + $0x58] sm:$0xff] %v476
      %591 = vst [vmem:[%s208 + $0x60] sm:$0xff] %v481
      %592 = vst [vmem:[%s208 + $0x68] sm:$0xff] %v486
      %593 = vst [vmem:[%s208 + $0x70] sm:$0xff] %v491
      %594 = vst [vmem:[%s208 + $0x78] sm:$0xff] %v496
      %595 = vst [vmem:[%s208 + $0x80] sm:$0xff] %v501
      %596 = vst [vmem:[%s208 + $0x88] sm:$0xff] %v506
      %597 = vst [vmem:[%s208 + $0x90] sm:$0xff] %v511
      %598 = vst [vmem:[%s208 + $0x98] sm:$0xff] %v516
      %599 = vst [vmem:[%s208 + $0xa0] sm:$0xff] %v521
      %600 = vst [vmem:[%s208 + $0xa8] sm:$0xff] %v526
      %601 = vst [vmem:[%s208 + $0xb0] sm:$0xff] %v531
      %602 = vst [vmem:[%s208 + $0xb8] sm:$0xff] %v536
      %603 = vst [vmem:[%s208 + $0xc0] sm:$0xff] %v541
      %604 = vst [vmem:[%s208 + $0xc8] sm:$0xff] %v546
      %605 = vst [vmem:[%s208 + $0xd0] sm:$0xff] %v551
      %606 = vst [vmem:[%s208 + $0xd8] sm:$0xff] %v556
      %607 = vst [vmem:[%s208 + $0xe0] sm:$0xff] %v561
      %608 = vst [vmem:[%s208 + $0xe8] sm:$0xff] %v566
      %609 = vst [vmem:[%s208 + $0xf0] sm:$0xff] %v571
      %610 = vst [vmem:[%s208 + $0xf8] sm:$0xff] %v576
      %s611 = smul.u32 32, %s19
      %p612 = scmp.lt.s32.totalorder %s18, 1
      %s613 = scalar_select %p612, %s18, 1
      %p614 = scmp.lt.s32.totalorder %s611, 31
      %s615 = scalar_select %p614, %s611, 31
      %s616 = smul.addr %s613, 32
      %s617 = sadd.s32 %s615, %s616
      %s618 = smul.addr %s617, 8
      %s619 = scalar_lea.vmem %s3, %s618
      // Predicated region
      $region33: #{multi_head_enc_dec_attention.3} parent=31 // pred_check
        %p620 = pneg %p116
      $region34: #{multi_head_enc_dec_attention.3} parent=31 // pred_check_branch
        %622 = sbr.rel (%p620) target = $region36
      $region35: #{multi_head_enc_dec_attention.3} parent=31 // pred_region
        %s623 = smul.u32 32, %s19
      $region36: #{multi_head_enc_dec_attention.3} parent=31 // pred_fallthru
        _
    $region32: #{multi_head_enc_dec_attention.3} parent=5 // pred_fallthru
      _
    %p624 = scmp.le.s32.totalorder 2, %s9
    // Predicated region
    $region37: #{multi_head_enc_dec_attention.3} parent=5 // pred_check
      %p625 = pneg %p624
    $region38: #{multi_head_enc_dec_attention.3} parent=5 // pred_check_branch
      %627 = sbr.rel (%p625) target = $region40
    $region39: #{multi_head_enc_dec_attention.3} parent=5 // pred_region
      %s628 = ssub.s32 %s9, 2
      // Predicated region
      $region41: #{multi_head_enc_dec_attention.3} parent=39 // pred_check
        %p629 = pneg %p122
      $region42: #{multi_head_enc_dec_attention.3} parent=39 // pred_check_branch
        %631 = sbr.rel (%p629) target = $region44
      $region43: #{multi_head_enc_dec_attention.3} parent=39 // pred_region
        %s632 = smul.u32 32, %s21
        %p633 = scmp.lt.s32.totalorder %s20, 1
        %s634 = scalar_select %p633, %s20, 1
        %p635 = scmp.lt.s32.totalorder %s632, 31
        %s636 = scalar_select %p635, %s632, 31
        %s637 = smul.addr %s634, 32
        %s638 = sadd.s32 %s636, %s637
        %s639 = smul.addr %s638, 8
        %s640 = scalar_lea.vmem %s3, %s639
      $region44: #{multi_head_enc_dec_attention.3} parent=39 // pred_fallthru
        _
    $region40: #{multi_head_enc_dec_attention.3} parent=5 // pred_fallthru
      _
  $region6: #{multi_head_enc_dec_attention.3} parent=0 // loop_footer
    %s13 = sadd.s32 1, %s9
  $region7: #{multi_head_enc_dec_attention.3} parent=0 // loop_footer_branch
    %8 = sbr.rel target = $region3
  $region8: #{multi_head_enc_dec_attention.3} parent=0 // loop_exit
    _

// kernel: multi_head_enc_dec_attention.4
$region0: #{multi_head_enc_dec_attention.4}
  #allocation0 [shape = 'u32[]', space=smem, size = 0x4, offset = 0x4, fixed_abs, tag = 'smem constant byte address 0x4 - core index']
  #allocation1 [shape = 'u32[144,128]{1,0:T(1,128)}', space=vmem, size = 0x12000, scoped, tag = 'internal scratch']
  %s0 = inlined_call_operand.vmem [shape: f32[2,256,64], index: 0, kind: input, shape index: {}]
  %s1 = inlined_call_operand.vmem [shape: f32[64,128], index: 1, kind: input, shape index: {}]
  %s2 = inlined_call_operand.vmem [shape: f32[1,128], index: 2, kind: input, shape index: {}]
  %s3 = inlined_call_operand.vmem [shape: f32[64,128], index: 3, kind: input, shape index: {}]
  %s4 = inlined_call_operand.vmem [shape: f32[1,128], index: 4, kind: input, shape index: {}]
  %s5 = inlined_call_operand.vmem [shape: f32[2,256,128], index: 5, kind: output, shape index: {0}]
  %s6 = inlined_call_operand.vmem [shape: f32[2,256,128], index: 6, kind: output, shape index: {1}]
  %7 = xla_tuple %s5, %s6
  %s8 = sld [smem:[#allocation0]]
  $region61: #{multi_head_enc_dec_attention.4} parent=0
    _
  %s10 = ssub.s32 1, %s8
  %s11 = scalar_select 0, %s10, %s8
  loop: start=0, step=1, limit=4
  $region2: #{multi_head_enc_dec_attention.4} parent=0 // loop_pre_header
    _
  $region3: #{multi_head_enc_dec_attention.4} parent=0 // loop_header
    %s13 = sphi 0, %s17
    %p14 = scmp.ge.s32.totalorder %s13, 4
    %s20 = sphi 0, %s32
    %s21 = sphi 0, %s28
    %s22 = sphi 0, %s20
    %s23 = sphi 0, %s21
    %s24 = sphi 0, %s22
    %s25 = sphi 0, %s23
    %s37 = sphi 0, %s39
    %s40 = sphi 0, %s37
    %s41 = sphi 0, %s40
    %s57 = sphi 0, %s41
    %s61 = sphi 0, %s61
    %s63 = sphi 0, %s61
    %s64 = sphi 0, %s63
    %s78 = sphi 0, %s64
    %s82 = sphi 0, %s82
    %s84 = sphi 0, %s82
    %s85 = sphi 0, %s84
    %s99 = sphi 0, %s85
    %s103 = sphi 0, %s103
    %s105 = sphi 0, %s103
    %s106 = sphi 0, %s105
    %s120 = sphi 0, %s106
    %s124 = sphi 0, %s124
    %s126 = sphi 0, %s124
    %s127 = sphi 0, %s126
    %s141 = sphi 0, %s127
    %s149 = sphi 0, %s151
    %s152 = sphi 0, %s149
    %s153 = sphi 0, %s152
    %s169 = sphi 0, %s153
    %s177 = sphi 0, %s179
    %s180 = sphi 0, %s177
    %s181 = sphi 0, %s180
    %s197 = sphi 0, %s181
  $region4: #{multi_head_enc_dec_attention.4} parent=0 // loop_header_branch
    %16 = sbr.rel (%p14) target = $region8
  $region5: #{multi_head_enc_dec_attention.4} parent=0 // loop_body
    %s18 = ssub.s32 %s13, 1
    %s19 = ssub.s32 %s13, 2
    %s26 = sadd.s32 1, %s21
    %p27 = scmp.ge.s32.totalorder %s26, 1
    %s28 = scalar_select %p27, 0, %s26
    %s29 = sadd.s32 1, %s20
    %s30 = scalar_select %p27, %s29, %s20
    %p31 = scmp.ge.s32.totalorder %s30, 2
    %s32 = scalar_select %p31, 0, %s30
    %s33 = ssub.s32 %s20, %s32
    %s34 = ssub.s32 %s21, %s28
    %s35 = sor.u32 %s33, %s34
    %p36 = scmp.eq.s32.totalorder %s35, 0
    %s38 = sadd.s32 %s37, 1
    %s39 = scalar_select %p36, %s37, %s38
    %p42 = pneg %p36
    %p43 = scmp.eq.s32.totalorder %s13, 1
    %p44 = por %p42, %p43
    %p45 = scmp.ne.s32.totalorder %s37, %s40
    %p46 = scmp.eq.s32.totalorder %s13, 0
    %p47 = por %p45, %p46
    %p48 = scmp.ne.s32.totalorder %s37, %s40
    %p49 = scmp.eq.s32.totalorder %s18, 1
    %p50 = por %p48, %p49
    %p51 = scmp.ne.s32.totalorder %s40, %s41
    %p52 = scmp.eq.s32.totalorder %s18, 0
    %p53 = por %p51, %p52
    %p54 = scmp.ne.s32.totalorder %s40, %s41
    %p55 = scmp.eq.s32.totalorder %s19, 1
    %p56 = por %p54, %p55
    %p58 = scmp.ne.s32.totalorder %s41, %s57
    %p59 = scmp.eq.s32.totalorder %s19, 0
    %p60 = por %p58, %p59
    %s62 = sadd.s32 %s61, 1
    %p65 = scmp.eq.s32.totalorder %s13, 1
    %p66 = scmp.ne.s32.totalorder %s61, %s63
    %p67 = scmp.eq.s32.totalorder %s13, 0
    %p68 = por %p66, %p67
    %p69 = scmp.ne.s32.totalorder %s61, %s63
    %p70 = scmp.eq.s32.totalorder %s18, 1
    %p71 = por %p69, %p70
    %p72 = scmp.ne.s32.totalorder %s63, %s64
    %p73 = scmp.eq.s32.totalorder %s18, 0
    %p74 = por %p72, %p73
    %p75 = scmp.ne.s32.totalorder %s63, %s64
    %p76 = scmp.eq.s32.totalorder %s19, 1
    %p77 = por %p75, %p76
    %p79 = scmp.ne.s32.totalorder %s64, %s78
    %p80 = scmp.eq.s32.totalorder %s19, 0
    %p81 = por %p79, %p80
    %s83 = sadd.s32 %s82, 1
    %p86 = scmp.eq.s32.totalorder %s13, 1
    %p87 = scmp.ne.s32.totalorder %s82, %s84
    %p88 = scmp.eq.s32.totalorder %s13, 0
    %p89 = por %p87, %p88
    %p90 = scmp.ne.s32.totalorder %s82, %s84
    %p91 = scmp.eq.s32.totalorder %s18, 1
    %p92 = por %p90, %p91
    %p93 = scmp.ne.s32.totalorder %s84, %s85
    %p94 = scmp.eq.s32.totalorder %s18, 0
    %p95 = por %p93, %p94
    %p96 = scmp.ne.s32.totalorder %s84, %s85
    %p97 = scmp.eq.s32.totalorder %s19, 1
    %p98 = por %p96, %p97
    %p100 = scmp.ne.s32.totalorder %s85, %s99
    %p101 = scmp.eq.s32.totalorder %s19, 0
    %p102 = por %p100, %p101
    %s104 = sadd.s32 %s103, 1
    %p107 = scmp.eq.s32.totalorder %s13, 1
    %p108 = scmp.ne.s32.totalorder %s103, %s105
    %p109 = scmp.eq.s32.totalorder %s13, 0
    %p110 = por %p108, %p109
    %p111 = scmp.ne.s32.totalorder %s103, %s105
    %p112 = scmp.eq.s32.totalorder %s18, 1
    %p113 = por %p111, %p112
    %p114 = scmp.ne.s32.totalorder %s105, %s106
    %p115 = scmp.eq.s32.totalorder %s18, 0
    %p116 = por %p114, %p115
    %p117 = scmp.ne.s32.totalorder %s105, %s106
    %p118 = scmp.eq.s32.totalorder %s19, 1
    %p119 = por %p117, %p118
    %p121 = scmp.ne.s32.totalorder %s106, %s120
    %p122 = scmp.eq.s32.totalorder %s19, 0
    %p123 = por %p121, %p122
    %s125 = sadd.s32 %s124, 1
    %p128 = scmp.eq.s32.totalorder %s13, 1
    %p129 = scmp.ne.s32.totalorder %s124, %s126
    %p130 = scmp.eq.s32.totalorder %s13, 0
    %p131 = por %p129, %p130
    %p132 = scmp.ne.s32.totalorder %s124, %s126
    %p133 = scmp.eq.s32.totalorder %s18, 1
    %p134 = por %p132, %p133
    %p135 = scmp.ne.s32.totalorder %s126, %s127
    %p136 = scmp.eq.s32.totalorder %s18, 0
    %p137 = por %p135, %p136
    %p138 = scmp.ne.s32.totalorder %s126, %s127
    %p139 = scmp.eq.s32.totalorder %s19, 1
    %p140 = por %p138, %p139
    %p142 = scmp.ne.s32.totalorder %s127, %s141
    %p143 = scmp.eq.s32.totalorder %s19, 0
    %p144 = por %p142, %p143
    %s145 = ssub.s32 %s20, %s32
    %s146 = ssub.s32 %s21, %s28
    %s147 = sor.u32 %s145, %s146
    %p148 = scmp.eq.s32.totalorder %s147, 0
    %s150 = sadd.s32 %s149, 1
    %s151 = scalar_select %p148, %s149, %s150
    %p154 = pneg %p148
    %p155 = scmp.eq.s32.totalorder %s13, 1
    %p156 = por %p154, %p155
    %p157 = scmp.ne.s32.totalorder %s149, %s152
    %p158 = scmp.eq.s32.totalorder %s13, 0
    %p159 = por %p157, %p158
    %p160 = scmp.ne.s32.totalorder %s149, %s152
    %p161 = scmp.eq.s32.totalorder %s18, 1
    %p162 = por %p160, %p161
    %p163 = scmp.ne.s32.totalorder %s152, %s153
    %p164 = scmp.eq.s32.totalorder %s18, 0
    %p165 = por %p163, %p164
    %p166 = scmp.ne.s32.totalorder %s152, %s153
    %p167 = scmp.eq.s32.totalorder %s19, 1
    %p168 = por %p166, %p167
    %p170 = scmp.ne.s32.totalorder %s153, %s169
    %p171 = scmp.eq.s32.totalorder %s19, 0
    %p172 = por %p170, %p171
    %s173 = ssub.s32 %s20, %s32
    %s174 = ssub.s32 %s21, %s28
    %s175 = sor.u32 %s173, %s174
    %p176 = scmp.eq.s32.totalorder %s175, 0
    %s178 = sadd.s32 %s177, 1
    %s179 = scalar_select %p176, %s177, %s178
    %p182 = pneg %p176
    %p183 = scmp.eq.s32.totalorder %s13, 1
    %p184 = por %p182, %p183
    %p185 = scmp.ne.s32.totalorder %s177, %s180
    %p186 = scmp.eq.s32.totalorder %s13, 0
    %p187 = por %p185, %p186
    %p188 = scmp.ne.s32.totalorder %s177, %s180
    %p189 = scmp.eq.s32.totalorder %s18, 1
    %p190 = por %p188, %p189
    %p191 = scmp.ne.s32.totalorder %s180, %s181
    %p192 = scmp.eq.s32.totalorder %s18, 0
    %p193 = por %p191, %p192
    %p194 = scmp.ne.s32.totalorder %s180, %s181
    %p195 = scmp.eq.s32.totalorder %s19, 1
    %p196 = por %p194, %p195
    %p198 = scmp.ne.s32.totalorder %s181, %s197
    %p199 = scmp.eq.s32.totalorder %s19, 0
    %p200 = por %p198, %p199
    %p201 = scmp.le.s32.totalorder 1, %s13
    %p202 = scmp.lt.s32.totalorder %s13, 3
    %p203 = pnand %p201, %p202
    %p204 = pneg %p203
    // Predicated region
    $region9: #{multi_head_enc_dec_attention.4} parent=5 // pred_check
      _
    $region10: #{multi_head_enc_dec_attention.4} parent=5 // pred_check_branch
      %206 = sbr.rel (%p203) target = $region12
    $region11: #{multi_head_enc_dec_attention.4} parent=5 // pred_region
      %s207 = ssub.s32 %s13, 1
      // Predicated region
      $region13: #{multi_head_enc_dec_attention.4} parent=11 // pred_check
        %p208 = pneg %p74
      $region14: #{multi_head_enc_dec_attention.4} parent=11 // pred_check_branch
        %210 = sbr.rel (%p208) target = $region16
      $region15: #{multi_head_enc_dec_attention.4} parent=11 // pred_region
        _
      $region16: #{multi_head_enc_dec_attention.4} parent=11 // pred_fallthru
        _
      // Predicated region
      $region17: #{multi_head_enc_dec_attention.4} parent=11 // pred_check
        %p211 = pneg %p95
      $region18: #{multi_head_enc_dec_attention.4} parent=11 // pred_check_branch
        %213 = sbr.rel (%p211) target = $region20
      $region19: #{multi_head_enc_dec_attention.4} parent=11 // pred_region
        _
      $region20: #{multi_head_enc_dec_attention.4} parent=11 // pred_fallthru
        _
      // Predicated region
      $region21: #{multi_head_enc_dec_attention.4} parent=11 // pred_check
        %p214 = pneg %p116
      $region22: #{multi_head_enc_dec_attention.4} parent=11 // pred_check_branch
        %216 = sbr.rel (%p214) target = $region24
      $region23: #{multi_head_enc_dec_attention.4} parent=11 // pred_region
        _
      $region24: #{multi_head_enc_dec_attention.4} parent=11 // pred_fallthru
        _
      // Predicated region
      $region25: #{multi_head_enc_dec_attention.4} parent=11 // pred_check
        %p217 = pneg %p137
      $region26: #{multi_head_enc_dec_attention.4} parent=11 // pred_check_branch
        %219 = sbr.rel (%p217) target = $region28
      $region27: #{multi_head_enc_dec_attention.4} parent=11 // pred_region
        _
      $region28: #{multi_head_enc_dec_attention.4} parent=11 // pred_fallthru
        _
    $region12: #{multi_head_enc_dec_attention.4} parent=5 // pred_fallthru
      _
    %p220 = scmp.lt.s32.totalorder %s13, 2
    // Predicated region
    $region29: #{multi_head_enc_dec_attention.4} parent=5 // pred_check
      %p221 = pneg %p220
    $region30: #{multi_head_enc_dec_attention.4} parent=5 // pred_check_branch
      %223 = sbr.rel (%p221) target = $region32
    $region31: #{multi_head_enc_dec_attention.4} parent=5 // pred_region
      // Predicated region
      $region33: #{multi_head_enc_dec_attention.4} parent=31 // pred_check
        %p224 = pneg %p47
      $region34: #{multi_head_enc_dec_attention.4} parent=31 // pred_check_branch
        %226 = sbr.rel (%p224) target = $region36
      $region35: #{multi_head_enc_dec_attention.4} parent=31 // pred_region
        %s227 = smul.u32 32, %s21
        %p228 = scmp.lt.s32.totalorder %s20, 1
        %s229 = scalar_select %p228, %s20, 1
        %p230 = scmp.lt.s32.totalorder %s227, 31
        %s231 = scalar_select %p230, %s227, 31
        %s232 = smul.addr %s229, 32
        %s233 = sadd.s32 %s231, %s232
        %s234 = smul.addr %s233, 8
        %s235 = scalar_lea.vmem %s0, %s234
        %s236 = smul.u32 32, %s21
      $region36: #{multi_head_enc_dec_attention.4} parent=31 // pred_fallthru
        _
    $region32: #{multi_head_enc_dec_attention.4} parent=5 // pred_fallthru
      _
    %p237 = scmp.le.s32.totalorder 1, %s13
    %p238 = scmp.lt.s32.totalorder %s13, 3
    %p239 = pnand %p237, %p238
    %p240 = pneg %p239
    // Predicated region
    $region37: #{multi_head_enc_dec_attention.4} parent=5 // pred_check
      _
    $region38: #{multi_head_enc_dec_attention.4} parent=5 // pred_check_branch
      %242 = sbr.rel (%p239) target = $region40
    $region39: #{multi_head_enc_dec_attention.4} parent=5 // pred_region
      %s243 = ssub.s32 %s13, 1
      %s244 = smul.u32 32, %s23
      %p245 = scmp.lt.s32.totalorder %s22, 1
      %s246 = scalar_select %p245, %s22, 1
      %p247 = scmp.lt.s32.totalorder %s244, 31
      %s248 = scalar_select %p247, %s244, 31
      %s249 = smul.addr %s246, 32
      %s250 = sadd.s32 %s248, %s249
      %s251 = smul.addr %s250, 8
      %s252 = scalar_lea.vmem %s0, %s251
      %p253 = pneg %p53
      %p254 = pneg %p50
      %p255 = pneg %p74
      %p256 = pneg %p71
      %p257 = pneg %p95
      %p258 = pneg %p92
      %p259 = pneg %p116
      %p260 = pneg %p113
      %p261 = pneg %p137
      %p262 = pneg %p134
      %p263 = pneg %p165
      %p264 = pneg %p162
      %s265 = smul.u32 32, %s23
      %p266 = scmp.lt.s32.totalorder %s22, 1
      %s267 = scalar_select %p266, %s22, 1
      %p268 = scmp.lt.s32.totalorder %s265, 31
      %s269 = scalar_select %p268, %s265, 31
      %s270 = smul.addr %s267, 32
      %s271 = sadd.s32 %s269, %s270
      %s272 = smul.addr %s271, 8
      %s273 = scalar_lea.vmem %s5, %s272
      %p274 = pneg %p193
      %p275 = pneg %p190
      %s276 = smul.u32 32, %s23
      %p277 = scmp.lt.s32.totalorder %s22, 1
      %s278 = scalar_select %p277, %s22, 1
      %p279 = scmp.lt.s32.totalorder %s276, 31
      %s280 = scalar_select %p279, %s276, 31
      %s281 = smul.addr %s278, 32
      %s282 = sadd.s32 %s280, %s281
      %s283 = smul.addr %s282, 8
      %s284 = scalar_lea.vmem %s6, %s283
      %s285 = smul.u32 32, %s23
      %p286 = scmp.lt.s32.totalorder %s22, 1
      %s287 = scalar_select %p286, %s22, 1
      %p288 = scmp.lt.s32.totalorder %s285, 31
      %s289 = scalar_select %p288, %s285, 31
      %s290 = smul.addr %s287, 32
      %s291 = sadd.s32 %s289, %s290
      %s292 = smul.addr %s291, 8
      %s293 = scalar_lea.vmem %s0, %s292
      %s294 = smul.u32 32, %s23
      %s295 = smul.u32 32, %s23
      %p296 = scmp.lt.s32.totalorder %s22, 1
      %s297 = scalar_select %p296, %s22, 1
      %p298 = scmp.lt.s32.totalorder %s295, 31
      %s299 = scalar_select %p298, %s295, 31
      %s300 = smul.addr %s297, 32
      %s301 = sadd.s32 %s299, %s300
      %s302 = smul.addr %s301, 8
      %s303 = scalar_lea.vmem %s5, %s302
      %s304 = smul.u32 32, %s23
      %s305 = smul.u32 32, %s23
      %p306 = scmp.lt.s32.totalorder %s22, 1
      %s307 = scalar_select %p306, %s22, 1
      %p308 = scmp.lt.s32.totalorder %s305, 31
      %s309 = scalar_select %p308, %s305, 31
      %s310 = smul.addr %s307, 32
      %s311 = sadd.s32 %s309, %s310
      %s312 = smul.addr %s311, 8
      %s313 = scalar_lea.vmem %s6, %s312
      %s314 = smul.u32 32, %s23
      %v315 = vld [vmem:[%s293] sm:$0xff]
      %v316 = vld [vmem:[%s293 + $0x8] sm:$0xff]
      %v317 = vld [vmem:[%s293 + $0x10] sm:$0xff]
      %v318 = vld [vmem:[%s293 + $0x18] sm:$0xff]
      %v319 = vld [vmem:[%s293 + $0x20] sm:$0xff]
      %v320 = vld [vmem:[%s293 + $0x28] sm:$0xff]
      %v321 = vld [vmem:[%s293 + $0x30] sm:$0xff]
      %v322 = vld [vmem:[%s293 + $0x38] sm:$0xff]
      %v323 = vld [vmem:[%s293 + $0x40] sm:$0xff]
      %v324 = vld [vmem:[%s293 + $0x48] sm:$0xff]
      %v325 = vld [vmem:[%s293 + $0x50] sm:$0xff]
      %v326 = vld [vmem:[%s293 + $0x58] sm:$0xff]
      %v327 = vld [vmem:[%s293 + $0x60] sm:$0xff]
      %v328 = vld [vmem:[%s293 + $0x68] sm:$0xff]
      %v329 = vld [vmem:[%s293 + $0x70] sm:$0xff]
      %v330 = vld [vmem:[%s293 + $0x78] sm:$0xff]
      %v331 = vld [vmem:[%s293 + $0x80] sm:$0xff]
      %v332 = vld [vmem:[%s293 + $0x88] sm:$0xff]
      %v333 = vld [vmem:[%s293 + $0x90] sm:$0xff]
      %v334 = vld [vmem:[%s293 + $0x98] sm:$0xff]
      %v335 = vld [vmem:[%s293 + $0xa0] sm:$0xff]
      %v336 = vld [vmem:[%s293 + $0xa8] sm:$0xff]
      %v337 = vld [vmem:[%s293 + $0xb0] sm:$0xff]
      %v338 = vld [vmem:[%s293 + $0xb8] sm:$0xff]
      %v339 = vld [vmem:[%s293 + $0xc0] sm:$0xff]
      %v340 = vld [vmem:[%s293 + $0xc8] sm:$0xff]
      %v341 = vld [vmem:[%s293 + $0xd0] sm:$0xff]
      %v342 = vld [vmem:[%s293 + $0xd8] sm:$0xff]
      %v343 = vld [vmem:[%s293 + $0xe0] sm:$0xff]
      %v344 = vld [vmem:[%s293 + $0xe8] sm:$0xff]
      %v345 = vld [vmem:[%s293 + $0xf0] sm:$0xff]
      %v346 = vld [vmem:[%s293 + $0xf8] sm:$0xff]
      %v347 = vld [vmem:[%s1] sm:$0xff]
      %v348 = vld [vmem:[%s1 + $0x8] sm:$0xff]
      %v349 = vld [vmem:[%s1 + $0x10] sm:$0xff]
      %v350 = vld [vmem:[%s1 + $0x18] sm:$0xff]
      %v351 = vld [vmem:[%s1 + $0x20] sm:$0xff]
      %v352 = vld [vmem:[%s1 + $0x28] sm:$0xff]
      %v353 = vld [vmem:[%s1 + $0x30] sm:$0xff]
      %v354 = vld [vmem:[%s1 + $0x38] sm:$0xff]
      %v355 = vld [vmem:[%s2] sm:$0x1]
      %v357 = vlaneseq
      %v358 = vshrl.u32 %v357, 7
      %v359 = vsub.s32 0, %v358
      %v360 = vrot.slane %v355, %v359
      %vm362 = vcmask 523264
      %v364 = vsel %vm362, %v315, 0
      %v367 = vsel %vm362, %v316, 0
      %v370 = vsel %vm362, %v317, 0
      %v373 = vsel %vm362, %v318, 0
      %v376 = vsel %vm362, %v319, 0
      %v379 = vsel %vm362, %v320, 0
      %v382 = vsel %vm362, %v321, 0
      %v385 = vsel %vm362, %v322, 0
      %v388 = vsel %vm362, %v323, 0
      %v391 = vsel %vm362, %v324, 0
      %v394 = vsel %vm362, %v325, 0
      %v397 = vsel %vm362, %v326, 0
      %v400 = vsel %vm362, %v327, 0
      %v403 = vsel %vm362, %v328, 0
      %v406 = vsel %vm362, %v329, 0
      %v409 = vsel %vm362, %v330, 0
      %v412 = vsel %vm362, %v331, 0
      %v415 = vsel %vm362, %v332, 0
      %v418 = vsel %vm362, %v333, 0
      %v421 = vsel %vm362, %v334, 0
      %v424 = vsel %vm362, %v335, 0
      %v427 = vsel %vm362, %v336, 0
      %v430 = vsel %vm362, %v337, 0
      %v433 = vsel %vm362, %v338, 0
      %v436 = vsel %vm362, %v339, 0
      %v439 = vsel %vm362, %v340, 0
      %v442 = vsel %vm362, %v341, 0
      %v445 = vsel %vm362, %v342, 0
      %v448 = vsel %vm362, %v343, 0
      %v451 = vsel %vm362, %v344, 0
      %v454 = vsel %vm362, %v345, 0
      %v457 = vsel %vm362, %v346, 0
      %459 = vmatprep.subr.mxu0 0.0
      %460 = vmatpush1.msra.mxu0 %v347
      %461 = vmatprep.subr.mxu0 0.0
      %462 = vmatpush1.msra.mxu0 %v348
      %463 = vmatprep.subr.mxu0 0.0
      %464 = vmatpush1.msra.mxu0 %v349
      %465 = vmatprep.subr.mxu0 0.0
      %466 = vmatpush1.msra.mxu0 %v350
      %467 = vmatprep.subr.mxu0 0.0
      %468 = vmatpush1.msra.mxu0 %v351
      %469 = vmatprep.subr.mxu0 0.0
      %470 = vmatpush1.msra.mxu0 %v352
      %471 = vmatprep.subr.mxu0 0.0
      %472 = vmatpush1.msra.mxu0 %v353
      %473 = vmatprep.subr.mxu0 0.0
      %474 = vmatpush1.msra.mxu0 %v354
      %475 = vmatprep.subr.mxu0 0.0
      %476 = vmatpush1.msra.mxu0 0.0
      %477 = vmatprep.subr.mxu0 0.0
      %478 = vmatpush1.msra.mxu0 0.0
      %479 = vmatprep.subr.mxu0 0.0
      %480 = vmatpush1.msra.mxu0 0.0
      %481 = vmatprep.subr.mxu0 0.0
      %482 = vmatpush1.msra.mxu0 0.0
      %483 = vmatprep.subr.mxu0 0.0
      %484 = vmatpush1.msra.mxu0 0.0
      %485 = vmatprep.subr.mxu0 0.0
      %486 = vmatpush1.msra.mxu0 0.0
      %487 = vmatprep.subr.mxu0 0.0
      %488 = vmatpush1.msra.mxu0 0.0
      %489 = vmatprep.subr.mxu0 0.0
      %490 = vmatpush1.msra.mxu0 0.0
      %491 = vmatprep.subr.mxu0 0.0
      %492 = vmatpush1.msra.mxu0 0.0
      %493 = vmatprep.subr.mxu0 0.0
      %494 = vmatpush1.msra.mxu0 0.0
      %495 = vmatprep.subr.mxu0 0.0
      %496 = vmatpush1.msra.mxu0 0.0
      %497 = vmatprep.subr.mxu0 0.0
      %498 = vmatpush1.msra.mxu0 0.0
      %499 = vmatprep.subr.mxu0 0.0
      %500 = vmatpush1.msra.mxu0 0.0
      %501 = vmatprep.subr.mxu0 0.0
      %502 = vmatpush1.msra.mxu0 0.0
      %503 = vmatprep.subr.mxu0 0.0
      %504 = vmatpush1.msra.mxu0 0.0
      %505 = vmatprep.subr.mxu0 0.0
      %506 = vmatpush1.msra.mxu0 0.0
      %507 = vmatprep.subr.mxu0 0.0
      %508 = vmatpush1.msra.mxu0 0.0
      %509 = vmatprep.subr.mxu0 0.0
      %510 = vmatpush1.msra.mxu0 0.0
      %511 = vmatprep.subr.mxu0 0.0
      %512 = vmatpush1.msra.mxu0 0.0
      %513 = vmatprep.subr.mxu0 0.0
      %514 = vmatpush1.msra.mxu0 0.0
      %515 = vmatprep.subr.mxu0 0.0
      %516 = vmatpush1.msra.mxu0 0.0
      %517 = vmatprep.subr.mxu0 0.0
      %518 = vmatpush1.msra.mxu0 0.0
      %519 = vmatprep.subr.mxu0 0.0
      %520 = vmatpush1.msra.mxu0 0.0
      %521 = vmatprep.subr.mxu0 0.0
      %522 = vmatpush1.msra.mxu0 0.0
      %523 = vmatprep.mubr.f32.mxu0 0.0
      %524 = vmatmul.mubr.f32.gmra.mrb[0].mxu0 %v364
      %v525 = vpop.f32.mrb[0].mxu0
      %v526 = vadd.f32 %v360, %v525
      %v527 = vpop.f32.mrb[0].mxu0
      %528 = vmatprep.mubr.f32.mxu0 0.0
      %529 = vmatmul.mubr.f32.gmra.mrb[0].mxu0 %v367
      %v530 = vpop.f32.mrb[0].mxu0
      %v531 = vadd.f32 %v360, %v530
      %v532 = vpop.f32.mrb[0].mxu0
      %533 = vmatprep.mubr.f32.mxu0 0.0
      %534 = vmatmul.mubr.f32.gmra.mrb[0].mxu0 %v370
      %v535 = vpop.f32.mrb[0].mxu0
      %v536 = vadd.f32 %v360, %v535
      %v537 = vpop.f32.mrb[0].mxu0
      %538 = vmatprep.mubr.f32.mxu0 0.0
      %539 = vmatmul.mubr.f32.gmra.mrb[0].mxu0 %v373
      %v540 = vpop.f32.mrb[0].mxu0
      %v541 = vadd.f32 %v360, %v540
      %v542 = vpop.f32.mrb[0].mxu0
      %543 = vmatprep.mubr.f32.mxu0 0.0
      %544 = vmatmul.mubr.f32.gmra.mrb[0].mxu0 %v376
      %v545 = vpop.f32.mrb[0].mxu0
      %v546 = vadd.f32 %v360, %v545
      %v547 = vpop.f32.mrb[0].mxu0
      %548 = vmatprep.mubr.f32.mxu0 0.0
      %549 = vmatmul.mubr.f32.gmra.mrb[0].mxu0 %v379
      %v550 = vpop.f32.mrb[0].mxu0
      %v551 = vadd.f32 %v360, %v550
      %v552 = vpop.f32.mrb[0].mxu0
      %553 = vmatprep.mubr.f32.mxu0 0.0
      %554 = vmatmul.mubr.f32.gmra.mrb[0].mxu0 %v382
      %v555 = vpop.f32.mrb[0].mxu0
      %v556 = vadd.f32 %v360, %v555
      %v557 = vpop.f32.mrb[0].mxu0
      %558 = vmatprep.mubr.f32.mxu0 0.0
      %559 = vmatmul.mubr.f32.gmra.mrb[0].mxu0 %v385
      %v560 = vpop.f32.mrb[0].mxu0
      %v561 = vadd.f32 %v360, %v560
      %v562 = vpop.f32.mrb[0].mxu0
      %563 = vmatprep.mubr.f32.mxu0 0.0
      %564 = vmatmul.mubr.f32.gmra.mrb[0].mxu0 %v388
      %v565 = vpop.f32.mrb[0].mxu0
      %v566 = vadd.f32 %v360, %v565
      %v567 = vpop.f32.mrb[0].mxu0
      %568 = vmatprep.mubr.f32.mxu0 0.0
      %569 = vmatmul.mubr.f32.gmra.mrb[0].mxu0 %v391
      %v570 = vpop.f32.mrb[0].mxu0
      %v571 = vadd.f32 %v360, %v570
      %v572 = vpop.f32.mrb[0].mxu0
      %573 = vmatprep.mubr.f32.mxu0 0.0
      %574 = vmatmul.mubr.f32.gmra.mrb[0].mxu0 %v394
      %v575 = vpop.f32.mrb[0].mxu0
      %v576 = vadd.f32 %v360, %v575
      %v577 = vpop.f32.mrb[0].mxu0
      %578 = vmatprep.mubr.f32.mxu0 0.0
      %579 = vmatmul.mubr.f32.gmra.mrb[0].mxu0 %v397
      %v580 = vpop.f32.mrb[0].mxu0
      %v581 = vadd.f32 %v360, %v580
      %v582 = vpop.f32.mrb[0].mxu0
      %583 = vmatprep.mubr.f32.mxu0 0.0
      %584 = vmatmul.mubr.f32.gmra.mrb[0].mxu0 %v400
      %v585 = vpop.f32.mrb[0].mxu0
      %v586 = vadd.f32 %v360, %v585
      %v587 = vpop.f32.mrb[0].mxu0
      %588 = vmatprep.mubr.f32.mxu0 0.0
      %589 = vmatmul.mubr.f32.gmra.mrb[0].mxu0 %v403
      %v590 = vpop.f32.mrb[0].mxu0
      %v591 = vadd.f32 %v360, %v590
      %v592 = vpop.f32.mrb[0].mxu0
      %593 = vmatprep.mubr.f32.mxu0 0.0
      %594 = vmatmul.mubr.f32.gmra.mrb[0].mxu0 %v406
      %v595 = vpop.f32.mrb[0].mxu0
      %v596 = vadd.f32 %v360, %v595
      %v597 = vpop.f32.mrb[0].mxu0
      %598 = vmatprep.mubr.f32.mxu0 0.0
      %599 = vmatmul.mubr.f32.gmra.mrb[0].mxu0 %v409
      %v600 = vpop.f32.mrb[0].mxu0
      %v601 = vadd.f32 %v360, %v600
      %v602 = vpop.f32.mrb[0].mxu0
      %603 = vmatprep.mubr.f32.mxu0 0.0
      %604 = vmatmul.mubr.f32.gmra.mrb[0].mxu0 %v412
      %v605 = vpop.f32.mrb[0].mxu0
      %v606 = vadd.f32 %v360, %v605
      %v607 = vpop.f32.mrb[0].mxu0
      %608 = vmatprep.mubr.f32.mxu0 0.0
      %609 = vmatmul.mubr.f32.gmra.mrb[0].mxu0 %v415
      %v610 = vpop.f32.mrb[0].mxu0
      %v611 = vadd.f32 %v360, %v610
      %v612 = vpop.f32.mrb[0].mxu0
      %613 = vmatprep.mubr.f32.mxu0 0.0
      %614 = vmatmul.mubr.f32.gmra.mrb[0].mxu0 %v418
      %v615 = vpop.f32.mrb[0].mxu0
      %v616 = vadd.f32 %v360, %v615
      %v617 = vpop.f32.mrb[0].mxu0
      %618 = vmatprep.mubr.f32.mxu0 0.0
      %619 = vmatmul.mubr.f32.gmra.mrb[0].mxu0 %v421
      %v620 = vpop.f32.mrb[0].mxu0
      %v621 = vadd.f32 %v360, %v620
      %v622 = vpop.f32.mrb[0].mxu0
      %623 = vmatprep.mubr.f32.mxu0 0.0
      %624 = vmatmul.mubr.f32.gmra.mrb[0].mxu0 %v424
      %v625 = vpop.f32.mrb[0].mxu0
      %v626 = vadd.f32 %v360, %v625
      %v627 = vpop.f32.mrb[0].mxu0
      %628 = vmatprep.mubr.f32.mxu0 0.0
      %629 = vmatmul.mubr.f32.gmra.mrb[0].mxu0 %v427
      %v630 = vpop.f32.mrb[0].mxu0
      %v631 = vadd.f32 %v360, %v630
      %v632 = vpop.f32.mrb[0].mxu0
      %633 = vmatprep.mubr.f32.mxu0 0.0
      %634 = vmatmul.mubr.f32.gmra.mrb[0].mxu0 %v430
      %v635 = vpop.f32.mrb[0].mxu0
      %v636 = vadd.f32 %v360, %v635
      %v637 = vpop.f32.mrb[0].mxu0
      %638 = vmatprep.mubr.f32.mxu0 0.0
      %639 = vmatmul.mubr.f32.gmra.mrb[0].mxu0 %v433
      %v640 = vpop.f32.mrb[0].mxu0
      %v641 = vadd.f32 %v360, %v640
      %v642 = vpop.f32.mrb[0].mxu0
      %643 = vmatprep.mubr.f32.mxu0 0.0
      %644 = vmatmul.mubr.f32.gmra.mrb[0].mxu0 %v436
      %v645 = vpop.f32.mrb[0].mxu0
      %v646 = vadd.f32 %v360, %v645
      %v647 = vpop.f32.mrb[0].mxu0
      %648 = vmatprep.mubr.f32.mxu0 0.0
      %649 = vmatmul.mubr.f32.gmra.mrb[0].mxu0 %v439
      %v650 = vpop.f32.mrb[0].mxu0
      %v651 = vadd.f32 %v360, %v650
      %v652 = vpop.f32.mrb[0].mxu0
      %653 = vmatprep.mubr.f32.mxu0 0.0
      %654 = vmatmul.mubr.f32.gmra.mrb[0].mxu0 %v442
      %v655 = vpop.f32.mrb[0].mxu0
      %v656 = vadd.f32 %v360, %v655
      %v657 = vpop.f32.mrb[0].mxu0
      %658 = vmatprep.mubr.f32.mxu0 0.0
      %659 = vmatmul.mubr.f32.gmra.mrb[0].mxu0 %v445
      %v660 = vpop.f32.mrb[0].mxu0
      %v661 = vadd.f32 %v360, %v660
      %v662 = vpop.f32.mrb[0].mxu0
      %663 = vmatprep.mubr.f32.mxu0 0.0
      %664 = vmatmul.mubr.f32.gmra.mrb[0].mxu0 %v448
      %v665 = vpop.f32.mrb[0].mxu0
      %v666 = vadd.f32 %v360, %v665
      %v667 = vpop.f32.mrb[0].mxu0
      %668 = vmatprep.mubr.f32.mxu0 0.0
      %669 = vmatmul.mubr.f32.gmra.mrb[0].mxu0 %v451
      %v670 = vpop.f32.mrb[0].mxu0
      %v671 = vadd.f32 %v360, %v670
      %v672 = vpop.f32.mrb[0].mxu0
      %673 = vmatprep.mubr.f32.mxu0 0.0
      %674 = vmatmul.mubr.f32.gmra.mrb[0].mxu0 %v454
      %v675 = vpop.f32.mrb[0].mxu0
      %v676 = vadd.f32 %v360, %v675
      %v677 = vpop.f32.mrb[0].mxu0
      %678 = vmatprep.mubr.f32.mxu0 0.0
      %679 = vmatmul.mubr.f32.gmra.mrb[0].mxu0 %v457
      %v680 = vpop.f32.mrb[0].mxu0
      %v681 = vadd.f32 %v360, %v680
      %v682 = vpop.f32.mrb[0].mxu0
      %683 = vdwg.mxu0
      %v684 = vld [vmem:[%s3] sm:$0xff]
      %v685 = vld [vmem:[%s3 + $0x8] sm:$0xff]
      %v686 = vld [vmem:[%s3 + $0x10] sm:$0xff]
      %v687 = vld [vmem:[%s3 + $0x18] sm:$0xff]
      %v688 = vld [vmem:[%s3 + $0x20] sm:$0xff]
      %v689 = vld [vmem:[%s3 + $0x28] sm:$0xff]
      %v690 = vld [vmem:[%s3 + $0x30] sm:$0xff]
      %v691 = vld [vmem:[%s3 + $0x38] sm:$0xff]
      %v692 = vld [vmem:[%s4] sm:$0x1]
      %v694 = vlaneseq
      %v695 = vshrl.u32 %v694, 7
      %v696 = vsub.s32 0, %v695
      %v697 = vrot.slane %v692, %v696
      %699 = vmatprep.subr.mxu0 0.0
      %700 = vmatpush1.msra.mxu0 %v684
      %701 = vmatprep.subr.mxu0 0.0
      %702 = vmatpush1.msra.mxu0 %v685
      %703 = vmatprep.subr.mxu0 0.0
      %704 = vmatpush1.msra.mxu0 %v686
      %705 = vmatprep.subr.mxu0 0.0
      %706 = vmatpush1.msra.mxu0 %v687
      %707 = vmatprep.subr.mxu0 0.0
      %708 = vmatpush1.msra.mxu0 %v688
      %709 = vmatprep.subr.mxu0 0.0
      %710 = vmatpush1.msra.mxu0 %v689
      %711 = vmatprep.subr.mxu0 0.0
      %712 = vmatpush1.msra.mxu0 %v690
      %713 = vmatprep.subr.mxu0 0.0
      %714 = vmatpush1.msra.mxu0 %v691
      %715 = vmatprep.subr.mxu0 0.0
      %716 = vmatpush1.msra.mxu0 0.0
      %717 = vmatprep.subr.mxu0 0.0
      %718 = vmatpush1.msra.mxu0 0.0
      %719 = vmatprep.subr.mxu0 0.0
      %720 = vmatpush1.msra.mxu0 0.0
      %721 = vmatprep.subr.mxu0 0.0
      %722 = vmatpush1.msra.mxu0 0.0
      %723 = vmatprep.subr.mxu0 0.0
      %724 = vmatpush1.msra.mxu0 0.0
      %725 = vmatprep.subr.mxu0 0.0
      %726 = vmatpush1.msra.mxu0 0.0
      %727 = vmatprep.subr.mxu0 0.0
      %728 = vmatpush1.msra.mxu0 0.0
      %729 = vmatprep.subr.mxu0 0.0
      %730 = vmatpush1.msra.mxu0 0.0
      %731 = vmatprep.subr.mxu0 0.0
      %732 = vmatpush1.msra.mxu0 0.0
      %733 = vmatprep.subr.mxu0 0.0
      %734 = vmatpush1.msra.mxu0 0.0
      %735 = vmatprep.subr.mxu0 0.0
      %736 = vmatpush1.msra.mxu0 0.0
      %737 = vmatprep.subr.mxu0 0.0
      %738 = vmatpush1.msra.mxu0 0.0
      %739 = vmatprep.subr.mxu0 0.0
      %740 = vmatpush1.msra.mxu0 0.0
      %741 = vmatprep.subr.mxu0 0.0
      %742 = vmatpush1.msra.mxu0 0.0
      %743 = vmatprep.subr.mxu0 0.0
      %744 = vmatpush1.msra.mxu0 0.0
      %745 = vmatprep.subr.mxu0 0.0
      %746 = vmatpush1.msra.mxu0 0.0
      %747 = vmatprep.subr.mxu0 0.0
      %748 = vmatpush1.msra.mxu0 0.0
      %749 = vmatprep.subr.mxu0 0.0
      %750 = vmatpush1.msra.mxu0 0.0
      %751 = vmatprep.subr.mxu0 0.0
      %752 = vmatpush1.msra.mxu0 0.0
      %753 = vmatprep.subr.mxu0 0.0
      %754 = vmatpush1.msra.mxu0 0.0
      %755 = vmatprep.subr.mxu0 0.0
      %756 = vmatpush1.msra.mxu0 0.0
      %757 = vmatprep.subr.mxu0 0.0
      %758 = vmatpush1.msra.mxu0 0.0
      %759 = vmatprep.subr.mxu0 0.0
      %760 = vmatpush1.msra.mxu0 0.0
      %761 = vmatprep.subr.mxu0 0.0
      %762 = vmatpush1.msra.mxu0 0.0
      %763 = vmatprep.mubr.f32.mxu0 0.0
      %764 = vmatmul.mubr.f32.gmra.mrb[0].mxu0 %v364
      %v765 = vpop.f32.mrb[0].mxu0
      %v766 = vadd.f32 %v697, %v765
      %v767 = vpop.f32.mrb[0].mxu0
      %768 = vmatprep.mubr.f32.mxu0 0.0
      %769 = vmatmul.mubr.f32.gmra.mrb[0].mxu0 %v367
      %v770 = vpop.f32.mrb[0].mxu0
      %v771 = vadd.f32 %v697, %v770
      %v772 = vpop.f32.mrb[0].mxu0
      %773 = vmatprep.mubr.f32.mxu0 0.0
      %774 = vmatmul.mubr.f32.gmra.mrb[0].mxu0 %v370
      %v775 = vpop.f32.mrb[0].mxu0
      %v776 = vadd.f32 %v697, %v775
      %v777 = vpop.f32.mrb[0].mxu0
      %778 = vmatprep.mubr.f32.mxu0 0.0
      %779 = vmatmul.mubr.f32.gmra.mrb[0].mxu0 %v373
      %v780 = vpop.f32.mrb[0].mxu0
      %v781 = vadd.f32 %v697, %v780
      %v782 = vpop.f32.mrb[0].mxu0
      %783 = vmatprep.mubr.f32.mxu0 0.0
      %784 = vmatmul.mubr.f32.gmra.mrb[0].mxu0 %v376
      %v785 = vpop.f32.mrb[0].mxu0
      %v786 = vadd.f32 %v697, %v785
      %v787 = vpop.f32.mrb[0].mxu0
      %788 = vmatprep.mubr.f32.mxu0 0.0
      %789 = vmatmul.mubr.f32.gmra.mrb[0].mxu0 %v379
      %v790 = vpop.f32.mrb[0].mxu0
      %v791 = vadd.f32 %v697, %v790
      %v792 = vpop.f32.mrb[0].mxu0
      %793 = vmatprep.mubr.f32.mxu0 0.0
      %794 = vmatmul.mubr.f32.gmra.mrb[0].mxu0 %v382
      %v795 = vpop.f32.mrb[0].mxu0
      %v796 = vadd.f32 %v697, %v795
      %v797 = vpop.f32.mrb[0].mxu0
      %798 = vmatprep.mubr.f32.mxu0 0.0
      %799 = vmatmul.mubr.f32.gmra.mrb[0].mxu0 %v385
      %v800 = vpop.f32.mrb[0].mxu0
      %v801 = vadd.f32 %v697, %v800
      %v802 = vpop.f32.mrb[0].mxu0
      %803 = vmatprep.mubr.f32.mxu0 0.0
      %804 = vmatmul.mubr.f32.gmra.mrb[0].mxu0 %v388
      %v805 = vpop.f32.mrb[0].mxu0
      %v806 = vadd.f32 %v697, %v805
      %v807 = vpop.f32.mrb[0].mxu0
      %808 = vmatprep.mubr.f32.mxu0 0.0
      %809 = vmatmul.mubr.f32.gmra.mrb[0].mxu0 %v391
      %v810 = vpop.f32.mrb[0].mxu0
      %v811 = vadd.f32 %v697, %v810
      %v812 = vpop.f32.mrb[0].mxu0
      %813 = vmatprep.mubr.f32.mxu0 0.0
      %814 = vmatmul.mubr.f32.gmra.mrb[0].mxu0 %v394
      %v815 = vpop.f32.mrb[0].mxu0
      %v816 = vadd.f32 %v697, %v815
      %v817 = vpop.f32.mrb[0].mxu0
      %818 = vmatprep.mubr.f32.mxu0 0.0
      %819 = vmatmul.mubr.f32.gmra.mrb[0].mxu0 %v397
      %v820 = vpop.f32.mrb[0].mxu0
      %v821 = vadd.f32 %v697, %v820
      %v822 = vpop.f32.mrb[0].mxu0
      %823 = vmatprep.mubr.f32.mxu0 0.0
      %824 = vmatmul.mubr.f32.gmra.mrb[0].mxu0 %v400
      %v825 = vpop.f32.mrb[0].mxu0
      %v826 = vadd.f32 %v697, %v825
      %v827 = vpop.f32.mrb[0].mxu0
      %828 = vmatprep.mubr.f32.mxu0 0.0
      %829 = vmatmul.mubr.f32.gmra.mrb[0].mxu0 %v403
      %v830 = vpop.f32.mrb[0].mxu0
      %v831 = vadd.f32 %v697, %v830
      %v832 = vpop.f32.mrb[0].mxu0
      %833 = vmatprep.mubr.f32.mxu0 0.0
      %834 = vmatmul.mubr.f32.gmra.mrb[0].mxu0 %v406
      %v835 = vpop.f32.mrb[0].mxu0
      %v836 = vadd.f32 %v697, %v835
      %v837 = vpop.f32.mrb[0].mxu0
      %838 = vmatprep.mubr.f32.mxu0 0.0
      %839 = vmatmul.mubr.f32.gmra.mrb[0].mxu0 %v409
      %v840 = vpop.f32.mrb[0].mxu0
      %v841 = vadd.f32 %v697, %v840
      %v842 = vpop.f32.mrb[0].mxu0
      %843 = vmatprep.mubr.f32.mxu0 0.0
      %844 = vmatmul.mubr.f32.gmra.mrb[0].mxu0 %v412
      %v845 = vpop.f32.mrb[0].mxu0
      %v846 = vadd.f32 %v697, %v845
      %v847 = vpop.f32.mrb[0].mxu0
      %848 = vmatprep.mubr.f32.mxu0 0.0
      %849 = vmatmul.mubr.f32.gmra.mrb[0].mxu0 %v415
      %v850 = vpop.f32.mrb[0].mxu0
      %v851 = vadd.f32 %v697, %v850
      %v852 = vpop.f32.mrb[0].mxu0
      %853 = vmatprep.mubr.f32.mxu0 0.0
      %854 = vmatmul.mubr.f32.gmra.mrb[0].mxu0 %v418
      %v855 = vpop.f32.mrb[0].mxu0
      %v856 = vadd.f32 %v697, %v855
      %v857 = vpop.f32.mrb[0].mxu0
      %858 = vmatprep.mubr.f32.mxu0 0.0
      %859 = vmatmul.mubr.f32.gmra.mrb[0].mxu0 %v421
      %v860 = vpop.f32.mrb[0].mxu0
      %v861 = vadd.f32 %v697, %v860
      %v862 = vpop.f32.mrb[0].mxu0
      %863 = vmatprep.mubr.f32.mxu0 0.0
      %864 = vmatmul.mubr.f32.gmra.mrb[0].mxu0 %v424
      %v865 = vpop.f32.mrb[0].mxu0
      %v866 = vadd.f32 %v697, %v865
      %v867 = vpop.f32.mrb[0].mxu0
      %868 = vmatprep.mubr.f32.mxu0 0.0
      %869 = vmatmul.mubr.f32.gmra.mrb[0].mxu0 %v427
      %v870 = vpop.f32.mrb[0].mxu0
      %v871 = vadd.f32 %v697, %v870
      %v872 = vpop.f32.mrb[0].mxu0
      %873 = vmatprep.mubr.f32.mxu0 0.0
      %874 = vmatmul.mubr.f32.gmra.mrb[0].mxu0 %v430
      %v875 = vpop.f32.mrb[0].mxu0
      %v876 = vadd.f32 %v697, %v875
      %v877 = vpop.f32.mrb[0].mxu0
      %878 = vmatprep.mubr.f32.mxu0 0.0
      %879 = vmatmul.mubr.f32.gmra.mrb[0].mxu0 %v433
      %v880 = vpop.f32.mrb[0].mxu0
      %v881 = vadd.f32 %v697, %v880
      %v882 = vpop.f32.mrb[0].mxu0
      %883 = vmatprep.mubr.f32.mxu0 0.0
      %884 = vmatmul.mubr.f32.gmra.mrb[0].mxu0 %v436
      %v885 = vpop.f32.mrb[0].mxu0
      %v886 = vadd.f32 %v697, %v885
      %v887 = vpop.f32.mrb[0].mxu0
      %888 = vmatprep.mubr.f32.mxu0 0.0
      %889 = vmatmul.mubr.f32.gmra.mrb[0].mxu0 %v439
      %v890 = vpop.f32.mrb[0].mxu0
      %v891 = vadd.f32 %v697, %v890
      %v892 = vpop.f32.mrb[0].mxu0
      %893 = vmatprep.mubr.f32.mxu0 0.0
      %894 = vmatmul.mubr.f32.gmra.mrb[0].mxu0 %v442
      %v895 = vpop.f32.mrb[0].mxu0
      %v896 = vadd.f32 %v697, %v895
      %v897 = vpop.f32.mrb[0].mxu0
      %898 = vmatprep.mubr.f32.mxu0 0.0
      %899 = vmatmul.mubr.f32.gmra.mrb[0].mxu0 %v445
      %v900 = vpop.f32.mrb[0].mxu0
      %v901 = vadd.f32 %v697, %v900
      %v902 = vpop.f32.mrb[0].mxu0
      %903 = vmatprep.mubr.f32.mxu0 0.0
      %904 = vmatmul.mubr.f32.gmra.mrb[0].mxu0 %v448
      %v905 = vpop.f32.mrb[0].mxu0
      %v906 = vadd.f32 %v697, %v905
      %v907 = vpop.f32.mrb[0].mxu0
      %908 = vmatprep.mubr.f32.mxu0 0.0
      %909 = vmatmul.mubr.f32.gmra.mrb[0].mxu0 %v451
      %v910 = vpop.f32.mrb[0].mxu0
      %v911 = vadd.f32 %v697, %v910
      %v912 = vpop.f32.mrb[0].mxu0
      %913 = vmatprep.mubr.f32.mxu0 0.0
      %914 = vmatmul.mubr.f32.gmra.mrb[0].mxu0 %v454
      %v915 = vpop.f32.mrb[0].mxu0
      %v916 = vadd.f32 %v697, %v915
      %v917 = vpop.f32.mrb[0].mxu0
      %918 = vmatprep.mubr.f32.mxu0 0.0
      %919 = vmatmul.mubr.f32.gmra.mrb[0].mxu0 %v457
      %v920 = vpop.f32.mrb[0].mxu0
      %v921 = vadd.f32 %v697, %v920
      %v922 = vpop.f32.mrb[0].mxu0
      %923 = vdwg.mxu0
      %924 = vst [vmem:[%s303] sm:$0xff] %v526
      %925 = vst [vmem:[%s303 + $0x8] sm:$0xff] %v531
      %926 = vst [vmem:[%s303 + $0x10] sm:$0xff] %v536
      %927 = vst [vmem:[%s303 + $0x18] sm:$0xff] %v541
      %928 = vst [vmem:[%s303 + $0x20] sm:$0xff] %v546
      %929 = vst [vmem:[%s303 + $0x28] sm:$0xff] %v551
      %930 = vst [vmem:[%s303 + $0x30] sm:$0xff] %v556
      %931 = vst [vmem:[%s303 + $0x38] sm:$0xff] %v561
      %932 = vst [vmem:[%s303 + $0x40] sm:$0xff] %v566
      %933 = vst [vmem:[%s303 + $0x48] sm:$0xff] %v571
      %934 = vst [vmem:[%s303 + $0x50] sm:$0xff] %v576
      %935 = vst [vmem:[%s303 + $0x58] sm:$0xff] %v581
      %936 = vst [vmem:[%s303 + $0x60] sm:$0xff] %v586
      %937 = vst [vmem:[%s303 + $0x68] sm:$0xff] %v591
      %938 = vst [vmem:[%s303 + $0x70] sm:$0xff] %v596
      %939 = vst [vmem:[%s303 + $0x78] sm:$0xff] %v601
      %940 = vst [vmem:[%s303 + $0x80] sm:$0xff] %v606
      %941 = vst [vmem:[%s303 + $0x88] sm:$0xff] %v611
      %942 = vst [vmem:[%s303 + $0x90] sm:$0xff] %v616
      %943 = vst [vmem:[%s303 + $0x98] sm:$0xff] %v621
      %944 = vst [vmem:[%s303 + $0xa0] sm:$0xff] %v626
      %945 = vst [vmem:[%s303 + $0xa8] sm:$0xff] %v631
      %946 = vst [vmem:[%s303 + $0xb0] sm:$0xff] %v636
      %947 = vst [vmem:[%s303 + $0xb8] sm:$0xff] %v641
      %948 = vst [vmem:[%s303 + $0xc0] sm:$0xff] %v646
      %949 = vst [vmem:[%s303 + $0xc8] sm:$0xff] %v651
      %950 = vst [vmem:[%s303 + $0xd0] sm:$0xff] %v656
      %951 = vst [vmem:[%s303 + $0xd8] sm:$0xff] %v661
      %952 = vst [vmem:[%s303 + $0xe0] sm:$0xff] %v666
      %953 = vst [vmem:[%s303 + $0xe8] sm:$0xff] %v671
      %954 = vst [vmem:[%s303 + $0xf0] sm:$0xff] %v676
      %955 = vst [vmem:[%s303 + $0xf8] sm:$0xff] %v681
      %956 = vst [vmem:[%s313] sm:$0xff] %v766
      %957 = vst [vmem:[%s313 + $0x8] sm:$0xff] %v771
      %958 = vst [vmem:[%s313 + $0x10] sm:$0xff] %v776
      %959 = vst [vmem:[%s313 + $0x18] sm:$0xff] %v781
      %960 = vst [vmem:[%s313 + $0x20] sm:$0xff] %v786
      %961 = vst [vmem:[%s313 + $0x28] sm:$0xff] %v791
      %962 = vst [vmem:[%s313 + $0x30] sm:$0xff] %v796
      %963 = vst [vmem:[%s313 + $0x38] sm:$0xff] %v801
      %964 = vst [vmem:[%s313 + $0x40] sm:$0xff] %v806
      %965 = vst [vmem:[%s313 + $0x48] sm:$0xff] %v811
      %966 = vst [vmem:[%s313 + $0x50] sm:$0xff] %v816
      %967 = vst [vmem:[%s313 + $0x58] sm:$0xff] %v821
      %968 = vst [vmem:[%s313 + $0x60] sm:$0xff] %v826
      %969 = vst [vmem:[%s313 + $0x68] sm:$0xff] %v831
      %970 = vst [vmem:[%s313 + $0x70] sm:$0xff] %v836
      %971 = vst [vmem:[%s313 + $0x78] sm:$0xff] %v841
      %972 = vst [vmem:[%s313 + $0x80] sm:$0xff] %v846
      %973 = vst [vmem:[%s313 + $0x88] sm:$0xff] %v851
      %974 = vst [vmem:[%s313 + $0x90] sm:$0xff] %v856
      %975 = vst [vmem:[%s313 + $0x98] sm:$0xff] %v861
      %976 = vst [vmem:[%s313 + $0xa0] sm:$0xff] %v866
      %977 = vst [vmem:[%s313 + $0xa8] sm:$0xff] %v871
      %978 = vst [vmem:[%s313 + $0xb0] sm:$0xff] %v876
      %979 = vst [vmem:[%s313 + $0xb8] sm:$0xff] %v881
      %980 = vst [vmem:[%s313 + $0xc0] sm:$0xff] %v886
      %981 = vst [vmem:[%s313 + $0xc8] sm:$0xff] %v891
      %982 = vst [vmem:[%s313 + $0xd0] sm:$0xff] %v896
      %983 = vst [vmem:[%s313 + $0xd8] sm:$0xff] %v901
      %984 = vst [vmem:[%s313 + $0xe0] sm:$0xff] %v906
      %985 = vst [vmem:[%s313 + $0xe8] sm:$0xff] %v911
      %986 = vst [vmem:[%s313 + $0xf0] sm:$0xff] %v916
      %987 = vst [vmem:[%s313 + $0xf8] sm:$0xff] %v921
      %s988 = smul.u32 32, %s23
      %p989 = scmp.lt.s32.totalorder %s22, 1
      %s990 = scalar_select %p989, %s22, 1
      %p991 = scmp.lt.s32.totalorder %s988, 31
      %s992 = scalar_select %p991, %s988, 31
      %s993 = smul.addr %s990, 32
      %s994 = sadd.s32 %s992, %s993
      %s995 = smul.addr %s994, 8
      %s996 = scalar_lea.vmem %s5, %s995
      %s997 = smul.u32 32, %s23
      %p998 = scmp.lt.s32.totalorder %s22, 1
      %s999 = scalar_select %p998, %s22, 1
      %p1000 = scmp.lt.s32.totalorder %s997, 31
      %s1001 = scalar_select %p1000, %s997, 31
      %s1002 = smul.addr %s999, 32
      %s1003 = sadd.s32 %s1001, %s1002
      %s1004 = smul.addr %s1003, 8
      %s1005 = scalar_lea.vmem %s6, %s1004
      // Predicated region
      $region41: #{multi_head_enc_dec_attention.4} parent=39 // pred_check
        %p1006 = pneg %p162
      $region42: #{multi_head_enc_dec_attention.4} parent=39 // pred_check_branch
        %1008 = sbr.rel (%p1006) target = $region44
      $region43: #{multi_head_enc_dec_attention.4} parent=39 // pred_region
        %s1009 = smul.u32 32, %s23
      $region44: #{multi_head_enc_dec_attention.4} parent=39 // pred_fallthru
        _
      // Predicated region
      $region45: #{multi_head_enc_dec_attention.4} parent=39 // pred_check
        %p1010 = pneg %p190
      $region46: #{multi_head_enc_dec_attention.4} parent=39 // pred_check_branch
        %1012 = sbr.rel (%p1010) target = $region48
      $region47: #{multi_head_enc_dec_attention.4} parent=39 // pred_region
        %s1013 = smul.u32 32, %s23
      $region48: #{multi_head_enc_dec_attention.4} parent=39 // pred_fallthru
        _
    $region40: #{multi_head_enc_dec_attention.4} parent=5 // pred_fallthru
      _
    %p1014 = scmp.le.s32.totalorder 2, %s13
    // Predicated region
    $region49: #{multi_head_enc_dec_attention.4} parent=5 // pred_check
      %p1015 = pneg %p1014
    $region50: #{multi_head_enc_dec_attention.4} parent=5 // pred_check_branch
      %1017 = sbr.rel (%p1015) target = $region52
    $region51: #{multi_head_enc_dec_attention.4} parent=5 // pred_region
      %s1018 = ssub.s32 %s13, 2
      // Predicated region
      $region53: #{multi_head_enc_dec_attention.4} parent=51 // pred_check
        %p1019 = pneg %p168
      $region54: #{multi_head_enc_dec_attention.4} parent=51 // pred_check_branch
        %1021 = sbr.rel (%p1019) target = $region56
      $region55: #{multi_head_enc_dec_attention.4} parent=51 // pred_region
        %s1022 = smul.u32 32, %s25
        %p1023 = scmp.lt.s32.totalorder %s24, 1
        %s1024 = scalar_select %p1023, %s24, 1
        %p1025 = scmp.lt.s32.totalorder %s1022, 31
        %s1026 = scalar_select %p1025, %s1022, 31
        %s1027 = smul.addr %s1024, 32
        %s1028 = sadd.s32 %s1026, %s1027
        %s1029 = smul.addr %s1028, 8
        %s1030 = scalar_lea.vmem %s5, %s1029
      $region56: #{multi_head_enc_dec_attention.4} parent=51 // pred_fallthru
        _
      // Predicated region
      $region57: #{multi_head_enc_dec_attention.4} parent=51 // pred_check
        %p1031 = pneg %p196
      $region58: #{multi_head_enc_dec_attention.4} parent=51 // pred_check_branch
        %1033 = sbr.rel (%p1031) target = $region60
      $region59: #{multi_head_enc_dec_attention.4} parent=51 // pred_region
        %s1034 = smul.u32 32, %s25
        %p1035 = scmp.lt.s32.totalorder %s24, 1
        %s1036 = scalar_select %p1035, %s24, 1
        %p1037 = scmp.lt.s32.totalorder %s1034, 31
        %s1038 = scalar_select %p1037, %s1034, 31
        %s1039 = smul.addr %s1036, 32
        %s1040 = sadd.s32 %s1038, %s1039
        %s1041 = smul.addr %s1040, 8
        %s1042 = scalar_lea.vmem %s6, %s1041
      $region60: #{multi_head_enc_dec_attention.4} parent=51 // pred_fallthru
        _
    $region52: #{multi_head_enc_dec_attention.4} parent=5 // pred_fallthru
      _
  $region6: #{multi_head_enc_dec_attention.4} parent=0 // loop_footer
    %s17 = sadd.s32 1, %s13
  $region7: #{multi_head_enc_dec_attention.4} parent=0 // loop_footer_branch
    %12 = sbr.rel target = $region3
  $region8: #{multi_head_enc_dec_attention.4} parent=0 // loop_exit
    _

// kernel: multi_head_enc_dec_attention.5
$region0: #{multi_head_enc_dec_attention.5}
  #allocation0 [shape = 'u32[]', space=smem, size = 0x4, offset = 0x4, fixed_abs, tag = 'smem constant byte address 0x4 - core index']
  #allocation1 [shape = 'u32[144,128]{1,0:T(1,128)}', space=vmem, size = 0x12000, scoped, tag = 'internal scratch']
  #allocation2 [shape = 'f32[4,128,1]{2,1,0:T(8,128)}', space=vmem, size = 0x40000, scoped, tag = 'scratch operand']
  #allocation3 [shape = 'f32[4,128,1]{2,1,0:T(8,128)}', space=vmem, size = 0x40000, scoped, tag = 'scratch operand']
  #allocation4 [shape = 'f32[4,128,32]{2,1,0:T(8,128)}', space=vmem, size = 0x40000, scoped, tag = 'scratch operand']
  %s0 = inlined_call_operand.vmem [shape: f32[2,4,256,32], index: 0, kind: input, shape index: {}]
  %s1 = inlined_call_operand.vmem [shape: f32[2,4,256,32], index: 1, kind: input, shape index: {}]
  %s2 = inlined_call_operand.vmem [shape: f32[2,4,256,32], index: 2, kind: input, shape index: {}]
  %s3 = inlined_call_operand.vmem [shape: f32[4,32,128], index: 3, kind: input, shape index: {}]
  %s4 = inlined_call_operand.vmem [shape: f32[1,128], index: 4, kind: input, shape index: {}]
  %s5 = inlined_call_operand.hbm [shape: f32[2,256,128], index: 5, kind: output, shape index: {}]
  %s6 = sld [smem:[#allocation0]]
  $region175: #{multi_head_enc_dec_attention.5} parent=0
    _
  %s8 = ssub.s32 1, %s6
  %s9 = scalar_select 0, %s8, %s6
  $region1: #{multi_head_enc_dec_attention.5} parent=0
    #allocation5 [shape = 'u8[524288]{0}', space=vmem, size = 0x80000, scoped, tag = 'input window, operand 0']
    #allocation6 [shape = 'u8[524288]{0}', space=vmem, size = 0x80000, scoped, tag = 'input window, operand 1']
    #allocation7 [shape = 'u8[524288]{0}', space=vmem, size = 0x80000, scoped, tag = 'input window, operand 2']
    #allocation8 [shape = 'u8[131072]{0}', space=vmem, size = 0x20000, scoped, tag = 'output window, operand 0']
    #allocation9 [shape = 's32[2]{0}', space=sflag, size = 0x8, scoped, tag = 'scoped memory for multi_head_enc_dec_attention.5']
    %10 = vsyncpa [#allocation9], 0
    %s11 = scalar_lea.sflag [#allocation9], 1
    %12 = vsyncpa %s11, 0
    loop: start=0, step=1, limit=10
    $region2: #{multi_head_enc_dec_attention.5} parent=1 // loop_pre_header
      _
    $region3: #{multi_head_enc_dec_attention.5} parent=1 // loop_header
      %s14 = sphi 0, %s18
      %p15 = scmp.ge.s32.totalorder %s14, 10
      %s21 = sphi 0, %s40
      %s22 = sphi 0, %s36
      %s23 = sphi 0, %s32
      %s24 = sphi 0, %s21
      %s25 = sphi 0, %s22
      %s26 = sphi 0, %s23
      %s27 = sphi 0, %s24
      %s28 = sphi 0, %s25
      %s29 = sphi 0, %s26
      %s45 = sphi 0, %s47
      %s48 = sphi 0, %s45
      %s49 = sphi 0, %s48
      %s65 = sphi 0, %s49
      %s73 = sphi 0, %s75
      %s76 = sphi 0, %s73
      %s77 = sphi 0, %s76
      %s93 = sphi 0, %s77
      %s101 = sphi 0, %s103
      %s104 = sphi 0, %s101
      %s105 = sphi 0, %s104
      %s121 = sphi 0, %s105
      %s125 = sphi 0, %s125
      %s127 = sphi 0, %s125
      %s128 = sphi 0, %s127
      %s142 = sphi 0, %s128
      %s146 = sphi 0, %s146
      %s148 = sphi 0, %s146
      %s149 = sphi 0, %s148
      %s163 = sphi 0, %s149
      %s171 = sphi 0, %s173
      %s174 = sphi 0, %s171
      %s175 = sphi 0, %s174
      %s191 = sphi 0, %s175
    $region4: #{multi_head_enc_dec_attention.5} parent=1 // loop_header_branch
      %17 = sbr.rel (%p15) target = $region8
    $region5: #{multi_head_enc_dec_attention.5} parent=1 // loop_body
      %s19 = ssub.s32 %s14, 1
      %s20 = ssub.s32 %s14, 2
      %s30 = sadd.s32 1, %s23
      %p31 = scmp.ge.s32.totalorder %s30, 2
      %s32 = scalar_select %p31, 0, %s30
      %s33 = sadd.s32 1, %s22
      %s34 = scalar_select %p31, %s33, %s22
      %p35 = scmp.ge.s32.totalorder %s34, 2
      %s36 = scalar_select %p35, 0, %s34
      %s37 = sadd.s32 1, %s21
      %s38 = scalar_select %p35, %s37, %s21
      %p39 = scmp.ge.s32.totalorder %s38, 2
      %s40 = scalar_select %p39, 0, %s38
      %s41 = ssub.s32 %s21, %s40
      %s42 = ssub.s32 %s22, %s36
      %s43 = sor.u32 %s41, %s42
      %p44 = scmp.eq.s32.totalorder %s43, 0
      %s46 = sadd.s32 %s45, 1
      %s47 = scalar_select %p44, %s45, %s46
      %p50 = pneg %p44
      %p51 = scmp.eq.s32.totalorder %s14, 7
      %p52 = por %p50, %p51
      %p53 = scmp.ne.s32.totalorder %s45, %s48
      %p54 = scmp.eq.s32.totalorder %s14, 0
      %p55 = por %p53, %p54
      %p56 = scmp.ne.s32.totalorder %s45, %s48
      %p57 = scmp.eq.s32.totalorder %s19, 7
      %p58 = por %p56, %p57
      %p59 = scmp.ne.s32.totalorder %s48, %s49
      %p60 = scmp.eq.s32.totalorder %s19, 0
      %p61 = por %p59, %p60
      %p62 = scmp.ne.s32.totalorder %s48, %s49
      %p63 = scmp.eq.s32.totalorder %s20, 7
      %p64 = por %p62, %p63
      %p66 = scmp.ne.s32.totalorder %s49, %s65
      %p67 = scmp.eq.s32.totalorder %s20, 0
      %p68 = por %p66, %p67
      %s69 = ssub.s32 %s21, %s40
      %s70 = ssub.s32 %s23, %s32
      %s71 = sor.u32 %s69, %s70
      %p72 = scmp.eq.s32.totalorder %s71, 0
      %s74 = sadd.s32 %s73, 1
      %s75 = scalar_select %p72, %s73, %s74
      %p78 = pneg %p72
      %p79 = scmp.eq.s32.totalorder %s14, 7
      %p80 = por %p78, %p79
      %p81 = scmp.ne.s32.totalorder %s73, %s76
      %p82 = scmp.eq.s32.totalorder %s14, 0
      %p83 = por %p81, %p82
      %p84 = scmp.ne.s32.totalorder %s73, %s76
      %p85 = scmp.eq.s32.totalorder %s19, 7
      %p86 = por %p84, %p85
      %p87 = scmp.ne.s32.totalorder %s76, %s77
      %p88 = scmp.eq.s32.totalorder %s19, 0
      %p89 = por %p87, %p88
      %p90 = scmp.ne.s32.totalorder %s76, %s77
      %p91 = scmp.eq.s32.totalorder %s20, 7
      %p92 = por %p90, %p91
      %p94 = scmp.ne.s32.totalorder %s77, %s93
      %p95 = scmp.eq.s32.totalorder %s20, 0
      %p96 = por %p94, %p95
      %s97 = ssub.s32 %s21, %s40
      %s98 = ssub.s32 %s23, %s32
      %s99 = sor.u32 %s97, %s98
      %p100 = scmp.eq.s32.totalorder %s99, 0
      %s102 = sadd.s32 %s101, 1
      %s103 = scalar_select %p100, %s101, %s102
      %p106 = pneg %p100
      %p107 = scmp.eq.s32.totalorder %s14, 7
      %p108 = por %p106, %p107
      %p109 = scmp.ne.s32.totalorder %s101, %s104
      %p110 = scmp.eq.s32.totalorder %s14, 0
      %p111 = por %p109, %p110
      %p112 = scmp.ne.s32.totalorder %s101, %s104
      %p113 = scmp.eq.s32.totalorder %s19, 7
      %p114 = por %p112, %p113
      %p115 = scmp.ne.s32.totalorder %s104, %s105
      %p116 = scmp.eq.s32.totalorder %s19, 0
      %p117 = por %p115, %p116
      %p118 = scmp.ne.s32.totalorder %s104, %s105
      %p119 = scmp.eq.s32.totalorder %s20, 7
      %p120 = por %p118, %p119
      %p122 = scmp.ne.s32.totalorder %s105, %s121
      %p123 = scmp.eq.s32.totalorder %s20, 0
      %p124 = por %p122, %p123
      %s126 = sadd.s32 %s125, 1
      %p129 = scmp.eq.s32.totalorder %s14, 7
      %p130 = scmp.ne.s32.totalorder %s125, %s127
      %p131 = scmp.eq.s32.totalorder %s14, 0
      %p132 = por %p130, %p131
      %p133 = scmp.ne.s32.totalorder %s125, %s127
      %p134 = scmp.eq.s32.totalorder %s19, 7
      %p135 = por %p133, %p134
      %p136 = scmp.ne.s32.totalorder %s127, %s128
      %p137 = scmp.eq.s32.totalorder %s19, 0
      %p138 = por %p136, %p137
      %p139 = scmp.ne.s32.totalorder %s127, %s128
      %p140 = scmp.eq.s32.totalorder %s20, 7
      %p141 = por %p139, %p140
      %p143 = scmp.ne.s32.totalorder %s128, %s142
      %p144 = scmp.eq.s32.totalorder %s20, 0
      %p145 = por %p143, %p144
      %s147 = sadd.s32 %s146, 1
      %p150 = scmp.eq.s32.totalorder %s14, 7
      %p151 = scmp.ne.s32.totalorder %s146, %s148
      %p152 = scmp.eq.s32.totalorder %s14, 0
      %p153 = por %p151, %p152
      %p154 = scmp.ne.s32.totalorder %s146, %s148
      %p155 = scmp.eq.s32.totalorder %s19, 7
      %p156 = por %p154, %p155
      %p157 = scmp.ne.s32.totalorder %s148, %s149
      %p158 = scmp.eq.s32.totalorder %s19, 0
      %p159 = por %p157, %p158
      %p160 = scmp.ne.s32.totalorder %s148, %s149
      %p161 = scmp.eq.s32.totalorder %s20, 7
      %p162 = por %p160, %p161
      %p164 = scmp.ne.s32.totalorder %s149, %s163
      %p165 = scmp.eq.s32.totalorder %s20, 0
      %p166 = por %p164, %p165
      %s167 = ssub.s32 %s21, %s40
      %s168 = ssub.s32 %s22, %s36
      %s169 = sor.u32 %s167, %s168
      %p170 = scmp.eq.s32.totalorder %s169, 0
      %s172 = sadd.s32 %s171, 1
      %s173 = scalar_select %p170, %s171, %s172
      %p176 = pneg %p170
      %p177 = scmp.eq.s32.totalorder %s14, 7
      %p178 = por %p176, %p177
      %p179 = scmp.ne.s32.totalorder %s171, %s174
      %p180 = scmp.eq.s32.totalorder %s14, 0
      %p181 = por %p179, %p180
      %p182 = scmp.ne.s32.totalorder %s171, %s174
      %p183 = scmp.eq.s32.totalorder %s19, 7
      %p184 = por %p182, %p183
      %p185 = scmp.ne.s32.totalorder %s174, %s175
      %p186 = scmp.eq.s32.totalorder %s19, 0
      %p187 = por %p185, %p186
      %p188 = scmp.ne.s32.totalorder %s174, %s175
      %p189 = scmp.eq.s32.totalorder %s20, 7
      %p190 = por %p188, %p189
      %p192 = scmp.ne.s32.totalorder %s175, %s191
      %p193 = scmp.eq.s32.totalorder %s20, 0
      %p194 = por %p192, %p193
      %p195 = scmp.le.s32.totalorder 1, %s14
      %p196 = scmp.lt.s32.totalorder %s14, 9
      %p197 = pnand %p195, %p196
      %p198 = pneg %p197
      // Predicated region
      $region9: #{multi_head_enc_dec_attention.5} parent=5 // pred_check
        _
      $region10: #{multi_head_enc_dec_attention.5} parent=5 // pred_check_branch
        %200 = sbr.rel (%p197) target = $region12
      $region11: #{multi_head_enc_dec_attention.5} parent=5 // pred_region
        %s201 = ssub.s32 %s14, 1
        // Predicated region
        $region13: #{multi_head_enc_dec_attention.5} parent=11 // pred_check
          %p202 = pneg %p138
        $region14: #{multi_head_enc_dec_attention.5} parent=11 // pred_check_branch
          %204 = sbr.rel (%p202) target = $region16
        $region15: #{multi_head_enc_dec_attention.5} parent=11 // pred_region
          _
        $region16: #{multi_head_enc_dec_attention.5} parent=11 // pred_fallthru
          _
        // Predicated region
        $region17: #{multi_head_enc_dec_attention.5} parent=11 // pred_check
          %p205 = pneg %p159
        $region18: #{multi_head_enc_dec_attention.5} parent=11 // pred_check_branch
          %207 = sbr.rel (%p205) target = $region20
        $region19: #{multi_head_enc_dec_attention.5} parent=11 // pred_region
          _
        $region20: #{multi_head_enc_dec_attention.5} parent=11 // pred_fallthru
          _
      $region12: #{multi_head_enc_dec_attention.5} parent=5 // pred_fallthru
        _
      %p208 = scmp.lt.s32.totalorder %s14, 8
      // Predicated region
      $region21: #{multi_head_enc_dec_attention.5} parent=5 // pred_check
        %p209 = pneg %p208
      $region22: #{multi_head_enc_dec_attention.5} parent=5 // pred_check_branch
        %211 = sbr.rel (%p209) target = $region24
      $region23: #{multi_head_enc_dec_attention.5} parent=5 // pred_region
        // Predicated region
        $region25: #{multi_head_enc_dec_attention.5} parent=23 // pred_check
          %p212 = pneg %p55
        $region26: #{multi_head_enc_dec_attention.5} parent=23 // pred_check_branch
          %214 = sbr.rel (%p212) target = $region28
        $region27: #{multi_head_enc_dec_attention.5} parent=23 // pred_region
          %s215 = sand.u32 %s45, 1
          %s216 = sand.u32 %s45, 1
          %s217 = smul.addr %s216, 512
          %s218 = scalar_lea.vmem [#allocation5], %s217
          %s219 = smul.u32 16, %s22
          %s220 = smul.addr %s21, 128
          %s221 = sadd.s32 %s219, %s220
          %s222 = smul.addr %s221, 8
          %s223 = scalar_lea.vmem %s0, %s222
          // Predicated region
          $region29: #{multi_head_enc_dec_attention.5} parent=27 // pred_check
            _
          $region30: #{multi_head_enc_dec_attention.5} parent=27 // pred_check_branch
            %225 = sbr.rel (0) target = $region32
          $region31: #{multi_head_enc_dec_attention.5} parent=27 // pred_region
            // Predicated region
            $region33: #{multi_head_enc_dec_attention.5} parent=31 // pred_check
              _
            $region34: #{multi_head_enc_dec_attention.5} parent=31 // pred_check_branch
              %227 = sbr.rel (0) target = $region36
            $region35: #{multi_head_enc_dec_attention.5} parent=31 // pred_region
              // Predicated region
              $region48: #{multi_head_enc_dec_attention.5} parent=35 // pred_check
                _
              $region49: #{multi_head_enc_dec_attention.5} parent=35 // pred_check_branch
                %368 = sbr.rel (0) target = $region51
              $region50: #{multi_head_enc_dec_attention.5} parent=35 // pred_region
                loop: start=0, step=1, limit=1
                $region52: #{multi_head_enc_dec_attention.5} parent=50 // loop_pre_header
                  _
                $region53: #{multi_head_enc_dec_attention.5} parent=50 // loop_header
                  %s370 = sphi 0, %s374
                  %p371 = scmp.ge.s32.totalorder %s370, 1
                  %s375 = sphi %s223, %s223
                  %s376 = sphi %s218, %s218
                $region54: #{multi_head_enc_dec_attention.5} parent=50 // loop_header_branch
                  %373 = sbr.rel (%p371) target = $region58
                $region55: #{multi_head_enc_dec_attention.5} parent=50 // loop_body
                  %v377 = vld [vmem:[%s375] sm:$0xff]
                  %378 = vst [vmem:[%s376] sm:$0xff] %v377
                  %v379 = vld [vmem:[%s375 + $0x8] sm:$0xff]
                  %380 = vst [vmem:[%s376 + $0x8] sm:$0xff] %v379
                  %v381 = vld [vmem:[%s375 + $0x10] sm:$0xff]
                  %382 = vst [vmem:[%s376 + $0x10] sm:$0xff] %v381
                  %v383 = vld [vmem:[%s375 + $0x18] sm:$0xff]
                  %384 = vst [vmem:[%s376 + $0x18] sm:$0xff] %v383
                  %v385 = vld [vmem:[%s375 + $0x20] sm:$0xff]
                  %386 = vst [vmem:[%s376 + $0x20] sm:$0xff] %v385
                  %v387 = vld [vmem:[%s375 + $0x28] sm:$0xff]
                  %388 = vst [vmem:[%s376 + $0x28] sm:$0xff] %v387
                  %v389 = vld [vmem:[%s375 + $0x30] sm:$0xff]
                  %390 = vst [vmem:[%s376 + $0x30] sm:$0xff] %v389
                  %v391 = vld [vmem:[%s375 + $0x38] sm:$0xff]
                  %392 = vst [vmem:[%s376 + $0x38] sm:$0xff] %v391
                  %v393 = vld [vmem:[%s375 + $0x40] sm:$0xff]
                  %394 = vst [vmem:[%s376 + $0x40] sm:$0xff] %v393
                  %v395 = vld [vmem:[%s375 + $0x48] sm:$0xff]
                  %396 = vst [vmem:[%s376 + $0x48] sm:$0xff] %v395
                  %v397 = vld [vmem:[%s375 + $0x50] sm:$0xff]
                  %398 = vst [vmem:[%s376 + $0x50] sm:$0xff] %v397
                  %v399 = vld [vmem:[%s375 + $0x58] sm:$0xff]
                  %400 = vst [vmem:[%s376 + $0x58] sm:$0xff] %v399
                  %v401 = vld [vmem:[%s375 + $0x60] sm:$0xff]
                  %402 = vst [vmem:[%s376 + $0x60] sm:$0xff] %v401
                  %v403 = vld [vmem:[%s375 + $0x68] sm:$0xff]
                  %404 = vst [vmem:[%s376 + $0x68] sm:$0xff] %v403
                  %v405 = vld [vmem:[%s375 + $0x70] sm:$0xff]
                  %406 = vst [vmem:[%s376 + $0x70] sm:$0xff] %v405
                  %v407 = vld [vmem:[%s375 + $0x78] sm:$0xff]
                  %408 = vst [vmem:[%s376 + $0x78] sm:$0xff] %v407
                  %v409 = vld [vmem:[%s375 + $0x100] sm:$0xff]
                  %410 = vst [vmem:[%s376 + $0x80] sm:$0xff] %v409
                  %v411 = vld [vmem:[%s375 + $0x108] sm:$0xff]
                  %412 = vst [vmem:[%s376 + $0x88] sm:$0xff] %v411
                  %v413 = vld [vmem:[%s375 + $0x110] sm:$0xff]
                  %414 = vst [vmem:[%s376 + $0x90] sm:$0xff] %v413
                  %v415 = vld [vmem:[%s375 + $0x118] sm:$0xff]
                  %416 = vst [vmem:[%s376 + $0x98] sm:$0xff] %v415
                  %v417 = vld [vmem:[%s375 + $0x120] sm:$0xff]
                  %418 = vst [vmem:[%s376 + $0xa0] sm:$0xff] %v417
                  %v419 = vld [vmem:[%s375 + $0x128] sm:$0xff]
                  %420 = vst [vmem:[%s376 + $0xa8] sm:$0xff] %v419
                  %v421 = vld [vmem:[%s375 + $0x130] sm:$0xff]
                  %422 = vst [vmem:[%s376 + $0xb0] sm:$0xff] %v421
                  %v423 = vld [vmem:[%s375 + $0x138] sm:$0xff]
                  %424 = vst [vmem:[%s376 + $0xb8] sm:$0xff] %v423
                  %v425 = vld [vmem:[%s375 + $0x140] sm:$0xff]
                  %426 = vst [vmem:[%s376 + $0xc0] sm:$0xff] %v425
                  %v427 = vld [vmem:[%s375 + $0x148] sm:$0xff]
                  %428 = vst [vmem:[%s376 + $0xc8] sm:$0xff] %v427
                  %v429 = vld [vmem:[%s375 + $0x150] sm:$0xff]
                  %430 = vst [vmem:[%s376 + $0xd0] sm:$0xff] %v429
                  %v431 = vld [vmem:[%s375 + $0x158] sm:$0xff]
                  %432 = vst [vmem:[%s376 + $0xd8] sm:$0xff] %v431
                  %v433 = vld [vmem:[%s375 + $0x160] sm:$0xff]
                  %434 = vst [vmem:[%s376 + $0xe0] sm:$0xff] %v433
                  %v435 = vld [vmem:[%s375 + $0x168] sm:$0xff]
                  %436 = vst [vmem:[%s376 + $0xe8] sm:$0xff] %v435
                  %v437 = vld [vmem:[%s375 + $0x170] sm:$0xff]
                  %438 = vst [vmem:[%s376 + $0xf0] sm:$0xff] %v437
                  %v439 = vld [vmem:[%s375 + $0x178] sm:$0xff]
                  %440 = vst [vmem:[%s376 + $0xf8] sm:$0xff] %v439
                  %v441 = vld [vmem:[%s375 + $0x200] sm:$0xff]
                  %442 = vst [vmem:[%s376 + $0x100] sm:$0xff] %v441
                  %v443 = vld [vmem:[%s375 + $0x208] sm:$0xff]
                  %444 = vst [vmem:[%s376 + $0x108] sm:$0xff] %v443
                  %v445 = vld [vmem:[%s375 + $0x210] sm:$0xff]
                  %446 = vst [vmem:[%s376 + $0x110] sm:$0xff] %v445
                  %v447 = vld [vmem:[%s375 + $0x218] sm:$0xff]
                  %448 = vst [vmem:[%s376 + $0x118] sm:$0xff] %v447
                  %v449 = vld [vmem:[%s375 + $0x220] sm:$0xff]
                  %450 = vst [vmem:[%s376 + $0x120] sm:$0xff] %v449
                  %v451 = vld [vmem:[%s375 + $0x228] sm:$0xff]
                  %452 = vst [vmem:[%s376 + $0x128] sm:$0xff] %v451
                  %v453 = vld [vmem:[%s375 + $0x230] sm:$0xff]
                  %454 = vst [vmem:[%s376 + $0x130] sm:$0xff] %v453
                  %v455 = vld [vmem:[%s375 + $0x238] sm:$0xff]
                  %456 = vst [vmem:[%s376 + $0x138] sm:$0xff] %v455
                  %v457 = vld [vmem:[%s375 + $0x240] sm:$0xff]
                  %458 = vst [vmem:[%s376 + $0x140] sm:$0xff] %v457
                  %v459 = vld [vmem:[%s375 + $0x248] sm:$0xff]
                  %460 = vst [vmem:[%s376 + $0x148] sm:$0xff] %v459
                  %v461 = vld [vmem:[%s375 + $0x250] sm:$0xff]
                  %462 = vst [vmem:[%s376 + $0x150] sm:$0xff] %v461
                  %v463 = vld [vmem:[%s375 + $0x258] sm:$0xff]
                  %464 = vst [vmem:[%s376 + $0x158] sm:$0xff] %v463
                  %v465 = vld [vmem:[%s375 + $0x260] sm:$0xff]
                  %466 = vst [vmem:[%s376 + $0x160] sm:$0xff] %v465
                  %v467 = vld [vmem:[%s375 + $0x268] sm:$0xff]
                  %468 = vst [vmem:[%s376 + $0x168] sm:$0xff] %v467
                  %v469 = vld [vmem:[%s375 + $0x270] sm:$0xff]
                  %470 = vst [vmem:[%s376 + $0x170] sm:$0xff] %v469
                  %v471 = vld [vmem:[%s375 + $0x278] sm:$0xff]
                  %472 = vst [vmem:[%s376 + $0x178] sm:$0xff] %v471
                  %v473 = vld [vmem:[%s375 + $0x300] sm:$0xff]
                  %474 = vst [vmem:[%s376 + $0x180] sm:$0xff] %v473
                  %v475 = vld [vmem:[%s375 + $0x308] sm:$0xff]
                  %476 = vst [vmem:[%s376 + $0x188] sm:$0xff] %v475
                  %v477 = vld [vmem:[%s375 + $0x310] sm:$0xff]
                  %478 = vst [vmem:[%s376 + $0x190] sm:$0xff] %v477
                  %v479 = vld [vmem:[%s375 + $0x318] sm:$0xff]
                  %480 = vst [vmem:[%s376 + $0x198] sm:$0xff] %v479
                  %v481 = vld [vmem:[%s375 + $0x320] sm:$0xff]
                  %482 = vst [vmem:[%s376 + $0x1a0] sm:$0xff] %v481
                  %v483 = vld [vmem:[%s375 + $0x328] sm:$0xff]
                  %484 = vst [vmem:[%s376 + $0x1a8] sm:$0xff] %v483
                  %v485 = vld [vmem:[%s375 + $0x330] sm:$0xff]
                  %486 = vst [vmem:[%s376 + $0x1b0] sm:$0xff] %v485
                  %v487 = vld [vmem:[%s375 + $0x338] sm:$0xff]
                  %488 = vst [vmem:[%s376 + $0x1b8] sm:$0xff] %v487
                  %v489 = vld [vmem:[%s375 + $0x340] sm:$0xff]
                  %490 = vst [vmem:[%s376 + $0x1c0] sm:$0xff] %v489
                  %v491 = vld [vmem:[%s375 + $0x348] sm:$0xff]
                  %492 = vst [vmem:[%s376 + $0x1c8] sm:$0xff] %v491
                  %v493 = vld [vmem:[%s375 + $0x350] sm:$0xff]
                  %494 = vst [vmem:[%s376 + $0x1d0] sm:$0xff] %v493
                  %v495 = vld [vmem:[%s375 + $0x358] sm:$0xff]
                  %496 = vst [vmem:[%s376 + $0x1d8] sm:$0xff] %v495
                  %v497 = vld [vmem:[%s375 + $0x360] sm:$0xff]
                  %498 = vst [vmem:[%s376 + $0x1e0] sm:$0xff] %v497
                  %v499 = vld [vmem:[%s375 + $0x368] sm:$0xff]
                  %500 = vst [vmem:[%s376 + $0x1e8] sm:$0xff] %v499
                  %v501 = vld [vmem:[%s375 + $0x370] sm:$0xff]
                  %502 = vst [vmem:[%s376 + $0x1f0] sm:$0xff] %v501
                  %v503 = vld [vmem:[%s375 + $0x378] sm:$0xff]
                  %504 = vst [vmem:[%s376 + $0x1f8] sm:$0xff] %v503
                $region56: #{multi_head_enc_dec_attention.5} parent=50 // loop_footer
                  %s374 = sadd.s32 1, %s370
                $region57: #{multi_head_enc_dec_attention.5} parent=50 // loop_footer_branch
                  %369 = sbr.rel target = $region53
                $region58: #{multi_head_enc_dec_attention.5} parent=50 // loop_exit
                  _
              $region51: #{multi_head_enc_dec_attention.5} parent=35 // pred_fallthru
                _
              // Predicated region
              $region59: #{multi_head_enc_dec_attention.5} parent=35 // pred_check
                _
              $region60: #{multi_head_enc_dec_attention.5} parent=35 // pred_check_branch
                %506 = sbr.rel target = $region62
              $region61: #{multi_head_enc_dec_attention.5} parent=35 // pred_region
                _
              $region62: #{multi_head_enc_dec_attention.5} parent=35 // pred_fallthru
                _
            $region36: #{multi_head_enc_dec_attention.5} parent=31 // pred_fallthru
              _
            // Predicated region
            $region37: #{multi_head_enc_dec_attention.5} parent=31 // pred_check
              _
            $region38: #{multi_head_enc_dec_attention.5} parent=31 // pred_check_branch
              %229 = sbr.rel target = $region40
            $region39: #{multi_head_enc_dec_attention.5} parent=31 // pred_region
              loop: start=0, step=1, limit=1
              $region41: #{multi_head_enc_dec_attention.5} parent=39 // loop_pre_header
                _
              $region42: #{multi_head_enc_dec_attention.5} parent=39 // loop_header
                %s232 = sphi 0, %s236
                %p233 = scmp.ge.s32.totalorder %s232, 1
                %s237 = sphi %s223, %s223
                %s238 = sphi %s218, %s218
              $region43: #{multi_head_enc_dec_attention.5} parent=39 // loop_header_branch
                %235 = sbr.rel (%p233) target = $region47
              $region44: #{multi_head_enc_dec_attention.5} parent=39 // loop_body
                %v239 = vld [vmem:[%s237] sm:$0xff]
                %240 = vst [vmem:[%s238] sm:$0xff] %v239
                %v241 = vld [vmem:[%s237 + $0x8] sm:$0xff]
                %242 = vst [vmem:[%s238 + $0x8] sm:$0xff] %v241
                %v243 = vld [vmem:[%s237 + $0x10] sm:$0xff]
                %244 = vst [vmem:[%s238 + $0x10] sm:$0xff] %v243
                %v245 = vld [vmem:[%s237 + $0x18] sm:$0xff]
                %246 = vst [vmem:[%s238 + $0x18] sm:$0xff] %v245
                %v247 = vld [vmem:[%s237 + $0x20] sm:$0xff]
                %248 = vst [vmem:[%s238 + $0x20] sm:$0xff] %v247
                %v249 = vld [vmem:[%s237 + $0x28] sm:$0xff]
                %250 = vst [vmem:[%s238 + $0x28] sm:$0xff] %v249
                %v251 = vld [vmem:[%s237 + $0x30] sm:$0xff]
                %252 = vst [vmem:[%s238 + $0x30] sm:$0xff] %v251
                %v253 = vld [vmem:[%s237 + $0x38] sm:$0xff]
                %254 = vst [vmem:[%s238 + $0x38] sm:$0xff] %v253
                %v255 = vld [vmem:[%s237 + $0x40] sm:$0xff]
                %256 = vst [vmem:[%s238 + $0x40] sm:$0xff] %v255
                %v257 = vld [vmem:[%s237 + $0x48] sm:$0xff]
                %258 = vst [vmem:[%s238 + $0x48] sm:$0xff] %v257
                %v259 = vld [vmem:[%s237 + $0x50] sm:$0xff]
                %260 = vst [vmem:[%s238 + $0x50] sm:$0xff] %v259
                %v261 = vld [vmem:[%s237 + $0x58] sm:$0xff]
                %262 = vst [vmem:[%s238 + $0x58] sm:$0xff] %v261
                %v263 = vld [vmem:[%s237 + $0x60] sm:$0xff]
                %264 = vst [vmem:[%s238 + $0x60] sm:$0xff] %v263
                %v265 = vld [vmem:[%s237 + $0x68] sm:$0xff]
                %266 = vst [vmem:[%s238 + $0x68] sm:$0xff] %v265
                %v267 = vld [vmem:[%s237 + $0x70] sm:$0xff]
                %268 = vst [vmem:[%s238 + $0x70] sm:$0xff] %v267
                %v269 = vld [vmem:[%s237 + $0x78] sm:$0xff]
                %270 = vst [vmem:[%s238 + $0x78] sm:$0xff] %v269
                %v271 = vld [vmem:[%s237 + $0x100] sm:$0xff]
                %272 = vst [vmem:[%s238 + $0x80] sm:$0xff] %v271
                %v273 = vld [vmem:[%s237 + $0x108] sm:$0xff]
                %274 = vst [vmem:[%s238 + $0x88] sm:$0xff] %v273
                %v275 = vld [vmem:[%s237 + $0x110] sm:$0xff]
                %276 = vst [vmem:[%s238 + $0x90] sm:$0xff] %v275
                %v277 = vld [vmem:[%s237 + $0x118] sm:$0xff]
                %278 = vst [vmem:[%s238 + $0x98] sm:$0xff] %v277
                %v279 = vld [vmem:[%s237 + $0x120] sm:$0xff]
                %280 = vst [vmem:[%s238 + $0xa0] sm:$0xff] %v279
                %v281 = vld [vmem:[%s237 + $0x128] sm:$0xff]
                %282 = vst [vmem:[%s238 + $0xa8] sm:$0xff] %v281
                %v283 = vld [vmem:[%s237 + $0x130] sm:$0xff]
                %284 = vst [vmem:[%s238 + $0xb0] sm:$0xff] %v283
                %v285 = vld [vmem:[%s237 + $0x138] sm:$0xff]
                %286 = vst [vmem:[%s238 + $0xb8] sm:$0xff] %v285
                %v287 = vld [vmem:[%s237 + $0x140] sm:$0xff]
                %288 = vst [vmem:[%s238 + $0xc0] sm:$0xff] %v287
                %v289 = vld [vmem:[%s237 + $0x148] sm:$0xff]
                %290 = vst [vmem:[%s238 + $0xc8] sm:$0xff] %v289
                %v291 = vld [vmem:[%s237 + $0x150] sm:$0xff]
                %292 = vst [vmem:[%s238 + $0xd0] sm:$0xff] %v291
                %v293 = vld [vmem:[%s237 + $0x158] sm:$0xff]
                %294 = vst [vmem:[%s238 + $0xd8] sm:$0xff] %v293
                %v295 = vld [vmem:[%s237 + $0x160] sm:$0xff]
                %296 = vst [vmem:[%s238 + $0xe0] sm:$0xff] %v295
                %v297 = vld [vmem:[%s237 + $0x168] sm:$0xff]
                %298 = vst [vmem:[%s238 + $0xe8] sm:$0xff] %v297
                %v299 = vld [vmem:[%s237 + $0x170] sm:$0xff]
                %300 = vst [vmem:[%s238 + $0xf0] sm:$0xff] %v299
                %v301 = vld [vmem:[%s237 + $0x178] sm:$0xff]
                %302 = vst [vmem:[%s238 + $0xf8] sm:$0xff] %v301
                %v303 = vld [vmem:[%s237 + $0x200] sm:$0xff]
                %304 = vst [vmem:[%s238 + $0x100] sm:$0xff] %v303
                %v305 = vld [vmem:[%s237 + $0x208] sm:$0xff]
                %306 = vst [vmem:[%s238 + $0x108] sm:$0xff] %v305
                %v307 = vld [vmem:[%s237 + $0x210] sm:$0xff]
                %308 = vst [vmem:[%s238 + $0x110] sm:$0xff] %v307
                %v309 = vld [vmem:[%s237 + $0x218] sm:$0xff]
                %310 = vst [vmem:[%s238 + $0x118] sm:$0xff] %v309
                %v311 = vld [vmem:[%s237 + $0x220] sm:$0xff]
                %312 = vst [vmem:[%s238 + $0x120] sm:$0xff] %v311
                %v313 = vld [vmem:[%s237 + $0x228] sm:$0xff]
                %314 = vst [vmem:[%s238 + $0x128] sm:$0xff] %v313
                %v315 = vld [vmem:[%s237 + $0x230] sm:$0xff]
                %316 = vst [vmem:[%s238 + $0x130] sm:$0xff] %v315
                %v317 = vld [vmem:[%s237 + $0x238] sm:$0xff]
                %318 = vst [vmem:[%s238 + $0x138] sm:$0xff] %v317
                %v319 = vld [vmem:[%s237 + $0x240] sm:$0xff]
                %320 = vst [vmem:[%s238 + $0x140] sm:$0xff] %v319
                %v321 = vld [vmem:[%s237 + $0x248] sm:$0xff]
                %322 = vst [vmem:[%s238 + $0x148] sm:$0xff] %v321
                %v323 = vld [vmem:[%s237 + $0x250] sm:$0xff]
                %324 = vst [vmem:[%s238 + $0x150] sm:$0xff] %v323
                %v325 = vld [vmem:[%s237 + $0x258] sm:$0xff]
                %326 = vst [vmem:[%s238 + $0x158] sm:$0xff] %v325
                %v327 = vld [vmem:[%s237 + $0x260] sm:$0xff]
                %328 = vst [vmem:[%s238 + $0x160] sm:$0xff] %v327
                %v329 = vld [vmem:[%s237 + $0x268] sm:$0xff]
                %330 = vst [vmem:[%s238 + $0x168] sm:$0xff] %v329
                %v331 = vld [vmem:[%s237 + $0x270] sm:$0xff]
                %332 = vst [vmem:[%s238 + $0x170] sm:$0xff] %v331
                %v333 = vld [vmem:[%s237 + $0x278] sm:$0xff]
                %334 = vst [vmem:[%s238 + $0x178] sm:$0xff] %v333
                %v335 = vld [vmem:[%s237 + $0x300] sm:$0xff]
                %336 = vst [vmem:[%s238 + $0x180] sm:$0xff] %v335
                %v337 = vld [vmem:[%s237 + $0x308] sm:$0xff]
                %338 = vst [vmem:[%s238 + $0x188] sm:$0xff] %v337
                %v339 = vld [vmem:[%s237 + $0x310] sm:$0xff]
                %340 = vst [vmem:[%s238 + $0x190] sm:$0xff] %v339
                %v341 = vld [vmem:[%s237 + $0x318] sm:$0xff]
                %342 = vst [vmem:[%s238 + $0x198] sm:$0xff] %v341
                %v343 = vld [vmem:[%s237 + $0x320] sm:$0xff]
                %344 = vst [vmem:[%s238 + $0x1a0] sm:$0xff] %v343
                %v345 = vld [vmem:[%s237 + $0x328] sm:$0xff]
                %346 = vst [vmem:[%s238 + $0x1a8] sm:$0xff] %v345
                %v347 = vld [vmem:[%s237 + $0x330] sm:$0xff]
                %348 = vst [vmem:[%s238 + $0x1b0] sm:$0xff] %v347
                %v349 = vld [vmem:[%s237 + $0x338] sm:$0xff]
                %350 = vst [vmem:[%s238 + $0x1b8] sm:$0xff] %v349
                %v351 = vld [vmem:[%s237 + $0x340] sm:$0xff]
                %352 = vst [vmem:[%s238 + $0x1c0] sm:$0xff] %v351
                %v353 = vld [vmem:[%s237 + $0x348] sm:$0xff]
                %354 = vst [vmem:[%s238 + $0x1c8] sm:$0xff] %v353
                %v355 = vld [vmem:[%s237 + $0x350] sm:$0xff]
                %356 = vst [vmem:[%s238 + $0x1d0] sm:$0xff] %v355
                %v357 = vld [vmem:[%s237 + $0x358] sm:$0xff]
                %358 = vst [vmem:[%s238 + $0x1d8] sm:$0xff] %v357
                %v359 = vld [vmem:[%s237 + $0x360] sm:$0xff]
                %360 = vst [vmem:[%s238 + $0x1e0] sm:$0xff] %v359
                %v361 = vld [vmem:[%s237 + $0x368] sm:$0xff]
                %362 = vst [vmem:[%s238 + $0x1e8] sm:$0xff] %v361
                %v363 = vld [vmem:[%s237 + $0x370] sm:$0xff]
                %364 = vst [vmem:[%s238 + $0x1f0] sm:$0xff] %v363
                %v365 = vld [vmem:[%s237 + $0x378] sm:$0xff]
                %366 = vst [vmem:[%s238 + $0x1f8] sm:$0xff] %v365
              $region45: #{multi_head_enc_dec_attention.5} parent=39 // loop_footer
                %s236 = sadd.s32 1, %s232
              $region46: #{multi_head_enc_dec_attention.5} parent=39 // loop_footer_branch
                %231 = sbr.rel target = $region42
              $region47: #{multi_head_enc_dec_attention.5} parent=39 // loop_exit
                _
            $region40: #{multi_head_enc_dec_attention.5} parent=31 // pred_fallthru
              _
          $region32: #{multi_head_enc_dec_attention.5} parent=27 // pred_fallthru
            _
          %507 = vnop
        $region28: #{multi_head_enc_dec_attention.5} parent=23 // pred_fallthru
          _
        // Predicated region
        $region63: #{multi_head_enc_dec_attention.5} parent=23 // pred_check
          %p508 = pneg %p83
        $region64: #{multi_head_enc_dec_attention.5} parent=23 // pred_check_branch
          %510 = sbr.rel (%p508) target = $region66
        $region65: #{multi_head_enc_dec_attention.5} parent=23 // pred_region
          %s511 = sand.u32 %s73, 1
          %s512 = sand.u32 %s73, 1
          %s513 = smul.addr %s512, 512
          %s514 = scalar_lea.vmem [#allocation6], %s513
          %s515 = smul.u32 16, %s23
          %s516 = smul.addr %s21, 128
          %s517 = sadd.s32 %s515, %s516
          %s518 = smul.addr %s517, 8
          %s519 = scalar_lea.vmem %s1, %s518
          // Predicated region
          $region67: #{multi_head_enc_dec_attention.5} parent=65 // pred_check
            _
          $region68: #{multi_head_enc_dec_attention.5} parent=65 // pred_check_branch
            %521 = sbr.rel (0) target = $region70
          $region69: #{multi_head_enc_dec_attention.5} parent=65 // pred_region
            // Predicated region
            $region71: #{multi_head_enc_dec_attention.5} parent=69 // pred_check
              _
            $region72: #{multi_head_enc_dec_attention.5} parent=69 // pred_check_branch
              %523 = sbr.rel (0) target = $region74
            $region73: #{multi_head_enc_dec_attention.5} parent=69 // pred_region
              // Predicated region
              $region86: #{multi_head_enc_dec_attention.5} parent=73 // pred_check
                _
              $region87: #{multi_head_enc_dec_attention.5} parent=73 // pred_check_branch
                %664 = sbr.rel (0) target = $region89
              $region88: #{multi_head_enc_dec_attention.5} parent=73 // pred_region
                loop: start=0, step=1, limit=1
                $region90: #{multi_head_enc_dec_attention.5} parent=88 // loop_pre_header
                  _
                $region91: #{multi_head_enc_dec_attention.5} parent=88 // loop_header
                  %s666 = sphi 0, %s670
                  %p667 = scmp.ge.s32.totalorder %s666, 1
                  %s671 = sphi %s519, %s519
                  %s672 = sphi %s514, %s514
                $region92: #{multi_head_enc_dec_attention.5} parent=88 // loop_header_branch
                  %669 = sbr.rel (%p667) target = $region96
                $region93: #{multi_head_enc_dec_attention.5} parent=88 // loop_body
                  %v673 = vld [vmem:[%s671] sm:$0xff]
                  %674 = vst [vmem:[%s672] sm:$0xff] %v673
                  %v675 = vld [vmem:[%s671 + $0x8] sm:$0xff]
                  %676 = vst [vmem:[%s672 + $0x8] sm:$0xff] %v675
                  %v677 = vld [vmem:[%s671 + $0x10] sm:$0xff]
                  %678 = vst [vmem:[%s672 + $0x10] sm:$0xff] %v677
                  %v679 = vld [vmem:[%s671 + $0x18] sm:$0xff]
                  %680 = vst [vmem:[%s672 + $0x18] sm:$0xff] %v679
                  %v681 = vld [vmem:[%s671 + $0x20] sm:$0xff]
                  %682 = vst [vmem:[%s672 + $0x20] sm:$0xff] %v681
                  %v683 = vld [vmem:[%s671 + $0x28] sm:$0xff]
                  %684 = vst [vmem:[%s672 + $0x28] sm:$0xff] %v683
                  %v685 = vld [vmem:[%s671 + $0x30] sm:$0xff]
                  %686 = vst [vmem:[%s672 + $0x30] sm:$0xff] %v685
                  %v687 = vld [vmem:[%s671 + $0x38] sm:$0xff]
                  %688 = vst [vmem:[%s672 + $0x38] sm:$0xff] %v687
                  %v689 = vld [vmem:[%s671 + $0x40] sm:$0xff]
                  %690 = vst [vmem:[%s672 + $0x40] sm:$0xff] %v689
                  %v691 = vld [vmem:[%s671 + $0x48] sm:$0xff]
                  %692 = vst [vmem:[%s672 + $0x48] sm:$0xff] %v691
                  %v693 = vld [vmem:[%s671 + $0x50] sm:$0xff]
                  %694 = vst [vmem:[%s672 + $0x50] sm:$0xff] %v693
                  %v695 = vld [vmem:[%s671 + $0x58] sm:$0xff]
                  %696 = vst [vmem:[%s672 + $0x58] sm:$0xff] %v695
                  %v697 = vld [vmem:[%s671 + $0x60] sm:$0xff]
                  %698 = vst [vmem:[%s672 + $0x60] sm:$0xff] %v697
                  %v699 = vld [vmem:[%s671 + $0x68] sm:$0xff]
                  %700 = vst [vmem:[%s672 + $0x68] sm:$0xff] %v699
                  %v701 = vld [vmem:[%s671 + $0x70] sm:$0xff]
                  %702 = vst [vmem:[%s672 + $0x70] sm:$0xff] %v701
                  %v703 = vld [vmem:[%s671 + $0x78] sm:$0xff]
                  %704 = vst [vmem:[%s672 + $0x78] sm:$0xff] %v703
                  %v705 = vld [vmem:[%s671 + $0x100] sm:$0xff]
                  %706 = vst [vmem:[%s672 + $0x80] sm:$0xff] %v705
                  %v707 = vld [vmem:[%s671 + $0x108] sm:$0xff]
                  %708 = vst [vmem:[%s672 + $0x88] sm:$0xff] %v707
                  %v709 = vld [vmem:[%s671 + $0x110] sm:$0xff]
                  %710 = vst [vmem:[%s672 + $0x90] sm:$0xff] %v709
                  %v711 = vld [vmem:[%s671 + $0x118] sm:$0xff]
                  %712 = vst [vmem:[%s672 + $0x98] sm:$0xff] %v711
                  %v713 = vld [vmem:[%s671 + $0x120] sm:$0xff]
                  %714 = vst [vmem:[%s672 + $0xa0] sm:$0xff] %v713
                  %v715 = vld [vmem:[%s671 + $0x128] sm:$0xff]
                  %716 = vst [vmem:[%s672 + $0xa8] sm:$0xff] %v715
                  %v717 = vld [vmem:[%s671 + $0x130] sm:$0xff]
                  %718 = vst [vmem:[%s672 + $0xb0] sm:$0xff] %v717
                  %v719 = vld [vmem:[%s671 + $0x138] sm:$0xff]
                  %720 = vst [vmem:[%s672 + $0xb8] sm:$0xff] %v719
                  %v721 = vld [vmem:[%s671 + $0x140] sm:$0xff]
                  %722 = vst [vmem:[%s672 + $0xc0] sm:$0xff] %v721
                  %v723 = vld [vmem:[%s671 + $0x148] sm:$0xff]
                  %724 = vst [vmem:[%s672 + $0xc8] sm:$0xff] %v723
                  %v725 = vld [vmem:[%s671 + $0x150] sm:$0xff]
                  %726 = vst [vmem:[%s672 + $0xd0] sm:$0xff] %v725
                  %v727 = vld [vmem:[%s671 + $0x158] sm:$0xff]
                  %728 = vst [vmem:[%s672 + $0xd8] sm:$0xff] %v727
                  %v729 = vld [vmem:[%s671 + $0x160] sm:$0xff]
                  %730 = vst [vmem:[%s672 + $0xe0] sm:$0xff] %v729
                  %v731 = vld [vmem:[%s671 + $0x168] sm:$0xff]
                  %732 = vst [vmem:[%s672 + $0xe8] sm:$0xff] %v731
                  %v733 = vld [vmem:[%s671 + $0x170] sm:$0xff]
                  %734 = vst [vmem:[%s672 + $0xf0] sm:$0xff] %v733
                  %v735 = vld [vmem:[%s671 + $0x178] sm:$0xff]
                  %736 = vst [vmem:[%s672 + $0xf8] sm:$0xff] %v735
                  %v737 = vld [vmem:[%s671 + $0x200] sm:$0xff]
                  %738 = vst [vmem:[%s672 + $0x100] sm:$0xff] %v737
                  %v739 = vld [vmem:[%s671 + $0x208] sm:$0xff]
                  %740 = vst [vmem:[%s672 + $0x108] sm:$0xff] %v739
                  %v741 = vld [vmem:[%s671 + $0x210] sm:$0xff]
                  %742 = vst [vmem:[%s672 + $0x110] sm:$0xff] %v741
                  %v743 = vld [vmem:[%s671 + $0x218] sm:$0xff]
                  %744 = vst [vmem:[%s672 + $0x118] sm:$0xff] %v743
                  %v745 = vld [vmem:[%s671 + $0x220] sm:$0xff]
                  %746 = vst [vmem:[%s672 + $0x120] sm:$0xff] %v745
                  %v747 = vld [vmem:[%s671 + $0x228] sm:$0xff]
                  %748 = vst [vmem:[%s672 + $0x128] sm:$0xff] %v747
                  %v749 = vld [vmem:[%s671 + $0x230] sm:$0xff]
                  %750 = vst [vmem:[%s672 + $0x130] sm:$0xff] %v749
                  %v751 = vld [vmem:[%s671 + $0x238] sm:$0xff]
                  %752 = vst [vmem:[%s672 + $0x138] sm:$0xff] %v751
                  %v753 = vld [vmem:[%s671 + $0x240] sm:$0xff]
                  %754 = vst [vmem:[%s672 + $0x140] sm:$0xff] %v753
                  %v755 = vld [vmem:[%s671 + $0x248] sm:$0xff]
                  %756 = vst [vmem:[%s672 + $0x148] sm:$0xff] %v755
                  %v757 = vld [vmem:[%s671 + $0x250] sm:$0xff]
                  %758 = vst [vmem:[%s672 + $0x150] sm:$0xff] %v757
                  %v759 = vld [vmem:[%s671 + $0x258] sm:$0xff]
                  %760 = vst [vmem:[%s672 + $0x158] sm:$0xff] %v759
                  %v761 = vld [vmem:[%s671 + $0x260] sm:$0xff]
                  %762 = vst [vmem:[%s672 + $0x160] sm:$0xff] %v761
                  %v763 = vld [vmem:[%s671 + $0x268] sm:$0xff]
                  %764 = vst [vmem:[%s672 + $0x168] sm:$0xff] %v763
                  %v765 = vld [vmem:[%s671 + $0x270] sm:$0xff]
                  %766 = vst [vmem:[%s672 + $0x170] sm:$0xff] %v765
                  %v767 = vld [vmem:[%s671 + $0x278] sm:$0xff]
                  %768 = vst [vmem:[%s672 + $0x178] sm:$0xff] %v767
                  %v769 = vld [vmem:[%s671 + $0x300] sm:$0xff]
                  %770 = vst [vmem:[%s672 + $0x180] sm:$0xff] %v769
                  %v771 = vld [vmem:[%s671 + $0x308] sm:$0xff]
                  %772 = vst [vmem:[%s672 + $0x188] sm:$0xff] %v771
                  %v773 = vld [vmem:[%s671 + $0x310] sm:$0xff]
                  %774 = vst [vmem:[%s672 + $0x190] sm:$0xff] %v773
                  %v775 = vld [vmem:[%s671 + $0x318] sm:$0xff]
                  %776 = vst [vmem:[%s672 + $0x198] sm:$0xff] %v775
                  %v777 = vld [vmem:[%s671 + $0x320] sm:$0xff]
                  %778 = vst [vmem:[%s672 + $0x1a0] sm:$0xff] %v777
                  %v779 = vld [vmem:[%s671 + $0x328] sm:$0xff]
                  %780 = vst [vmem:[%s672 + $0x1a8] sm:$0xff] %v779
                  %v781 = vld [vmem:[%s671 + $0x330] sm:$0xff]
                  %782 = vst [vmem:[%s672 + $0x1b0] sm:$0xff] %v781
                  %v783 = vld [vmem:[%s671 + $0x338] sm:$0xff]
                  %784 = vst [vmem:[%s672 + $0x1b8] sm:$0xff] %v783
                  %v785 = vld [vmem:[%s671 + $0x340] sm:$0xff]
                  %786 = vst [vmem:[%s672 + $0x1c0] sm:$0xff] %v785
                  %v787 = vld [vmem:[%s671 + $0x348] sm:$0xff]
                  %788 = vst [vmem:[%s672 + $0x1c8] sm:$0xff] %v787
                  %v789 = vld [vmem:[%s671 + $0x350] sm:$0xff]
                  %790 = vst [vmem:[%s672 + $0x1d0] sm:$0xff] %v789
                  %v791 = vld [vmem:[%s671 + $0x358] sm:$0xff]
                  %792 = vst [vmem:[%s672 + $0x1d8] sm:$0xff] %v791
                  %v793 = vld [vmem:[%s671 + $0x360] sm:$0xff]
                  %794 = vst [vmem:[%s672 + $0x1e0] sm:$0xff] %v793
                  %v795 = vld [vmem:[%s671 + $0x368] sm:$0xff]
                  %796 = vst [vmem:[%s672 + $0x1e8] sm:$0xff] %v795
                  %v797 = vld [vmem:[%s671 + $0x370] sm:$0xff]
                  %798 = vst [vmem:[%s672 + $0x1f0] sm:$0xff] %v797
                  %v799 = vld [vmem:[%s671 + $0x378] sm:$0xff]
                  %800 = vst [vmem:[%s672 + $0x1f8] sm:$0xff] %v799
                $region94: #{multi_head_enc_dec_attention.5} parent=88 // loop_footer
                  %s670 = sadd.s32 1, %s666
                $region95: #{multi_head_enc_dec_attention.5} parent=88 // loop_footer_branch
                  %665 = sbr.rel target = $region91
                $region96: #{multi_head_enc_dec_attention.5} parent=88 // loop_exit
                  _
              $region89: #{multi_head_enc_dec_attention.5} parent=73 // pred_fallthru
                _
              // Predicated region
              $region97: #{multi_head_enc_dec_attention.5} parent=73 // pred_check
                _
              $region98: #{multi_head_enc_dec_attention.5} parent=73 // pred_check_branch
                %802 = sbr.rel target = $region100
              $region99: #{multi_head_enc_dec_attention.5} parent=73 // pred_region
                _
              $region100: #{multi_head_enc_dec_attention.5} parent=73 // pred_fallthru
                _
            $region74: #{multi_head_enc_dec_attention.5} parent=69 // pred_fallthru
              _
            // Predicated region
            $region75: #{multi_head_enc_dec_attention.5} parent=69 // pred_check
              _
            $region76: #{multi_head_enc_dec_attention.5} parent=69 // pred_check_branch
              %525 = sbr.rel target = $region78
            $region77: #{multi_head_enc_dec_attention.5} parent=69 // pred_region
              loop: start=0, step=1, limit=1
              $region79: #{multi_head_enc_dec_attention.5} parent=77 // loop_pre_header
                _
              $region80: #{multi_head_enc_dec_attention.5} parent=77 // loop_header
                %s528 = sphi 0, %s532
                %p529 = scmp.ge.s32.totalorder %s528, 1
                %s533 = sphi %s519, %s519
                %s534 = sphi %s514, %s514
              $region81: #{multi_head_enc_dec_attention.5} parent=77 // loop_header_branch
                %531 = sbr.rel (%p529) target = $region85
              $region82: #{multi_head_enc_dec_attention.5} parent=77 // loop_body
                %v535 = vld [vmem:[%s533] sm:$0xff]
                %536 = vst [vmem:[%s534] sm:$0xff] %v535
                %v537 = vld [vmem:[%s533 + $0x8] sm:$0xff]
                %538 = vst [vmem:[%s534 + $0x8] sm:$0xff] %v537
                %v539 = vld [vmem:[%s533 + $0x10] sm:$0xff]
                %540 = vst [vmem:[%s534 + $0x10] sm:$0xff] %v539
                %v541 = vld [vmem:[%s533 + $0x18] sm:$0xff]
                %542 = vst [vmem:[%s534 + $0x18] sm:$0xff] %v541
                %v543 = vld [vmem:[%s533 + $0x20] sm:$0xff]
                %544 = vst [vmem:[%s534 + $0x20] sm:$0xff] %v543
                %v545 = vld [vmem:[%s533 + $0x28] sm:$0xff]
                %546 = vst [vmem:[%s534 + $0x28] sm:$0xff] %v545
                %v547 = vld [vmem:[%s533 + $0x30] sm:$0xff]
                %548 = vst [vmem:[%s534 + $0x30] sm:$0xff] %v547
                %v549 = vld [vmem:[%s533 + $0x38] sm:$0xff]
                %550 = vst [vmem:[%s534 + $0x38] sm:$0xff] %v549
                %v551 = vld [vmem:[%s533 + $0x40] sm:$0xff]
                %552 = vst [vmem:[%s534 + $0x40] sm:$0xff] %v551
                %v553 = vld [vmem:[%s533 + $0x48] sm:$0xff]
                %554 = vst [vmem:[%s534 + $0x48] sm:$0xff] %v553
                %v555 = vld [vmem:[%s533 + $0x50] sm:$0xff]
                %556 = vst [vmem:[%s534 + $0x50] sm:$0xff] %v555
                %v557 = vld [vmem:[%s533 + $0x58] sm:$0xff]
                %558 = vst [vmem:[%s534 + $0x58] sm:$0xff] %v557
                %v559 = vld [vmem:[%s533 + $0x60] sm:$0xff]
                %560 = vst [vmem:[%s534 + $0x60] sm:$0xff] %v559
                %v561 = vld [vmem:[%s533 + $0x68] sm:$0xff]
                %562 = vst [vmem:[%s534 + $0x68] sm:$0xff] %v561
                %v563 = vld [vmem:[%s533 + $0x70] sm:$0xff]
                %564 = vst [vmem:[%s534 + $0x70] sm:$0xff] %v563
                %v565 = vld [vmem:[%s533 + $0x78] sm:$0xff]
                %566 = vst [vmem:[%s534 + $0x78] sm:$0xff] %v565
                %v567 = vld [vmem:[%s533 + $0x100] sm:$0xff]
                %568 = vst [vmem:[%s534 + $0x80] sm:$0xff] %v567
                %v569 = vld [vmem:[%s533 + $0x108] sm:$0xff]
                %570 = vst [vmem:[%s534 + $0x88] sm:$0xff] %v569
                %v571 = vld [vmem:[%s533 + $0x110] sm:$0xff]
                %572 = vst [vmem:[%s534 + $0x90] sm:$0xff] %v571
                %v573 = vld [vmem:[%s533 + $0x118] sm:$0xff]
                %574 = vst [vmem:[%s534 + $0x98] sm:$0xff] %v573
                %v575 = vld [vmem:[%s533 + $0x120] sm:$0xff]
                %576 = vst [vmem:[%s534 + $0xa0] sm:$0xff] %v575
                %v577 = vld [vmem:[%s533 + $0x128] sm:$0xff]
                %578 = vst [vmem:[%s534 + $0xa8] sm:$0xff] %v577
                %v579 = vld [vmem:[%s533 + $0x130] sm:$0xff]
                %580 = vst [vmem:[%s534 + $0xb0] sm:$0xff] %v579
                %v581 = vld [vmem:[%s533 + $0x138] sm:$0xff]
                %582 = vst [vmem:[%s534 + $0xb8] sm:$0xff] %v581
                %v583 = vld [vmem:[%s533 + $0x140] sm:$0xff]
                %584 = vst [vmem:[%s534 + $0xc0] sm:$0xff] %v583
                %v585 = vld [vmem:[%s533 + $0x148] sm:$0xff]
                %586 = vst [vmem:[%s534 + $0xc8] sm:$0xff] %v585
                %v587 = vld [vmem:[%s533 + $0x150] sm:$0xff]
                %588 = vst [vmem:[%s534 + $0xd0] sm:$0xff] %v587
                %v589 = vld [vmem:[%s533 + $0x158] sm:$0xff]
                %590 = vst [vmem:[%s534 + $0xd8] sm:$0xff] %v589
                %v591 = vld [vmem:[%s533 + $0x160] sm:$0xff]
                %592 = vst [vmem:[%s534 + $0xe0] sm:$0xff] %v591
                %v593 = vld [vmem:[%s533 + $0x168] sm:$0xff]
                %594 = vst [vmem:[%s534 + $0xe8] sm:$0xff] %v593
                %v595 = vld [vmem:[%s533 + $0x170] sm:$0xff]
                %596 = vst [vmem:[%s534 + $0xf0] sm:$0xff] %v595
                %v597 = vld [vmem:[%s533 + $0x178] sm:$0xff]
                %598 = vst [vmem:[%s534 + $0xf8] sm:$0xff] %v597
                %v599 = vld [vmem:[%s533 + $0x200] sm:$0xff]
                %600 = vst [vmem:[%s534 + $0x100] sm:$0xff] %v599
                %v601 = vld [vmem:[%s533 + $0x208] sm:$0xff]
                %602 = vst [vmem:[%s534 + $0x108] sm:$0xff] %v601
                %v603 = vld [vmem:[%s533 + $0x210] sm:$0xff]
                %604 = vst [vmem:[%s534 + $0x110] sm:$0xff] %v603
                %v605 = vld [vmem:[%s533 + $0x218] sm:$0xff]
                %606 = vst [vmem:[%s534 + $0x118] sm:$0xff] %v605
                %v607 = vld [vmem:[%s533 + $0x220] sm:$0xff]
                %608 = vst [vmem:[%s534 + $0x120] sm:$0xff] %v607
                %v609 = vld [vmem:[%s533 + $0x228] sm:$0xff]
                %610 = vst [vmem:[%s534 + $0x128] sm:$0xff] %v609
                %v611 = vld [vmem:[%s533 + $0x230] sm:$0xff]
                %612 = vst [vmem:[%s534 + $0x130] sm:$0xff] %v611
                %v613 = vld [vmem:[%s533 + $0x238] sm:$0xff]
                %614 = vst [vmem:[%s534 + $0x138] sm:$0xff] %v613
                %v615 = vld [vmem:[%s533 + $0x240] sm:$0xff]
                %616 = vst [vmem:[%s534 + $0x140] sm:$0xff] %v615
                %v617 = vld [vmem:[%s533 + $0x248] sm:$0xff]
                %618 = vst [vmem:[%s534 + $0x148] sm:$0xff] %v617
                %v619 = vld [vmem:[%s533 + $0x250] sm:$0xff]
                %620 = vst [vmem:[%s534 + $0x150] sm:$0xff] %v619
                %v621 = vld [vmem:[%s533 + $0x258] sm:$0xff]
                %622 = vst [vmem:[%s534 + $0x158] sm:$0xff] %v621
                %v623 = vld [vmem:[%s533 + $0x260] sm:$0xff]
                %624 = vst [vmem:[%s534 + $0x160] sm:$0xff] %v623
                %v625 = vld [vmem:[%s533 + $0x268] sm:$0xff]
                %626 = vst [vmem:[%s534 + $0x168] sm:$0xff] %v625
                %v627 = vld [vmem:[%s533 + $0x270] sm:$0xff]
                %628 = vst [vmem:[%s534 + $0x170] sm:$0xff] %v627
                %v629 = vld [vmem:[%s533 + $0x278] sm:$0xff]
                %630 = vst [vmem:[%s534 + $0x178] sm:$0xff] %v629
                %v631 = vld [vmem:[%s533 + $0x300] sm:$0xff]
                %632 = vst [vmem:[%s534 + $0x180] sm:$0xff] %v631
                %v633 = vld [vmem:[%s533 + $0x308] sm:$0xff]
                %634 = vst [vmem:[%s534 + $0x188] sm:$0xff] %v633
                %v635 = vld [vmem:[%s533 + $0x310] sm:$0xff]
                %636 = vst [vmem:[%s534 + $0x190] sm:$0xff] %v635
                %v637 = vld [vmem:[%s533 + $0x318] sm:$0xff]
                %638 = vst [vmem:[%s534 + $0x198] sm:$0xff] %v637
                %v639 = vld [vmem:[%s533 + $0x320] sm:$0xff]
                %640 = vst [vmem:[%s534 + $0x1a0] sm:$0xff] %v639
                %v641 = vld [vmem:[%s533 + $0x328] sm:$0xff]
                %642 = vst [vmem:[%s534 + $0x1a8] sm:$0xff] %v641
                %v643 = vld [vmem:[%s533 + $0x330] sm:$0xff]
                %644 = vst [vmem:[%s534 + $0x1b0] sm:$0xff] %v643
                %v645 = vld [vmem:[%s533 + $0x338] sm:$0xff]
                %646 = vst [vmem:[%s534 + $0x1b8] sm:$0xff] %v645
                %v647 = vld [vmem:[%s533 + $0x340] sm:$0xff]
                %648 = vst [vmem:[%s534 + $0x1c0] sm:$0xff] %v647
                %v649 = vld [vmem:[%s533 + $0x348] sm:$0xff]
                %650 = vst [vmem:[%s534 + $0x1c8] sm:$0xff] %v649
                %v651 = vld [vmem:[%s533 + $0x350] sm:$0xff]
                %652 = vst [vmem:[%s534 + $0x1d0] sm:$0xff] %v651
                %v653 = vld [vmem:[%s533 + $0x358] sm:$0xff]
                %654 = vst [vmem:[%s534 + $0x1d8] sm:$0xff] %v653
                %v655 = vld [vmem:[%s533 + $0x360] sm:$0xff]
                %656 = vst [vmem:[%s534 + $0x1e0] sm:$0xff] %v655
                %v657 = vld [vmem:[%s533 + $0x368] sm:$0xff]
                %658 = vst [vmem:[%s534 + $0x1e8] sm:$0xff] %v657
                %v659 = vld [vmem:[%s533 + $0x370] sm:$0xff]
                %660 = vst [vmem:[%s534 + $0x1f0] sm:$0xff] %v659
                %v661 = vld [vmem:[%s533 + $0x378] sm:$0xff]
                %662 = vst [vmem:[%s534 + $0x1f8] sm:$0xff] %v661
              $region83: #{multi_head_enc_dec_attention.5} parent=77 // loop_footer
                %s532 = sadd.s32 1, %s528
              $region84: #{multi_head_enc_dec_attention.5} parent=77 // loop_footer_branch
                %527 = sbr.rel target = $region80
              $region85: #{multi_head_enc_dec_attention.5} parent=77 // loop_exit
                _
            $region78: #{multi_head_enc_dec_attention.5} parent=69 // pred_fallthru
              _
          $region70: #{multi_head_enc_dec_attention.5} parent=65 // pred_fallthru
            _
          %803 = vnop
        $region66: #{multi_head_enc_dec_attention.5} parent=23 // pred_fallthru
          _
        // Predicated region
        $region101: #{multi_head_enc_dec_attention.5} parent=23 // pred_check
          %p804 = pneg %p111
        $region102: #{multi_head_enc_dec_attention.5} parent=23 // pred_check_branch
          %806 = sbr.rel (%p804) target = $region104
        $region103: #{multi_head_enc_dec_attention.5} parent=23 // pred_region
          %s807 = sand.u32 %s101, 1
          %s808 = sand.u32 %s101, 1
          %s809 = smul.addr %s808, 512
          %s810 = scalar_lea.vmem [#allocation7], %s809
          %s811 = smul.u32 16, %s23
          %s812 = smul.addr %s21, 128
          %s813 = sadd.s32 %s811, %s812
          %s814 = smul.addr %s813, 8
          %s815 = scalar_lea.vmem %s2, %s814
          // Predicated region
          $region105: #{multi_head_enc_dec_attention.5} parent=103 // pred_check
            _
          $region106: #{multi_head_enc_dec_attention.5} parent=103 // pred_check_branch
            %817 = sbr.rel (0) target = $region108
          $region107: #{multi_head_enc_dec_attention.5} parent=103 // pred_region
            // Predicated region
            $region109: #{multi_head_enc_dec_attention.5} parent=107 // pred_check
              _
            $region110: #{multi_head_enc_dec_attention.5} parent=107 // pred_check_branch
              %819 = sbr.rel (0) target = $region112
            $region111: #{multi_head_enc_dec_attention.5} parent=107 // pred_region
              // Predicated region
              $region124: #{multi_head_enc_dec_attention.5} parent=111 // pred_check
                _
              $region125: #{multi_head_enc_dec_attention.5} parent=111 // pred_check_branch
                %960 = sbr.rel (0) target = $region127
              $region126: #{multi_head_enc_dec_attention.5} parent=111 // pred_region
                loop: start=0, step=1, limit=1
                $region128: #{multi_head_enc_dec_attention.5} parent=126 // loop_pre_header
                  _
                $region129: #{multi_head_enc_dec_attention.5} parent=126 // loop_header
                  %s962 = sphi 0, %s966
                  %p963 = scmp.ge.s32.totalorder %s962, 1
                  %s967 = sphi %s815, %s815
                  %s968 = sphi %s810, %s810
                $region130: #{multi_head_enc_dec_attention.5} parent=126 // loop_header_branch
                  %965 = sbr.rel (%p963) target = $region134
                $region131: #{multi_head_enc_dec_attention.5} parent=126 // loop_body
                  %v969 = vld [vmem:[%s967] sm:$0xff]
                  %970 = vst [vmem:[%s968] sm:$0xff] %v969
                  %v971 = vld [vmem:[%s967 + $0x8] sm:$0xff]
                  %972 = vst [vmem:[%s968 + $0x8] sm:$0xff] %v971
                  %v973 = vld [vmem:[%s967 + $0x10] sm:$0xff]
                  %974 = vst [vmem:[%s968 + $0x10] sm:$0xff] %v973
                  %v975 = vld [vmem:[%s967 + $0x18] sm:$0xff]
                  %976 = vst [vmem:[%s968 + $0x18] sm:$0xff] %v975
                  %v977 = vld [vmem:[%s967 + $0x20] sm:$0xff]
                  %978 = vst [vmem:[%s968 + $0x20] sm:$0xff] %v977
                  %v979 = vld [vmem:[%s967 + $0x28] sm:$0xff]
                  %980 = vst [vmem:[%s968 + $0x28] sm:$0xff] %v979
                  %v981 = vld [vmem:[%s967 + $0x30] sm:$0xff]
                  %982 = vst [vmem:[%s968 + $0x30] sm:$0xff] %v981
                  %v983 = vld [vmem:[%s967 + $0x38] sm:$0xff]
                  %984 = vst [vmem:[%s968 + $0x38] sm:$0xff] %v983
                  %v985 = vld [vmem:[%s967 + $0x40] sm:$0xff]
                  %986 = vst [vmem:[%s968 + $0x40] sm:$0xff] %v985
                  %v987 = vld [vmem:[%s967 + $0x48] sm:$0xff]
                  %988 = vst [vmem:[%s968 + $0x48] sm:$0xff] %v987
                  %v989 = vld [vmem:[%s967 + $0x50] sm:$0xff]
                  %990 = vst [vmem:[%s968 + $0x50] sm:$0xff] %v989
                  %v991 = vld [vmem:[%s967 + $0x58] sm:$0xff]
                  %992 = vst [vmem:[%s968 + $0x58] sm:$0xff] %v991
                  %v993 = vld [vmem:[%s967 + $0x60] sm:$0xff]
                  %994 = vst [vmem:[%s968 + $0x60] sm:$0xff] %v993
                  %v995 = vld [vmem:[%s967 + $0x68] sm:$0xff]
                  %996 = vst [vmem:[%s968 + $0x68] sm:$0xff] %v995
                  %v997 = vld [vmem:[%s967 + $0x70] sm:$0xff]
                  %998 = vst [vmem:[%s968 + $0x70] sm:$0xff] %v997
                  %v999 = vld [vmem:[%s967 + $0x78] sm:$0xff]
                  %1000 = vst [vmem:[%s968 + $0x78] sm:$0xff] %v999
                  %v1001 = vld [vmem:[%s967 + $0x100] sm:$0xff]
                  %1002 = vst [vmem:[%s968 + $0x80] sm:$0xff] %v1001
                  %v1003 = vld [vmem:[%s967 + $0x108] sm:$0xff]
                  %1004 = vst [vmem:[%s968 + $0x88] sm:$0xff] %v1003
                  %v1005 = vld [vmem:[%s967 + $0x110] sm:$0xff]
                  %1006 = vst [vmem:[%s968 + $0x90] sm:$0xff] %v1005
                  %v1007 = vld [vmem:[%s967 + $0x118] sm:$0xff]
                  %1008 = vst [vmem:[%s968 + $0x98] sm:$0xff] %v1007
                  %v1009 = vld [vmem:[%s967 + $0x120] sm:$0xff]
                  %1010 = vst [vmem:[%s968 + $0xa0] sm:$0xff] %v1009
                  %v1011 = vld [vmem:[%s967 + $0x128] sm:$0xff]
                  %1012 = vst [vmem:[%s968 + $0xa8] sm:$0xff] %v1011
                  %v1013 = vld [vmem:[%s967 + $0x130] sm:$0xff]
                  %1014 = vst [vmem:[%s968 + $0xb0] sm:$0xff] %v1013
                  %v1015 = vld [vmem:[%s967 + $0x138] sm:$0xff]
                  %1016 = vst [vmem:[%s968 + $0xb8] sm:$0xff] %v1015
                  %v1017 = vld [vmem:[%s967 + $0x140] sm:$0xff]
                  %1018 = vst [vmem:[%s968 + $0xc0] sm:$0xff] %v1017
                  %v1019 = vld [vmem:[%s967 + $0x148] sm:$0xff]
                  %1020 = vst [vmem:[%s968 + $0xc8] sm:$0xff] %v1019
                  %v1021 = vld [vmem:[%s967 + $0x150] sm:$0xff]
                  %1022 = vst [vmem:[%s968 + $0xd0] sm:$0xff] %v1021
                  %v1023 = vld [vmem:[%s967 + $0x158] sm:$0xff]
                  %1024 = vst [vmem:[%s968 + $0xd8] sm:$0xff] %v1023
                  %v1025 = vld [vmem:[%s967 + $0x160] sm:$0xff]
                  %1026 = vst [vmem:[%s968 + $0xe0] sm:$0xff] %v1025
                  %v1027 = vld [vmem:[%s967 + $0x168] sm:$0xff]
                  %1028 = vst [vmem:[%s968 + $0xe8] sm:$0xff] %v1027
                  %v1029 = vld [vmem:[%s967 + $0x170] sm:$0xff]
                  %1030 = vst [vmem:[%s968 + $0xf0] sm:$0xff] %v1029
                  %v1031 = vld [vmem:[%s967 + $0x178] sm:$0xff]
                  %1032 = vst [vmem:[%s968 + $0xf8] sm:$0xff] %v1031
                  %v1033 = vld [vmem:[%s967 + $0x200] sm:$0xff]
                  %1034 = vst [vmem:[%s968 + $0x100] sm:$0xff] %v1033
                  %v1035 = vld [vmem:[%s967 + $0x208] sm:$0xff]
                  %1036 = vst [vmem:[%s968 + $0x108] sm:$0xff] %v1035
                  %v1037 = vld [vmem:[%s967 + $0x210] sm:$0xff]
                  %1038 = vst [vmem:[%s968 + $0x110] sm:$0xff] %v1037
                  %v1039 = vld [vmem:[%s967 + $0x218] sm:$0xff]
                  %1040 = vst [vmem:[%s968 + $0x118] sm:$0xff] %v1039
                  %v1041 = vld [vmem:[%s967 + $0x220] sm:$0xff]
                  %1042 = vst [vmem:[%s968 + $0x120] sm:$0xff] %v1041
                  %v1043 = vld [vmem:[%s967 + $0x228] sm:$0xff]
                  %1044 = vst [vmem:[%s968 + $0x128] sm:$0xff] %v1043
                  %v1045 = vld [vmem:[%s967 + $0x230] sm:$0xff]
                  %1046 = vst [vmem:[%s968 + $0x130] sm:$0xff] %v1045
                  %v1047 = vld [vmem:[%s967 + $0x238] sm:$0xff]
                  %1048 = vst [vmem:[%s968 + $0x138] sm:$0xff] %v1047
                  %v1049 = vld [vmem:[%s967 + $0x240] sm:$0xff]
                  %1050 = vst [vmem:[%s968 + $0x140] sm:$0xff] %v1049
                  %v1051 = vld [vmem:[%s967 + $0x248] sm:$0xff]
                  %1052 = vst [vmem:[%s968 + $0x148] sm:$0xff] %v1051
                  %v1053 = vld [vmem:[%s967 + $0x250] sm:$0xff]
                  %1054 = vst [vmem:[%s968 + $0x150] sm:$0xff] %v1053
                  %v1055 = vld [vmem:[%s967 + $0x258] sm:$0xff]
                  %1056 = vst [vmem:[%s968 + $0x158] sm:$0xff] %v1055
                  %v1057 = vld [vmem:[%s967 + $0x260] sm:$0xff]
                  %1058 = vst [vmem:[%s968 + $0x160] sm:$0xff] %v1057
                  %v1059 = vld [vmem:[%s967 + $0x268] sm:$0xff]
                  %1060 = vst [vmem:[%s968 + $0x168] sm:$0xff] %v1059
                  %v1061 = vld [vmem:[%s967 + $0x270] sm:$0xff]
                  %1062 = vst [vmem:[%s968 + $0x170] sm:$0xff] %v1061
                  %v1063 = vld [vmem:[%s967 + $0x278] sm:$0xff]
                  %1064 = vst [vmem:[%s968 + $0x178] sm:$0xff] %v1063
                  %v1065 = vld [vmem:[%s967 + $0x300] sm:$0xff]
                  %1066 = vst [vmem:[%s968 + $0x180] sm:$0xff] %v1065
                  %v1067 = vld [vmem:[%s967 + $0x308] sm:$0xff]
                  %1068 = vst [vmem:[%s968 + $0x188] sm:$0xff] %v1067
                  %v1069 = vld [vmem:[%s967 + $0x310] sm:$0xff]
                  %1070 = vst [vmem:[%s968 + $0x190] sm:$0xff] %v1069
                  %v1071 = vld [vmem:[%s967 + $0x318] sm:$0xff]
                  %1072 = vst [vmem:[%s968 + $0x198] sm:$0xff] %v1071
                  %v1073 = vld [vmem:[%s967 + $0x320] sm:$0xff]
                  %1074 = vst [vmem:[%s968 + $0x1a0] sm:$0xff] %v1073
                  %v1075 = vld [vmem:[%s967 + $0x328] sm:$0xff]
                  %1076 = vst [vmem:[%s968 + $0x1a8] sm:$0xff] %v1075
                  %v1077 = vld [vmem:[%s967 + $0x330] sm:$0xff]
                  %1078 = vst [vmem:[%s968 + $0x1b0] sm:$0xff] %v1077
                  %v1079 = vld [vmem:[%s967 + $0x338] sm:$0xff]
                  %1080 = vst [vmem:[%s968 + $0x1b8] sm:$0xff] %v1079
                  %v1081 = vld [vmem:[%s967 + $0x340] sm:$0xff]
                  %1082 = vst [vmem:[%s968 + $0x1c0] sm:$0xff] %v1081
                  %v1083 = vld [vmem:[%s967 + $0x348] sm:$0xff]
                  %1084 = vst [vmem:[%s968 + $0x1c8] sm:$0xff] %v1083
                  %v1085 = vld [vmem:[%s967 + $0x350] sm:$0xff]
                  %1086 = vst [vmem:[%s968 + $0x1d0] sm:$0xff] %v1085
                  %v1087 = vld [vmem:[%s967 + $0x358] sm:$0xff]
                  %1088 = vst [vmem:[%s968 + $0x1d8] sm:$0xff] %v1087
                  %v1089 = vld [vmem:[%s967 + $0x360] sm:$0xff]
                  %1090 = vst [vmem:[%s968 + $0x1e0] sm:$0xff] %v1089
                  %v1091 = vld [vmem:[%s967 + $0x368] sm:$0xff]
                  %1092 = vst [vmem:[%s968 + $0x1e8] sm:$0xff] %v1091
                  %v1093 = vld [vmem:[%s967 + $0x370] sm:$0xff]
                  %1094 = vst [vmem:[%s968 + $0x1f0] sm:$0xff] %v1093
                  %v1095 = vld [vmem:[%s967 + $0x378] sm:$0xff]
                  %1096 = vst [vmem:[%s968 + $0x1f8] sm:$0xff] %v1095
                $region132: #{multi_head_enc_dec_attention.5} parent=126 // loop_footer
                  %s966 = sadd.s32 1, %s962
                $region133: #{multi_head_enc_dec_attention.5} parent=126 // loop_footer_branch
                  %961 = sbr.rel target = $region129
                $region134: #{multi_head_enc_dec_attention.5} parent=126 // loop_exit
                  _
              $region127: #{multi_head_enc_dec_attention.5} parent=111 // pred_fallthru
                _
              // Predicated region
              $region135: #{multi_head_enc_dec_attention.5} parent=111 // pred_check
                _
              $region136: #{multi_head_enc_dec_attention.5} parent=111 // pred_check_branch
                %1098 = sbr.rel target = $region138
              $region137: #{multi_head_enc_dec_attention.5} parent=111 // pred_region
                _
              $region138: #{multi_head_enc_dec_attention.5} parent=111 // pred_fallthru
                _
            $region112: #{multi_head_enc_dec_attention.5} parent=107 // pred_fallthru
              _
            // Predicated region
            $region113: #{multi_head_enc_dec_attention.5} parent=107 // pred_check
              _
            $region114: #{multi_head_enc_dec_attention.5} parent=107 // pred_check_branch
              %821 = sbr.rel target = $region116
            $region115: #{multi_head_enc_dec_attention.5} parent=107 // pred_region
              loop: start=0, step=1, limit=1
              $region117: #{multi_head_enc_dec_attention.5} parent=115 // loop_pre_header
                _
              $region118: #{multi_head_enc_dec_attention.5} parent=115 // loop_header
                %s824 = sphi 0, %s828
                %p825 = scmp.ge.s32.totalorder %s824, 1
                %s829 = sphi %s815, %s815
                %s830 = sphi %s810, %s810
              $region119: #{multi_head_enc_dec_attention.5} parent=115 // loop_header_branch
                %827 = sbr.rel (%p825) target = $region123
              $region120: #{multi_head_enc_dec_attention.5} parent=115 // loop_body
                %v831 = vld [vmem:[%s829] sm:$0xff]
                %832 = vst [vmem:[%s830] sm:$0xff] %v831
                %v833 = vld [vmem:[%s829 + $0x8] sm:$0xff]
                %834 = vst [vmem:[%s830 + $0x8] sm:$0xff] %v833
                %v835 = vld [vmem:[%s829 + $0x10] sm:$0xff]
                %836 = vst [vmem:[%s830 + $0x10] sm:$0xff] %v835
                %v837 = vld [vmem:[%s829 + $0x18] sm:$0xff]
                %838 = vst [vmem:[%s830 + $0x18] sm:$0xff] %v837
                %v839 = vld [vmem:[%s829 + $0x20] sm:$0xff]
                %840 = vst [vmem:[%s830 + $0x20] sm:$0xff] %v839
                %v841 = vld [vmem:[%s829 + $0x28] sm:$0xff]
                %842 = vst [vmem:[%s830 + $0x28] sm:$0xff] %v841
                %v843 = vld [vmem:[%s829 + $0x30] sm:$0xff]
                %844 = vst [vmem:[%s830 + $0x30] sm:$0xff] %v843
                %v845 = vld [vmem:[%s829 + $0x38] sm:$0xff]
                %846 = vst [vmem:[%s830 + $0x38] sm:$0xff] %v845
                %v847 = vld [vmem:[%s829 + $0x40] sm:$0xff]
                %848 = vst [vmem:[%s830 + $0x40] sm:$0xff] %v847
                %v849 = vld [vmem:[%s829 + $0x48] sm:$0xff]
                %850 = vst [vmem:[%s830 + $0x48] sm:$0xff] %v849
                %v851 = vld [vmem:[%s829 + $0x50] sm:$0xff]
                %852 = vst [vmem:[%s830 + $0x50] sm:$0xff] %v851
                %v853 = vld [vmem:[%s829 + $0x58] sm:$0xff]
                %854 = vst [vmem:[%s830 + $0x58] sm:$0xff] %v853
                %v855 = vld [vmem:[%s829 + $0x60] sm:$0xff]
                %856 = vst [vmem:[%s830 + $0x60] sm:$0xff] %v855
                %v857 = vld [vmem:[%s829 + $0x68] sm:$0xff]
                %858 = vst [vmem:[%s830 + $0x68] sm:$0xff] %v857
                %v859 = vld [vmem:[%s829 + $0x70] sm:$0xff]
                %860 = vst [vmem:[%s830 + $0x70] sm:$0xff] %v859
                %v861 = vld [vmem:[%s829 + $0x78] sm:$0xff]
                %862 = vst [vmem:[%s830 + $0x78] sm:$0xff] %v861
                %v863 = vld [vmem:[%s829 + $0x100] sm:$0xff]
                %864 = vst [vmem:[%s830 + $0x80] sm:$0xff] %v863
                %v865 = vld [vmem:[%s829 + $0x108] sm:$0xff]
                %866 = vst [vmem:[%s830 + $0x88] sm:$0xff] %v865
                %v867 = vld [vmem:[%s829 + $0x110] sm:$0xff]
                %868 = vst [vmem:[%s830 + $0x90] sm:$0xff] %v867
                %v869 = vld [vmem:[%s829 + $0x118] sm:$0xff]
                %870 = vst [vmem:[%s830 + $0x98] sm:$0xff] %v869
                %v871 = vld [vmem:[%s829 + $0x120] sm:$0xff]
                %872 = vst [vmem:[%s830 + $0xa0] sm:$0xff] %v871
                %v873 = vld [vmem:[%s829 + $0x128] sm:$0xff]
                %874 = vst [vmem:[%s830 + $0xa8] sm:$0xff] %v873
                %v875 = vld [vmem:[%s829 + $0x130] sm:$0xff]
                %876 = vst [vmem:[%s830 + $0xb0] sm:$0xff] %v875
                %v877 = vld [vmem:[%s829 + $0x138] sm:$0xff]
                %878 = vst [vmem:[%s830 + $0xb8] sm:$0xff] %v877
                %v879 = vld [vmem:[%s829 + $0x140] sm:$0xff]
                %880 = vst [vmem:[%s830 + $0xc0] sm:$0xff] %v879
                %v881 = vld [vmem:[%s829 + $0x148] sm:$0xff]
                %882 = vst [vmem:[%s830 + $0xc8] sm:$0xff] %v881
                %v883 = vld [vmem:[%s829 + $0x150] sm:$0xff]
                %884 = vst [vmem:[%s830 + $0xd0] sm:$0xff] %v883
                %v885 = vld [vmem:[%s829 + $0x158] sm:$0xff]
                %886 = vst [vmem:[%s830 + $0xd8] sm:$0xff] %v885
                %v887 = vld [vmem:[%s829 + $0x160] sm:$0xff]
                %888 = vst [vmem:[%s830 + $0xe0] sm:$0xff] %v887
                %v889 = vld [vmem:[%s829 + $0x168] sm:$0xff]
                %890 = vst [vmem:[%s830 + $0xe8] sm:$0xff] %v889
                %v891 = vld [vmem:[%s829 + $0x170] sm:$0xff]
                %892 = vst [vmem:[%s830 + $0xf0] sm:$0xff] %v891
                %v893 = vld [vmem:[%s829 + $0x178] sm:$0xff]
                %894 = vst [vmem:[%s830 + $0xf8] sm:$0xff] %v893
                %v895 = vld [vmem:[%s829 + $0x200] sm:$0xff]
                %896 = vst [vmem:[%s830 + $0x100] sm:$0xff] %v895
                %v897 = vld [vmem:[%s829 + $0x208] sm:$0xff]
                %898 = vst [vmem:[%s830 + $0x108] sm:$0xff] %v897
                %v899 = vld [vmem:[%s829 + $0x210] sm:$0xff]
                %900 = vst [vmem:[%s830 + $0x110] sm:$0xff] %v899
                %v901 = vld [vmem:[%s829 + $0x218] sm:$0xff]
                %902 = vst [vmem:[%s830 + $0x118] sm:$0xff] %v901
                %v903 = vld [vmem:[%s829 + $0x220] sm:$0xff]
                %904 = vst [vmem:[%s830 + $0x120] sm:$0xff] %v903
                %v905 = vld [vmem:[%s829 + $0x228] sm:$0xff]
                %906 = vst [vmem:[%s830 + $0x128] sm:$0xff] %v905
                %v907 = vld [vmem:[%s829 + $0x230] sm:$0xff]
                %908 = vst [vmem:[%s830 + $0x130] sm:$0xff] %v907
                %v909 = vld [vmem:[%s829 + $0x238] sm:$0xff]
                %910 = vst [vmem:[%s830 + $0x138] sm:$0xff] %v909
                %v911 = vld [vmem:[%s829 + $0x240] sm:$0xff]
                %912 = vst [vmem:[%s830 + $0x140] sm:$0xff] %v911
                %v913 = vld [vmem:[%s829 + $0x248] sm:$0xff]
                %914 = vst [vmem:[%s830 + $0x148] sm:$0xff] %v913
                %v915 = vld [vmem:[%s829 + $0x250] sm:$0xff]
                %916 = vst [vmem:[%s830 + $0x150] sm:$0xff] %v915
                %v917 = vld [vmem:[%s829 + $0x258] sm:$0xff]
                %918 = vst [vmem:[%s830 + $0x158] sm:$0xff] %v917
                %v919 = vld [vmem:[%s829 + $0x260] sm:$0xff]
                %920 = vst [vmem:[%s830 + $0x160] sm:$0xff] %v919
                %v921 = vld [vmem:[%s829 + $0x268] sm:$0xff]
                %922 = vst [vmem:[%s830 + $0x168] sm:$0xff] %v921
                %v923 = vld [vmem:[%s829 + $0x270] sm:$0xff]
                %924 = vst [vmem:[%s830 + $0x170] sm:$0xff] %v923
                %v925 = vld [vmem:[%s829 + $0x278] sm:$0xff]
                %926 = vst [vmem:[%s830 + $0x178] sm:$0xff] %v925
                %v927 = vld [vmem:[%s829 + $0x300] sm:$0xff]
                %928 = vst [vmem:[%s830 + $0x180] sm:$0xff] %v927
                %v929 = vld [vmem:[%s829 + $0x308] sm:$0xff]
                %930 = vst [vmem:[%s830 + $0x188] sm:$0xff] %v929
                %v931 = vld [vmem:[%s829 + $0x310] sm:$0xff]
                %932 = vst [vmem:[%s830 + $0x190] sm:$0xff] %v931
                %v933 = vld [vmem:[%s829 + $0x318] sm:$0xff]
                %934 = vst [vmem:[%s830 + $0x198] sm:$0xff] %v933
                %v935 = vld [vmem:[%s829 + $0x320] sm:$0xff]
                %936 = vst [vmem:[%s830 + $0x1a0] sm:$0xff] %v935
                %v937 = vld [vmem:[%s829 + $0x328] sm:$0xff]
                %938 = vst [vmem:[%s830 + $0x1a8] sm:$0xff] %v937
                %v939 = vld [vmem:[%s829 + $0x330] sm:$0xff]
                %940 = vst [vmem:[%s830 + $0x1b0] sm:$0xff] %v939
                %v941 = vld [vmem:[%s829 + $0x338] sm:$0xff]
                %942 = vst [vmem:[%s830 + $0x1b8] sm:$0xff] %v941
                %v943 = vld [vmem:[%s829 + $0x340] sm:$0xff]
                %944 = vst [vmem:[%s830 + $0x1c0] sm:$0xff] %v943
                %v945 = vld [vmem:[%s829 + $0x348] sm:$0xff]
                %946 = vst [vmem:[%s830 + $0x1c8] sm:$0xff] %v945
                %v947 = vld [vmem:[%s829 + $0x350] sm:$0xff]
                %948 = vst [vmem:[%s830 + $0x1d0] sm:$0xff] %v947
                %v949 = vld [vmem:[%s829 + $0x358] sm:$0xff]
                %950 = vst [vmem:[%s830 + $0x1d8] sm:$0xff] %v949
                %v951 = vld [vmem:[%s829 + $0x360] sm:$0xff]
                %952 = vst [vmem:[%s830 + $0x1e0] sm:$0xff] %v951
                %v953 = vld [vmem:[%s829 + $0x368] sm:$0xff]
                %954 = vst [vmem:[%s830 + $0x1e8] sm:$0xff] %v953
                %v955 = vld [vmem:[%s829 + $0x370] sm:$0xff]
                %956 = vst [vmem:[%s830 + $0x1f0] sm:$0xff] %v955
                %v957 = vld [vmem:[%s829 + $0x378] sm:$0xff]
                %958 = vst [vmem:[%s830 + $0x1f8] sm:$0xff] %v957
              $region121: #{multi_head_enc_dec_attention.5} parent=115 // loop_footer
                %s828 = sadd.s32 1, %s824
              $region122: #{multi_head_enc_dec_attention.5} parent=115 // loop_footer_branch
                %823 = sbr.rel target = $region118
              $region123: #{multi_head_enc_dec_attention.5} parent=115 // loop_exit
                _
            $region116: #{multi_head_enc_dec_attention.5} parent=107 // pred_fallthru
              _
          $region108: #{multi_head_enc_dec_attention.5} parent=103 // pred_fallthru
            _
          %1099 = vnop
        $region104: #{multi_head_enc_dec_attention.5} parent=23 // pred_fallthru
          _
      $region24: #{multi_head_enc_dec_attention.5} parent=5 // pred_fallthru
        _
      %p1100 = scmp.le.s32.totalorder 1, %s14
      %p1101 = scmp.lt.s32.totalorder %s14, 9
      %p1102 = pnand %p1100, %p1101
      %p1103 = pneg %p1102
      // Predicated region
      $region139: #{multi_head_enc_dec_attention.5} parent=5 // pred_check
        _
      $region140: #{multi_head_enc_dec_attention.5} parent=5 // pred_check_branch
        %1105 = sbr.rel (%p1102) target = $region142
      $region141: #{multi_head_enc_dec_attention.5} parent=5 // pred_region
        %s1106 = ssub.s32 %s14, 1
        %s1107 = sand.u32 %s48, 1
        %s1108 = sand.u32 %s48, 1
        %s1109 = smul.addr %s1108, 512
        %s1110 = scalar_lea.vmem [#allocation5], %s1109
        // Predicated region
        $region143: #{multi_head_enc_dec_attention.5} parent=141 // pred_check
          %p1111 = pneg %p61
        $region144: #{multi_head_enc_dec_attention.5} parent=141 // pred_check_branch
          %1113 = sbr.rel (%p1111) target = $region146
        $region145: #{multi_head_enc_dec_attention.5} parent=141 // pred_region
          _
        $region146: #{multi_head_enc_dec_attention.5} parent=141 // pred_fallthru
          _
        %s1114 = sand.u32 %s76, 1
        %s1115 = sand.u32 %s76, 1
        %s1116 = smul.addr %s1115, 512
        %s1117 = scalar_lea.vmem [#allocation6], %s1116
        // Predicated region
        $region147: #{multi_head_enc_dec_attention.5} parent=141 // pred_check
          %p1118 = pneg %p89
        $region148: #{multi_head_enc_dec_attention.5} parent=141 // pred_check_branch
          %1120 = sbr.rel (%p1118) target = $region150
        $region149: #{multi_head_enc_dec_attention.5} parent=141 // pred_region
          _
        $region150: #{multi_head_enc_dec_attention.5} parent=141 // pred_fallthru
          _
        %s1121 = sand.u32 %s104, 1
        %s1122 = sand.u32 %s104, 1
        %s1123 = smul.addr %s1122, 512
        %s1124 = scalar_lea.vmem [#allocation7], %s1123
        // Predicated region
        $region151: #{multi_head_enc_dec_attention.5} parent=141 // pred_check
          %p1125 = pneg %p117
        $region152: #{multi_head_enc_dec_attention.5} parent=141 // pred_check_branch
          %1127 = sbr.rel (%p1125) target = $region154
        $region153: #{multi_head_enc_dec_attention.5} parent=141 // pred_region
          _
        $region154: #{multi_head_enc_dec_attention.5} parent=141 // pred_fallthru
          _
        %s1128 = sand.u32 %s48, 1
        %s1129 = sand.u32 %s48, 1
        %s1130 = smul.addr %s1129, 512
        %s1131 = scalar_lea.vmem [#allocation5], %s1130
        %p1132 = pneg %p61
        %p1133 = pneg %p58
        %s1134 = sand.u32 %s76, 1
        %s1135 = sand.u32 %s76, 1
        %s1136 = smul.addr %s1135, 512
        %s1137 = scalar_lea.vmem [#allocation6], %s1136
        %p1138 = pneg %p89
        %p1139 = pneg %p86
        %s1140 = sand.u32 %s104, 1
        %s1141 = sand.u32 %s104, 1
        %s1142 = smul.addr %s1141, 512
        %s1143 = scalar_lea.vmem [#allocation7], %s1142
        %p1144 = pneg %p117
        %p1145 = pneg %p114
        %p1146 = pneg %p138
        %p1147 = pneg %p135
        %p1148 = pneg %p159
        %p1149 = pneg %p156
        %p1150 = pneg %p187
        %p1151 = pneg %p184
        %s1152 = sand.u32 %s174, 1
        %s1153 = scalar_lea.sflag [#allocation9], %s1152
        %s1154 = sand.u32 %s174, 1
        %s1155 = smul.addr %s1154, 128
        %s1156 = scalar_lea.vmem [#allocation8], %s1155
        %s1157 = smul.u32 16, %s25
        %s1158 = smul.u32 16, %s26
        %s1159 = smul.u32 16, %s26
        %s1160 = smul.u32 16, %s25
        %p1161 = scmp.eq.s32.totalorder %s26, 0
        // Predicated region
        $region155: #{multi_head_enc_dec_attention.5} parent=141 // pred_check
          %p1162 = pneg %p1161
        $region156: #{multi_head_enc_dec_attention.5} parent=141 // pred_check_branch
          %1164 = sbr.rel (%p1162) target = $region158
        $region157: #{multi_head_enc_dec_attention.5} parent=141 // pred_region
          %vm1165 = vcmask 7168
          %1166 = vst.msk [vmem:[#allocation2] sm:$0xff] %vm1165, -1e+30
          %1167 = vst.msk [vmem:[#allocation2 + $0x8] sm:$0xff] %vm1165, -1e+30
          %1168 = vst.msk [vmem:[#allocation2 + $0x10] sm:$0xff] %vm1165, -1e+30
          %1169 = vst.msk [vmem:[#allocation2 + $0x18] sm:$0xff] %vm1165, -1e+30
          %1170 = vst.msk [vmem:[#allocation2 + $0x20] sm:$0xff] %vm1165, -1e+30
          %1171 = vst.msk [vmem:[#allocation2 + $0x28] sm:$0xff] %vm1165, -1e+30
          %1172 = vst.msk [vmem:[#allocation2 + $0x30] sm:$0xff] %vm1165, -1e+30
          %1173 = vst.msk [vmem:[#allocation2 + $0x38] sm:$0xff] %vm1165, -1e+30
          %1174 = vst.msk [vmem:[#allocation2 + $0x40] sm:$0xff] %vm1165, -1e+30
          %1175 = vst.msk [vmem:[#allocation2 + $0x48] sm:$0xff] %vm1165, -1e+30
          %1176 = vst.msk [vmem:[#allocation2 + $0x50] sm:$0xff] %vm1165, -1e+30
          %1177 = vst.msk [vmem:[#allocation2 + $0x58] sm:$0xff] %vm1165, -1e+30
          %1178 = vst.msk [vmem:[#allocation2 + $0x60] sm:$0xff] %vm1165, -1e+30
          %1179 = vst.msk [vmem:[#allocation2 + $0x68] sm:$0xff] %vm1165, -1e+30
          %1180 = vst.msk [vmem:[#allocation2 + $0x70] sm:$0xff] %vm1165, -1e+30
          %1181 = vst.msk [vmem:[#allocation2 + $0x78] sm:$0xff] %vm1165, -1e+30
          %1182 = vst.msk [vmem:[#allocation2 + $0x80] sm:$0xff] %vm1165, -1e+30
          %1183 = vst.msk [vmem:[#allocation2 + $0x88] sm:$0xff] %vm1165, -1e+30
          %1184 = vst.msk [vmem:[#allocation2 + $0x90] sm:$0xff] %vm1165, -1e+30
          %1185 = vst.msk [vmem:[#allocation2 + $0x98] sm:$0xff] %vm1165, -1e+30
          %1186 = vst.msk [vmem:[#allocation2 + $0xa0] sm:$0xff] %vm1165, -1e+30
          %1187 = vst.msk [vmem:[#allocation2 + $0xa8] sm:$0xff] %vm1165, -1e+30
          %1188 = vst.msk [vmem:[#allocation2 + $0xb0] sm:$0xff] %vm1165, -1e+30
          %1189 = vst.msk [vmem:[#allocation2 + $0xb8] sm:$0xff] %vm1165, -1e+30
          %1190 = vst.msk [vmem:[#allocation2 + $0xc0] sm:$0xff] %vm1165, -1e+30
          %1191 = vst.msk [vmem:[#allocation2 + $0xc8] sm:$0xff] %vm1165, -1e+30
          %1192 = vst.msk [vmem:[#allocation2 + $0xd0] sm:$0xff] %vm1165, -1e+30
          %1193 = vst.msk [vmem:[#allocation2 + $0xd8] sm:$0xff] %vm1165, -1e+30
          %1194 = vst.msk [vmem:[#allocation2 + $0xe0] sm:$0xff] %vm1165, -1e+30
          %1195 = vst.msk [vmem:[#allocation2 + $0xe8] sm:$0xff] %vm1165, -1e+30
          %1196 = vst.msk [vmem:[#allocation2 + $0xf0] sm:$0xff] %vm1165, -1e+30
          %1197 = vst.msk [vmem:[#allocation2 + $0xf8] sm:$0xff] %vm1165, -1e+30
          %1198 = vst.msk [vmem:[#allocation2 + $0x100] sm:$0xff] %vm1165, -1e+30
          %1199 = vst.msk [vmem:[#allocation2 + $0x108] sm:$0xff] %vm1165, -1e+30
          %1200 = vst.msk [vmem:[#allocation2 + $0x110] sm:$0xff] %vm1165, -1e+30
          %1201 = vst.msk [vmem:[#allocation2 + $0x118] sm:$0xff] %vm1165, -1e+30
          %1202 = vst.msk [vmem:[#allocation2 + $0x120] sm:$0xff] %vm1165, -1e+30
          %1203 = vst.msk [vmem:[#allocation2 + $0x128] sm:$0xff] %vm1165, -1e+30
          %1204 = vst.msk [vmem:[#allocation2 + $0x130] sm:$0xff] %vm1165, -1e+30
          %1205 = vst.msk [vmem:[#allocation2 + $0x138] sm:$0xff] %vm1165, -1e+30
          %1206 = vst.msk [vmem:[#allocation2 + $0x140] sm:$0xff] %vm1165, -1e+30
          %1207 = vst.msk [vmem:[#allocation2 + $0x148] sm:$0xff] %vm1165, -1e+30
          %1208 = vst.msk [vmem:[#allocation2 + $0x150] sm:$0xff] %vm1165, -1e+30
          %1209 = vst.msk [vmem:[#allocation2 + $0x158] sm:$0xff] %vm1165, -1e+30
          %1210 = vst.msk [vmem:[#allocation2 + $0x160] sm:$0xff] %vm1165, -1e+30
          %1211 = vst.msk [vmem:[#allocation2 + $0x168] sm:$0xff] %vm1165, -1e+30
          %1212 = vst.msk [vmem:[#allocation2 + $0x170] sm:$0xff] %vm1165, -1e+30
          %1213 = vst.msk [vmem:[#allocation2 + $0x178] sm:$0xff] %vm1165, -1e+30
          %1214 = vst.msk [vmem:[#allocation2 + $0x180] sm:$0xff] %vm1165, -1e+30
          %1215 = vst.msk [vmem:[#allocation2 + $0x188] sm:$0xff] %vm1165, -1e+30
          %1216 = vst.msk [vmem:[#allocation2 + $0x190] sm:$0xff] %vm1165, -1e+30
          %1217 = vst.msk [vmem:[#allocation2 + $0x198] sm:$0xff] %vm1165, -1e+30
          %1218 = vst.msk [vmem:[#allocation2 + $0x1a0] sm:$0xff] %vm1165, -1e+30
          %1219 = vst.msk [vmem:[#allocation2 + $0x1a8] sm:$0xff] %vm1165, -1e+30
          %1220 = vst.msk [vmem:[#allocation2 + $0x1b0] sm:$0xff] %vm1165, -1e+30
          %1221 = vst.msk [vmem:[#allocation2 + $0x1b8] sm:$0xff] %vm1165, -1e+30
          %1222 = vst.msk [vmem:[#allocation2 + $0x1c0] sm:$0xff] %vm1165, -1e+30
          %1223 = vst.msk [vmem:[#allocation2 + $0x1c8] sm:$0xff] %vm1165, -1e+30
          %1224 = vst.msk [vmem:[#allocation2 + $0x1d0] sm:$0xff] %vm1165, -1e+30
          %1225 = vst.msk [vmem:[#allocation2 + $0x1d8] sm:$0xff] %vm1165, -1e+30
          %1226 = vst.msk [vmem:[#allocation2 + $0x1e0] sm:$0xff] %vm1165, -1e+30
          %1227 = vst.msk [vmem:[#allocation2 + $0x1e8] sm:$0xff] %vm1165, -1e+30
          %1228 = vst.msk [vmem:[#allocation2 + $0x1f0] sm:$0xff] %vm1165, -1e+30
          %1229 = vst.msk [vmem:[#allocation2 + $0x1f8] sm:$0xff] %vm1165, -1e+30
          %1230 = vst.msk [vmem:[#allocation3] sm:$0xff] %vm1165, 0.0
          %1231 = vst.msk [vmem:[#allocation3 + $0x8] sm:$0xff] %vm1165, 0.0
          %1232 = vst.msk [vmem:[#allocation3 + $0x10] sm:$0xff] %vm1165, 0.0
          %1233 = vst.msk [vmem:[#allocation3 + $0x18] sm:$0xff] %vm1165, 0.0
          %1234 = vst.msk [vmem:[#allocation3 + $0x20] sm:$0xff] %vm1165, 0.0
          %1235 = vst.msk [vmem:[#allocation3 + $0x28] sm:$0xff] %vm1165, 0.0
          %1236 = vst.msk [vmem:[#allocation3 + $0x30] sm:$0xff] %vm1165, 0.0
          %1237 = vst.msk [vmem:[#allocation3 + $0x38] sm:$0xff] %vm1165, 0.0
          %1238 = vst.msk [vmem:[#allocation3 + $0x40] sm:$0xff] %vm1165, 0.0
          %1239 = vst.msk [vmem:[#allocation3 + $0x48] sm:$0xff] %vm1165, 0.0
          %1240 = vst.msk [vmem:[#allocation3 + $0x50] sm:$0xff] %vm1165, 0.0
          %1241 = vst.msk [vmem:[#allocation3 + $0x58] sm:$0xff] %vm1165, 0.0
          %1242 = vst.msk [vmem:[#allocation3 + $0x60] sm:$0xff] %vm1165, 0.0
          %1243 = vst.msk [vmem:[#allocation3 + $0x68] sm:$0xff] %vm1165, 0.0
          %1244 = vst.msk [vmem:[#allocation3 + $0x70] sm:$0xff] %vm1165, 0.0
          %1245 = vst.msk [vmem:[#allocation3 + $0x78] sm:$0xff] %vm1165, 0.0
          %1246 = vst.msk [vmem:[#allocation3 + $0x80] sm:$0xff] %vm1165, 0.0
          %1247 = vst.msk [vmem:[#allocation3 + $0x88] sm:$0xff] %vm1165, 0.0
          %1248 = vst.msk [vmem:[#allocation3 + $0x90] sm:$0xff] %vm1165, 0.0
          %1249 = vst.msk [vmem:[#allocation3 + $0x98] sm:$0xff] %vm1165, 0.0
          %1250 = vst.msk [vmem:[#allocation3 + $0xa0] sm:$0xff] %vm1165, 0.0
          %1251 = vst.msk [vmem:[#allocation3 + $0xa8] sm:$0xff] %vm1165, 0.0
          %1252 = vst.msk [vmem:[#allocation3 + $0xb0] sm:$0xff] %vm1165, 0.0
          %1253 = vst.msk [vmem:[#allocation3 + $0xb8] sm:$0xff] %vm1165, 0.0
          %1254 = vst.msk [vmem:[#allocation3 + $0xc0] sm:$0xff] %vm1165, 0.0
          %1255 = vst.msk [vmem:[#allocation3 + $0xc8] sm:$0xff] %vm1165, 0.0
          %1256 = vst.msk [vmem:[#allocation3 + $0xd0] sm:$0xff] %vm1165, 0.0
          %1257 = vst.msk [vmem:[#allocation3 + $0xd8] sm:$0xff] %vm1165, 0.0
          %1258 = vst.msk [vmem:[#allocation3 + $0xe0] sm:$0xff] %vm1165, 0.0
          %1259 = vst.msk [vmem:[#allocation3 + $0xe8] sm:$0xff] %vm1165, 0.0
          %1260 = vst.msk [vmem:[#allocation3 + $0xf0] sm:$0xff] %vm1165, 0.0
          %1261 = vst.msk [vmem:[#allocation3 + $0xf8] sm:$0xff] %vm1165, 0.0
          %1262 = vst.msk [vmem:[#allocation3 + $0x100] sm:$0xff] %vm1165, 0.0
          %1263 = vst.msk [vmem:[#allocation3 + $0x108] sm:$0xff] %vm1165, 0.0
          %1264 = vst.msk [vmem:[#allocation3 + $0x110] sm:$0xff] %vm1165, 0.0
          %1265 = vst.msk [vmem:[#allocation3 + $0x118] sm:$0xff] %vm1165, 0.0
          %1266 = vst.msk [vmem:[#allocation3 + $0x120] sm:$0xff] %vm1165, 0.0
          %1267 = vst.msk [vmem:[#allocation3 + $0x128] sm:$0xff] %vm1165, 0.0
          %1268 = vst.msk [vmem:[#allocation3 + $0x130] sm:$0xff] %vm1165, 0.0
          %1269 = vst.msk [vmem:[#allocation3 + $0x138] sm:$0xff] %vm1165, 0.0
          %1270 = vst.msk [vmem:[#allocation3 + $0x140] sm:$0xff] %vm1165, 0.0
          %1271 = vst.msk [vmem:[#allocation3 + $0x148] sm:$0xff] %vm1165, 0.0
          %1272 = vst.msk [vmem:[#allocation3 + $0x150] sm:$0xff] %vm1165, 0.0
          %1273 = vst.msk [vmem:[#allocation3 + $0x158] sm:$0xff] %vm1165, 0.0
          %1274 = vst.msk [vmem:[#allocation3 + $0x160] sm:$0xff] %vm1165, 0.0
          %1275 = vst.msk [vmem:[#allocation3 + $0x168] sm:$0xff] %vm1165, 0.0
          %1276 = vst.msk [vmem:[#allocation3 + $0x170] sm:$0xff] %vm1165, 0.0
          %1277 = vst.msk [vmem:[#allocation3 + $0x178] sm:$0xff] %vm1165, 0.0
          %1278 = vst.msk [vmem:[#allocation3 + $0x180] sm:$0xff] %vm1165, 0.0
          %1279 = vst.msk [vmem:[#allocation3 + $0x188] sm:$0xff] %vm1165, 0.0
          %1280 = vst.msk [vmem:[#allocation3 + $0x190] sm:$0xff] %vm1165, 0.0
          %1281 = vst.msk [vmem:[#allocation3 + $0x198] sm:$0xff] %vm1165, 0.0
          %1282 = vst.msk [vmem:[#allocation3 + $0x1a0] sm:$0xff] %vm1165, 0.0
          %1283 = vst.msk [vmem:[#allocation3 + $0x1a8] sm:$0xff] %vm1165, 0.0
          %1284 = vst.msk [vmem:[#allocation3 + $0x1b0] sm:$0xff] %vm1165, 0.0
          %1285 = vst.msk [vmem:[#allocation3 + $0x1b8] sm:$0xff] %vm1165, 0.0
          %1286 = vst.msk [vmem:[#allocation3 + $0x1c0] sm:$0xff] %vm1165, 0.0
          %1287 = vst.msk [vmem:[#allocation3 + $0x1c8] sm:$0xff] %vm1165, 0.0
          %1288 = vst.msk [vmem:[#allocation3 + $0x1d0] sm:$0xff] %vm1165, 0.0
          %1289 = vst.msk [vmem:[#allocation3 + $0x1d8] sm:$0xff] %vm1165, 0.0
          %1290 = vst.msk [vmem:[#allocation3 + $0x1e0] sm:$0xff] %vm1165, 0.0
          %1291 = vst.msk [vmem:[#allocation3 + $0x1e8] sm:$0xff] %vm1165, 0.0
          %1292 = vst.msk [vmem:[#allocation3 + $0x1f0] sm:$0xff] %vm1165, 0.0
          %1293 = vst.msk [vmem:[#allocation3 + $0x1f8] sm:$0xff] %vm1165, 0.0
          %vm1294 = vcmask 261120
          %1295 = vst.msk [vmem:[#allocation4] sm:$0xff] %vm1294, 0.0
          %1296 = vst.msk [vmem:[#allocation4 + $0x8] sm:$0xff] %vm1294, 0.0
          %1297 = vst.msk [vmem:[#allocation4 + $0x10] sm:$0xff] %vm1294, 0.0
          %1298 = vst.msk [vmem:[#allocation4 + $0x18] sm:$0xff] %vm1294, 0.0
          %1299 = vst.msk [vmem:[#allocation4 + $0x20] sm:$0xff] %vm1294, 0.0
          %1300 = vst.msk [vmem:[#allocation4 + $0x28] sm:$0xff] %vm1294, 0.0
          %1301 = vst.msk [vmem:[#allocation4 + $0x30] sm:$0xff] %vm1294, 0.0
          %1302 = vst.msk [vmem:[#allocation4 + $0x38] sm:$0xff] %vm1294, 0.0
          %1303 = vst.msk [vmem:[#allocation4 + $0x40] sm:$0xff] %vm1294, 0.0
          %1304 = vst.msk [vmem:[#allocation4 + $0x48] sm:$0xff] %vm1294, 0.0
          %1305 = vst.msk [vmem:[#allocation4 + $0x50] sm:$0xff] %vm1294, 0.0
          %1306 = vst.msk [vmem:[#allocation4 + $0x58] sm:$0xff] %vm1294, 0.0
          %1307 = vst.msk [vmem:[#allocation4 + $0x60] sm:$0xff] %vm1294, 0.0
          %1308 = vst.msk [vmem:[#allocation4 + $0x68] sm:$0xff] %vm1294, 0.0
          %1309 = vst.msk [vmem:[#allocation4 + $0x70] sm:$0xff] %vm1294, 0.0
          %1310 = vst.msk [vmem:[#allocation4 + $0x78] sm:$0xff] %vm1294, 0.0
          %1311 = vst.msk [vmem:[#allocation4 + $0x80] sm:$0xff] %vm1294, 0.0
          %1312 = vst.msk [vmem:[#allocation4 + $0x88] sm:$0xff] %vm1294, 0.0
          %1313 = vst.msk [vmem:[#allocation4 + $0x90] sm:$0xff] %vm1294, 0.0
          %1314 = vst.msk [vmem:[#allocation4 + $0x98] sm:$0xff] %vm1294, 0.0
          %1315 = vst.msk [vmem:[#allocation4 + $0xa0] sm:$0xff] %vm1294, 0.0
          %1316 = vst.msk [vmem:[#allocation4 + $0xa8] sm:$0xff] %vm1294, 0.0
          %1317 = vst.msk [vmem:[#allocation4 + $0xb0] sm:$0xff] %vm1294, 0.0
          %1318 = vst.msk [vmem:[#allocation4 + $0xb8] sm:$0xff] %vm1294, 0.0
          %1319 = vst.msk [vmem:[#allocation4 + $0xc0] sm:$0xff] %vm1294, 0.0
          %1320 = vst.msk [vmem:[#allocation4 + $0xc8] sm:$0xff] %vm1294, 0.0
          %1321 = vst.msk [vmem:[#allocation4 + $0xd0] sm:$0xff] %vm1294, 0.0
          %1322 = vst.msk [vmem:[#allocation4 + $0xd8] sm:$0xff] %vm1294, 0.0
          %1323 = vst.msk [vmem:[#allocation4 + $0xe0] sm:$0xff] %vm1294, 0.0
          %1324 = vst.msk [vmem:[#allocation4 + $0xe8] sm:$0xff] %vm1294, 0.0
          %1325 = vst.msk [vmem:[#allocation4 + $0xf0] sm:$0xff] %vm1294, 0.0
          %1326 = vst.msk [vmem:[#allocation4 + $0xf8] sm:$0xff] %vm1294, 0.0
          %1327 = vst.msk [vmem:[#allocation4 + $0x100] sm:$0xff] %vm1294, 0.0
          %1328 = vst.msk [vmem:[#allocation4 + $0x108] sm:$0xff] %vm1294, 0.0
          %1329 = vst.msk [vmem:[#allocation4 + $0x110] sm:$0xff] %vm1294, 0.0
          %1330 = vst.msk [vmem:[#allocation4 + $0x118] sm:$0xff] %vm1294, 0.0
          %1331 = vst.msk [vmem:[#allocation4 + $0x120] sm:$0xff] %vm1294, 0.0
          %1332 = vst.msk [vmem:[#allocation4 + $0x128] sm:$0xff] %vm1294, 0.0
          %1333 = vst.msk [vmem:[#allocation4 + $0x130] sm:$0xff] %vm1294, 0.0
          %1334 = vst.msk [vmem:[#allocation4 + $0x138] sm:$0xff] %vm1294, 0.0
          %1335 = vst.msk [vmem:[#allocation4 + $0x140] sm:$0xff] %vm1294, 0.0
          %1336 = vst.msk [vmem:[#allocation4 + $0x148] sm:$0xff] %vm1294, 0.0
          %1337 = vst.msk [vmem:[#allocation4 + $0x150] sm:$0xff] %vm1294, 0.0
          %1338 = vst.msk [vmem:[#allocation4 + $0x158] sm:$0xff] %vm1294, 0.0
          %1339 = vst.msk [vmem:[#allocation4 + $0x160] sm:$0xff] %vm1294, 0.0
          %1340 = vst.msk [vmem:[#allocation4 + $0x168] sm:$0xff] %vm1294, 0.0
          %1341 = vst.msk [vmem:[#allocation4 + $0x170] sm:$0xff] %vm1294, 0.0
          %1342 = vst.msk [vmem:[#allocation4 + $0x178] sm:$0xff] %vm1294, 0.0
          %1343 = vst.msk [vmem:[#allocation4 + $0x180] sm:$0xff] %vm1294, 0.0
          %1344 = vst.msk [vmem:[#allocation4 + $0x188] sm:$0xff] %vm1294, 0.0
          %1345 = vst.msk [vmem:[#allocation4 + $0x190] sm:$0xff] %vm1294, 0.0
          %1346 = vst.msk [vmem:[#allocation4 + $0x198] sm:$0xff] %vm1294, 0.0
          %1347 = vst.msk [vmem:[#allocation4 + $0x1a0] sm:$0xff] %vm1294, 0.0
          %1348 = vst.msk [vmem:[#allocation4 + $0x1a8] sm:$0xff] %vm1294, 0.0
          %1349 = vst.msk [vmem:[#allocation4 + $0x1b0] sm:$0xff] %vm1294, 0.0
          %1350 = vst.msk [vmem:[#allocation4 + $0x1b8] sm:$0xff] %vm1294, 0.0
          %1351 = vst.msk [vmem:[#allocation4 + $0x1c0] sm:$0xff] %vm1294, 0.0
          %1352 = vst.msk [vmem:[#allocation4 + $0x1c8] sm:$0xff] %vm1294, 0.0
          %1353 = vst.msk [vmem:[#allocation4 + $0x1d0] sm:$0xff] %vm1294, 0.0
          %1354 = vst.msk [vmem:[#allocation4 + $0x1d8] sm:$0xff] %vm1294, 0.0
          %1355 = vst.msk [vmem:[#allocation4 + $0x1e0] sm:$0xff] %vm1294, 0.0
          %1356 = vst.msk [vmem:[#allocation4 + $0x1e8] sm:$0xff] %vm1294, 0.0
          %1357 = vst.msk [vmem:[#allocation4 + $0x1f0] sm:$0xff] %vm1294, 0.0
          %1358 = vst.msk [vmem:[#allocation4 + $0x1f8] sm:$0xff] %vm1294, 0.0
        $region158: #{multi_head_enc_dec_attention.5} parent=141 // pred_fallthru
          _
        %v1359 = vld [vmem:[%s1110] sm:$0xff]
        %v1360 = vld [vmem:[%s1110 + $0x8] sm:$0xff]
        %v1361 = vld [vmem:[%s1110 + $0x10] sm:$0xff]
        %v1362 = vld [vmem:[%s1110 + $0x18] sm:$0xff]
        %v1363 = vld [vmem:[%s1110 + $0x20] sm:$0xff]
        %v1364 = vld [vmem:[%s1110 + $0x28] sm:$0xff]
        %v1365 = vld [vmem:[%s1110 + $0x30] sm:$0xff]
        %v1366 = vld [vmem:[%s1110 + $0x38] sm:$0xff]
        %v1367 = vld [vmem:[%s1110 + $0x40] sm:$0xff]
        %v1368 = vld [vmem:[%s1110 + $0x48] sm:$0xff]
        %v1369 = vld [vmem:[%s1110 + $0x50] sm:$0xff]
        %v1370 = vld [vmem:[%s1110 + $0x58] sm:$0xff]
        %v1371 = vld [vmem:[%s1110 + $0x60] sm:$0xff]
        %v1372 = vld [vmem:[%s1110 + $0x68] sm:$0xff]
        %v1373 = vld [vmem:[%s1110 + $0x70] sm:$0xff]
        %v1374 = vld [vmem:[%s1110 + $0x78] sm:$0xff]
        %v1375 = vld [vmem:[%s1110 + $0x80] sm:$0xff]
        %v1376 = vld [vmem:[%s1110 + $0x88] sm:$0xff]
        %v1377 = vld [vmem:[%s1110 + $0x90] sm:$0xff]
        %v1378 = vld [vmem:[%s1110 + $0x98] sm:$0xff]
        %v1379 = vld [vmem:[%s1110 + $0xa0] sm:$0xff]
        %v1380 = vld [vmem:[%s1110 + $0xa8] sm:$0xff]
        %v1381 = vld [vmem:[%s1110 + $0xb0] sm:$0xff]
        %v1382 = vld [vmem:[%s1110 + $0xb8] sm:$0xff]
        %v1383 = vld [vmem:[%s1110 + $0xc0] sm:$0xff]
        %v1384 = vld [vmem:[%s1110 + $0xc8] sm:$0xff]
        %v1385 = vld [vmem:[%s1110 + $0xd0] sm:$0xff]
        %v1386 = vld [vmem:[%s1110 + $0xd8] sm:$0xff]
        %v1387 = vld [vmem:[%s1110 + $0xe0] sm:$0xff]
        %v1388 = vld [vmem:[%s1110 + $0xe8] sm:$0xff]
        %v1389 = vld [vmem:[%s1110 + $0xf0] sm:$0xff]
        %v1390 = vld [vmem:[%s1110 + $0xf8] sm:$0xff]
        %v1391 = vld [vmem:[%s1110 + $0x100] sm:$0xff]
        %v1392 = vld [vmem:[%s1110 + $0x108] sm:$0xff]
        %v1393 = vld [vmem:[%s1110 + $0x110] sm:$0xff]
        %v1394 = vld [vmem:[%s1110 + $0x118] sm:$0xff]
        %v1395 = vld [vmem:[%s1110 + $0x120] sm:$0xff]
        %v1396 = vld [vmem:[%s1110 + $0x128] sm:$0xff]
        %v1397 = vld [vmem:[%s1110 + $0x130] sm:$0xff]
        %v1398 = vld [vmem:[%s1110 + $0x138] sm:$0xff]
        %v1399 = vld [vmem:[%s1110 + $0x140] sm:$0xff]
        %v1400 = vld [vmem:[%s1110 + $0x148] sm:$0xff]
        %v1401 = vld [vmem:[%s1110 + $0x150] sm:$0xff]
        %v1402 = vld [vmem:[%s1110 + $0x158] sm:$0xff]
        %v1403 = vld [vmem:[%s1110 + $0x160] sm:$0xff]
        %v1404 = vld [vmem:[%s1110 + $0x168] sm:$0xff]
        %v1405 = vld [vmem:[%s1110 + $0x170] sm:$0xff]
        %v1406 = vld [vmem:[%s1110 + $0x178] sm:$0xff]
        %v1407 = vld [vmem:[%s1110 + $0x180] sm:$0xff]
        %v1408 = vld [vmem:[%s1110 + $0x188] sm:$0xff]
        %v1409 = vld [vmem:[%s1110 + $0x190] sm:$0xff]
        %v1410 = vld [vmem:[%s1110 + $0x198] sm:$0xff]
        %v1411 = vld [vmem:[%s1110 + $0x1a0] sm:$0xff]
        %v1412 = vld [vmem:[%s1110 + $0x1a8] sm:$0xff]
        %v1413 = vld [vmem:[%s1110 + $0x1b0] sm:$0xff]
        %v1414 = vld [vmem:[%s1110 + $0x1b8] sm:$0xff]
        %v1415 = vld [vmem:[%s1110 + $0x1c0] sm:$0xff]
        %v1416 = vld [vmem:[%s1110 + $0x1c8] sm:$0xff]
        %v1417 = vld [vmem:[%s1110 + $0x1d0] sm:$0xff]
        %v1418 = vld [vmem:[%s1110 + $0x1d8] sm:$0xff]
        %v1419 = vld [vmem:[%s1110 + $0x1e0] sm:$0xff]
        %v1420 = vld [vmem:[%s1110 + $0x1e8] sm:$0xff]
        %v1421 = vld [vmem:[%s1110 + $0x1f0] sm:$0xff]
        %v1422 = vld [vmem:[%s1110 + $0x1f8] sm:$0xff]
        %v1423 = vld [vmem:[%s1117] sm:$0xff]
        %v1424 = vld [vmem:[%s1117 + $0x8] sm:$0xff]
        %v1425 = vld [vmem:[%s1117 + $0x10] sm:$0xff]
        %v1426 = vld [vmem:[%s1117 + $0x18] sm:$0xff]
        %v1427 = vld [vmem:[%s1117 + $0x20] sm:$0xff]
        %v1428 = vld [vmem:[%s1117 + $0x28] sm:$0xff]
        %v1429 = vld [vmem:[%s1117 + $0x30] sm:$0xff]
        %v1430 = vld [vmem:[%s1117 + $0x38] sm:$0xff]
        %v1431 = vld [vmem:[%s1117 + $0x40] sm:$0xff]
        %v1432 = vld [vmem:[%s1117 + $0x48] sm:$0xff]
        %v1433 = vld [vmem:[%s1117 + $0x50] sm:$0xff]
        %v1434 = vld [vmem:[%s1117 + $0x58] sm:$0xff]
        %v1435 = vld [vmem:[%s1117 + $0x60] sm:$0xff]
        %v1436 = vld [vmem:[%s1117 + $0x68] sm:$0xff]
        %v1437 = vld [vmem:[%s1117 + $0x70] sm:$0xff]
        %v1438 = vld [vmem:[%s1117 + $0x78] sm:$0xff]
        %v1439 = vld [vmem:[%s1117 + $0x80] sm:$0xff]
        %v1440 = vld [vmem:[%s1117 + $0x88] sm:$0xff]
        %v1441 = vld [vmem:[%s1117 + $0x90] sm:$0xff]
        %v1442 = vld [vmem:[%s1117 + $0x98] sm:$0xff]
        %v1443 = vld [vmem:[%s1117 + $0xa0] sm:$0xff]
        %v1444 = vld [vmem:[%s1117 + $0xa8] sm:$0xff]
        %v1445 = vld [vmem:[%s1117 + $0xb0] sm:$0xff]
        %v1446 = vld [vmem:[%s1117 + $0xb8] sm:$0xff]
        %v1447 = vld [vmem:[%s1117 + $0xc0] sm:$0xff]
        %v1448 = vld [vmem:[%s1117 + $0xc8] sm:$0xff]
        %v1449 = vld [vmem:[%s1117 + $0xd0] sm:$0xff]
        %v1450 = vld [vmem:[%s1117 + $0xd8] sm:$0xff]
        %v1451 = vld [vmem:[%s1117 + $0xe0] sm:$0xff]
        %v1452 = vld [vmem:[%s1117 + $0xe8] sm:$0xff]
        %v1453 = vld [vmem:[%s1117 + $0xf0] sm:$0xff]
        %v1454 = vld [vmem:[%s1117 + $0xf8] sm:$0xff]
        %v1455 = vld [vmem:[%s1117 + $0x100] sm:$0xff]
        %v1456 = vld [vmem:[%s1117 + $0x108] sm:$0xff]
        %v1457 = vld [vmem:[%s1117 + $0x110] sm:$0xff]
        %v1458 = vld [vmem:[%s1117 + $0x118] sm:$0xff]
        %v1459 = vld [vmem:[%s1117 + $0x120] sm:$0xff]
        %v1460 = vld [vmem:[%s1117 + $0x128] sm:$0xff]
        %v1461 = vld [vmem:[%s1117 + $0x130] sm:$0xff]
        %v1462 = vld [vmem:[%s1117 + $0x138] sm:$0xff]
        %v1463 = vld [vmem:[%s1117 + $0x140] sm:$0xff]
        %v1464 = vld [vmem:[%s1117 + $0x148] sm:$0xff]
        %v1465 = vld [vmem:[%s1117 + $0x150] sm:$0xff]
        %v1466 = vld [vmem:[%s1117 + $0x158] sm:$0xff]
        %v1467 = vld [vmem:[%s1117 + $0x160] sm:$0xff]
        %v1468 = vld [vmem:[%s1117 + $0x168] sm:$0xff]
        %v1469 = vld [vmem:[%s1117 + $0x170] sm:$0xff]
        %v1470 = vld [vmem:[%s1117 + $0x178] sm:$0xff]
        %v1471 = vld [vmem:[%s1117 + $0x180] sm:$0xff]
        %v1472 = vld [vmem:[%s1117 + $0x188] sm:$0xff]
        %v1473 = vld [vmem:[%s1117 + $0x190] sm:$0xff]
        %v1474 = vld [vmem:[%s1117 + $0x198] sm:$0xff]
        %v1475 = vld [vmem:[%s1117 + $0x1a0] sm:$0xff]
        %v1476 = vld [vmem:[%s1117 + $0x1a8] sm:$0xff]
        %v1477 = vld [vmem:[%s1117 + $0x1b0] sm:$0xff]
        %v1478 = vld [vmem:[%s1117 + $0x1b8] sm:$0xff]
        %v1479 = vld [vmem:[%s1117 + $0x1c0] sm:$0xff]
        %v1480 = vld [vmem:[%s1117 + $0x1c8] sm:$0xff]
        %v1481 = vld [vmem:[%s1117 + $0x1d0] sm:$0xff]
        %v1482 = vld [vmem:[%s1117 + $0x1d8] sm:$0xff]
        %v1483 = vld [vmem:[%s1117 + $0x1e0] sm:$0xff]
        %v1484 = vld [vmem:[%s1117 + $0x1e8] sm:$0xff]
        %v1485 = vld [vmem:[%s1117 + $0x1f0] sm:$0xff]
        %v1486 = vld [vmem:[%s1117 + $0x1f8] sm:$0xff]
        %v1487 = vld [vmem:[%s1124] sm:$0xff]
        %v1488 = vld [vmem:[%s1124 + $0x8] sm:$0xff]
        %v1489 = vld [vmem:[%s1124 + $0x10] sm:$0xff]
        %v1490 = vld [vmem:[%s1124 + $0x18] sm:$0xff]
        %v1491 = vld [vmem:[%s1124 + $0x20] sm:$0xff]
        %v1492 = vld [vmem:[%s1124 + $0x28] sm:$0xff]
        %v1493 = vld [vmem:[%s1124 + $0x30] sm:$0xff]
        %v1494 = vld [vmem:[%s1124 + $0x38] sm:$0xff]
        %v1495 = vld [vmem:[%s1124 + $0x40] sm:$0xff]
        %v1496 = vld [vmem:[%s1124 + $0x48] sm:$0xff]
        %v1497 = vld [vmem:[%s1124 + $0x50] sm:$0xff]
        %v1498 = vld [vmem:[%s1124 + $0x58] sm:$0xff]
        %v1499 = vld [vmem:[%s1124 + $0x60] sm:$0xff]
        %v1500 = vld [vmem:[%s1124 + $0x68] sm:$0xff]
        %v1501 = vld [vmem:[%s1124 + $0x70] sm:$0xff]
        %v1502 = vld [vmem:[%s1124 + $0x78] sm:$0xff]
        %v1503 = vld [vmem:[%s1124 + $0x80] sm:$0xff]
        %v1504 = vld [vmem:[%s1124 + $0x88] sm:$0xff]
        %v1505 = vld [vmem:[%s1124 + $0x90] sm:$0xff]
        %v1506 = vld [vmem:[%s1124 + $0x98] sm:$0xff]
        %v1507 = vld [vmem:[%s1124 + $0xa0] sm:$0xff]
        %v1508 = vld [vmem:[%s1124 + $0xa8] sm:$0xff]
        %v1509 = vld [vmem:[%s1124 + $0xb0] sm:$0xff]
        %v1510 = vld [vmem:[%s1124 + $0xb8] sm:$0xff]
        %v1511 = vld [vmem:[%s1124 + $0xc0] sm:$0xff]
        %v1512 = vld [vmem:[%s1124 + $0xc8] sm:$0xff]
        %v1513 = vld [vmem:[%s1124 + $0xd0] sm:$0xff]
        %v1514 = vld [vmem:[%s1124 + $0xd8] sm:$0xff]
        %v1515 = vld [vmem:[%s1124 + $0xe0] sm:$0xff]
        %v1516 = vld [vmem:[%s1124 + $0xe8] sm:$0xff]
        %v1517 = vld [vmem:[%s1124 + $0xf0] sm:$0xff]
        %v1518 = vld [vmem:[%s1124 + $0xf8] sm:$0xff]
        %v1519 = vld [vmem:[%s1124 + $0x100] sm:$0xff]
        %v1520 = vld [vmem:[%s1124 + $0x108] sm:$0xff]
        %v1521 = vld [vmem:[%s1124 + $0x110] sm:$0xff]
        %v1522 = vld [vmem:[%s1124 + $0x118] sm:$0xff]
        %v1523 = vld [vmem:[%s1124 + $0x120] sm:$0xff]
        %v1524 = vld [vmem:[%s1124 + $0x128] sm:$0xff]
        %v1525 = vld [vmem:[%s1124 + $0x130] sm:$0xff]
        %v1526 = vld [vmem:[%s1124 + $0x138] sm:$0xff]
        %v1527 = vld [vmem:[%s1124 + $0x140] sm:$0xff]
        %v1528 = vld [vmem:[%s1124 + $0x148] sm:$0xff]
        %v1529 = vld [vmem:[%s1124 + $0x150] sm:$0xff]
        %v1530 = vld [vmem:[%s1124 + $0x158] sm:$0xff]
        %v1531 = vld [vmem:[%s1124 + $0x160] sm:$0xff]
        %v1532 = vld [vmem:[%s1124 + $0x168] sm:$0xff]
        %v1533 = vld [vmem:[%s1124 + $0x170] sm:$0xff]
        %v1534 = vld [vmem:[%s1124 + $0x178] sm:$0xff]
        %v1535 = vld [vmem:[%s1124 + $0x180] sm:$0xff]
        %v1536 = vld [vmem:[%s1124 + $0x188] sm:$0xff]
        %v1537 = vld [vmem:[%s1124 + $0x190] sm:$0xff]
        %v1538 = vld [vmem:[%s1124 + $0x198] sm:$0xff]
        %v1539 = vld [vmem:[%s1124 + $0x1a0] sm:$0xff]
        %v1540 = vld [vmem:[%s1124 + $0x1a8] sm:$0xff]
        %v1541 = vld [vmem:[%s1124 + $0x1b0] sm:$0xff]
        %v1542 = vld [vmem:[%s1124 + $0x1b8] sm:$0xff]
        %v1543 = vld [vmem:[%s1124 + $0x1c0] sm:$0xff]
        %v1544 = vld [vmem:[%s1124 + $0x1c8] sm:$0xff]
        %v1545 = vld [vmem:[%s1124 + $0x1d0] sm:$0xff]
        %v1546 = vld [vmem:[%s1124 + $0x1d8] sm:$0xff]
        %v1547 = vld [vmem:[%s1124 + $0x1e0] sm:$0xff]
        %v1548 = vld [vmem:[%s1124 + $0x1e8] sm:$0xff]
        %v1549 = vld [vmem:[%s1124 + $0x1f0] sm:$0xff]
        %v1550 = vld [vmem:[%s1124 + $0x1f8] sm:$0xff]
        %vm1551 = vcmask 261120
        %v1553 = vsel %vm1551, %v1359, 0
        %v1556 = vsel %vm1551, %v1360, 0
        %v1559 = vsel %vm1551, %v1361, 0
        %v1562 = vsel %vm1551, %v1362, 0
        %v1565 = vsel %vm1551, %v1363, 0
        %v1568 = vsel %vm1551, %v1364, 0
        %v1571 = vsel %vm1551, %v1365, 0
        %v1574 = vsel %vm1551, %v1366, 0
        %v1577 = vsel %vm1551, %v1367, 0
        %v1580 = vsel %vm1551, %v1368, 0
        %v1583 = vsel %vm1551, %v1369, 0
        %v1586 = vsel %vm1551, %v1370, 0
        %v1589 = vsel %vm1551, %v1371, 0
        %v1592 = vsel %vm1551, %v1372, 0
        %v1595 = vsel %vm1551, %v1373, 0
        %v1598 = vsel %vm1551, %v1374, 0
        %v1601 = vsel %vm1551, %v1423, 0
        %v1604 = vsel %vm1551, %v1424, 0
        %v1607 = vsel %vm1551, %v1425, 0
        %v1610 = vsel %vm1551, %v1426, 0
        %v1613 = vsel %vm1551, %v1427, 0
        %v1616 = vsel %vm1551, %v1428, 0
        %v1619 = vsel %vm1551, %v1429, 0
        %v1622 = vsel %vm1551, %v1430, 0
        %v1625 = vsel %vm1551, %v1431, 0
        %v1628 = vsel %vm1551, %v1432, 0
        %v1631 = vsel %vm1551, %v1433, 0
        %v1634 = vsel %vm1551, %v1434, 0
        %v1637 = vsel %vm1551, %v1435, 0
        %v1640 = vsel %vm1551, %v1436, 0
        %v1643 = vsel %vm1551, %v1437, 0
        %v1646 = vsel %vm1551, %v1438, 0
        %1648 = vmatprep.subr.mxu0 0.0
        %1649 = vmatpush1.xpose.msra.mxu0 %v1601
        %1650 = vmatprep.subr.mxu0 0.0
        %1651 = vmatpush1.xpose.msra.mxu0 %v1604
        %1652 = vmatprep.subr.mxu0 0.0
        %1653 = vmatpush1.xpose.msra.mxu0 %v1607
        %1654 = vmatprep.subr.mxu0 0.0
        %1655 = vmatpush1.xpose.msra.mxu0 %v1610
        %1656 = vmatprep.subr.mxu0 0.0
        %1657 = vmatpush1.xpose.msra.mxu0 %v1613
        %1658 = vmatprep.subr.mxu0 0.0
        %1659 = vmatpush1.xpose.msra.mxu0 %v1616
        %1660 = vmatprep.subr.mxu0 0.0
        %1661 = vmatpush1.xpose.msra.mxu0 %v1619
        %1662 = vmatprep.subr.mxu0 0.0
        %1663 = vmatpush1.xpose.msra.mxu0 %v1622
        %1664 = vmatprep.subr.mxu0 0.0
        %1665 = vmatpush1.xpose.msra.mxu0 %v1625
        %1666 = vmatprep.subr.mxu0 0.0
        %1667 = vmatpush1.xpose.msra.mxu0 %v1628
        %1668 = vmatprep.subr.mxu0 0.0
        %1669 = vmatpush1.xpose.msra.mxu0 %v1631
        %1670 = vmatprep.subr.mxu0 0.0
        %1671 = vmatpush1.xpose.msra.mxu0 %v1634
        %1672 = vmatprep.subr.mxu0 0.0
        %1673 = vmatpush1.xpose.msra.mxu0 %v1637
        %1674 = vmatprep.subr.mxu0 0.0
        %1675 = vmatpush1.xpose.msra.mxu0 %v1640
        %1676 = vmatprep.subr.mxu0 0.0
        %1677 = vmatpush1.xpose.msra.mxu0 %v1643
        %1678 = vmatprep.subr.mxu0 0.0
        %1679 = vmatpush1.xpose.msra.mxu0 %v1646
        %1680 = vmatprep.subr.mxu0 0.0
        %1681 = vmatpush1.xpose.msra.mxu0 0.0
        %1682 = vmatprep.subr.mxu0 0.0
        %1683 = vmatpush1.xpose.msra.mxu0 0.0
        %1684 = vmatprep.subr.mxu0 0.0
        %1685 = vmatpush1.xpose.msra.mxu0 0.0
        %1686 = vmatprep.subr.mxu0 0.0
        %1687 = vmatpush1.xpose.msra.mxu0 0.0
        %1688 = vmatprep.subr.mxu0 0.0
        %1689 = vmatpush1.xpose.msra.mxu0 0.0
        %1690 = vmatprep.subr.mxu0 0.0
        %1691 = vmatpush1.xpose.msra.mxu0 0.0
        %1692 = vmatprep.subr.mxu0 0.0
        %1693 = vmatpush1.xpose.msra.mxu0 0.0
        %1694 = vmatprep.subr.mxu0 0.0
        %1695 = vmatpush1.xpose.msra.mxu0 0.0
        %1696 = vmatprep.subr.mxu0 0.0
        %1697 = vmatpush1.xpose.msra.mxu0 0.0
        %1698 = vmatprep.subr.mxu0 0.0
        %1699 = vmatpush1.xpose.msra.mxu0 0.0
        %1700 = vmatprep.subr.mxu0 0.0
        %1701 = vmatpush1.xpose.msra.mxu0 0.0
        %1702 = vmatprep.subr.mxu0 0.0
        %1703 = vmatpush1.xpose.msra.mxu0 0.0
        %1704 = vmatprep.subr.mxu0 0.0
        %1705 = vmatpush1.xpose.msra.mxu0 0.0
        %1706 = vmatprep.subr.mxu0 0.0
        %1707 = vmatpush1.xpose.msra.mxu0 0.0
        %1708 = vmatprep.subr.mxu0 0.0
        %1709 = vmatpush1.xpose.msra.mxu0 0.0
        %1710 = vmatprep.subr.mxu0 0.0
        %1711 = vmatpush1.xpose.msra.mxu0 0.0
        %1712 = vmatprep.mubr.f32.mxu0 0.0
        %1713 = vmatmul.mubr.f32.gmra.mrb[0].mxu0 %v1553
        %v1714 = vpop.f32.mrb[0].mxu0
        %v1715 = vadd.f32 0.0, %v1714
        %v1716 = vpop.f32.mrb[0].mxu0
        %1717 = vmatprep.mubr.f32.mxu0 0.0
        %1718 = vmatmul.mubr.f32.gmra.mrb[0].mxu0 %v1556
        %v1719 = vpop.f32.mrb[0].mxu0
        %v1720 = vadd.f32 0.0, %v1719
        %v1721 = vpop.f32.mrb[0].mxu0
        %1722 = vmatprep.mubr.f32.mxu0 0.0
        %1723 = vmatmul.mubr.f32.gmra.mrb[0].mxu0 %v1559
        %v1724 = vpop.f32.mrb[0].mxu0
        %v1725 = vadd.f32 0.0, %v1724
        %v1726 = vpop.f32.mrb[0].mxu0
        %1727 = vmatprep.mubr.f32.mxu0 0.0
        %1728 = vmatmul.mubr.f32.gmra.mrb[0].mxu0 %v1562
        %v1729 = vpop.f32.mrb[0].mxu0
        %v1730 = vadd.f32 0.0, %v1729
        %v1731 = vpop.f32.mrb[0].mxu0
        %1732 = vmatprep.mubr.f32.mxu0 0.0
        %1733 = vmatmul.mubr.f32.gmra.mrb[0].mxu0 %v1565
        %v1734 = vpop.f32.mrb[0].mxu0
        %v1735 = vadd.f32 0.0, %v1734
        %v1736 = vpop.f32.mrb[0].mxu0
        %1737 = vmatprep.mubr.f32.mxu0 0.0
        %1738 = vmatmul.mubr.f32.gmra.mrb[0].mxu0 %v1568
        %v1739 = vpop.f32.mrb[0].mxu0
        %v1740 = vadd.f32 0.0, %v1739
        %v1741 = vpop.f32.mrb[0].mxu0
        %1742 = vmatprep.mubr.f32.mxu0 0.0
        %1743 = vmatmul.mubr.f32.gmra.mrb[0].mxu0 %v1571
        %v1744 = vpop.f32.mrb[0].mxu0
        %v1745 = vadd.f32 0.0, %v1744
        %v1746 = vpop.f32.mrb[0].mxu0
        %1747 = vmatprep.mubr.f32.mxu0 0.0
        %1748 = vmatmul.mubr.f32.gmra.mrb[0].mxu0 %v1574
        %v1749 = vpop.f32.mrb[0].mxu0
        %v1750 = vadd.f32 0.0, %v1749
        %v1751 = vpop.f32.mrb[0].mxu0
        %1752 = vmatprep.mubr.f32.mxu0 0.0
        %1753 = vmatmul.mubr.f32.gmra.mrb[0].mxu0 %v1577
        %v1754 = vpop.f32.mrb[0].mxu0
        %v1755 = vadd.f32 0.0, %v1754
        %v1756 = vpop.f32.mrb[0].mxu0
        %1757 = vmatprep.mubr.f32.mxu0 0.0
        %1758 = vmatmul.mubr.f32.gmra.mrb[0].mxu0 %v1580
        %v1759 = vpop.f32.mrb[0].mxu0
        %v1760 = vadd.f32 0.0, %v1759
        %v1761 = vpop.f32.mrb[0].mxu0
        %1762 = vmatprep.mubr.f32.mxu0 0.0
        %1763 = vmatmul.mubr.f32.gmra.mrb[0].mxu0 %v1583
        %v1764 = vpop.f32.mrb[0].mxu0
        %v1765 = vadd.f32 0.0, %v1764
        %v1766 = vpop.f32.mrb[0].mxu0
        %1767 = vmatprep.mubr.f32.mxu0 0.0
        %1768 = vmatmul.mubr.f32.gmra.mrb[0].mxu0 %v1586
        %v1769 = vpop.f32.mrb[0].mxu0
        %v1770 = vadd.f32 0.0, %v1769
        %v1771 = vpop.f32.mrb[0].mxu0
        %1772 = vmatprep.mubr.f32.mxu0 0.0
        %1773 = vmatmul.mubr.f32.gmra.mrb[0].mxu0 %v1589
        %v1774 = vpop.f32.mrb[0].mxu0
        %v1775 = vadd.f32 0.0, %v1774
        %v1776 = vpop.f32.mrb[0].mxu0
        %1777 = vmatprep.mubr.f32.mxu0 0.0
        %1778 = vmatmul.mubr.f32.gmra.mrb[0].mxu0 %v1592
        %v1779 = vpop.f32.mrb[0].mxu0
        %v1780 = vadd.f32 0.0, %v1779
        %v1781 = vpop.f32.mrb[0].mxu0
        %1782 = vmatprep.mubr.f32.mxu0 0.0
        %1783 = vmatmul.mubr.f32.gmra.mrb[0].mxu0 %v1595
        %v1784 = vpop.f32.mrb[0].mxu0
        %v1785 = vadd.f32 0.0, %v1784
        %v1786 = vpop.f32.mrb[0].mxu0
        %1787 = vmatprep.mubr.f32.mxu0 0.0
        %1788 = vmatmul.mubr.f32.gmra.mrb[0].mxu0 %v1598
        %v1789 = vpop.f32.mrb[0].mxu0
        %v1790 = vadd.f32 0.0, %v1789
        %v1791 = vpop.f32.mrb[0].mxu0
        %1792 = vdwg.mxu0
        %v1794 = vsel %vm1551, %v1375, 0
        %v1797 = vsel %vm1551, %v1376, 0
        %v1800 = vsel %vm1551, %v1377, 0
        %v1803 = vsel %vm1551, %v1378, 0
        %v1806 = vsel %vm1551, %v1379, 0
        %v1809 = vsel %vm1551, %v1380, 0
        %v1812 = vsel %vm1551, %v1381, 0
        %v1815 = vsel %vm1551, %v1382, 0
        %v1818 = vsel %vm1551, %v1383, 0
        %v1821 = vsel %vm1551, %v1384, 0
        %v1824 = vsel %vm1551, %v1385, 0
        %v1827 = vsel %vm1551, %v1386, 0
        %v1830 = vsel %vm1551, %v1387, 0
        %v1833 = vsel %vm1551, %v1388, 0
        %v1836 = vsel %vm1551, %v1389, 0
        %v1839 = vsel %vm1551, %v1390, 0
        %v1842 = vsel %vm1551, %v1439, 0
        %v1845 = vsel %vm1551, %v1440, 0
        %v1848 = vsel %vm1551, %v1441, 0
        %v1851 = vsel %vm1551, %v1442, 0
        %v1854 = vsel %vm1551, %v1443, 0
        %v1857 = vsel %vm1551, %v1444, 0
        %v1860 = vsel %vm1551, %v1445, 0
        %v1863 = vsel %vm1551, %v1446, 0
        %v1866 = vsel %vm1551, %v1447, 0
        %v1869 = vsel %vm1551, %v1448, 0
        %v1872 = vsel %vm1551, %v1449, 0
        %v1875 = vsel %vm1551, %v1450, 0
        %v1878 = vsel %vm1551, %v1451, 0
        %v1881 = vsel %vm1551, %v1452, 0
        %v1884 = vsel %vm1551, %v1453, 0
        %v1887 = vsel %vm1551, %v1454, 0
        %1889 = vmatprep.subr.mxu0 0.0
        %1890 = vmatpush1.xpose.msra.mxu0 %v1842
        %1891 = vmatprep.subr.mxu0 0.0
        %1892 = vmatpush1.xpose.msra.mxu0 %v1845
        %1893 = vmatprep.subr.mxu0 0.0
        %1894 = vmatpush1.xpose.msra.mxu0 %v1848
        %1895 = vmatprep.subr.mxu0 0.0
        %1896 = vmatpush1.xpose.msra.mxu0 %v1851
        %1897 = vmatprep.subr.mxu0 0.0
        %1898 = vmatpush1.xpose.msra.mxu0 %v1854
        %1899 = vmatprep.subr.mxu0 0.0
        %1900 = vmatpush1.xpose.msra.mxu0 %v1857
        %1901 = vmatprep.subr.mxu0 0.0
        %1902 = vmatpush1.xpose.msra.mxu0 %v1860
        %1903 = vmatprep.subr.mxu0 0.0
        %1904 = vmatpush1.xpose.msra.mxu0 %v1863
        %1905 = vmatprep.subr.mxu0 0.0
        %1906 = vmatpush1.xpose.msra.mxu0 %v1866
        %1907 = vmatprep.subr.mxu0 0.0
        %1908 = vmatpush1.xpose.msra.mxu0 %v1869
        %1909 = vmatprep.subr.mxu0 0.0
        %1910 = vmatpush1.xpose.msra.mxu0 %v1872
        %1911 = vmatprep.subr.mxu0 0.0
        %1912 = vmatpush1.xpose.msra.mxu0 %v1875
        %1913 = vmatprep.subr.mxu0 0.0
        %1914 = vmatpush1.xpose.msra.mxu0 %v1878
        %1915 = vmatprep.subr.mxu0 0.0
        %1916 = vmatpush1.xpose.msra.mxu0 %v1881
        %1917 = vmatprep.subr.mxu0 0.0
        %1918 = vmatpush1.xpose.msra.mxu0 %v1884
        %1919 = vmatprep.subr.mxu0 0.0
        %1920 = vmatpush1.xpose.msra.mxu0 %v1887
        %1921 = vmatprep.subr.mxu0 0.0
        %1922 = vmatpush1.xpose.msra.mxu0 0.0
        %1923 = vmatprep.subr.mxu0 0.0
        %1924 = vmatpush1.xpose.msra.mxu0 0.0
        %1925 = vmatprep.subr.mxu0 0.0
        %1926 = vmatpush1.xpose.msra.mxu0 0.0
        %1927 = vmatprep.subr.mxu0 0.0
        %1928 = vmatpush1.xpose.msra.mxu0 0.0
        %1929 = vmatprep.subr.mxu0 0.0
        %1930 = vmatpush1.xpose.msra.mxu0 0.0
        %1931 = vmatprep.subr.mxu0 0.0
        %1932 = vmatpush1.xpose.msra.mxu0 0.0
        %1933 = vmatprep.subr.mxu0 0.0
        %1934 = vmatpush1.xpose.msra.mxu0 0.0
        %1935 = vmatprep.subr.mxu0 0.0
        %1936 = vmatpush1.xpose.msra.mxu0 0.0
        %1937 = vmatprep.subr.mxu0 0.0
        %1938 = vmatpush1.xpose.msra.mxu0 0.0
        %1939 = vmatprep.subr.mxu0 0.0
        %1940 = vmatpush1.xpose.msra.mxu0 0.0
        %1941 = vmatprep.subr.mxu0 0.0
        %1942 = vmatpush1.xpose.msra.mxu0 0.0
        %1943 = vmatprep.subr.mxu0 0.0
        %1944 = vmatpush1.xpose.msra.mxu0 0.0
        %1945 = vmatprep.subr.mxu0 0.0
        %1946 = vmatpush1.xpose.msra.mxu0 0.0
        %1947 = vmatprep.subr.mxu0 0.0
        %1948 = vmatpush1.xpose.msra.mxu0 0.0
        %1949 = vmatprep.subr.mxu0 0.0
        %1950 = vmatpush1.xpose.msra.mxu0 0.0
        %1951 = vmatprep.subr.mxu0 0.0
        %1952 = vmatpush1.xpose.msra.mxu0 0.0
        %1953 = vmatprep.mubr.f32.mxu0 0.0
        %1954 = vmatmul.mubr.f32.gmra.mrb[0].mxu0 %v1794
        %v1955 = vpop.f32.mrb[0].mxu0
        %v1956 = vadd.f32 0.0, %v1955
        %v1957 = vpop.f32.mrb[0].mxu0
        %1958 = vmatprep.mubr.f32.mxu0 0.0
        %1959 = vmatmul.mubr.f32.gmra.mrb[0].mxu0 %v1797
        %v1960 = vpop.f32.mrb[0].mxu0
        %v1961 = vadd.f32 0.0, %v1960
        %v1962 = vpop.f32.mrb[0].mxu0
        %1963 = vmatprep.mubr.f32.mxu0 0.0
        %1964 = vmatmul.mubr.f32.gmra.mrb[0].mxu0 %v1800
        %v1965 = vpop.f32.mrb[0].mxu0
        %v1966 = vadd.f32 0.0, %v1965
        %v1967 = vpop.f32.mrb[0].mxu0
        %1968 = vmatprep.mubr.f32.mxu0 0.0
        %1969 = vmatmul.mubr.f32.gmra.mrb[0].mxu0 %v1803
        %v1970 = vpop.f32.mrb[0].mxu0
        %v1971 = vadd.f32 0.0, %v1970
        %v1972 = vpop.f32.mrb[0].mxu0
        %1973 = vmatprep.mubr.f32.mxu0 0.0
        %1974 = vmatmul.mubr.f32.gmra.mrb[0].mxu0 %v1806
        %v1975 = vpop.f32.mrb[0].mxu0
        %v1976 = vadd.f32 0.0, %v1975
        %v1977 = vpop.f32.mrb[0].mxu0
        %1978 = vmatprep.mubr.f32.mxu0 0.0
        %1979 = vmatmul.mubr.f32.gmra.mrb[0].mxu0 %v1809
        %v1980 = vpop.f32.mrb[0].mxu0
        %v1981 = vadd.f32 0.0, %v1980
        %v1982 = vpop.f32.mrb[0].mxu0
        %1983 = vmatprep.mubr.f32.mxu0 0.0
        %1984 = vmatmul.mubr.f32.gmra.mrb[0].mxu0 %v1812
        %v1985 = vpop.f32.mrb[0].mxu0
        %v1986 = vadd.f32 0.0, %v1985
        %v1987 = vpop.f32.mrb[0].mxu0
        %1988 = vmatprep.mubr.f32.mxu0 0.0
        %1989 = vmatmul.mubr.f32.gmra.mrb[0].mxu0 %v1815
        %v1990 = vpop.f32.mrb[0].mxu0
        %v1991 = vadd.f32 0.0, %v1990
        %v1992 = vpop.f32.mrb[0].mxu0
        %1993 = vmatprep.mubr.f32.mxu0 0.0
        %1994 = vmatmul.mubr.f32.gmra.mrb[0].mxu0 %v1818
        %v1995 = vpop.f32.mrb[0].mxu0
        %v1996 = vadd.f32 0.0, %v1995
        %v1997 = vpop.f32.mrb[0].mxu0
        %1998 = vmatprep.mubr.f32.mxu0 0.0
        %1999 = vmatmul.mubr.f32.gmra.mrb[0].mxu0 %v1821
        %v2000 = vpop.f32.mrb[0].mxu0
        %v2001 = vadd.f32 0.0, %v2000
        %v2002 = vpop.f32.mrb[0].mxu0
        %2003 = vmatprep.mubr.f32.mxu0 0.0
        %2004 = vmatmul.mubr.f32.gmra.mrb[0].mxu0 %v1824
        %v2005 = vpop.f32.mrb[0].mxu0
        %v2006 = vadd.f32 0.0, %v2005
        %v2007 = vpop.f32.mrb[0].mxu0
        %2008 = vmatprep.mubr.f32.mxu0 0.0
        %2009 = vmatmul.mubr.f32.gmra.mrb[0].mxu0 %v1827
        %v2010 = vpop.f32.mrb[0].mxu0
        %v2011 = vadd.f32 0.0, %v2010
        %v2012 = vpop.f32.mrb[0].mxu0
        %2013 = vmatprep.mubr.f32.mxu0 0.0
        %2014 = vmatmul.mubr.f32.gmra.mrb[0].mxu0 %v1830
        %v2015 = vpop.f32.mrb[0].mxu0
        %v2016 = vadd.f32 0.0, %v2015
        %v2017 = vpop.f32.mrb[0].mxu0
        %2018 = vmatprep.mubr.f32.mxu0 0.0
        %2019 = vmatmul.mubr.f32.gmra.mrb[0].mxu0 %v1833
        %v2020 = vpop.f32.mrb[0].mxu0
        %v2021 = vadd.f32 0.0, %v2020
        %v2022 = vpop.f32.mrb[0].mxu0
        %2023 = vmatprep.mubr.f32.mxu0 0.0
        %2024 = vmatmul.mubr.f32.gmra.mrb[0].mxu0 %v1836
        %v2025 = vpop.f32.mrb[0].mxu0
        %v2026 = vadd.f32 0.0, %v2025
        %v2027 = vpop.f32.mrb[0].mxu0
        %2028 = vmatprep.mubr.f32.mxu0 0.0
        %2029 = vmatmul.mubr.f32.gmra.mrb[0].mxu0 %v1839
        %v2030 = vpop.f32.mrb[0].mxu0
        %v2031 = vadd.f32 0.0, %v2030
        %v2032 = vpop.f32.mrb[0].mxu0
        %2033 = vdwg.mxu0
        %v2035 = vsel %vm1551, %v1391, 0
        %v2038 = vsel %vm1551, %v1392, 0
        %v2041 = vsel %vm1551, %v1393, 0
        %v2044 = vsel %vm1551, %v1394, 0
        %v2047 = vsel %vm1551, %v1395, 0
        %v2050 = vsel %vm1551, %v1396, 0
        %v2053 = vsel %vm1551, %v1397, 0
        %v2056 = vsel %vm1551, %v1398, 0
        %v2059 = vsel %vm1551, %v1399, 0
        %v2062 = vsel %vm1551, %v1400, 0
        %v2065 = vsel %vm1551, %v1401, 0
        %v2068 = vsel %vm1551, %v1402, 0
        %v2071 = vsel %vm1551, %v1403, 0
        %v2074 = vsel %vm1551, %v1404, 0
        %v2077 = vsel %vm1551, %v1405, 0
        %v2080 = vsel %vm1551, %v1406, 0
        %v2083 = vsel %vm1551, %v1455, 0
        %v2086 = vsel %vm1551, %v1456, 0
        %v2089 = vsel %vm1551, %v1457, 0
        %v2092 = vsel %vm1551, %v1458, 0
        %v2095 = vsel %vm1551, %v1459, 0
        %v2098 = vsel %vm1551, %v1460, 0
        %v2101 = vsel %vm1551, %v1461, 0
        %v2104 = vsel %vm1551, %v1462, 0
        %v2107 = vsel %vm1551, %v1463, 0
        %v2110 = vsel %vm1551, %v1464, 0
        %v2113 = vsel %vm1551, %v1465, 0
        %v2116 = vsel %vm1551, %v1466, 0
        %v2119 = vsel %vm1551, %v1467, 0
        %v2122 = vsel %vm1551, %v1468, 0
        %v2125 = vsel %vm1551, %v1469, 0
        %v2128 = vsel %vm1551, %v1470, 0
        %2130 = vmatprep.subr.mxu0 0.0
        %2131 = vmatpush1.xpose.msra.mxu0 %v2083
        %2132 = vmatprep.subr.mxu0 0.0
        %2133 = vmatpush1.xpose.msra.mxu0 %v2086
        %2134 = vmatprep.subr.mxu0 0.0
        %2135 = vmatpush1.xpose.msra.mxu0 %v2089
        %2136 = vmatprep.subr.mxu0 0.0
        %2137 = vmatpush1.xpose.msra.mxu0 %v2092
        %2138 = vmatprep.subr.mxu0 0.0
        %2139 = vmatpush1.xpose.msra.mxu0 %v2095
        %2140 = vmatprep.subr.mxu0 0.0
        %2141 = vmatpush1.xpose.msra.mxu0 %v2098
        %2142 = vmatprep.subr.mxu0 0.0
        %2143 = vmatpush1.xpose.msra.mxu0 %v2101
        %2144 = vmatprep.subr.mxu0 0.0
        %2145 = vmatpush1.xpose.msra.mxu0 %v2104
        %2146 = vmatprep.subr.mxu0 0.0
        %2147 = vmatpush1.xpose.msra.mxu0 %v2107
        %2148 = vmatprep.subr.mxu0 0.0
        %2149 = vmatpush1.xpose.msra.mxu0 %v2110
        %2150 = vmatprep.subr.mxu0 0.0
        %2151 = vmatpush1.xpose.msra.mxu0 %v2113
        %2152 = vmatprep.subr.mxu0 0.0
        %2153 = vmatpush1.xpose.msra.mxu0 %v2116
        %2154 = vmatprep.subr.mxu0 0.0
        %2155 = vmatpush1.xpose.msra.mxu0 %v2119
        %2156 = vmatprep.subr.mxu0 0.0
        %2157 = vmatpush1.xpose.msra.mxu0 %v2122
        %2158 = vmatprep.subr.mxu0 0.0
        %2159 = vmatpush1.xpose.msra.mxu0 %v2125
        %2160 = vmatprep.subr.mxu0 0.0
        %2161 = vmatpush1.xpose.msra.mxu0 %v2128
        %2162 = vmatprep.subr.mxu0 0.0
        %2163 = vmatpush1.xpose.msra.mxu0 0.0
        %2164 = vmatprep.subr.mxu0 0.0
        %2165 = vmatpush1.xpose.msra.mxu0 0.0
        %2166 = vmatprep.subr.mxu0 0.0
        %2167 = vmatpush1.xpose.msra.mxu0 0.0
        %2168 = vmatprep.subr.mxu0 0.0
        %2169 = vmatpush1.xpose.msra.mxu0 0.0
        %2170 = vmatprep.subr.mxu0 0.0
        %2171 = vmatpush1.xpose.msra.mxu0 0.0
        %2172 = vmatprep.subr.mxu0 0.0
        %2173 = vmatpush1.xpose.msra.mxu0 0.0
        %2174 = vmatprep.subr.mxu0 0.0
        %2175 = vmatpush1.xpose.msra.mxu0 0.0
        %2176 = vmatprep.subr.mxu0 0.0
        %2177 = vmatpush1.xpose.msra.mxu0 0.0
        %2178 = vmatprep.subr.mxu0 0.0
        %2179 = vmatpush1.xpose.msra.mxu0 0.0
        %2180 = vmatprep.subr.mxu0 0.0
        %2181 = vmatpush1.xpose.msra.mxu0 0.0
        %2182 = vmatprep.subr.mxu0 0.0
        %2183 = vmatpush1.xpose.msra.mxu0 0.0
        %2184 = vmatprep.subr.mxu0 0.0
        %2185 = vmatpush1.xpose.msra.mxu0 0.0
        %2186 = vmatprep.subr.mxu0 0.0
        %2187 = vmatpush1.xpose.msra.mxu0 0.0
        %2188 = vmatprep.subr.mxu0 0.0
        %2189 = vmatpush1.xpose.msra.mxu0 0.0
        %2190 = vmatprep.subr.mxu0 0.0
        %2191 = vmatpush1.xpose.msra.mxu0 0.0
        %2192 = vmatprep.subr.mxu0 0.0
        %2193 = vmatpush1.xpose.msra.mxu0 0.0
        %2194 = vmatprep.mubr.f32.mxu0 0.0
        %2195 = vmatmul.mubr.f32.gmra.mrb[0].mxu0 %v2035
        %v2196 = vpop.f32.mrb[0].mxu0
        %v2197 = vadd.f32 0.0, %v2196
        %v2198 = vpop.f32.mrb[0].mxu0
        %2199 = vmatprep.mubr.f32.mxu0 0.0
        %2200 = vmatmul.mubr.f32.gmra.mrb[0].mxu0 %v2038
        %v2201 = vpop.f32.mrb[0].mxu0
        %v2202 = vadd.f32 0.0, %v2201
        %v2203 = vpop.f32.mrb[0].mxu0
        %2204 = vmatprep.mubr.f32.mxu0 0.0
        %2205 = vmatmul.mubr.f32.gmra.mrb[0].mxu0 %v2041
        %v2206 = vpop.f32.mrb[0].mxu0
        %v2207 = vadd.f32 0.0, %v2206
        %v2208 = vpop.f32.mrb[0].mxu0
        %2209 = vmatprep.mubr.f32.mxu0 0.0
        %2210 = vmatmul.mubr.f32.gmra.mrb[0].mxu0 %v2044
        %v2211 = vpop.f32.mrb[0].mxu0
        %v2212 = vadd.f32 0.0, %v2211
        %v2213 = vpop.f32.mrb[0].mxu0
        %2214 = vmatprep.mubr.f32.mxu0 0.0
        %2215 = vmatmul.mubr.f32.gmra.mrb[0].mxu0 %v2047
        %v2216 = vpop.f32.mrb[0].mxu0
        %v2217 = vadd.f32 0.0, %v2216
        %v2218 = vpop.f32.mrb[0].mxu0
        %2219 = vmatprep.mubr.f32.mxu0 0.0
        %2220 = vmatmul.mubr.f32.gmra.mrb[0].mxu0 %v2050
        %v2221 = vpop.f32.mrb[0].mxu0
        %v2222 = vadd.f32 0.0, %v2221
        %v2223 = vpop.f32.mrb[0].mxu0
        %2224 = vmatprep.mubr.f32.mxu0 0.0
        %2225 = vmatmul.mubr.f32.gmra.mrb[0].mxu0 %v2053
        %v2226 = vpop.f32.mrb[0].mxu0
        %v2227 = vadd.f32 0.0, %v2226
        %v2228 = vpop.f32.mrb[0].mxu0
        %2229 = vmatprep.mubr.f32.mxu0 0.0
        %2230 = vmatmul.mubr.f32.gmra.mrb[0].mxu0 %v2056
        %v2231 = vpop.f32.mrb[0].mxu0
        %v2232 = vadd.f32 0.0, %v2231
        %v2233 = vpop.f32.mrb[0].mxu0
        %2234 = vmatprep.mubr.f32.mxu0 0.0
        %2235 = vmatmul.mubr.f32.gmra.mrb[0].mxu0 %v2059
        %v2236 = vpop.f32.mrb[0].mxu0
        %v2237 = vadd.f32 0.0, %v2236
        %v2238 = vpop.f32.mrb[0].mxu0
        %2239 = vmatprep.mubr.f32.mxu0 0.0
        %2240 = vmatmul.mubr.f32.gmra.mrb[0].mxu0 %v2062
        %v2241 = vpop.f32.mrb[0].mxu0
        %v2242 = vadd.f32 0.0, %v2241
        %v2243 = vpop.f32.mrb[0].mxu0
        %2244 = vmatprep.mubr.f32.mxu0 0.0
        %2245 = vmatmul.mubr.f32.gmra.mrb[0].mxu0 %v2065
        %v2246 = vpop.f32.mrb[0].mxu0
        %v2247 = vadd.f32 0.0, %v2246
        %v2248 = vpop.f32.mrb[0].mxu0
        %2249 = vmatprep.mubr.f32.mxu0 0.0
        %2250 = vmatmul.mubr.f32.gmra.mrb[0].mxu0 %v2068
        %v2251 = vpop.f32.mrb[0].mxu0
        %v2252 = vadd.f32 0.0, %v2251
        %v2253 = vpop.f32.mrb[0].mxu0
        %2254 = vmatprep.mubr.f32.mxu0 0.0
        %2255 = vmatmul.mubr.f32.gmra.mrb[0].mxu0 %v2071
        %v2256 = vpop.f32.mrb[0].mxu0
        %v2257 = vadd.f32 0.0, %v2256
        %v2258 = vpop.f32.mrb[0].mxu0
        %2259 = vmatprep.mubr.f32.mxu0 0.0
        %2260 = vmatmul.mubr.f32.gmra.mrb[0].mxu0 %v2074
        %v2261 = vpop.f32.mrb[0].mxu0
        %v2262 = vadd.f32 0.0, %v2261
        %v2263 = vpop.f32.mrb[0].mxu0
        %2264 = vmatprep.mubr.f32.mxu0 0.0
        %2265 = vmatmul.mubr.f32.gmra.mrb[0].mxu0 %v2077
        %v2266 = vpop.f32.mrb[0].mxu0
        %v2267 = vadd.f32 0.0, %v2266
        %v2268 = vpop.f32.mrb[0].mxu0
        %2269 = vmatprep.mubr.f32.mxu0 0.0
        %2270 = vmatmul.mubr.f32.gmra.mrb[0].mxu0 %v2080
        %v2271 = vpop.f32.mrb[0].mxu0
        %v2272 = vadd.f32 0.0, %v2271
        %v2273 = vpop.f32.mrb[0].mxu0
        %2274 = vdwg.mxu0
        %v2276 = vsel %vm1551, %v1407, 0
        %v2279 = vsel %vm1551, %v1408, 0
        %v2282 = vsel %vm1551, %v1409, 0
        %v2285 = vsel %vm1551, %v1410, 0
        %v2288 = vsel %vm1551, %v1411, 0
        %v2291 = vsel %vm1551, %v1412, 0
        %v2294 = vsel %vm1551, %v1413, 0
        %v2297 = vsel %vm1551, %v1414, 0
        %v2300 = vsel %vm1551, %v1415, 0
        %v2303 = vsel %vm1551, %v1416, 0
        %v2306 = vsel %vm1551, %v1417, 0
        %v2309 = vsel %vm1551, %v1418, 0
        %v2312 = vsel %vm1551, %v1419, 0
        %v2315 = vsel %vm1551, %v1420, 0
        %v2318 = vsel %vm1551, %v1421, 0
        %v2321 = vsel %vm1551, %v1422, 0
        %v2324 = vsel %vm1551, %v1471, 0
        %v2327 = vsel %vm1551, %v1472, 0
        %v2330 = vsel %vm1551, %v1473, 0
        %v2333 = vsel %vm1551, %v1474, 0
        %v2336 = vsel %vm1551, %v1475, 0
        %v2339 = vsel %vm1551, %v1476, 0
        %v2342 = vsel %vm1551, %v1477, 0
        %v2345 = vsel %vm1551, %v1478, 0
        %v2348 = vsel %vm1551, %v1479, 0
        %v2351 = vsel %vm1551, %v1480, 0
        %v2354 = vsel %vm1551, %v1481, 0
        %v2357 = vsel %vm1551, %v1482, 0
        %v2360 = vsel %vm1551, %v1483, 0
        %v2363 = vsel %vm1551, %v1484, 0
        %v2366 = vsel %vm1551, %v1485, 0
        %v2369 = vsel %vm1551, %v1486, 0
        %2371 = vmatprep.subr.mxu0 0.0
        %2372 = vmatpush1.xpose.msra.mxu0 %v2324
        %2373 = vmatprep.subr.mxu0 0.0
        %2374 = vmatpush1.xpose.msra.mxu0 %v2327
        %2375 = vmatprep.subr.mxu0 0.0
        %2376 = vmatpush1.xpose.msra.mxu0 %v2330
        %2377 = vmatprep.subr.mxu0 0.0
        %2378 = vmatpush1.xpose.msra.mxu0 %v2333
        %2379 = vmatprep.subr.mxu0 0.0
        %2380 = vmatpush1.xpose.msra.mxu0 %v2336
        %2381 = vmatprep.subr.mxu0 0.0
        %2382 = vmatpush1.xpose.msra.mxu0 %v2339
        %2383 = vmatprep.subr.mxu0 0.0
        %2384 = vmatpush1.xpose.msra.mxu0 %v2342
        %2385 = vmatprep.subr.mxu0 0.0
        %2386 = vmatpush1.xpose.msra.mxu0 %v2345
        %2387 = vmatprep.subr.mxu0 0.0
        %2388 = vmatpush1.xpose.msra.mxu0 %v2348
        %2389 = vmatprep.subr.mxu0 0.0
        %2390 = vmatpush1.xpose.msra.mxu0 %v2351
        %2391 = vmatprep.subr.mxu0 0.0
        %2392 = vmatpush1.xpose.msra.mxu0 %v2354
        %2393 = vmatprep.subr.mxu0 0.0
        %2394 = vmatpush1.xpose.msra.mxu0 %v2357
        %2395 = vmatprep.subr.mxu0 0.0
        %2396 = vmatpush1.xpose.msra.mxu0 %v2360
        %2397 = vmatprep.subr.mxu0 0.0
        %2398 = vmatpush1.xpose.msra.mxu0 %v2363
        %2399 = vmatprep.subr.mxu0 0.0
        %2400 = vmatpush1.xpose.msra.mxu0 %v2366
        %2401 = vmatprep.subr.mxu0 0.0
        %2402 = vmatpush1.xpose.msra.mxu0 %v2369
        %2403 = vmatprep.subr.mxu0 0.0
        %2404 = vmatpush1.xpose.msra.mxu0 0.0
        %2405 = vmatprep.subr.mxu0 0.0
        %2406 = vmatpush1.xpose.msra.mxu0 0.0
        %2407 = vmatprep.subr.mxu0 0.0
        %2408 = vmatpush1.xpose.msra.mxu0 0.0
        %2409 = vmatprep.subr.mxu0 0.0
        %2410 = vmatpush1.xpose.msra.mxu0 0.0
        %2411 = vmatprep.subr.mxu0 0.0
        %2412 = vmatpush1.xpose.msra.mxu0 0.0
        %2413 = vmatprep.subr.mxu0 0.0
        %2414 = vmatpush1.xpose.msra.mxu0 0.0
        %2415 = vmatprep.subr.mxu0 0.0
        %2416 = vmatpush1.xpose.msra.mxu0 0.0
        %2417 = vmatprep.subr.mxu0 0.0
        %2418 = vmatpush1.xpose.msra.mxu0 0.0
        %2419 = vmatprep.subr.mxu0 0.0
        %2420 = vmatpush1.xpose.msra.mxu0 0.0
        %2421 = vmatprep.subr.mxu0 0.0
        %2422 = vmatpush1.xpose.msra.mxu0 0.0
        %2423 = vmatprep.subr.mxu0 0.0
        %2424 = vmatpush1.xpose.msra.mxu0 0.0
        %2425 = vmatprep.subr.mxu0 0.0
        %2426 = vmatpush1.xpose.msra.mxu0 0.0
        %2427 = vmatprep.subr.mxu0 0.0
        %2428 = vmatpush1.xpose.msra.mxu0 0.0
        %2429 = vmatprep.subr.mxu0 0.0
        %2430 = vmatpush1.xpose.msra.mxu0 0.0
        %2431 = vmatprep.subr.mxu0 0.0
        %2432 = vmatpush1.xpose.msra.mxu0 0.0
        %2433 = vmatprep.subr.mxu0 0.0
        %2434 = vmatpush1.xpose.msra.mxu0 0.0
        %2435 = vmatprep.mubr.f32.mxu0 0.0
        %2436 = vmatmul.mubr.f32.gmra.mrb[0].mxu0 %v2276
        %v2437 = vpop.f32.mrb[0].mxu0
        %v2438 = vadd.f32 0.0, %v2437
        %v2439 = vpop.f32.mrb[0].mxu0
        %2440 = vmatprep.mubr.f32.mxu0 0.0
        %2441 = vmatmul.mubr.f32.gmra.mrb[0].mxu0 %v2279
        %v2442 = vpop.f32.mrb[0].mxu0
        %v2443 = vadd.f32 0.0, %v2442
        %v2444 = vpop.f32.mrb[0].mxu0
        %2445 = vmatprep.mubr.f32.mxu0 0.0
        %2446 = vmatmul.mubr.f32.gmra.mrb[0].mxu0 %v2282
        %v2447 = vpop.f32.mrb[0].mxu0
        %v2448 = vadd.f32 0.0, %v2447
        %v2449 = vpop.f32.mrb[0].mxu0
        %2450 = vmatprep.mubr.f32.mxu0 0.0
        %2451 = vmatmul.mubr.f32.gmra.mrb[0].mxu0 %v2285
        %v2452 = vpop.f32.mrb[0].mxu0
        %v2453 = vadd.f32 0.0, %v2452
        %v2454 = vpop.f32.mrb[0].mxu0
        %2455 = vmatprep.mubr.f32.mxu0 0.0
        %2456 = vmatmul.mubr.f32.gmra.mrb[0].mxu0 %v2288
        %v2457 = vpop.f32.mrb[0].mxu0
        %v2458 = vadd.f32 0.0, %v2457
        %v2459 = vpop.f32.mrb[0].mxu0
        %2460 = vmatprep.mubr.f32.mxu0 0.0
        %2461 = vmatmul.mubr.f32.gmra.mrb[0].mxu0 %v2291
        %v2462 = vpop.f32.mrb[0].mxu0
        %v2463 = vadd.f32 0.0, %v2462
        %v2464 = vpop.f32.mrb[0].mxu0
        %2465 = vmatprep.mubr.f32.mxu0 0.0
        %2466 = vmatmul.mubr.f32.gmra.mrb[0].mxu0 %v2294
        %v2467 = vpop.f32.mrb[0].mxu0
        %v2468 = vadd.f32 0.0, %v2467
        %v2469 = vpop.f32.mrb[0].mxu0
        %2470 = vmatprep.mubr.f32.mxu0 0.0
        %2471 = vmatmul.mubr.f32.gmra.mrb[0].mxu0 %v2297
        %v2472 = vpop.f32.mrb[0].mxu0
        %v2473 = vadd.f32 0.0, %v2472
        %v2474 = vpop.f32.mrb[0].mxu0
        %2475 = vmatprep.mubr.f32.mxu0 0.0
        %2476 = vmatmul.mubr.f32.gmra.mrb[0].mxu0 %v2300
        %v2477 = vpop.f32.mrb[0].mxu0
        %v2478 = vadd.f32 0.0, %v2477
        %v2479 = vpop.f32.mrb[0].mxu0
        %2480 = vmatprep.mubr.f32.mxu0 0.0
        %2481 = vmatmul.mubr.f32.gmra.mrb[0].mxu0 %v2303
        %v2482 = vpop.f32.mrb[0].mxu0
        %v2483 = vadd.f32 0.0, %v2482
        %v2484 = vpop.f32.mrb[0].mxu0
        %2485 = vmatprep.mubr.f32.mxu0 0.0
        %2486 = vmatmul.mubr.f32.gmra.mrb[0].mxu0 %v2306
        %v2487 = vpop.f32.mrb[0].mxu0
        %v2488 = vadd.f32 0.0, %v2487
        %v2489 = vpop.f32.mrb[0].mxu0
        %2490 = vmatprep.mubr.f32.mxu0 0.0
        %2491 = vmatmul.mubr.f32.gmra.mrb[0].mxu0 %v2309
        %v2492 = vpop.f32.mrb[0].mxu0
        %v2493 = vadd.f32 0.0, %v2492
        %v2494 = vpop.f32.mrb[0].mxu0
        %2495 = vmatprep.mubr.f32.mxu0 0.0
        %2496 = vmatmul.mubr.f32.gmra.mrb[0].mxu0 %v2312
        %v2497 = vpop.f32.mrb[0].mxu0
        %v2498 = vadd.f32 0.0, %v2497
        %v2499 = vpop.f32.mrb[0].mxu0
        %2500 = vmatprep.mubr.f32.mxu0 0.0
        %2501 = vmatmul.mubr.f32.gmra.mrb[0].mxu0 %v2315
        %v2502 = vpop.f32.mrb[0].mxu0
        %v2503 = vadd.f32 0.0, %v2502
        %v2504 = vpop.f32.mrb[0].mxu0
        %2505 = vmatprep.mubr.f32.mxu0 0.0
        %2506 = vmatmul.mubr.f32.gmra.mrb[0].mxu0 %v2318
        %v2507 = vpop.f32.mrb[0].mxu0
        %v2508 = vadd.f32 0.0, %v2507
        %v2509 = vpop.f32.mrb[0].mxu0
        %2510 = vmatprep.mubr.f32.mxu0 0.0
        %2511 = vmatmul.mubr.f32.gmra.mrb[0].mxu0 %v2321
        %v2512 = vpop.f32.mrb[0].mxu0
        %v2513 = vadd.f32 0.0, %v2512
        %v2514 = vpop.f32.mrb[0].mxu0
        %2515 = vdwg.mxu0
        %v2516 = vld [vmem:[#allocation2] sm:$0xff]
        %v2517 = vld [vmem:[#allocation2 + $0x8] sm:$0xff]
        %v2518 = vld [vmem:[#allocation2 + $0x10] sm:$0xff]
        %v2519 = vld [vmem:[#allocation2 + $0x18] sm:$0xff]
        %v2520 = vld [vmem:[#allocation2 + $0x20] sm:$0xff]
        %v2521 = vld [vmem:[#allocation2 + $0x28] sm:$0xff]
        %v2522 = vld [vmem:[#allocation2 + $0x30] sm:$0xff]
        %v2523 = vld [vmem:[#allocation2 + $0x38] sm:$0xff]
        %v2524 = vld [vmem:[#allocation2 + $0x40] sm:$0xff]
        %v2525 = vld [vmem:[#allocation2 + $0x48] sm:$0xff]
        %v2526 = vld [vmem:[#allocation2 + $0x50] sm:$0xff]
        %v2527 = vld [vmem:[#allocation2 + $0x58] sm:$0xff]
        %v2528 = vld [vmem:[#allocation2 + $0x60] sm:$0xff]
        %v2529 = vld [vmem:[#allocation2 + $0x68] sm:$0xff]
        %v2530 = vld [vmem:[#allocation2 + $0x70] sm:$0xff]
        %v2531 = vld [vmem:[#allocation2 + $0x78] sm:$0xff]
        %v2532 = vld [vmem:[#allocation2 + $0x80] sm:$0xff]
        %v2533 = vld [vmem:[#allocation2 + $0x88] sm:$0xff]
        %v2534 = vld [vmem:[#allocation2 + $0x90] sm:$0xff]
        %v2535 = vld [vmem:[#allocation2 + $0x98] sm:$0xff]
        %v2536 = vld [vmem:[#allocation2 + $0xa0] sm:$0xff]
        %v2537 = vld [vmem:[#allocation2 + $0xa8] sm:$0xff]
        %v2538 = vld [vmem:[#allocation2 + $0xb0] sm:$0xff]
        %v2539 = vld [vmem:[#allocation2 + $0xb8] sm:$0xff]
        %v2540 = vld [vmem:[#allocation2 + $0xc0] sm:$0xff]
        %v2541 = vld [vmem:[#allocation2 + $0xc8] sm:$0xff]
        %v2542 = vld [vmem:[#allocation2 + $0xd0] sm:$0xff]
        %v2543 = vld [vmem:[#allocation2 + $0xd8] sm:$0xff]
        %v2544 = vld [vmem:[#allocation2 + $0xe0] sm:$0xff]
        %v2545 = vld [vmem:[#allocation2 + $0xe8] sm:$0xff]
        %v2546 = vld [vmem:[#allocation2 + $0xf0] sm:$0xff]
        %v2547 = vld [vmem:[#allocation2 + $0xf8] sm:$0xff]
        %v2548 = vld [vmem:[#allocation2 + $0x100] sm:$0xff]
        %v2549 = vld [vmem:[#allocation2 + $0x108] sm:$0xff]
        %v2550 = vld [vmem:[#allocation2 + $0x110] sm:$0xff]
        %v2551 = vld [vmem:[#allocation2 + $0x118] sm:$0xff]
        %v2552 = vld [vmem:[#allocation2 + $0x120] sm:$0xff]
        %v2553 = vld [vmem:[#allocation2 + $0x128] sm:$0xff]
        %v2554 = vld [vmem:[#allocation2 + $0x130] sm:$0xff]
        %v2555 = vld [vmem:[#allocation2 + $0x138] sm:$0xff]
        %v2556 = vld [vmem:[#allocation2 + $0x140] sm:$0xff]
        %v2557 = vld [vmem:[#allocation2 + $0x148] sm:$0xff]
        %v2558 = vld [vmem:[#allocation2 + $0x150] sm:$0xff]
        %v2559 = vld [vmem:[#allocation2 + $0x158] sm:$0xff]
        %v2560 = vld [vmem:[#allocation2 + $0x160] sm:$0xff]
        %v2561 = vld [vmem:[#allocation2 + $0x168] sm:$0xff]
        %v2562 = vld [vmem:[#allocation2 + $0x170] sm:$0xff]
        %v2563 = vld [vmem:[#allocation2 + $0x178] sm:$0xff]
        %v2564 = vld [vmem:[#allocation2 + $0x180] sm:$0xff]
        %v2565 = vld [vmem:[#allocation2 + $0x188] sm:$0xff]
        %v2566 = vld [vmem:[#allocation2 + $0x190] sm:$0xff]
        %v2567 = vld [vmem:[#allocation2 + $0x198] sm:$0xff]
        %v2568 = vld [vmem:[#allocation2 + $0x1a0] sm:$0xff]
        %v2569 = vld [vmem:[#allocation2 + $0x1a8] sm:$0xff]
        %v2570 = vld [vmem:[#allocation2 + $0x1b0] sm:$0xff]
        %v2571 = vld [vmem:[#allocation2 + $0x1b8] sm:$0xff]
        %v2572 = vld [vmem:[#allocation2 + $0x1c0] sm:$0xff]
        %v2573 = vld [vmem:[#allocation2 + $0x1c8] sm:$0xff]
        %v2574 = vld [vmem:[#allocation2 + $0x1d0] sm:$0xff]
        %v2575 = vld [vmem:[#allocation2 + $0x1d8] sm:$0xff]
        %v2576 = vld [vmem:[#allocation2 + $0x1e0] sm:$0xff]
        %v2577 = vld [vmem:[#allocation2 + $0x1e8] sm:$0xff]
        %v2578 = vld [vmem:[#allocation2 + $0x1f0] sm:$0xff]
        %v2579 = vld [vmem:[#allocation2 + $0x1f8] sm:$0xff]
        %2580 = vmax.xlane.f32.xlu0 %v1715
        %v2581 = vpop.xlane.xlu0 %2580
        %2582 = vmax.xlane.f32.xlu0 %v1720
        %v2583 = vpop.xlane.xlu0 %2582
        %2584 = vmax.xlane.f32.xlu0 %v1725
        %v2585 = vpop.xlane.xlu0 %2584
        %2586 = vmax.xlane.f32.xlu0 %v1730
        %v2587 = vpop.xlane.xlu0 %2586
        %2588 = vmax.xlane.f32.xlu0 %v1735
        %v2589 = vpop.xlane.xlu0 %2588
        %2590 = vmax.xlane.f32.xlu0 %v1740
        %v2591 = vpop.xlane.xlu0 %2590
        %2592 = vmax.xlane.f32.xlu0 %v1745
        %v2593 = vpop.xlane.xlu0 %2592
        %2594 = vmax.xlane.f32.xlu0 %v1750
        %v2595 = vpop.xlane.xlu0 %2594
        %2596 = vmax.xlane.f32.xlu0 %v1755
        %v2597 = vpop.xlane.xlu0 %2596
        %2598 = vmax.xlane.f32.xlu0 %v1760
        %v2599 = vpop.xlane.xlu0 %2598
        %2600 = vmax.xlane.f32.xlu0 %v1765
        %v2601 = vpop.xlane.xlu0 %2600
        %2602 = vmax.xlane.f32.xlu0 %v1770
        %v2603 = vpop.xlane.xlu0 %2602
        %2604 = vmax.xlane.f32.xlu0 %v1775
        %v2605 = vpop.xlane.xlu0 %2604
        %2606 = vmax.xlane.f32.xlu0 %v1780
        %v2607 = vpop.xlane.xlu0 %2606
        %2608 = vmax.xlane.f32.xlu0 %v1785
        %v2609 = vpop.xlane.xlu0 %2608
        %2610 = vmax.xlane.f32.xlu0 %v1790
        %v2611 = vpop.xlane.xlu0 %2610
        %2612 = vmax.xlane.f32.xlu0 %v1956
        %v2613 = vpop.xlane.xlu0 %2612
        %2614 = vmax.xlane.f32.xlu0 %v1961
        %v2615 = vpop.xlane.xlu0 %2614
        %2616 = vmax.xlane.f32.xlu0 %v1966
        %v2617 = vpop.xlane.xlu0 %2616
        %2618 = vmax.xlane.f32.xlu0 %v1971
        %v2619 = vpop.xlane.xlu0 %2618
        %2620 = vmax.xlane.f32.xlu0 %v1976
        %v2621 = vpop.xlane.xlu0 %2620
        %2622 = vmax.xlane.f32.xlu0 %v1981
        %v2623 = vpop.xlane.xlu0 %2622
        %2624 = vmax.xlane.f32.xlu0 %v1986
        %v2625 = vpop.xlane.xlu0 %2624
        %2626 = vmax.xlane.f32.xlu0 %v1991
        %v2627 = vpop.xlane.xlu0 %2626
        %2628 = vmax.xlane.f32.xlu0 %v1996
        %v2629 = vpop.xlane.xlu0 %2628
        %2630 = vmax.xlane.f32.xlu0 %v2001
        %v2631 = vpop.xlane.xlu0 %2630
        %2632 = vmax.xlane.f32.xlu0 %v2006
        %v2633 = vpop.xlane.xlu0 %2632
        %2634 = vmax.xlane.f32.xlu0 %v2011
        %v2635 = vpop.xlane.xlu0 %2634
        %2636 = vmax.xlane.f32.xlu0 %v2016
        %v2637 = vpop.xlane.xlu0 %2636
        %2638 = vmax.xlane.f32.xlu0 %v2021
        %v2639 = vpop.xlane.xlu0 %2638
        %2640 = vmax.xlane.f32.xlu0 %v2026
        %v2641 = vpop.xlane.xlu0 %2640
        %2642 = vmax.xlane.f32.xlu0 %v2031
        %v2643 = vpop.xlane.xlu0 %2642
        %2644 = vmax.xlane.f32.xlu0 %v2197
        %v2645 = vpop.xlane.xlu0 %2644
        %2646 = vmax.xlane.f32.xlu0 %v2202
        %v2647 = vpop.xlane.xlu0 %2646
        %2648 = vmax.xlane.f32.xlu0 %v2207
        %v2649 = vpop.xlane.xlu0 %2648
        %2650 = vmax.xlane.f32.xlu0 %v2212
        %v2651 = vpop.xlane.xlu0 %2650
        %2652 = vmax.xlane.f32.xlu0 %v2217
        %v2653 = vpop.xlane.xlu0 %2652
        %2654 = vmax.xlane.f32.xlu0 %v2222
        %v2655 = vpop.xlane.xlu0 %2654
        %2656 = vmax.xlane.f32.xlu0 %v2227
        %v2657 = vpop.xlane.xlu0 %2656
        %2658 = vmax.xlane.f32.xlu0 %v2232
        %v2659 = vpop.xlane.xlu0 %2658
        %2660 = vmax.xlane.f32.xlu0 %v2237
        %v2661 = vpop.xlane.xlu0 %2660
        %2662 = vmax.xlane.f32.xlu0 %v2242
        %v2663 = vpop.xlane.xlu0 %2662
        %2664 = vmax.xlane.f32.xlu0 %v2247
        %v2665 = vpop.xlane.xlu0 %2664
        %2666 = vmax.xlane.f32.xlu0 %v2252
        %v2667 = vpop.xlane.xlu0 %2666
        %2668 = vmax.xlane.f32.xlu0 %v2257
        %v2669 = vpop.xlane.xlu0 %2668
        %2670 = vmax.xlane.f32.xlu0 %v2262
        %v2671 = vpop.xlane.xlu0 %2670
        %2672 = vmax.xlane.f32.xlu0 %v2267
        %v2673 = vpop.xlane.xlu0 %2672
        %2674 = vmax.xlane.f32.xlu0 %v2272
        %v2675 = vpop.xlane.xlu0 %2674
        %2676 = vmax.xlane.f32.xlu0 %v2438
        %v2677 = vpop.xlane.xlu0 %2676
        %2678 = vmax.xlane.f32.xlu0 %v2443
        %v2679 = vpop.xlane.xlu0 %2678
        %2680 = vmax.xlane.f32.xlu0 %v2448
        %v2681 = vpop.xlane.xlu0 %2680
        %2682 = vmax.xlane.f32.xlu0 %v2453
        %v2683 = vpop.xlane.xlu0 %2682
        %2684 = vmax.xlane.f32.xlu0 %v2458
        %v2685 = vpop.xlane.xlu0 %2684
        %2686 = vmax.xlane.f32.xlu0 %v2463
        %v2687 = vpop.xlane.xlu0 %2686
        %2688 = vmax.xlane.f32.xlu0 %v2468
        %v2689 = vpop.xlane.xlu0 %2688
        %2690 = vmax.xlane.f32.xlu0 %v2473
        %v2691 = vpop.xlane.xlu0 %2690
        %2692 = vmax.xlane.f32.xlu0 %v2478
        %v2693 = vpop.xlane.xlu0 %2692
        %2694 = vmax.xlane.f32.xlu0 %v2483
        %v2695 = vpop.xlane.xlu0 %2694
        %2696 = vmax.xlane.f32.xlu0 %v2488
        %v2697 = vpop.xlane.xlu0 %2696
        %2698 = vmax.xlane.f32.xlu0 %v2493
        %v2699 = vpop.xlane.xlu0 %2698
        %2700 = vmax.xlane.f32.xlu0 %v2498
        %v2701 = vpop.xlane.xlu0 %2700
        %2702 = vmax.xlane.f32.xlu0 %v2503
        %v2703 = vpop.xlane.xlu0 %2702
        %2704 = vmax.xlane.f32.xlu0 %v2508
        %v2705 = vpop.xlane.xlu0 %2704
        %2706 = vmax.xlane.f32.xlu0 %v2513
        %v2707 = vpop.xlane.xlu0 %2706
        %v2708 = vmax.f32 %v2516, %v2581
        %v2709 = vmax.f32 %v2517, %v2583
        %v2710 = vmax.f32 %v2518, %v2585
        %v2711 = vmax.f32 %v2519, %v2587
        %v2712 = vmax.f32 %v2520, %v2589
        %v2713 = vmax.f32 %v2521, %v2591
        %v2714 = vmax.f32 %v2522, %v2593
        %v2715 = vmax.f32 %v2523, %v2595
        %v2716 = vmax.f32 %v2524, %v2597
        %v2717 = vmax.f32 %v2525, %v2599
        %v2718 = vmax.f32 %v2526, %v2601
        %v2719 = vmax.f32 %v2527, %v2603
        %v2720 = vmax.f32 %v2528, %v2605
        %v2721 = vmax.f32 %v2529, %v2607
        %v2722 = vmax.f32 %v2530, %v2609
        %v2723 = vmax.f32 %v2531, %v2611
        %v2724 = vmax.f32 %v2532, %v2613
        %v2725 = vmax.f32 %v2533, %v2615
        %v2726 = vmax.f32 %v2534, %v2617
        %v2727 = vmax.f32 %v2535, %v2619
        %v2728 = vmax.f32 %v2536, %v2621
        %v2729 = vmax.f32 %v2537, %v2623
        %v2730 = vmax.f32 %v2538, %v2625
        %v2731 = vmax.f32 %v2539, %v2627
        %v2732 = vmax.f32 %v2540, %v2629
        %v2733 = vmax.f32 %v2541, %v2631
        %v2734 = vmax.f32 %v2542, %v2633
        %v2735 = vmax.f32 %v2543, %v2635
        %v2736 = vmax.f32 %v2544, %v2637
        %v2737 = vmax.f32 %v2545, %v2639
        %v2738 = vmax.f32 %v2546, %v2641
        %v2739 = vmax.f32 %v2547, %v2643
        %v2740 = vmax.f32 %v2548, %v2645
        %v2741 = vmax.f32 %v2549, %v2647
        %v2742 = vmax.f32 %v2550, %v2649
        %v2743 = vmax.f32 %v2551, %v2651
        %v2744 = vmax.f32 %v2552, %v2653
        %v2745 = vmax.f32 %v2553, %v2655
        %v2746 = vmax.f32 %v2554, %v2657
        %v2747 = vmax.f32 %v2555, %v2659
        %v2748 = vmax.f32 %v2556, %v2661
        %v2749 = vmax.f32 %v2557, %v2663
        %v2750 = vmax.f32 %v2558, %v2665
        %v2751 = vmax.f32 %v2559, %v2667
        %v2752 = vmax.f32 %v2560, %v2669
        %v2753 = vmax.f32 %v2561, %v2671
        %v2754 = vmax.f32 %v2562, %v2673
        %v2755 = vmax.f32 %v2563, %v2675
        %v2756 = vmax.f32 %v2564, %v2677
        %v2757 = vmax.f32 %v2565, %v2679
        %v2758 = vmax.f32 %v2566, %v2681
        %v2759 = vmax.f32 %v2567, %v2683
        %v2760 = vmax.f32 %v2568, %v2685
        %v2761 = vmax.f32 %v2569, %v2687
        %v2762 = vmax.f32 %v2570, %v2689
        %v2763 = vmax.f32 %v2571, %v2691
        %v2764 = vmax.f32 %v2572, %v2693
        %v2765 = vmax.f32 %v2573, %v2695
        %v2766 = vmax.f32 %v2574, %v2697
        %v2767 = vmax.f32 %v2575, %v2699
        %v2768 = vmax.f32 %v2576, %v2701
        %v2769 = vmax.f32 %v2577, %v2703
        %v2770 = vmax.f32 %v2578, %v2705
        %v2771 = vmax.f32 %v2579, %v2707
        %v2772 = vsub.f32 %v2516, %v2708
        %v2773 = vsub.f32 %v2517, %v2709
        %v2774 = vsub.f32 %v2518, %v2710
        %v2775 = vsub.f32 %v2519, %v2711
        %v2776 = vsub.f32 %v2520, %v2712
        %v2777 = vsub.f32 %v2521, %v2713
        %v2778 = vsub.f32 %v2522, %v2714
        %v2779 = vsub.f32 %v2523, %v2715
        %v2780 = vsub.f32 %v2524, %v2716
        %v2781 = vsub.f32 %v2525, %v2717
        %v2782 = vsub.f32 %v2526, %v2718
        %v2783 = vsub.f32 %v2527, %v2719
        %v2784 = vsub.f32 %v2528, %v2720
        %v2785 = vsub.f32 %v2529, %v2721
        %v2786 = vsub.f32 %v2530, %v2722
        %v2787 = vsub.f32 %v2531, %v2723
        %v2788 = vsub.f32 %v2532, %v2724
        %v2789 = vsub.f32 %v2533, %v2725
        %v2790 = vsub.f32 %v2534, %v2726
        %v2791 = vsub.f32 %v2535, %v2727
        %v2792 = vsub.f32 %v2536, %v2728
        %v2793 = vsub.f32 %v2537, %v2729
        %v2794 = vsub.f32 %v2538, %v2730
        %v2795 = vsub.f32 %v2539, %v2731
        %v2796 = vsub.f32 %v2540, %v2732
        %v2797 = vsub.f32 %v2541, %v2733
        %v2798 = vsub.f32 %v2542, %v2734
        %v2799 = vsub.f32 %v2543, %v2735
        %v2800 = vsub.f32 %v2544, %v2736
        %v2801 = vsub.f32 %v2545, %v2737
        %v2802 = vsub.f32 %v2546, %v2738
        %v2803 = vsub.f32 %v2547, %v2739
        %v2804 = vsub.f32 %v2548, %v2740
        %v2805 = vsub.f32 %v2549, %v2741
        %v2806 = vsub.f32 %v2550, %v2742
        %v2807 = vsub.f32 %v2551, %v2743
        %v2808 = vsub.f32 %v2552, %v2744
        %v2809 = vsub.f32 %v2553, %v2745
        %v2810 = vsub.f32 %v2554, %v2746
        %v2811 = vsub.f32 %v2555, %v2747
        %v2812 = vsub.f32 %v2556, %v2748
        %v2813 = vsub.f32 %v2557, %v2749
        %v2814 = vsub.f32 %v2558, %v2750
        %v2815 = vsub.f32 %v2559, %v2751
        %v2816 = vsub.f32 %v2560, %v2752
        %v2817 = vsub.f32 %v2561, %v2753
        %v2818 = vsub.f32 %v2562, %v2754
        %v2819 = vsub.f32 %v2563, %v2755
        %v2820 = vsub.f32 %v2564, %v2756
        %v2821 = vsub.f32 %v2565, %v2757
        %v2822 = vsub.f32 %v2566, %v2758
        %v2823 = vsub.f32 %v2567, %v2759
        %v2824 = vsub.f32 %v2568, %v2760
        %v2825 = vsub.f32 %v2569, %v2761
        %v2826 = vsub.f32 %v2570, %v2762
        %v2827 = vsub.f32 %v2571, %v2763
        %v2828 = vsub.f32 %v2572, %v2764
        %v2829 = vsub.f32 %v2573, %v2765
        %v2830 = vsub.f32 %v2574, %v2766
        %v2831 = vsub.f32 %v2575, %v2767
        %v2832 = vsub.f32 %v2576, %v2768
        %v2833 = vsub.f32 %v2577, %v2769
        %v2834 = vsub.f32 %v2578, %v2770
        %v2835 = vsub.f32 %v2579, %v2771
        %v2836 = vmul.f32 %v2772, 1.442695
        %v2837 = vpow.pop %v2836
        %v2838 = vmul.f32 %v2773, 1.442695
        %v2839 = vpow.pop %v2838
        %v2840 = vmul.f32 %v2774, 1.442695
        %v2841 = vpow.pop %v2840
        %v2842 = vmul.f32 %v2775, 1.442695
        %v2843 = vpow.pop %v2842
        %v2844 = vmul.f32 %v2776, 1.442695
        %v2845 = vpow.pop %v2844
        %v2846 = vmul.f32 %v2777, 1.442695
        %v2847 = vpow.pop %v2846
        %v2848 = vmul.f32 %v2778, 1.442695
        %v2849 = vpow.pop %v2848
        %v2850 = vmul.f32 %v2779, 1.442695
        %v2851 = vpow.pop %v2850
        %v2852 = vmul.f32 %v2780, 1.442695
        %v2853 = vpow.pop %v2852
        %v2854 = vmul.f32 %v2781, 1.442695
        %v2855 = vpow.pop %v2854
        %v2856 = vmul.f32 %v2782, 1.442695
        %v2857 = vpow.pop %v2856
        %v2858 = vmul.f32 %v2783, 1.442695
        %v2859 = vpow.pop %v2858
        %v2860 = vmul.f32 %v2784, 1.442695
        %v2861 = vpow.pop %v2860
        %v2862 = vmul.f32 %v2785, 1.442695
        %v2863 = vpow.pop %v2862
        %v2864 = vmul.f32 %v2786, 1.442695
        %v2865 = vpow.pop %v2864
        %v2866 = vmul.f32 %v2787, 1.442695
        %v2867 = vpow.pop %v2866
        %v2868 = vmul.f32 %v2788, 1.442695
        %v2869 = vpow.pop %v2868
        %v2870 = vmul.f32 %v2789, 1.442695
        %v2871 = vpow.pop %v2870
        %v2872 = vmul.f32 %v2790, 1.442695
        %v2873 = vpow.pop %v2872
        %v2874 = vmul.f32 %v2791, 1.442695
        %v2875 = vpow.pop %v2874
        %v2876 = vmul.f32 %v2792, 1.442695
        %v2877 = vpow.pop %v2876
        %v2878 = vmul.f32 %v2793, 1.442695
        %v2879 = vpow.pop %v2878
        %v2880 = vmul.f32 %v2794, 1.442695
        %v2881 = vpow.pop %v2880
        %v2882 = vmul.f32 %v2795, 1.442695
        %v2883 = vpow.pop %v2882
        %v2884 = vmul.f32 %v2796, 1.442695
        %v2885 = vpow.pop %v2884
        %v2886 = vmul.f32 %v2797, 1.442695
        %v2887 = vpow.pop %v2886
        %v2888 = vmul.f32 %v2798, 1.442695
        %v2889 = vpow.pop %v2888
        %v2890 = vmul.f32 %v2799, 1.442695
        %v2891 = vpow.pop %v2890
        %v2892 = vmul.f32 %v2800, 1.442695
        %v2893 = vpow.pop %v2892
        %v2894 = vmul.f32 %v2801, 1.442695
        %v2895 = vpow.pop %v2894
        %v2896 = vmul.f32 %v2802, 1.442695
        %v2897 = vpow.pop %v2896
        %v2898 = vmul.f32 %v2803, 1.442695
        %v2899 = vpow.pop %v2898
        %v2900 = vmul.f32 %v2804, 1.442695
        %v2901 = vpow.pop %v2900
        %v2902 = vmul.f32 %v2805, 1.442695
        %v2903 = vpow.pop %v2902
        %v2904 = vmul.f32 %v2806, 1.442695
        %v2905 = vpow.pop %v2904
        %v2906 = vmul.f32 %v2807, 1.442695
        %v2907 = vpow.pop %v2906
        %v2908 = vmul.f32 %v2808, 1.442695
        %v2909 = vpow.pop %v2908
        %v2910 = vmul.f32 %v2809, 1.442695
        %v2911 = vpow.pop %v2910
        %v2912 = vmul.f32 %v2810, 1.442695
        %v2913 = vpow.pop %v2912
        %v2914 = vmul.f32 %v2811, 1.442695
        %v2915 = vpow.pop %v2914
        %v2916 = vmul.f32 %v2812, 1.442695
        %v2917 = vpow.pop %v2916
        %v2918 = vmul.f32 %v2813, 1.442695
        %v2919 = vpow.pop %v2918
        %v2920 = vmul.f32 %v2814, 1.442695
        %v2921 = vpow.pop %v2920
        %v2922 = vmul.f32 %v2815, 1.442695
        %v2923 = vpow.pop %v2922
        %v2924 = vmul.f32 %v2816, 1.442695
        %v2925 = vpow.pop %v2924
        %v2926 = vmul.f32 %v2817, 1.442695
        %v2927 = vpow.pop %v2926
        %v2928 = vmul.f32 %v2818, 1.442695
        %v2929 = vpow.pop %v2928
        %v2930 = vmul.f32 %v2819, 1.442695
        %v2931 = vpow.pop %v2930
        %v2932 = vmul.f32 %v2820, 1.442695
        %v2933 = vpow.pop %v2932
        %v2934 = vmul.f32 %v2821, 1.442695
        %v2935 = vpow.pop %v2934
        %v2936 = vmul.f32 %v2822, 1.442695
        %v2937 = vpow.pop %v2936
        %v2938 = vmul.f32 %v2823, 1.442695
        %v2939 = vpow.pop %v2938
        %v2940 = vmul.f32 %v2824, 1.442695
        %v2941 = vpow.pop %v2940
        %v2942 = vmul.f32 %v2825, 1.442695
        %v2943 = vpow.pop %v2942
        %v2944 = vmul.f32 %v2826, 1.442695
        %v2945 = vpow.pop %v2944
        %v2946 = vmul.f32 %v2827, 1.442695
        %v2947 = vpow.pop %v2946
        %v2948 = vmul.f32 %v2828, 1.442695
        %v2949 = vpow.pop %v2948
        %v2950 = vmul.f32 %v2829, 1.442695
        %v2951 = vpow.pop %v2950
        %v2952 = vmul.f32 %v2830, 1.442695
        %v2953 = vpow.pop %v2952
        %v2954 = vmul.f32 %v2831, 1.442695
        %v2955 = vpow.pop %v2954
        %v2956 = vmul.f32 %v2832, 1.442695
        %v2957 = vpow.pop %v2956
        %v2958 = vmul.f32 %v2833, 1.442695
        %v2959 = vpow.pop %v2958
        %v2960 = vmul.f32 %v2834, 1.442695
        %v2961 = vpow.pop %v2960
        %v2962 = vmul.f32 %v2835, 1.442695
        %v2963 = vpow.pop %v2962
        %2965 = vset.pattern.permute.xlu0 0
        %2966 = vperm.xlu0 %2965, %v2708
        %v2967 = vpop.permute.xlu0 %2966
        %2970 = vset.pattern.permute.xlu0 0
        %2971 = vperm.xlu0 %2970, %v2709
        %v2972 = vpop.permute.xlu0 %2971
        %2975 = vset.pattern.permute.xlu0 0
        %2976 = vperm.xlu0 %2975, %v2710
        %v2977 = vpop.permute.xlu0 %2976
        %2980 = vset.pattern.permute.xlu0 0
        %2981 = vperm.xlu0 %2980, %v2711
        %v2982 = vpop.permute.xlu0 %2981
        %2985 = vset.pattern.permute.xlu0 0
        %2986 = vperm.xlu0 %2985, %v2712
        %v2987 = vpop.permute.xlu0 %2986
        %2990 = vset.pattern.permute.xlu0 0
        %2991 = vperm.xlu0 %2990, %v2713
        %v2992 = vpop.permute.xlu0 %2991
        %2995 = vset.pattern.permute.xlu0 0
        %2996 = vperm.xlu0 %2995, %v2714
        %v2997 = vpop.permute.xlu0 %2996
        %3000 = vset.pattern.permute.xlu0 0
        %3001 = vperm.xlu0 %3000, %v2715
        %v3002 = vpop.permute.xlu0 %3001
        %3005 = vset.pattern.permute.xlu0 0
        %3006 = vperm.xlu0 %3005, %v2716
        %v3007 = vpop.permute.xlu0 %3006
        %3010 = vset.pattern.permute.xlu0 0
        %3011 = vperm.xlu0 %3010, %v2717
        %v3012 = vpop.permute.xlu0 %3011
        %3015 = vset.pattern.permute.xlu0 0
        %3016 = vperm.xlu0 %3015, %v2718
        %v3017 = vpop.permute.xlu0 %3016
        %3020 = vset.pattern.permute.xlu0 0
        %3021 = vperm.xlu0 %3020, %v2719
        %v3022 = vpop.permute.xlu0 %3021
        %3025 = vset.pattern.permute.xlu0 0
        %3026 = vperm.xlu0 %3025, %v2720
        %v3027 = vpop.permute.xlu0 %3026
        %3030 = vset.pattern.permute.xlu0 0
        %3031 = vperm.xlu0 %3030, %v2721
        %v3032 = vpop.permute.xlu0 %3031
        %3035 = vset.pattern.permute.xlu0 0
        %3036 = vperm.xlu0 %3035, %v2722
        %v3037 = vpop.permute.xlu0 %3036
        %3040 = vset.pattern.permute.xlu0 0
        %3041 = vperm.xlu0 %3040, %v2723
        %v3042 = vpop.permute.xlu0 %3041
        %3045 = vset.pattern.permute.xlu0 0
        %3046 = vperm.xlu0 %3045, %v2724
        %v3047 = vpop.permute.xlu0 %3046
        %3050 = vset.pattern.permute.xlu0 0
        %3051 = vperm.xlu0 %3050, %v2725
        %v3052 = vpop.permute.xlu0 %3051
        %3055 = vset.pattern.permute.xlu0 0
        %3056 = vperm.xlu0 %3055, %v2726
        %v3057 = vpop.permute.xlu0 %3056
        %3060 = vset.pattern.permute.xlu0 0
        %3061 = vperm.xlu0 %3060, %v2727
        %v3062 = vpop.permute.xlu0 %3061
        %3065 = vset.pattern.permute.xlu0 0
        %3066 = vperm.xlu0 %3065, %v2728
        %v3067 = vpop.permute.xlu0 %3066
        %3070 = vset.pattern.permute.xlu0 0
        %3071 = vperm.xlu0 %3070, %v2729
        %v3072 = vpop.permute.xlu0 %3071
        %3075 = vset.pattern.permute.xlu0 0
        %3076 = vperm.xlu0 %3075, %v2730
        %v3077 = vpop.permute.xlu0 %3076
        %3080 = vset.pattern.permute.xlu0 0
        %3081 = vperm.xlu0 %3080, %v2731
        %v3082 = vpop.permute.xlu0 %3081
        %3085 = vset.pattern.permute.xlu0 0
        %3086 = vperm.xlu0 %3085, %v2732
        %v3087 = vpop.permute.xlu0 %3086
        %3090 = vset.pattern.permute.xlu0 0
        %3091 = vperm.xlu0 %3090, %v2733
        %v3092 = vpop.permute.xlu0 %3091
        %3095 = vset.pattern.permute.xlu0 0
        %3096 = vperm.xlu0 %3095, %v2734
        %v3097 = vpop.permute.xlu0 %3096
        %3100 = vset.pattern.permute.xlu0 0
        %3101 = vperm.xlu0 %3100, %v2735
        %v3102 = vpop.permute.xlu0 %3101
        %3105 = vset.pattern.permute.xlu0 0
        %3106 = vperm.xlu0 %3105, %v2736
        %v3107 = vpop.permute.xlu0 %3106
        %3110 = vset.pattern.permute.xlu0 0
        %3111 = vperm.xlu0 %3110, %v2737
        %v3112 = vpop.permute.xlu0 %3111
        %3115 = vset.pattern.permute.xlu0 0
        %3116 = vperm.xlu0 %3115, %v2738
        %v3117 = vpop.permute.xlu0 %3116
        %3120 = vset.pattern.permute.xlu0 0
        %3121 = vperm.xlu0 %3120, %v2739
        %v3122 = vpop.permute.xlu0 %3121
        %3125 = vset.pattern.permute.xlu0 0
        %3126 = vperm.xlu0 %3125, %v2740
        %v3127 = vpop.permute.xlu0 %3126
        %3130 = vset.pattern.permute.xlu0 0
        %3131 = vperm.xlu0 %3130, %v2741
        %v3132 = vpop.permute.xlu0 %3131
        %3135 = vset.pattern.permute.xlu0 0
        %3136 = vperm.xlu0 %3135, %v2742
        %v3137 = vpop.permute.xlu0 %3136
        %3140 = vset.pattern.permute.xlu0 0
        %3141 = vperm.xlu0 %3140, %v2743
        %v3142 = vpop.permute.xlu0 %3141
        %3145 = vset.pattern.permute.xlu0 0
        %3146 = vperm.xlu0 %3145, %v2744
        %v3147 = vpop.permute.xlu0 %3146
        %3150 = vset.pattern.permute.xlu0 0
        %3151 = vperm.xlu0 %3150, %v2745
        %v3152 = vpop.permute.xlu0 %3151
        %3155 = vset.pattern.permute.xlu0 0
        %3156 = vperm.xlu0 %3155, %v2746
        %v3157 = vpop.permute.xlu0 %3156
        %3160 = vset.pattern.permute.xlu0 0
        %3161 = vperm.xlu0 %3160, %v2747
        %v3162 = vpop.permute.xlu0 %3161
        %3165 = vset.pattern.permute.xlu0 0
        %3166 = vperm.xlu0 %3165, %v2748
        %v3167 = vpop.permute.xlu0 %3166
        %3170 = vset.pattern.permute.xlu0 0
        %3171 = vperm.xlu0 %3170, %v2749
        %v3172 = vpop.permute.xlu0 %3171
        %3175 = vset.pattern.permute.xlu0 0
        %3176 = vperm.xlu0 %3175, %v2750
        %v3177 = vpop.permute.xlu0 %3176
        %3180 = vset.pattern.permute.xlu0 0
        %3181 = vperm.xlu0 %3180, %v2751
        %v3182 = vpop.permute.xlu0 %3181
        %3185 = vset.pattern.permute.xlu0 0
        %3186 = vperm.xlu0 %3185, %v2752
        %v3187 = vpop.permute.xlu0 %3186
        %3190 = vset.pattern.permute.xlu0 0
        %3191 = vperm.xlu0 %3190, %v2753
        %v3192 = vpop.permute.xlu0 %3191
        %3195 = vset.pattern.permute.xlu0 0
        %3196 = vperm.xlu0 %3195, %v2754
        %v3197 = vpop.permute.xlu0 %3196
        %3200 = vset.pattern.permute.xlu0 0
        %3201 = vperm.xlu0 %3200, %v2755
        %v3202 = vpop.permute.xlu0 %3201
        %3205 = vset.pattern.permute.xlu0 0
        %3206 = vperm.xlu0 %3205, %v2756
        %v3207 = vpop.permute.xlu0 %3206
        %3210 = vset.pattern.permute.xlu0 0
        %3211 = vperm.xlu0 %3210, %v2757
        %v3212 = vpop.permute.xlu0 %3211
        %3215 = vset.pattern.permute.xlu0 0
        %3216 = vperm.xlu0 %3215, %v2758
        %v3217 = vpop.permute.xlu0 %3216
        %3220 = vset.pattern.permute.xlu0 0
        %3221 = vperm.xlu0 %3220, %v2759
        %v3222 = vpop.permute.xlu0 %3221
        %3225 = vset.pattern.permute.xlu0 0
        %3226 = vperm.xlu0 %3225, %v2760
        %v3227 = vpop.permute.xlu0 %3226
        %3230 = vset.pattern.permute.xlu0 0
        %3231 = vperm.xlu0 %3230, %v2761
        %v3232 = vpop.permute.xlu0 %3231
        %3235 = vset.pattern.permute.xlu0 0
        %3236 = vperm.xlu0 %3235, %v2762
        %v3237 = vpop.permute.xlu0 %3236
        %3240 = vset.pattern.permute.xlu0 0
        %3241 = vperm.xlu0 %3240, %v2763
        %v3242 = vpop.permute.xlu0 %3241
        %3245 = vset.pattern.permute.xlu0 0
        %3246 = vperm.xlu0 %3245, %v2764
        %v3247 = vpop.permute.xlu0 %3246
        %3250 = vset.pattern.permute.xlu0 0
        %3251 = vperm.xlu0 %3250, %v2765
        %v3252 = vpop.permute.xlu0 %3251
        %3255 = vset.pattern.permute.xlu0 0
        %3256 = vperm.xlu0 %3255, %v2766
        %v3257 = vpop.permute.xlu0 %3256
        %3260 = vset.pattern.permute.xlu0 0
        %3261 = vperm.xlu0 %3260, %v2767
        %v3262 = vpop.permute.xlu0 %3261
        %3265 = vset.pattern.permute.xlu0 0
        %3266 = vperm.xlu0 %3265, %v2768
        %v3267 = vpop.permute.xlu0 %3266
        %3270 = vset.pattern.permute.xlu0 0
        %3271 = vperm.xlu0 %3270, %v2769
        %v3272 = vpop.permute.xlu0 %3271
        %3275 = vset.pattern.permute.xlu0 0
        %3276 = vperm.xlu0 %3275, %v2770
        %v3277 = vpop.permute.xlu0 %3276
        %3280 = vset.pattern.permute.xlu0 0
        %3281 = vperm.xlu0 %3280, %v2771
        %v3282 = vpop.permute.xlu0 %3281
        %v3284 = vsub.f32 %v1715, %v2967
        %v3285 = vsub.f32 %v1720, %v2972
        %v3286 = vsub.f32 %v1725, %v2977
        %v3287 = vsub.f32 %v1730, %v2982
        %v3288 = vsub.f32 %v1735, %v2987
        %v3289 = vsub.f32 %v1740, %v2992
        %v3290 = vsub.f32 %v1745, %v2997
        %v3291 = vsub.f32 %v1750, %v3002
        %v3292 = vsub.f32 %v1755, %v3007
        %v3293 = vsub.f32 %v1760, %v3012
        %v3294 = vsub.f32 %v1765, %v3017
        %v3295 = vsub.f32 %v1770, %v3022
        %v3296 = vsub.f32 %v1775, %v3027
        %v3297 = vsub.f32 %v1780, %v3032
        %v3298 = vsub.f32 %v1785, %v3037
        %v3299 = vsub.f32 %v1790, %v3042
        %v3300 = vsub.f32 %v1956, %v3047
        %v3301 = vsub.f32 %v1961, %v3052
        %v3302 = vsub.f32 %v1966, %v3057
        %v3303 = vsub.f32 %v1971, %v3062
        %v3304 = vsub.f32 %v1976, %v3067
        %v3305 = vsub.f32 %v1981, %v3072
        %v3306 = vsub.f32 %v1986, %v3077
        %v3307 = vsub.f32 %v1991, %v3082
        %v3308 = vsub.f32 %v1996, %v3087
        %v3309 = vsub.f32 %v2001, %v3092
        %v3310 = vsub.f32 %v2006, %v3097
        %v3311 = vsub.f32 %v2011, %v3102
        %v3312 = vsub.f32 %v2016, %v3107
        %v3313 = vsub.f32 %v2021, %v3112
        %v3314 = vsub.f32 %v2026, %v3117
        %v3315 = vsub.f32 %v2031, %v3122
        %v3316 = vsub.f32 %v2197, %v3127
        %v3317 = vsub.f32 %v2202, %v3132
        %v3318 = vsub.f32 %v2207, %v3137
        %v3319 = vsub.f32 %v2212, %v3142
        %v3320 = vsub.f32 %v2217, %v3147
        %v3321 = vsub.f32 %v2222, %v3152
        %v3322 = vsub.f32 %v2227, %v3157
        %v3323 = vsub.f32 %v2232, %v3162
        %v3324 = vsub.f32 %v2237, %v3167
        %v3325 = vsub.f32 %v2242, %v3172
        %v3326 = vsub.f32 %v2247, %v3177
        %v3327 = vsub.f32 %v2252, %v3182
        %v3328 = vsub.f32 %v2257, %v3187
        %v3329 = vsub.f32 %v2262, %v3192
        %v3330 = vsub.f32 %v2267, %v3197
        %v3331 = vsub.f32 %v2272, %v3202
        %v3332 = vsub.f32 %v2438, %v3207
        %v3333 = vsub.f32 %v2443, %v3212
        %v3334 = vsub.f32 %v2448, %v3217
        %v3335 = vsub.f32 %v2453, %v3222
        %v3336 = vsub.f32 %v2458, %v3227
        %v3337 = vsub.f32 %v2463, %v3232
        %v3338 = vsub.f32 %v2468, %v3237
        %v3339 = vsub.f32 %v2473, %v3242
        %v3340 = vsub.f32 %v2478, %v3247
        %v3341 = vsub.f32 %v2483, %v3252
        %v3342 = vsub.f32 %v2488, %v3257
        %v3343 = vsub.f32 %v2493, %v3262
        %v3344 = vsub.f32 %v2498, %v3267
        %v3345 = vsub.f32 %v2503, %v3272
        %v3346 = vsub.f32 %v2508, %v3277
        %v3347 = vsub.f32 %v2513, %v3282
        %v3348 = vmul.f32 %v3284, 1.442695
        %v3349 = vpow.pop %v3348
        %v3350 = vmul.f32 %v3285, 1.442695
        %v3351 = vpow.pop %v3350
        %v3352 = vmul.f32 %v3286, 1.442695
        %v3353 = vpow.pop %v3352
        %v3354 = vmul.f32 %v3287, 1.442695
        %v3355 = vpow.pop %v3354
        %v3356 = vmul.f32 %v3288, 1.442695
        %v3357 = vpow.pop %v3356
        %v3358 = vmul.f32 %v3289, 1.442695
        %v3359 = vpow.pop %v3358
        %v3360 = vmul.f32 %v3290, 1.442695
        %v3361 = vpow.pop %v3360
        %v3362 = vmul.f32 %v3291, 1.442695
        %v3363 = vpow.pop %v3362
        %v3364 = vmul.f32 %v3292, 1.442695
        %v3365 = vpow.pop %v3364
        %v3366 = vmul.f32 %v3293, 1.442695
        %v3367 = vpow.pop %v3366
        %v3368 = vmul.f32 %v3294, 1.442695
        %v3369 = vpow.pop %v3368
        %v3370 = vmul.f32 %v3295, 1.442695
        %v3371 = vpow.pop %v3370
        %v3372 = vmul.f32 %v3296, 1.442695
        %v3373 = vpow.pop %v3372
        %v3374 = vmul.f32 %v3297, 1.442695
        %v3375 = vpow.pop %v3374
        %v3376 = vmul.f32 %v3298, 1.442695
        %v3377 = vpow.pop %v3376
        %v3378 = vmul.f32 %v3299, 1.442695
        %v3379 = vpow.pop %v3378
        %v3380 = vmul.f32 %v3300, 1.442695
        %v3381 = vpow.pop %v3380
        %v3382 = vmul.f32 %v3301, 1.442695
        %v3383 = vpow.pop %v3382
        %v3384 = vmul.f32 %v3302, 1.442695
        %v3385 = vpow.pop %v3384
        %v3386 = vmul.f32 %v3303, 1.442695
        %v3387 = vpow.pop %v3386
        %v3388 = vmul.f32 %v3304, 1.442695
        %v3389 = vpow.pop %v3388
        %v3390 = vmul.f32 %v3305, 1.442695
        %v3391 = vpow.pop %v3390
        %v3392 = vmul.f32 %v3306, 1.442695
        %v3393 = vpow.pop %v3392
        %v3394 = vmul.f32 %v3307, 1.442695
        %v3395 = vpow.pop %v3394
        %v3396 = vmul.f32 %v3308, 1.442695
        %v3397 = vpow.pop %v3396
        %v3398 = vmul.f32 %v3309, 1.442695
        %v3399 = vpow.pop %v3398
        %v3400 = vmul.f32 %v3310, 1.442695
        %v3401 = vpow.pop %v3400
        %v3402 = vmul.f32 %v3311, 1.442695
        %v3403 = vpow.pop %v3402
        %v3404 = vmul.f32 %v3312, 1.442695
        %v3405 = vpow.pop %v3404
        %v3406 = vmul.f32 %v3313, 1.442695
        %v3407 = vpow.pop %v3406
        %v3408 = vmul.f32 %v3314, 1.442695
        %v3409 = vpow.pop %v3408
        %v3410 = vmul.f32 %v3315, 1.442695
        %v3411 = vpow.pop %v3410
        %v3412 = vmul.f32 %v3316, 1.442695
        %v3413 = vpow.pop %v3412
        %v3414 = vmul.f32 %v3317, 1.442695
        %v3415 = vpow.pop %v3414
        %v3416 = vmul.f32 %v3318, 1.442695
        %v3417 = vpow.pop %v3416
        %v3418 = vmul.f32 %v3319, 1.442695
        %v3419 = vpow.pop %v3418
        %v3420 = vmul.f32 %v3320, 1.442695
        %v3421 = vpow.pop %v3420
        %v3422 = vmul.f32 %v3321, 1.442695
        %v3423 = vpow.pop %v3422
        %v3424 = vmul.f32 %v3322, 1.442695
        %v3425 = vpow.pop %v3424
        %v3426 = vmul.f32 %v3323, 1.442695
        %v3427 = vpow.pop %v3426
        %v3428 = vmul.f32 %v3324, 1.442695
        %v3429 = vpow.pop %v3428
        %v3430 = vmul.f32 %v3325, 1.442695
        %v3431 = vpow.pop %v3430
        %v3432 = vmul.f32 %v3326, 1.442695
        %v3433 = vpow.pop %v3432
        %v3434 = vmul.f32 %v3327, 1.442695
        %v3435 = vpow.pop %v3434
        %v3436 = vmul.f32 %v3328, 1.442695
        %v3437 = vpow.pop %v3436
        %v3438 = vmul.f32 %v3329, 1.442695
        %v3439 = vpow.pop %v3438
        %v3440 = vmul.f32 %v3330, 1.442695
        %v3441 = vpow.pop %v3440
        %v3442 = vmul.f32 %v3331, 1.442695
        %v3443 = vpow.pop %v3442
        %v3444 = vmul.f32 %v3332, 1.442695
        %v3445 = vpow.pop %v3444
        %v3446 = vmul.f32 %v3333, 1.442695
        %v3447 = vpow.pop %v3446
        %v3448 = vmul.f32 %v3334, 1.442695
        %v3449 = vpow.pop %v3448
        %v3450 = vmul.f32 %v3335, 1.442695
        %v3451 = vpow.pop %v3450
        %v3452 = vmul.f32 %v3336, 1.442695
        %v3453 = vpow.pop %v3452
        %v3454 = vmul.f32 %v3337, 1.442695
        %v3455 = vpow.pop %v3454
        %v3456 = vmul.f32 %v3338, 1.442695
        %v3457 = vpow.pop %v3456
        %v3458 = vmul.f32 %v3339, 1.442695
        %v3459 = vpow.pop %v3458
        %v3460 = vmul.f32 %v3340, 1.442695
        %v3461 = vpow.pop %v3460
        %v3462 = vmul.f32 %v3341, 1.442695
        %v3463 = vpow.pop %v3462
        %v3464 = vmul.f32 %v3342, 1.442695
        %v3465 = vpow.pop %v3464
        %v3466 = vmul.f32 %v3343, 1.442695
        %v3467 = vpow.pop %v3466
        %v3468 = vmul.f32 %v3344, 1.442695
        %v3469 = vpow.pop %v3468
        %v3470 = vmul.f32 %v3345, 1.442695
        %v3471 = vpow.pop %v3470
        %v3472 = vmul.f32 %v3346, 1.442695
        %v3473 = vpow.pop %v3472
        %v3474 = vmul.f32 %v3347, 1.442695
        %v3475 = vpow.pop %v3474
        %v3476 = vld [vmem:[#allocation3] sm:$0xff]
        %v3477 = vld [vmem:[#allocation3 + $0x8] sm:$0xff]
        %v3478 = vld [vmem:[#allocation3 + $0x10] sm:$0xff]
        %v3479 = vld [vmem:[#allocation3 + $0x18] sm:$0xff]
        %v3480 = vld [vmem:[#allocation3 + $0x20] sm:$0xff]
        %v3481 = vld [vmem:[#allocation3 + $0x28] sm:$0xff]
        %v3482 = vld [vmem:[#allocation3 + $0x30] sm:$0xff]
        %v3483 = vld [vmem:[#allocation3 + $0x38] sm:$0xff]
        %v3484 = vld [vmem:[#allocation3 + $0x40] sm:$0xff]
        %v3485 = vld [vmem:[#allocation3 + $0x48] sm:$0xff]
        %v3486 = vld [vmem:[#allocation3 + $0x50] sm:$0xff]
        %v3487 = vld [vmem:[#allocation3 + $0x58] sm:$0xff]
        %v3488 = vld [vmem:[#allocation3 + $0x60] sm:$0xff]
        %v3489 = vld [vmem:[#allocation3 + $0x68] sm:$0xff]
        %v3490 = vld [vmem:[#allocation3 + $0x70] sm:$0xff]
        %v3491 = vld [vmem:[#allocation3 + $0x78] sm:$0xff]
        %v3492 = vld [vmem:[#allocation3 + $0x80] sm:$0xff]
        %v3493 = vld [vmem:[#allocation3 + $0x88] sm:$0xff]
        %v3494 = vld [vmem:[#allocation3 + $0x90] sm:$0xff]
        %v3495 = vld [vmem:[#allocation3 + $0x98] sm:$0xff]
        %v3496 = vld [vmem:[#allocation3 + $0xa0] sm:$0xff]
        %v3497 = vld [vmem:[#allocation3 + $0xa8] sm:$0xff]
        %v3498 = vld [vmem:[#allocation3 + $0xb0] sm:$0xff]
        %v3499 = vld [vmem:[#allocation3 + $0xb8] sm:$0xff]
        %v3500 = vld [vmem:[#allocation3 + $0xc0] sm:$0xff]
        %v3501 = vld [vmem:[#allocation3 + $0xc8] sm:$0xff]
        %v3502 = vld [vmem:[#allocation3 + $0xd0] sm:$0xff]
        %v3503 = vld [vmem:[#allocation3 + $0xd8] sm:$0xff]
        %v3504 = vld [vmem:[#allocation3 + $0xe0] sm:$0xff]
        %v3505 = vld [vmem:[#allocation3 + $0xe8] sm:$0xff]
        %v3506 = vld [vmem:[#allocation3 + $0xf0] sm:$0xff]
        %v3507 = vld [vmem:[#allocation3 + $0xf8] sm:$0xff]
        %v3508 = vld [vmem:[#allocation3 + $0x100] sm:$0xff]
        %v3509 = vld [vmem:[#allocation3 + $0x108] sm:$0xff]
        %v3510 = vld [vmem:[#allocation3 + $0x110] sm:$0xff]
        %v3511 = vld [vmem:[#allocation3 + $0x118] sm:$0xff]
        %v3512 = vld [vmem:[#allocation3 + $0x120] sm:$0xff]
        %v3513 = vld [vmem:[#allocation3 + $0x128] sm:$0xff]
        %v3514 = vld [vmem:[#allocation3 + $0x130] sm:$0xff]
        %v3515 = vld [vmem:[#allocation3 + $0x138] sm:$0xff]
        %v3516 = vld [vmem:[#allocation3 + $0x140] sm:$0xff]
        %v3517 = vld [vmem:[#allocation3 + $0x148] sm:$0xff]
        %v3518 = vld [vmem:[#allocation3 + $0x150] sm:$0xff]
        %v3519 = vld [vmem:[#allocation3 + $0x158] sm:$0xff]
        %v3520 = vld [vmem:[#allocation3 + $0x160] sm:$0xff]
        %v3521 = vld [vmem:[#allocation3 + $0x168] sm:$0xff]
        %v3522 = vld [vmem:[#allocation3 + $0x170] sm:$0xff]
        %v3523 = vld [vmem:[#allocation3 + $0x178] sm:$0xff]
        %v3524 = vld [vmem:[#allocation3 + $0x180] sm:$0xff]
        %v3525 = vld [vmem:[#allocation3 + $0x188] sm:$0xff]
        %v3526 = vld [vmem:[#allocation3 + $0x190] sm:$0xff]
        %v3527 = vld [vmem:[#allocation3 + $0x198] sm:$0xff]
        %v3528 = vld [vmem:[#allocation3 + $0x1a0] sm:$0xff]
        %v3529 = vld [vmem:[#allocation3 + $0x1a8] sm:$0xff]
        %v3530 = vld [vmem:[#allocation3 + $0x1b0] sm:$0xff]
        %v3531 = vld [vmem:[#allocation3 + $0x1b8] sm:$0xff]
        %v3532 = vld [vmem:[#allocation3 + $0x1c0] sm:$0xff]
        %v3533 = vld [vmem:[#allocation3 + $0x1c8] sm:$0xff]
        %v3534 = vld [vmem:[#allocation3 + $0x1d0] sm:$0xff]
        %v3535 = vld [vmem:[#allocation3 + $0x1d8] sm:$0xff]
        %v3536 = vld [vmem:[#allocation3 + $0x1e0] sm:$0xff]
        %v3537 = vld [vmem:[#allocation3 + $0x1e8] sm:$0xff]
        %v3538 = vld [vmem:[#allocation3 + $0x1f0] sm:$0xff]
        %v3539 = vld [vmem:[#allocation3 + $0x1f8] sm:$0xff]
        %v3540 = vmul.f32 %v2837, %v3476
        %v3541 = vmul.f32 %v2839, %v3477
        %v3542 = vmul.f32 %v2841, %v3478
        %v3543 = vmul.f32 %v2843, %v3479
        %v3544 = vmul.f32 %v2845, %v3480
        %v3545 = vmul.f32 %v2847, %v3481
        %v3546 = vmul.f32 %v2849, %v3482
        %v3547 = vmul.f32 %v2851, %v3483
        %v3548 = vmul.f32 %v2853, %v3484
        %v3549 = vmul.f32 %v2855, %v3485
        %v3550 = vmul.f32 %v2857, %v3486
        %v3551 = vmul.f32 %v2859, %v3487
        %v3552 = vmul.f32 %v2861, %v3488
        %v3553 = vmul.f32 %v2863, %v3489
        %v3554 = vmul.f32 %v2865, %v3490
        %v3555 = vmul.f32 %v2867, %v3491
        %v3556 = vmul.f32 %v2869, %v3492
        %v3557 = vmul.f32 %v2871, %v3493
        %v3558 = vmul.f32 %v2873, %v3494
        %v3559 = vmul.f32 %v2875, %v3495
        %v3560 = vmul.f32 %v2877, %v3496
        %v3561 = vmul.f32 %v2879, %v3497
        %v3562 = vmul.f32 %v2881, %v3498
        %v3563 = vmul.f32 %v2883, %v3499
        %v3564 = vmul.f32 %v2885, %v3500
        %v3565 = vmul.f32 %v2887, %v3501
        %v3566 = vmul.f32 %v2889, %v3502
        %v3567 = vmul.f32 %v2891, %v3503
        %v3568 = vmul.f32 %v2893, %v3504
        %v3569 = vmul.f32 %v2895, %v3505
        %v3570 = vmul.f32 %v2897, %v3506
        %v3571 = vmul.f32 %v2899, %v3507
        %v3572 = vmul.f32 %v2901, %v3508
        %v3573 = vmul.f32 %v2903, %v3509
        %v3574 = vmul.f32 %v2905, %v3510
        %v3575 = vmul.f32 %v2907, %v3511
        %v3576 = vmul.f32 %v2909, %v3512
        %v3577 = vmul.f32 %v2911, %v3513
        %v3578 = vmul.f32 %v2913, %v3514
        %v3579 = vmul.f32 %v2915, %v3515
        %v3580 = vmul.f32 %v2917, %v3516
        %v3581 = vmul.f32 %v2919, %v3517
        %v3582 = vmul.f32 %v2921, %v3518
        %v3583 = vmul.f32 %v2923, %v3519
        %v3584 = vmul.f32 %v2925, %v3520
        %v3585 = vmul.f32 %v2927, %v3521
        %v3586 = vmul.f32 %v2929, %v3522
        %v3587 = vmul.f32 %v2931, %v3523
        %v3588 = vmul.f32 %v2933, %v3524
        %v3589 = vmul.f32 %v2935, %v3525
        %v3590 = vmul.f32 %v2937, %v3526
        %v3591 = vmul.f32 %v2939, %v3527
        %v3592 = vmul.f32 %v2941, %v3528
        %v3593 = vmul.f32 %v2943, %v3529
        %v3594 = vmul.f32 %v2945, %v3530
        %v3595 = vmul.f32 %v2947, %v3531
        %v3596 = vmul.f32 %v2949, %v3532
        %v3597 = vmul.f32 %v2951, %v3533
        %v3598 = vmul.f32 %v2953, %v3534
        %v3599 = vmul.f32 %v2955, %v3535
        %v3600 = vmul.f32 %v2957, %v3536
        %v3601 = vmul.f32 %v2959, %v3537
        %v3602 = vmul.f32 %v2961, %v3538
        %v3603 = vmul.f32 %v2963, %v3539
        %3604 = vadd.xlane.f32.xlu0 %v3349
        %v3605 = vpop.xlane.xlu0 %3604
        %3606 = vadd.xlane.f32.xlu0 %v3351
        %v3607 = vpop.xlane.xlu0 %3606
        %3608 = vadd.xlane.f32.xlu0 %v3353
        %v3609 = vpop.xlane.xlu0 %3608
        %3610 = vadd.xlane.f32.xlu0 %v3355
        %v3611 = vpop.xlane.xlu0 %3610
        %3612 = vadd.xlane.f32.xlu0 %v3357
        %v3613 = vpop.xlane.xlu0 %3612
        %3614 = vadd.xlane.f32.xlu0 %v3359
        %v3615 = vpop.xlane.xlu0 %3614
        %3616 = vadd.xlane.f32.xlu0 %v3361
        %v3617 = vpop.xlane.xlu0 %3616
        %3618 = vadd.xlane.f32.xlu0 %v3363
        %v3619 = vpop.xlane.xlu0 %3618
        %3620 = vadd.xlane.f32.xlu0 %v3365
        %v3621 = vpop.xlane.xlu0 %3620
        %3622 = vadd.xlane.f32.xlu0 %v3367
        %v3623 = vpop.xlane.xlu0 %3622
        %3624 = vadd.xlane.f32.xlu0 %v3369
        %v3625 = vpop.xlane.xlu0 %3624
        %3626 = vadd.xlane.f32.xlu0 %v3371
        %v3627 = vpop.xlane.xlu0 %3626
        %3628 = vadd.xlane.f32.xlu0 %v3373
        %v3629 = vpop.xlane.xlu0 %3628
        %3630 = vadd.xlane.f32.xlu0 %v3375
        %v3631 = vpop.xlane.xlu0 %3630
        %3632 = vadd.xlane.f32.xlu0 %v3377
        %v3633 = vpop.xlane.xlu0 %3632
        %3634 = vadd.xlane.f32.xlu0 %v3379
        %v3635 = vpop.xlane.xlu0 %3634
        %3636 = vadd.xlane.f32.xlu0 %v3381
        %v3637 = vpop.xlane.xlu0 %3636
        %3638 = vadd.xlane.f32.xlu0 %v3383
        %v3639 = vpop.xlane.xlu0 %3638
        %3640 = vadd.xlane.f32.xlu0 %v3385
        %v3641 = vpop.xlane.xlu0 %3640
        %3642 = vadd.xlane.f32.xlu0 %v3387
        %v3643 = vpop.xlane.xlu0 %3642
        %3644 = vadd.xlane.f32.xlu0 %v3389
        %v3645 = vpop.xlane.xlu0 %3644
        %3646 = vadd.xlane.f32.xlu0 %v3391
        %v3647 = vpop.xlane.xlu0 %3646
        %3648 = vadd.xlane.f32.xlu0 %v3393
        %v3649 = vpop.xlane.xlu0 %3648
        %3650 = vadd.xlane.f32.xlu0 %v3395
        %v3651 = vpop.xlane.xlu0 %3650
        %3652 = vadd.xlane.f32.xlu0 %v3397
        %v3653 = vpop.xlane.xlu0 %3652
        %3654 = vadd.xlane.f32.xlu0 %v3399
        %v3655 = vpop.xlane.xlu0 %3654
        %3656 = vadd.xlane.f32.xlu0 %v3401
        %v3657 = vpop.xlane.xlu0 %3656
        %3658 = vadd.xlane.f32.xlu0 %v3403
        %v3659 = vpop.xlane.xlu0 %3658
        %3660 = vadd.xlane.f32.xlu0 %v3405
        %v3661 = vpop.xlane.xlu0 %3660
        %3662 = vadd.xlane.f32.xlu0 %v3407
        %v3663 = vpop.xlane.xlu0 %3662
        %3664 = vadd.xlane.f32.xlu0 %v3409
        %v3665 = vpop.xlane.xlu0 %3664
        %3666 = vadd.xlane.f32.xlu0 %v3411
        %v3667 = vpop.xlane.xlu0 %3666
        %3668 = vadd.xlane.f32.xlu0 %v3413
        %v3669 = vpop.xlane.xlu0 %3668
        %3670 = vadd.xlane.f32.xlu0 %v3415
        %v3671 = vpop.xlane.xlu0 %3670
        %3672 = vadd.xlane.f32.xlu0 %v3417
        %v3673 = vpop.xlane.xlu0 %3672
        %3674 = vadd.xlane.f32.xlu0 %v3419
        %v3675 = vpop.xlane.xlu0 %3674
        %3676 = vadd.xlane.f32.xlu0 %v3421
        %v3677 = vpop.xlane.xlu0 %3676
        %3678 = vadd.xlane.f32.xlu0 %v3423
        %v3679 = vpop.xlane.xlu0 %3678
        %3680 = vadd.xlane.f32.xlu0 %v3425
        %v3681 = vpop.xlane.xlu0 %3680
        %3682 = vadd.xlane.f32.xlu0 %v3427
        %v3683 = vpop.xlane.xlu0 %3682
        %3684 = vadd.xlane.f32.xlu0 %v3429
        %v3685 = vpop.xlane.xlu0 %3684
        %3686 = vadd.xlane.f32.xlu0 %v3431
        %v3687 = vpop.xlane.xlu0 %3686
        %3688 = vadd.xlane.f32.xlu0 %v3433
        %v3689 = vpop.xlane.xlu0 %3688
        %3690 = vadd.xlane.f32.xlu0 %v3435
        %v3691 = vpop.xlane.xlu0 %3690
        %3692 = vadd.xlane.f32.xlu0 %v3437
        %v3693 = vpop.xlane.xlu0 %3692
        %3694 = vadd.xlane.f32.xlu0 %v3439
        %v3695 = vpop.xlane.xlu0 %3694
        %3696 = vadd.xlane.f32.xlu0 %v3441
        %v3697 = vpop.xlane.xlu0 %3696
        %3698 = vadd.xlane.f32.xlu0 %v3443
        %v3699 = vpop.xlane.xlu0 %3698
        %3700 = vadd.xlane.f32.xlu0 %v3445
        %v3701 = vpop.xlane.xlu0 %3700
        %3702 = vadd.xlane.f32.xlu0 %v3447
        %v3703 = vpop.xlane.xlu0 %3702
        %3704 = vadd.xlane.f32.xlu0 %v3449
        %v3705 = vpop.xlane.xlu0 %3704
        %3706 = vadd.xlane.f32.xlu0 %v3451
        %v3707 = vpop.xlane.xlu0 %3706
        %3708 = vadd.xlane.f32.xlu0 %v3453
        %v3709 = vpop.xlane.xlu0 %3708
        %3710 = vadd.xlane.f32.xlu0 %v3455
        %v3711 = vpop.xlane.xlu0 %3710
        %3712 = vadd.xlane.f32.xlu0 %v3457
        %v3713 = vpop.xlane.xlu0 %3712
        %3714 = vadd.xlane.f32.xlu0 %v3459
        %v3715 = vpop.xlane.xlu0 %3714
        %3716 = vadd.xlane.f32.xlu0 %v3461
        %v3717 = vpop.xlane.xlu0 %3716
        %3718 = vadd.xlane.f32.xlu0 %v3463
        %v3719 = vpop.xlane.xlu0 %3718
        %3720 = vadd.xlane.f32.xlu0 %v3465
        %v3721 = vpop.xlane.xlu0 %3720
        %3722 = vadd.xlane.f32.xlu0 %v3467
        %v3723 = vpop.xlane.xlu0 %3722
        %3724 = vadd.xlane.f32.xlu0 %v3469
        %v3725 = vpop.xlane.xlu0 %3724
        %3726 = vadd.xlane.f32.xlu0 %v3471
        %v3727 = vpop.xlane.xlu0 %3726
        %3728 = vadd.xlane.f32.xlu0 %v3473
        %v3729 = vpop.xlane.xlu0 %3728
        %3730 = vadd.xlane.f32.xlu0 %v3475
        %v3731 = vpop.xlane.xlu0 %3730
        %v3732 = vadd.f32 %v3540, %v3605
        %v3733 = vadd.f32 %v3541, %v3607
        %v3734 = vadd.f32 %v3542, %v3609
        %v3735 = vadd.f32 %v3543, %v3611
        %v3736 = vadd.f32 %v3544, %v3613
        %v3737 = vadd.f32 %v3545, %v3615
        %v3738 = vadd.f32 %v3546, %v3617
        %v3739 = vadd.f32 %v3547, %v3619
        %v3740 = vadd.f32 %v3548, %v3621
        %v3741 = vadd.f32 %v3549, %v3623
        %v3742 = vadd.f32 %v3550, %v3625
        %v3743 = vadd.f32 %v3551, %v3627
        %v3744 = vadd.f32 %v3552, %v3629
        %v3745 = vadd.f32 %v3553, %v3631
        %v3746 = vadd.f32 %v3554, %v3633
        %v3747 = vadd.f32 %v3555, %v3635
        %v3748 = vadd.f32 %v3556, %v3637
        %v3749 = vadd.f32 %v3557, %v3639
        %v3750 = vadd.f32 %v3558, %v3641
        %v3751 = vadd.f32 %v3559, %v3643
        %v3752 = vadd.f32 %v3560, %v3645
        %v3753 = vadd.f32 %v3561, %v3647
        %v3754 = vadd.f32 %v3562, %v3649
        %v3755 = vadd.f32 %v3563, %v3651
        %v3756 = vadd.f32 %v3564, %v3653
        %v3757 = vadd.f32 %v3565, %v3655
        %v3758 = vadd.f32 %v3566, %v3657
        %v3759 = vadd.f32 %v3567, %v3659
        %v3760 = vadd.f32 %v3568, %v3661
        %v3761 = vadd.f32 %v3569, %v3663
        %v3762 = vadd.f32 %v3570, %v3665
        %v3763 = vadd.f32 %v3571, %v3667
        %v3764 = vadd.f32 %v3572, %v3669
        %v3765 = vadd.f32 %v3573, %v3671
        %v3766 = vadd.f32 %v3574, %v3673
        %v3767 = vadd.f32 %v3575, %v3675
        %v3768 = vadd.f32 %v3576, %v3677
        %v3769 = vadd.f32 %v3577, %v3679
        %v3770 = vadd.f32 %v3578, %v3681
        %v3771 = vadd.f32 %v3579, %v3683
        %v3772 = vadd.f32 %v3580, %v3685
        %v3773 = vadd.f32 %v3581, %v3687
        %v3774 = vadd.f32 %v3582, %v3689
        %v3775 = vadd.f32 %v3583, %v3691
        %v3776 = vadd.f32 %v3584, %v3693
        %v3777 = vadd.f32 %v3585, %v3695
        %v3778 = vadd.f32 %v3586, %v3697
        %v3779 = vadd.f32 %v3587, %v3699
        %v3780 = vadd.f32 %v3588, %v3701
        %v3781 = vadd.f32 %v3589, %v3703
        %v3782 = vadd.f32 %v3590, %v3705
        %v3783 = vadd.f32 %v3591, %v3707
        %v3784 = vadd.f32 %v3592, %v3709
        %v3785 = vadd.f32 %v3593, %v3711
        %v3786 = vadd.f32 %v3594, %v3713
        %v3787 = vadd.f32 %v3595, %v3715
        %v3788 = vadd.f32 %v3596, %v3717
        %v3789 = vadd.f32 %v3597, %v3719
        %v3790 = vadd.f32 %v3598, %v3721
        %v3791 = vadd.f32 %v3599, %v3723
        %v3792 = vadd.f32 %v3600, %v3725
        %v3793 = vadd.f32 %v3601, %v3727
        %v3794 = vadd.f32 %v3602, %v3729
        %v3795 = vadd.f32 %v3603, %v3731
        %vm3796 = vcmask 7168
        %3797 = vst.msk [vmem:[#allocation3] sm:$0xff] %vm3796, %v3732
        %3798 = vst.msk [vmem:[#allocation3 + $0x8] sm:$0xff] %vm3796, %v3733
        %3799 = vst.msk [vmem:[#allocation3 + $0x10] sm:$0xff] %vm3796, %v3734
        %3800 = vst.msk [vmem:[#allocation3 + $0x18] sm:$0xff] %vm3796, %v3735
        %3801 = vst.msk [vmem:[#allocation3 + $0x20] sm:$0xff] %vm3796, %v3736
        %3802 = vst.msk [vmem:[#allocation3 + $0x28] sm:$0xff] %vm3796, %v3737
        %3803 = vst.msk [vmem:[#allocation3 + $0x30] sm:$0xff] %vm3796, %v3738
        %3804 = vst.msk [vmem:[#allocation3 + $0x38] sm:$0xff] %vm3796, %v3739
        %3805 = vst.msk [vmem:[#allocation3 + $0x40] sm:$0xff] %vm3796, %v3740
        %3806 = vst.msk [vmem:[#allocation3 + $0x48] sm:$0xff] %vm3796, %v3741
        %3807 = vst.msk [vmem:[#allocation3 + $0x50] sm:$0xff] %vm3796, %v3742
        %3808 = vst.msk [vmem:[#allocation3 + $0x58] sm:$0xff] %vm3796, %v3743
        %3809 = vst.msk [vmem:[#allocation3 + $0x60] sm:$0xff] %vm3796, %v3744
        %3810 = vst.msk [vmem:[#allocation3 + $0x68] sm:$0xff] %vm3796, %v3745
        %3811 = vst.msk [vmem:[#allocation3 + $0x70] sm:$0xff] %vm3796, %v3746
        %3812 = vst.msk [vmem:[#allocation3 + $0x78] sm:$0xff] %vm3796, %v3747
        %3813 = vst.msk [vmem:[#allocation3 + $0x80] sm:$0xff] %vm3796, %v3748
        %3814 = vst.msk [vmem:[#allocation3 + $0x88] sm:$0xff] %vm3796, %v3749
        %3815 = vst.msk [vmem:[#allocation3 + $0x90] sm:$0xff] %vm3796, %v3750
        %3816 = vst.msk [vmem:[#allocation3 + $0x98] sm:$0xff] %vm3796, %v3751
        %3817 = vst.msk [vmem:[#allocation3 + $0xa0] sm:$0xff] %vm3796, %v3752
        %3818 = vst.msk [vmem:[#allocation3 + $0xa8] sm:$0xff] %vm3796, %v3753
        %3819 = vst.msk [vmem:[#allocation3 + $0xb0] sm:$0xff] %vm3796, %v3754
        %3820 = vst.msk [vmem:[#allocation3 + $0xb8] sm:$0xff] %vm3796, %v3755
        %3821 = vst.msk [vmem:[#allocation3 + $0xc0] sm:$0xff] %vm3796, %v3756
        %3822 = vst.msk [vmem:[#allocation3 + $0xc8] sm:$0xff] %vm3796, %v3757
        %3823 = vst.msk [vmem:[#allocation3 + $0xd0] sm:$0xff] %vm3796, %v3758
        %3824 = vst.msk [vmem:[#allocation3 + $0xd8] sm:$0xff] %vm3796, %v3759
        %3825 = vst.msk [vmem:[#allocation3 + $0xe0] sm:$0xff] %vm3796, %v3760
        %3826 = vst.msk [vmem:[#allocation3 + $0xe8] sm:$0xff] %vm3796, %v3761
        %3827 = vst.msk [vmem:[#allocation3 + $0xf0] sm:$0xff] %vm3796, %v3762
        %3828 = vst.msk [vmem:[#allocation3 + $0xf8] sm:$0xff] %vm3796, %v3763
        %3829 = vst.msk [vmem:[#allocation3 + $0x100] sm:$0xff] %vm3796, %v3764
        %3830 = vst.msk [vmem:[#allocation3 + $0x108] sm:$0xff] %vm3796, %v3765
        %3831 = vst.msk [vmem:[#allocation3 + $0x110] sm:$0xff] %vm3796, %v3766
        %3832 = vst.msk [vmem:[#allocation3 + $0x118] sm:$0xff] %vm3796, %v3767
        %3833 = vst.msk [vmem:[#allocation3 + $0x120] sm:$0xff] %vm3796, %v3768
        %3834 = vst.msk [vmem:[#allocation3 + $0x128] sm:$0xff] %vm3796, %v3769
        %3835 = vst.msk [vmem:[#allocation3 + $0x130] sm:$0xff] %vm3796, %v3770
        %3836 = vst.msk [vmem:[#allocation3 + $0x138] sm:$0xff] %vm3796, %v3771
        %3837 = vst.msk [vmem:[#allocation3 + $0x140] sm:$0xff] %vm3796, %v3772
        %3838 = vst.msk [vmem:[#allocation3 + $0x148] sm:$0xff] %vm3796, %v3773
        %3839 = vst.msk [vmem:[#allocation3 + $0x150] sm:$0xff] %vm3796, %v3774
        %3840 = vst.msk [vmem:[#allocation3 + $0x158] sm:$0xff] %vm3796, %v3775
        %3841 = vst.msk [vmem:[#allocation3 + $0x160] sm:$0xff] %vm3796, %v3776
        %3842 = vst.msk [vmem:[#allocation3 + $0x168] sm:$0xff] %vm3796, %v3777
        %3843 = vst.msk [vmem:[#allocation3 + $0x170] sm:$0xff] %vm3796, %v3778
        %3844 = vst.msk [vmem:[#allocation3 + $0x178] sm:$0xff] %vm3796, %v3779
        %3845 = vst.msk [vmem:[#allocation3 + $0x180] sm:$0xff] %vm3796, %v3780
        %3846 = vst.msk [vmem:[#allocation3 + $0x188] sm:$0xff] %vm3796, %v3781
        %3847 = vst.msk [vmem:[#allocation3 + $0x190] sm:$0xff] %vm3796, %v3782
        %3848 = vst.msk [vmem:[#allocation3 + $0x198] sm:$0xff] %vm3796, %v3783
        %3849 = vst.msk [vmem:[#allocation3 + $0x1a0] sm:$0xff] %vm3796, %v3784
        %3850 = vst.msk [vmem:[#allocation3 + $0x1a8] sm:$0xff] %vm3796, %v3785
        %3851 = vst.msk [vmem:[#allocation3 + $0x1b0] sm:$0xff] %vm3796, %v3786
        %3852 = vst.msk [vmem:[#allocation3 + $0x1b8] sm:$0xff] %vm3796, %v3787
        %3853 = vst.msk [vmem:[#allocation3 + $0x1c0] sm:$0xff] %vm3796, %v3788
        %3854 = vst.msk [vmem:[#allocation3 + $0x1c8] sm:$0xff] %vm3796, %v3789
        %3855 = vst.msk [vmem:[#allocation3 + $0x1d0] sm:$0xff] %vm3796, %v3790
        %3856 = vst.msk [vmem:[#allocation3 + $0x1d8] sm:$0xff] %vm3796, %v3791
        %3857 = vst.msk [vmem:[#allocation3 + $0x1e0] sm:$0xff] %vm3796, %v3792
        %3858 = vst.msk [vmem:[#allocation3 + $0x1e8] sm:$0xff] %vm3796, %v3793
        %3859 = vst.msk [vmem:[#allocation3 + $0x1f0] sm:$0xff] %vm3796, %v3794
        %3860 = vst.msk [vmem:[#allocation3 + $0x1f8] sm:$0xff] %vm3796, %v3795
        %3861 = vmatprep.subr.mxu0 0.0
        %3862 = vmatpush1.msra.mxu0 %v1487
        %3863 = vmatprep.subr.mxu0 0.0
        %3864 = vmatpush1.msra.mxu0 %v1488
        %3865 = vmatprep.subr.mxu0 0.0
        %3866 = vmatpush1.msra.mxu0 %v1489
        %3867 = vmatprep.subr.mxu0 0.0
        %3868 = vmatpush1.msra.mxu0 %v1490
        %3869 = vmatprep.subr.mxu0 0.0
        %3870 = vmatpush1.msra.mxu0 %v1491
        %3871 = vmatprep.subr.mxu0 0.0
        %3872 = vmatpush1.msra.mxu0 %v1492
        %3873 = vmatprep.subr.mxu0 0.0
        %3874 = vmatpush1.msra.mxu0 %v1493
        %3875 = vmatprep.subr.mxu0 0.0
        %3876 = vmatpush1.msra.mxu0 %v1494
        %3877 = vmatprep.subr.mxu0 0.0
        %3878 = vmatpush1.msra.mxu0 %v1495
        %3879 = vmatprep.subr.mxu0 0.0
        %3880 = vmatpush1.msra.mxu0 %v1496
        %3881 = vmatprep.subr.mxu0 0.0
        %3882 = vmatpush1.msra.mxu0 %v1497
        %3883 = vmatprep.subr.mxu0 0.0
        %3884 = vmatpush1.msra.mxu0 %v1498
        %3885 = vmatprep.subr.mxu0 0.0
        %3886 = vmatpush1.msra.mxu0 %v1499
        %3887 = vmatprep.subr.mxu0 0.0
        %3888 = vmatpush1.msra.mxu0 %v1500
        %3889 = vmatprep.subr.mxu0 0.0
        %3890 = vmatpush1.msra.mxu0 %v1501
        %3891 = vmatprep.subr.mxu0 0.0
        %3892 = vmatpush1.msra.mxu0 %v1502
        %3893 = vmatprep.subr.mxu0 0.0
        %3894 = vmatpush1.msra.mxu0 0.0
        %3895 = vmatprep.subr.mxu0 0.0
        %3896 = vmatpush1.msra.mxu0 0.0
        %3897 = vmatprep.subr.mxu0 0.0
        %3898 = vmatpush1.msra.mxu0 0.0
        %3899 = vmatprep.subr.mxu0 0.0
        %3900 = vmatpush1.msra.mxu0 0.0
        %3901 = vmatprep.subr.mxu0 0.0
        %3902 = vmatpush1.msra.mxu0 0.0
        %3903 = vmatprep.subr.mxu0 0.0
        %3904 = vmatpush1.msra.mxu0 0.0
        %3905 = vmatprep.subr.mxu0 0.0
        %3906 = vmatpush1.msra.mxu0 0.0
        %3907 = vmatprep.subr.mxu0 0.0
        %3908 = vmatpush1.msra.mxu0 0.0
        %3909 = vmatprep.subr.mxu0 0.0
        %3910 = vmatpush1.msra.mxu0 0.0
        %3911 = vmatprep.subr.mxu0 0.0
        %3912 = vmatpush1.msra.mxu0 0.0
        %3913 = vmatprep.subr.mxu0 0.0
        %3914 = vmatpush1.msra.mxu0 0.0
        %3915 = vmatprep.subr.mxu0 0.0
        %3916 = vmatpush1.msra.mxu0 0.0
        %3917 = vmatprep.subr.mxu0 0.0
        %3918 = vmatpush1.msra.mxu0 0.0
        %3919 = vmatprep.subr.mxu0 0.0
        %3920 = vmatpush1.msra.mxu0 0.0
        %3921 = vmatprep.subr.mxu0 0.0
        %3922 = vmatpush1.msra.mxu0 0.0
        %3923 = vmatprep.subr.mxu0 0.0
        %3924 = vmatpush1.msra.mxu0 0.0
        %3925 = vmatprep.mubr.f32.mxu0 0.0
        %3926 = vmatmul.mubr.f32.gmra.mrb[0].mxu0 %v3349
        %v3927 = vpop.f32.mrb[0].mxu0
        %v3928 = vadd.f32 0.0, %v3927
        %v3929 = vpop.f32.mrb[0].mxu0
        %3930 = vmatprep.mubr.f32.mxu0 0.0
        %3931 = vmatmul.mubr.f32.gmra.mrb[0].mxu0 %v3351
        %v3932 = vpop.f32.mrb[0].mxu0
        %v3933 = vadd.f32 0.0, %v3932
        %v3934 = vpop.f32.mrb[0].mxu0
        %3935 = vmatprep.mubr.f32.mxu0 0.0
        %3936 = vmatmul.mubr.f32.gmra.mrb[0].mxu0 %v3353
        %v3937 = vpop.f32.mrb[0].mxu0
        %v3938 = vadd.f32 0.0, %v3937
        %v3939 = vpop.f32.mrb[0].mxu0
        %3940 = vmatprep.mubr.f32.mxu0 0.0
        %3941 = vmatmul.mubr.f32.gmra.mrb[0].mxu0 %v3355
        %v3942 = vpop.f32.mrb[0].mxu0
        %v3943 = vadd.f32 0.0, %v3942
        %v3944 = vpop.f32.mrb[0].mxu0
        %3945 = vmatprep.mubr.f32.mxu0 0.0
        %3946 = vmatmul.mubr.f32.gmra.mrb[0].mxu0 %v3357
        %v3947 = vpop.f32.mrb[0].mxu0
        %v3948 = vadd.f32 0.0, %v3947
        %v3949 = vpop.f32.mrb[0].mxu0
        %3950 = vmatprep.mubr.f32.mxu0 0.0
        %3951 = vmatmul.mubr.f32.gmra.mrb[0].mxu0 %v3359
        %v3952 = vpop.f32.mrb[0].mxu0
        %v3953 = vadd.f32 0.0, %v3952
        %v3954 = vpop.f32.mrb[0].mxu0
        %3955 = vmatprep.mubr.f32.mxu0 0.0
        %3956 = vmatmul.mubr.f32.gmra.mrb[0].mxu0 %v3361
        %v3957 = vpop.f32.mrb[0].mxu0
        %v3958 = vadd.f32 0.0, %v3957
        %v3959 = vpop.f32.mrb[0].mxu0
        %3960 = vmatprep.mubr.f32.mxu0 0.0
        %3961 = vmatmul.mubr.f32.gmra.mrb[0].mxu0 %v3363
        %v3962 = vpop.f32.mrb[0].mxu0
        %v3963 = vadd.f32 0.0, %v3962
        %v3964 = vpop.f32.mrb[0].mxu0
        %3965 = vmatprep.mubr.f32.mxu0 0.0
        %3966 = vmatmul.mubr.f32.gmra.mrb[0].mxu0 %v3365
        %v3967 = vpop.f32.mrb[0].mxu0
        %v3968 = vadd.f32 0.0, %v3967
        %v3969 = vpop.f32.mrb[0].mxu0
        %3970 = vmatprep.mubr.f32.mxu0 0.0
        %3971 = vmatmul.mubr.f32.gmra.mrb[0].mxu0 %v3367
        %v3972 = vpop.f32.mrb[0].mxu0
        %v3973 = vadd.f32 0.0, %v3972
        %v3974 = vpop.f32.mrb[0].mxu0
        %3975 = vmatprep.mubr.f32.mxu0 0.0
        %3976 = vmatmul.mubr.f32.gmra.mrb[0].mxu0 %v3369
        %v3977 = vpop.f32.mrb[0].mxu0
        %v3978 = vadd.f32 0.0, %v3977
        %v3979 = vpop.f32.mrb[0].mxu0
        %3980 = vmatprep.mubr.f32.mxu0 0.0
        %3981 = vmatmul.mubr.f32.gmra.mrb[0].mxu0 %v3371
        %v3982 = vpop.f32.mrb[0].mxu0
        %v3983 = vadd.f32 0.0, %v3982
        %v3984 = vpop.f32.mrb[0].mxu0
        %3985 = vmatprep.mubr.f32.mxu0 0.0
        %3986 = vmatmul.mubr.f32.gmra.mrb[0].mxu0 %v3373
        %v3987 = vpop.f32.mrb[0].mxu0
        %v3988 = vadd.f32 0.0, %v3987
        %v3989 = vpop.f32.mrb[0].mxu0
        %3990 = vmatprep.mubr.f32.mxu0 0.0
        %3991 = vmatmul.mubr.f32.gmra.mrb[0].mxu0 %v3375
        %v3992 = vpop.f32.mrb[0].mxu0
        %v3993 = vadd.f32 0.0, %v3992
        %v3994 = vpop.f32.mrb[0].mxu0
        %3995 = vmatprep.mubr.f32.mxu0 0.0
        %3996 = vmatmul.mubr.f32.gmra.mrb[0].mxu0 %v3377
        %v3997 = vpop.f32.mrb[0].mxu0
        %v3998 = vadd.f32 0.0, %v3997
        %v3999 = vpop.f32.mrb[0].mxu0
        %4000 = vmatprep.mubr.f32.mxu0 0.0
        %4001 = vmatmul.mubr.f32.gmra.mrb[0].mxu0 %v3379
        %v4002 = vpop.f32.mrb[0].mxu0
        %v4003 = vadd.f32 0.0, %v4002
        %v4004 = vpop.f32.mrb[0].mxu0
        %4005 = vdwg.mxu0
        %4006 = vmatprep.subr.mxu0 0.0
        %4007 = vmatpush1.msra.mxu0 %v1503
        %4008 = vmatprep.subr.mxu0 0.0
        %4009 = vmatpush1.msra.mxu0 %v1504
        %4010 = vmatprep.subr.mxu0 0.0
        %4011 = vmatpush1.msra.mxu0 %v1505
        %4012 = vmatprep.subr.mxu0 0.0
        %4013 = vmatpush1.msra.mxu0 %v1506
        %4014 = vmatprep.subr.mxu0 0.0
        %4015 = vmatpush1.msra.mxu0 %v1507
        %4016 = vmatprep.subr.mxu0 0.0
        %4017 = vmatpush1.msra.mxu0 %v1508
        %4018 = vmatprep.subr.mxu0 0.0
        %4019 = vmatpush1.msra.mxu0 %v1509
        %4020 = vmatprep.subr.mxu0 0.0
        %4021 = vmatpush1.msra.mxu0 %v1510
        %4022 = vmatprep.subr.mxu0 0.0
        %4023 = vmatpush1.msra.mxu0 %v1511
        %4024 = vmatprep.subr.mxu0 0.0
        %4025 = vmatpush1.msra.mxu0 %v1512
        %4026 = vmatprep.subr.mxu0 0.0
        %4027 = vmatpush1.msra.mxu0 %v1513
        %4028 = vmatprep.subr.mxu0 0.0
        %4029 = vmatpush1.msra.mxu0 %v1514
        %4030 = vmatprep.subr.mxu0 0.0
        %4031 = vmatpush1.msra.mxu0 %v1515
        %4032 = vmatprep.subr.mxu0 0.0
        %4033 = vmatpush1.msra.mxu0 %v1516
        %4034 = vmatprep.subr.mxu0 0.0
        %4035 = vmatpush1.msra.mxu0 %v1517
        %4036 = vmatprep.subr.mxu0 0.0
        %4037 = vmatpush1.msra.mxu0 %v1518
        %4038 = vmatprep.subr.mxu0 0.0
        %4039 = vmatpush1.msra.mxu0 0.0
        %4040 = vmatprep.subr.mxu0 0.0
        %4041 = vmatpush1.msra.mxu0 0.0
        %4042 = vmatprep.subr.mxu0 0.0
        %4043 = vmatpush1.msra.mxu0 0.0
        %4044 = vmatprep.subr.mxu0 0.0
        %4045 = vmatpush1.msra.mxu0 0.0
        %4046 = vmatprep.subr.mxu0 0.0
        %4047 = vmatpush1.msra.mxu0 0.0
        %4048 = vmatprep.subr.mxu0 0.0
        %4049 = vmatpush1.msra.mxu0 0.0
        %4050 = vmatprep.subr.mxu0 0.0
        %4051 = vmatpush1.msra.mxu0 0.0
        %4052 = vmatprep.subr.mxu0 0.0
        %4053 = vmatpush1.msra.mxu0 0.0
        %4054 = vmatprep.subr.mxu0 0.0
        %4055 = vmatpush1.msra.mxu0 0.0
        %4056 = vmatprep.subr.mxu0 0.0
        %4057 = vmatpush1.msra.mxu0 0.0
        %4058 = vmatprep.subr.mxu0 0.0
        %4059 = vmatpush1.msra.mxu0 0.0
        %4060 = vmatprep.subr.mxu0 0.0
        %4061 = vmatpush1.msra.mxu0 0.0
        %4062 = vmatprep.subr.mxu0 0.0
        %4063 = vmatpush1.msra.mxu0 0.0
        %4064 = vmatprep.subr.mxu0 0.0
        %4065 = vmatpush1.msra.mxu0 0.0
        %4066 = vmatprep.subr.mxu0 0.0
        %4067 = vmatpush1.msra.mxu0 0.0
        %4068 = vmatprep.subr.mxu0 0.0
        %4069 = vmatpush1.msra.mxu0 0.0
        %4070 = vmatprep.mubr.f32.mxu0 0.0
        %4071 = vmatmul.mubr.f32.gmra.mrb[0].mxu0 %v3381
        %v4072 = vpop.f32.mrb[0].mxu0
        %v4073 = vadd.f32 0.0, %v4072
        %v4074 = vpop.f32.mrb[0].mxu0
        %4075 = vmatprep.mubr.f32.mxu0 0.0
        %4076 = vmatmul.mubr.f32.gmra.mrb[0].mxu0 %v3383
        %v4077 = vpop.f32.mrb[0].mxu0
        %v4078 = vadd.f32 0.0, %v4077
        %v4079 = vpop.f32.mrb[0].mxu0
        %4080 = vmatprep.mubr.f32.mxu0 0.0
        %4081 = vmatmul.mubr.f32.gmra.mrb[0].mxu0 %v3385
        %v4082 = vpop.f32.mrb[0].mxu0
        %v4083 = vadd.f32 0.0, %v4082
        %v4084 = vpop.f32.mrb[0].mxu0
        %4085 = vmatprep.mubr.f32.mxu0 0.0
        %4086 = vmatmul.mubr.f32.gmra.mrb[0].mxu0 %v3387
        %v4087 = vpop.f32.mrb[0].mxu0
        %v4088 = vadd.f32 0.0, %v4087
        %v4089 = vpop.f32.mrb[0].mxu0
        %4090 = vmatprep.mubr.f32.mxu0 0.0
        %4091 = vmatmul.mubr.f32.gmra.mrb[0].mxu0 %v3389
        %v4092 = vpop.f32.mrb[0].mxu0
        %v4093 = vadd.f32 0.0, %v4092
        %v4094 = vpop.f32.mrb[0].mxu0
        %4095 = vmatprep.mubr.f32.mxu0 0.0
        %4096 = vmatmul.mubr.f32.gmra.mrb[0].mxu0 %v3391
        %v4097 = vpop.f32.mrb[0].mxu0
        %v4098 = vadd.f32 0.0, %v4097
        %v4099 = vpop.f32.mrb[0].mxu0
        %4100 = vmatprep.mubr.f32.mxu0 0.0
        %4101 = vmatmul.mubr.f32.gmra.mrb[0].mxu0 %v3393
        %v4102 = vpop.f32.mrb[0].mxu0
        %v4103 = vadd.f32 0.0, %v4102
        %v4104 = vpop.f32.mrb[0].mxu0
        %4105 = vmatprep.mubr.f32.mxu0 0.0
        %4106 = vmatmul.mubr.f32.gmra.mrb[0].mxu0 %v3395
        %v4107 = vpop.f32.mrb[0].mxu0
        %v4108 = vadd.f32 0.0, %v4107
        %v4109 = vpop.f32.mrb[0].mxu0
        %4110 = vmatprep.mubr.f32.mxu0 0.0
        %4111 = vmatmul.mubr.f32.gmra.mrb[0].mxu0 %v3397
        %v4112 = vpop.f32.mrb[0].mxu0
        %v4113 = vadd.f32 0.0, %v4112
        %v4114 = vpop.f32.mrb[0].mxu0
        %4115 = vmatprep.mubr.f32.mxu0 0.0
        %4116 = vmatmul.mubr.f32.gmra.mrb[0].mxu0 %v3399
        %v4117 = vpop.f32.mrb[0].mxu0
        %v4118 = vadd.f32 0.0, %v4117
        %v4119 = vpop.f32.mrb[0].mxu0
        %4120 = vmatprep.mubr.f32.mxu0 0.0
        %4121 = vmatmul.mubr.f32.gmra.mrb[0].mxu0 %v3401
        %v4122 = vpop.f32.mrb[0].mxu0
        %v4123 = vadd.f32 0.0, %v4122
        %v4124 = vpop.f32.mrb[0].mxu0
        %4125 = vmatprep.mubr.f32.mxu0 0.0
        %4126 = vmatmul.mubr.f32.gmra.mrb[0].mxu0 %v3403
        %v4127 = vpop.f32.mrb[0].mxu0
        %v4128 = vadd.f32 0.0, %v4127
        %v4129 = vpop.f32.mrb[0].mxu0
        %4130 = vmatprep.mubr.f32.mxu0 0.0
        %4131 = vmatmul.mubr.f32.gmra.mrb[0].mxu0 %v3405
        %v4132 = vpop.f32.mrb[0].mxu0
        %v4133 = vadd.f32 0.0, %v4132
        %v4134 = vpop.f32.mrb[0].mxu0
        %4135 = vmatprep.mubr.f32.mxu0 0.0
        %4136 = vmatmul.mubr.f32.gmra.mrb[0].mxu0 %v3407
        %v4137 = vpop.f32.mrb[0].mxu0
        %v4138 = vadd.f32 0.0, %v4137
        %v4139 = vpop.f32.mrb[0].mxu0
        %4140 = vmatprep.mubr.f32.mxu0 0.0
        %4141 = vmatmul.mubr.f32.gmra.mrb[0].mxu0 %v3409
        %v4142 = vpop.f32.mrb[0].mxu0
        %v4143 = vadd.f32 0.0, %v4142
        %v4144 = vpop.f32.mrb[0].mxu0
        %4145 = vmatprep.mubr.f32.mxu0 0.0
        %4146 = vmatmul.mubr.f32.gmra.mrb[0].mxu0 %v3411
        %v4147 = vpop.f32.mrb[0].mxu0
        %v4148 = vadd.f32 0.0, %v4147
        %v4149 = vpop.f32.mrb[0].mxu0
        %4150 = vdwg.mxu0
        %4151 = vmatprep.subr.mxu0 0.0
        %4152 = vmatpush1.msra.mxu0 %v1519
        %4153 = vmatprep.subr.mxu0 0.0
        %4154 = vmatpush1.msra.mxu0 %v1520
        %4155 = vmatprep.subr.mxu0 0.0
        %4156 = vmatpush1.msra.mxu0 %v1521
        %4157 = vmatprep.subr.mxu0 0.0
        %4158 = vmatpush1.msra.mxu0 %v1522
        %4159 = vmatprep.subr.mxu0 0.0
        %4160 = vmatpush1.msra.mxu0 %v1523
        %4161 = vmatprep.subr.mxu0 0.0
        %4162 = vmatpush1.msra.mxu0 %v1524
        %4163 = vmatprep.subr.mxu0 0.0
        %4164 = vmatpush1.msra.mxu0 %v1525
        %4165 = vmatprep.subr.mxu0 0.0
        %4166 = vmatpush1.msra.mxu0 %v1526
        %4167 = vmatprep.subr.mxu0 0.0
        %4168 = vmatpush1.msra.mxu0 %v1527
        %4169 = vmatprep.subr.mxu0 0.0
        %4170 = vmatpush1.msra.mxu0 %v1528
        %4171 = vmatprep.subr.mxu0 0.0
        %4172 = vmatpush1.msra.mxu0 %v1529
        %4173 = vmatprep.subr.mxu0 0.0
        %4174 = vmatpush1.msra.mxu0 %v1530
        %4175 = vmatprep.subr.mxu0 0.0
        %4176 = vmatpush1.msra.mxu0 %v1531
        %4177 = vmatprep.subr.mxu0 0.0
        %4178 = vmatpush1.msra.mxu0 %v1532
        %4179 = vmatprep.subr.mxu0 0.0
        %4180 = vmatpush1.msra.mxu0 %v1533
        %4181 = vmatprep.subr.mxu0 0.0
        %4182 = vmatpush1.msra.mxu0 %v1534
        %4183 = vmatprep.subr.mxu0 0.0
        %4184 = vmatpush1.msra.mxu0 0.0
        %4185 = vmatprep.subr.mxu0 0.0
        %4186 = vmatpush1.msra.mxu0 0.0
        %4187 = vmatprep.subr.mxu0 0.0
        %4188 = vmatpush1.msra.mxu0 0.0
        %4189 = vmatprep.subr.mxu0 0.0
        %4190 = vmatpush1.msra.mxu0 0.0
        %4191 = vmatprep.subr.mxu0 0.0
        %4192 = vmatpush1.msra.mxu0 0.0
        %4193 = vmatprep.subr.mxu0 0.0
        %4194 = vmatpush1.msra.mxu0 0.0
        %4195 = vmatprep.subr.mxu0 0.0
        %4196 = vmatpush1.msra.mxu0 0.0
        %4197 = vmatprep.subr.mxu0 0.0
        %4198 = vmatpush1.msra.mxu0 0.0
        %4199 = vmatprep.subr.mxu0 0.0
        %4200 = vmatpush1.msra.mxu0 0.0
        %4201 = vmatprep.subr.mxu0 0.0
        %4202 = vmatpush1.msra.mxu0 0.0
        %4203 = vmatprep.subr.mxu0 0.0
        %4204 = vmatpush1.msra.mxu0 0.0
        %4205 = vmatprep.subr.mxu0 0.0
        %4206 = vmatpush1.msra.mxu0 0.0
        %4207 = vmatprep.subr.mxu0 0.0
        %4208 = vmatpush1.msra.mxu0 0.0
        %4209 = vmatprep.subr.mxu0 0.0
        %4210 = vmatpush1.msra.mxu0 0.0
        %4211 = vmatprep.subr.mxu0 0.0
        %4212 = vmatpush1.msra.mxu0 0.0
        %4213 = vmatprep.subr.mxu0 0.0
        %4214 = vmatpush1.msra.mxu0 0.0
        %4215 = vmatprep.mubr.f32.mxu0 0.0
        %4216 = vmatmul.mubr.f32.gmra.mrb[0].mxu0 %v3413
        %v4217 = vpop.f32.mrb[0].mxu0
        %v4218 = vadd.f32 0.0, %v4217
        %v4219 = vpop.f32.mrb[0].mxu0
        %4220 = vmatprep.mubr.f32.mxu0 0.0
        %4221 = vmatmul.mubr.f32.gmra.mrb[0].mxu0 %v3415
        %v4222 = vpop.f32.mrb[0].mxu0
        %v4223 = vadd.f32 0.0, %v4222
        %v4224 = vpop.f32.mrb[0].mxu0
        %4225 = vmatprep.mubr.f32.mxu0 0.0
        %4226 = vmatmul.mubr.f32.gmra.mrb[0].mxu0 %v3417
        %v4227 = vpop.f32.mrb[0].mxu0
        %v4228 = vadd.f32 0.0, %v4227
        %v4229 = vpop.f32.mrb[0].mxu0
        %4230 = vmatprep.mubr.f32.mxu0 0.0
        %4231 = vmatmul.mubr.f32.gmra.mrb[0].mxu0 %v3419
        %v4232 = vpop.f32.mrb[0].mxu0
        %v4233 = vadd.f32 0.0, %v4232
        %v4234 = vpop.f32.mrb[0].mxu0
        %4235 = vmatprep.mubr.f32.mxu0 0.0
        %4236 = vmatmul.mubr.f32.gmra.mrb[0].mxu0 %v3421
        %v4237 = vpop.f32.mrb[0].mxu0
        %v4238 = vadd.f32 0.0, %v4237
        %v4239 = vpop.f32.mrb[0].mxu0
        %4240 = vmatprep.mubr.f32.mxu0 0.0
        %4241 = vmatmul.mubr.f32.gmra.mrb[0].mxu0 %v3423
        %v4242 = vpop.f32.mrb[0].mxu0
        %v4243 = vadd.f32 0.0, %v4242
        %v4244 = vpop.f32.mrb[0].mxu0
        %4245 = vmatprep.mubr.f32.mxu0 0.0
        %4246 = vmatmul.mubr.f32.gmra.mrb[0].mxu0 %v3425
        %v4247 = vpop.f32.mrb[0].mxu0
        %v4248 = vadd.f32 0.0, %v4247
        %v4249 = vpop.f32.mrb[0].mxu0
        %4250 = vmatprep.mubr.f32.mxu0 0.0
        %4251 = vmatmul.mubr.f32.gmra.mrb[0].mxu0 %v3427
        %v4252 = vpop.f32.mrb[0].mxu0
        %v4253 = vadd.f32 0.0, %v4252
        %v4254 = vpop.f32.mrb[0].mxu0
        %4255 = vmatprep.mubr.f32.mxu0 0.0
        %4256 = vmatmul.mubr.f32.gmra.mrb[0].mxu0 %v3429
        %v4257 = vpop.f32.mrb[0].mxu0
        %v4258 = vadd.f32 0.0, %v4257
        %v4259 = vpop.f32.mrb[0].mxu0
        %4260 = vmatprep.mubr.f32.mxu0 0.0
        %4261 = vmatmul.mubr.f32.gmra.mrb[0].mxu0 %v3431
        %v4262 = vpop.f32.mrb[0].mxu0
        %v4263 = vadd.f32 0.0, %v4262
        %v4264 = vpop.f32.mrb[0].mxu0
        %4265 = vmatprep.mubr.f32.mxu0 0.0
        %4266 = vmatmul.mubr.f32.gmra.mrb[0].mxu0 %v3433
        %v4267 = vpop.f32.mrb[0].mxu0
        %v4268 = vadd.f32 0.0, %v4267
        %v4269 = vpop.f32.mrb[0].mxu0
        %4270 = vmatprep.mubr.f32.mxu0 0.0
        %4271 = vmatmul.mubr.f32.gmra.mrb[0].mxu0 %v3435
        %v4272 = vpop.f32.mrb[0].mxu0
        %v4273 = vadd.f32 0.0, %v4272
        %v4274 = vpop.f32.mrb[0].mxu0
        %4275 = vmatprep.mubr.f32.mxu0 0.0
        %4276 = vmatmul.mubr.f32.gmra.mrb[0].mxu0 %v3437
        %v4277 = vpop.f32.mrb[0].mxu0
        %v4278 = vadd.f32 0.0, %v4277
        %v4279 = vpop.f32.mrb[0].mxu0
        %4280 = vmatprep.mubr.f32.mxu0 0.0
        %4281 = vmatmul.mubr.f32.gmra.mrb[0].mxu0 %v3439
        %v4282 = vpop.f32.mrb[0].mxu0
        %v4283 = vadd.f32 0.0, %v4282
        %v4284 = vpop.f32.mrb[0].mxu0
        %4285 = vmatprep.mubr.f32.mxu0 0.0
        %4286 = vmatmul.mubr.f32.gmra.mrb[0].mxu0 %v3441
        %v4287 = vpop.f32.mrb[0].mxu0
        %v4288 = vadd.f32 0.0, %v4287
        %v4289 = vpop.f32.mrb[0].mxu0
        %4290 = vmatprep.mubr.f32.mxu0 0.0
        %4291 = vmatmul.mubr.f32.gmra.mrb[0].mxu0 %v3443
        %v4292 = vpop.f32.mrb[0].mxu0
        %v4293 = vadd.f32 0.0, %v4292
        %v4294 = vpop.f32.mrb[0].mxu0
        %4295 = vdwg.mxu0
        %4296 = vmatprep.subr.mxu0 0.0
        %4297 = vmatpush1.msra.mxu0 %v1535
        %4298 = vmatprep.subr.mxu0 0.0
        %4299 = vmatpush1.msra.mxu0 %v1536
        %4300 = vmatprep.subr.mxu0 0.0
        %4301 = vmatpush1.msra.mxu0 %v1537
        %4302 = vmatprep.subr.mxu0 0.0
        %4303 = vmatpush1.msra.mxu0 %v1538
        %4304 = vmatprep.subr.mxu0 0.0
        %4305 = vmatpush1.msra.mxu0 %v1539
        %4306 = vmatprep.subr.mxu0 0.0
        %4307 = vmatpush1.msra.mxu0 %v1540
        %4308 = vmatprep.subr.mxu0 0.0
        %4309 = vmatpush1.msra.mxu0 %v1541
        %4310 = vmatprep.subr.mxu0 0.0
        %4311 = vmatpush1.msra.mxu0 %v1542
        %4312 = vmatprep.subr.mxu0 0.0
        %4313 = vmatpush1.msra.mxu0 %v1543
        %4314 = vmatprep.subr.mxu0 0.0
        %4315 = vmatpush1.msra.mxu0 %v1544
        %4316 = vmatprep.subr.mxu0 0.0
        %4317 = vmatpush1.msra.mxu0 %v1545
        %4318 = vmatprep.subr.mxu0 0.0
        %4319 = vmatpush1.msra.mxu0 %v1546
        %4320 = vmatprep.subr.mxu0 0.0
        %4321 = vmatpush1.msra.mxu0 %v1547
        %4322 = vmatprep.subr.mxu0 0.0
        %4323 = vmatpush1.msra.mxu0 %v1548
        %4324 = vmatprep.subr.mxu0 0.0
        %4325 = vmatpush1.msra.mxu0 %v1549
        %4326 = vmatprep.subr.mxu0 0.0
        %4327 = vmatpush1.msra.mxu0 %v1550
        %4328 = vmatprep.subr.mxu0 0.0
        %4329 = vmatpush1.msra.mxu0 0.0
        %4330 = vmatprep.subr.mxu0 0.0
        %4331 = vmatpush1.msra.mxu0 0.0
        %4332 = vmatprep.subr.mxu0 0.0
        %4333 = vmatpush1.msra.mxu0 0.0
        %4334 = vmatprep.subr.mxu0 0.0
        %4335 = vmatpush1.msra.mxu0 0.0
        %4336 = vmatprep.subr.mxu0 0.0
        %4337 = vmatpush1.msra.mxu0 0.0
        %4338 = vmatprep.subr.mxu0 0.0
        %4339 = vmatpush1.msra.mxu0 0.0
        %4340 = vmatprep.subr.mxu0 0.0
        %4341 = vmatpush1.msra.mxu0 0.0
        %4342 = vmatprep.subr.mxu0 0.0
        %4343 = vmatpush1.msra.mxu0 0.0
        %4344 = vmatprep.subr.mxu0 0.0
        %4345 = vmatpush1.msra.mxu0 0.0
        %4346 = vmatprep.subr.mxu0 0.0
        %4347 = vmatpush1.msra.mxu0 0.0
        %4348 = vmatprep.subr.mxu0 0.0
        %4349 = vmatpush1.msra.mxu0 0.0
        %4350 = vmatprep.subr.mxu0 0.0
        %4351 = vmatpush1.msra.mxu0 0.0
        %4352 = vmatprep.subr.mxu0 0.0
        %4353 = vmatpush1.msra.mxu0 0.0
        %4354 = vmatprep.subr.mxu0 0.0
        %4355 = vmatpush1.msra.mxu0 0.0
        %4356 = vmatprep.subr.mxu0 0.0
        %4357 = vmatpush1.msra.mxu0 0.0
        %4358 = vmatprep.subr.mxu0 0.0
        %4359 = vmatpush1.msra.mxu0 0.0
        %4360 = vmatprep.mubr.f32.mxu0 0.0
        %4361 = vmatmul.mubr.f32.gmra.mrb[0].mxu0 %v3445
        %v4362 = vpop.f32.mrb[0].mxu0
        %v4363 = vadd.f32 0.0, %v4362
        %v4364 = vpop.f32.mrb[0].mxu0
        %4365 = vmatprep.mubr.f32.mxu0 0.0
        %4366 = vmatmul.mubr.f32.gmra.mrb[0].mxu0 %v3447
        %v4367 = vpop.f32.mrb[0].mxu0
        %v4368 = vadd.f32 0.0, %v4367
        %v4369 = vpop.f32.mrb[0].mxu0
        %4370 = vmatprep.mubr.f32.mxu0 0.0
        %4371 = vmatmul.mubr.f32.gmra.mrb[0].mxu0 %v3449
        %v4372 = vpop.f32.mrb[0].mxu0
        %v4373 = vadd.f32 0.0, %v4372
        %v4374 = vpop.f32.mrb[0].mxu0
        %4375 = vmatprep.mubr.f32.mxu0 0.0
        %4376 = vmatmul.mubr.f32.gmra.mrb[0].mxu0 %v3451
        %v4377 = vpop.f32.mrb[0].mxu0
        %v4378 = vadd.f32 0.0, %v4377
        %v4379 = vpop.f32.mrb[0].mxu0
        %4380 = vmatprep.mubr.f32.mxu0 0.0
        %4381 = vmatmul.mubr.f32.gmra.mrb[0].mxu0 %v3453
        %v4382 = vpop.f32.mrb[0].mxu0
        %v4383 = vadd.f32 0.0, %v4382
        %v4384 = vpop.f32.mrb[0].mxu0
        %4385 = vmatprep.mubr.f32.mxu0 0.0
        %4386 = vmatmul.mubr.f32.gmra.mrb[0].mxu0 %v3455
        %v4387 = vpop.f32.mrb[0].mxu0
        %v4388 = vadd.f32 0.0, %v4387
        %v4389 = vpop.f32.mrb[0].mxu0
        %4390 = vmatprep.mubr.f32.mxu0 0.0
        %4391 = vmatmul.mubr.f32.gmra.mrb[0].mxu0 %v3457
        %v4392 = vpop.f32.mrb[0].mxu0
        %v4393 = vadd.f32 0.0, %v4392
        %v4394 = vpop.f32.mrb[0].mxu0
        %4395 = vmatprep.mubr.f32.mxu0 0.0
        %4396 = vmatmul.mubr.f32.gmra.mrb[0].mxu0 %v3459
        %v4397 = vpop.f32.mrb[0].mxu0
        %v4398 = vadd.f32 0.0, %v4397
        %v4399 = vpop.f32.mrb[0].mxu0
        %4400 = vmatprep.mubr.f32.mxu0 0.0
        %4401 = vmatmul.mubr.f32.gmra.mrb[0].mxu0 %v3461
        %v4402 = vpop.f32.mrb[0].mxu0
        %v4403 = vadd.f32 0.0, %v4402
        %v4404 = vpop.f32.mrb[0].mxu0
        %4405 = vmatprep.mubr.f32.mxu0 0.0
        %4406 = vmatmul.mubr.f32.gmra.mrb[0].mxu0 %v3463
        %v4407 = vpop.f32.mrb[0].mxu0
        %v4408 = vadd.f32 0.0, %v4407
        %v4409 = vpop.f32.mrb[0].mxu0
        %4410 = vmatprep.mubr.f32.mxu0 0.0
        %4411 = vmatmul.mubr.f32.gmra.mrb[0].mxu0 %v3465
        %v4412 = vpop.f32.mrb[0].mxu0
        %v4413 = vadd.f32 0.0, %v4412
        %v4414 = vpop.f32.mrb[0].mxu0
        %4415 = vmatprep.mubr.f32.mxu0 0.0
        %4416 = vmatmul.mubr.f32.gmra.mrb[0].mxu0 %v3467
        %v4417 = vpop.f32.mrb[0].mxu0
        %v4418 = vadd.f32 0.0, %v4417
        %v4419 = vpop.f32.mrb[0].mxu0
        %4420 = vmatprep.mubr.f32.mxu0 0.0
        %4421 = vmatmul.mubr.f32.gmra.mrb[0].mxu0 %v3469
        %v4422 = vpop.f32.mrb[0].mxu0
        %v4423 = vadd.f32 0.0, %v4422
        %v4424 = vpop.f32.mrb[0].mxu0
        %4425 = vmatprep.mubr.f32.mxu0 0.0
        %4426 = vmatmul.mubr.f32.gmra.mrb[0].mxu0 %v3471
        %v4427 = vpop.f32.mrb[0].mxu0
        %v4428 = vadd.f32 0.0, %v4427
        %v4429 = vpop.f32.mrb[0].mxu0
        %4430 = vmatprep.mubr.f32.mxu0 0.0
        %4431 = vmatmul.mubr.f32.gmra.mrb[0].mxu0 %v3473
        %v4432 = vpop.f32.mrb[0].mxu0
        %v4433 = vadd.f32 0.0, %v4432
        %v4434 = vpop.f32.mrb[0].mxu0
        %4435 = vmatprep.mubr.f32.mxu0 0.0
        %4436 = vmatmul.mubr.f32.gmra.mrb[0].mxu0 %v3475
        %v4437 = vpop.f32.mrb[0].mxu0
        %v4438 = vadd.f32 0.0, %v4437
        %v4439 = vpop.f32.mrb[0].mxu0
        %4440 = vdwg.mxu0
        %v4441 = vld [vmem:[#allocation4] sm:$0xff]
        %v4442 = vld [vmem:[#allocation4 + $0x8] sm:$0xff]
        %v4443 = vld [vmem:[#allocation4 + $0x10] sm:$0xff]
        %v4444 = vld [vmem:[#allocation4 + $0x18] sm:$0xff]
        %v4445 = vld [vmem:[#allocation4 + $0x20] sm:$0xff]
        %v4446 = vld [vmem:[#allocation4 + $0x28] sm:$0xff]
        %v4447 = vld [vmem:[#allocation4 + $0x30] sm:$0xff]
        %v4448 = vld [vmem:[#allocation4 + $0x38] sm:$0xff]
        %v4449 = vld [vmem:[#allocation4 + $0x40] sm:$0xff]
        %v4450 = vld [vmem:[#allocation4 + $0x48] sm:$0xff]
        %v4451 = vld [vmem:[#allocation4 + $0x50] sm:$0xff]
        %v4452 = vld [vmem:[#allocation4 + $0x58] sm:$0xff]
        %v4453 = vld [vmem:[#allocation4 + $0x60] sm:$0xff]
        %v4454 = vld [vmem:[#allocation4 + $0x68] sm:$0xff]
        %v4455 = vld [vmem:[#allocation4 + $0x70] sm:$0xff]
        %v4456 = vld [vmem:[#allocation4 + $0x78] sm:$0xff]
        %v4457 = vld [vmem:[#allocation4 + $0x80] sm:$0xff]
        %v4458 = vld [vmem:[#allocation4 + $0x88] sm:$0xff]
        %v4459 = vld [vmem:[#allocation4 + $0x90] sm:$0xff]
        %v4460 = vld [vmem:[#allocation4 + $0x98] sm:$0xff]
        %v4461 = vld [vmem:[#allocation4 + $0xa0] sm:$0xff]
        %v4462 = vld [vmem:[#allocation4 + $0xa8] sm:$0xff]
        %v4463 = vld [vmem:[#allocation4 + $0xb0] sm:$0xff]
        %v4464 = vld [vmem:[#allocation4 + $0xb8] sm:$0xff]
        %v4465 = vld [vmem:[#allocation4 + $0xc0] sm:$0xff]
        %v4466 = vld [vmem:[#allocation4 + $0xc8] sm:$0xff]
        %v4467 = vld [vmem:[#allocation4 + $0xd0] sm:$0xff]
        %v4468 = vld [vmem:[#allocation4 + $0xd8] sm:$0xff]
        %v4469 = vld [vmem:[#allocation4 + $0xe0] sm:$0xff]
        %v4470 = vld [vmem:[#allocation4 + $0xe8] sm:$0xff]
        %v4471 = vld [vmem:[#allocation4 + $0xf0] sm:$0xff]
        %v4472 = vld [vmem:[#allocation4 + $0xf8] sm:$0xff]
        %v4473 = vld [vmem:[#allocation4 + $0x100] sm:$0xff]
        %v4474 = vld [vmem:[#allocation4 + $0x108] sm:$0xff]
        %v4475 = vld [vmem:[#allocation4 + $0x110] sm:$0xff]
        %v4476 = vld [vmem:[#allocation4 + $0x118] sm:$0xff]
        %v4477 = vld [vmem:[#allocation4 + $0x120] sm:$0xff]
        %v4478 = vld [vmem:[#allocation4 + $0x128] sm:$0xff]
        %v4479 = vld [vmem:[#allocation4 + $0x130] sm:$0xff]
        %v4480 = vld [vmem:[#allocation4 + $0x138] sm:$0xff]
        %v4481 = vld [vmem:[#allocation4 + $0x140] sm:$0xff]
        %v4482 = vld [vmem:[#allocation4 + $0x148] sm:$0xff]
        %v4483 = vld [vmem:[#allocation4 + $0x150] sm:$0xff]
        %v4484 = vld [vmem:[#allocation4 + $0x158] sm:$0xff]
        %v4485 = vld [vmem:[#allocation4 + $0x160] sm:$0xff]
        %v4486 = vld [vmem:[#allocation4 + $0x168] sm:$0xff]
        %v4487 = vld [vmem:[#allocation4 + $0x170] sm:$0xff]
        %v4488 = vld [vmem:[#allocation4 + $0x178] sm:$0xff]
        %v4489 = vld [vmem:[#allocation4 + $0x180] sm:$0xff]
        %v4490 = vld [vmem:[#allocation4 + $0x188] sm:$0xff]
        %v4491 = vld [vmem:[#allocation4 + $0x190] sm:$0xff]
        %v4492 = vld [vmem:[#allocation4 + $0x198] sm:$0xff]
        %v4493 = vld [vmem:[#allocation4 + $0x1a0] sm:$0xff]
        %v4494 = vld [vmem:[#allocation4 + $0x1a8] sm:$0xff]
        %v4495 = vld [vmem:[#allocation4 + $0x1b0] sm:$0xff]
        %v4496 = vld [vmem:[#allocation4 + $0x1b8] sm:$0xff]
        %v4497 = vld [vmem:[#allocation4 + $0x1c0] sm:$0xff]
        %v4498 = vld [vmem:[#allocation4 + $0x1c8] sm:$0xff]
        %v4499 = vld [vmem:[#allocation4 + $0x1d0] sm:$0xff]
        %v4500 = vld [vmem:[#allocation4 + $0x1d8] sm:$0xff]
        %v4501 = vld [vmem:[#allocation4 + $0x1e0] sm:$0xff]
        %v4502 = vld [vmem:[#allocation4 + $0x1e8] sm:$0xff]
        %v4503 = vld [vmem:[#allocation4 + $0x1f0] sm:$0xff]
        %v4504 = vld [vmem:[#allocation4 + $0x1f8] sm:$0xff]
        %4506 = vset.pattern.permute.xlu0 0
        %4507 = vperm.xlu0 %4506, %v2837
        %v4508 = vpop.permute.xlu0 %4507
        %4511 = vset.pattern.permute.xlu0 0
        %4512 = vperm.xlu0 %4511, %v2839
        %v4513 = vpop.permute.xlu0 %4512
        %4516 = vset.pattern.permute.xlu0 0
        %4517 = vperm.xlu0 %4516, %v2841
        %v4518 = vpop.permute.xlu0 %4517
        %4521 = vset.pattern.permute.xlu0 0
        %4522 = vperm.xlu0 %4521, %v2843
        %v4523 = vpop.permute.xlu0 %4522
        %4526 = vset.pattern.permute.xlu0 0
        %4527 = vperm.xlu0 %4526, %v2845
        %v4528 = vpop.permute.xlu0 %4527
        %4531 = vset.pattern.permute.xlu0 0
        %4532 = vperm.xlu0 %4531, %v2847
        %v4533 = vpop.permute.xlu0 %4532
        %4536 = vset.pattern.permute.xlu0 0
        %4537 = vperm.xlu0 %4536, %v2849
        %v4538 = vpop.permute.xlu0 %4537
        %4541 = vset.pattern.permute.xlu0 0
        %4542 = vperm.xlu0 %4541, %v2851
        %v4543 = vpop.permute.xlu0 %4542
        %4546 = vset.pattern.permute.xlu0 0
        %4547 = vperm.xlu0 %4546, %v2853
        %v4548 = vpop.permute.xlu0 %4547
        %4551 = vset.pattern.permute.xlu0 0
        %4552 = vperm.xlu0 %4551, %v2855
        %v4553 = vpop.permute.xlu0 %4552
        %4556 = vset.pattern.permute.xlu0 0
        %4557 = vperm.xlu0 %4556, %v2857
        %v4558 = vpop.permute.xlu0 %4557
        %4561 = vset.pattern.permute.xlu0 0
        %4562 = vperm.xlu0 %4561, %v2859
        %v4563 = vpop.permute.xlu0 %4562
        %4566 = vset.pattern.permute.xlu0 0
        %4567 = vperm.xlu0 %4566, %v2861
        %v4568 = vpop.permute.xlu0 %4567
        %4571 = vset.pattern.permute.xlu0 0
        %4572 = vperm.xlu0 %4571, %v2863
        %v4573 = vpop.permute.xlu0 %4572
        %4576 = vset.pattern.permute.xlu0 0
        %4577 = vperm.xlu0 %4576, %v2865
        %v4578 = vpop.permute.xlu0 %4577
        %4581 = vset.pattern.permute.xlu0 0
        %4582 = vperm.xlu0 %4581, %v2867
        %v4583 = vpop.permute.xlu0 %4582
        %4586 = vset.pattern.permute.xlu0 0
        %4587 = vperm.xlu0 %4586, %v2869
        %v4588 = vpop.permute.xlu0 %4587
        %4591 = vset.pattern.permute.xlu0 0
        %4592 = vperm.xlu0 %4591, %v2871
        %v4593 = vpop.permute.xlu0 %4592
        %4596 = vset.pattern.permute.xlu0 0
        %4597 = vperm.xlu0 %4596, %v2873
        %v4598 = vpop.permute.xlu0 %4597
        %4601 = vset.pattern.permute.xlu0 0
        %4602 = vperm.xlu0 %4601, %v2875
        %v4603 = vpop.permute.xlu0 %4602
        %4606 = vset.pattern.permute.xlu0 0
        %4607 = vperm.xlu0 %4606, %v2877
        %v4608 = vpop.permute.xlu0 %4607
        %4611 = vset.pattern.permute.xlu0 0
        %4612 = vperm.xlu0 %4611, %v2879
        %v4613 = vpop.permute.xlu0 %4612
        %4616 = vset.pattern.permute.xlu0 0
        %4617 = vperm.xlu0 %4616, %v2881
        %v4618 = vpop.permute.xlu0 %4617
        %4621 = vset.pattern.permute.xlu0 0
        %4622 = vperm.xlu0 %4621, %v2883
        %v4623 = vpop.permute.xlu0 %4622
        %4626 = vset.pattern.permute.xlu0 0
        %4627 = vperm.xlu0 %4626, %v2885
        %v4628 = vpop.permute.xlu0 %4627
        %4631 = vset.pattern.permute.xlu0 0
        %4632 = vperm.xlu0 %4631, %v2887
        %v4633 = vpop.permute.xlu0 %4632
        %4636 = vset.pattern.permute.xlu0 0
        %4637 = vperm.xlu0 %4636, %v2889
        %v4638 = vpop.permute.xlu0 %4637
        %4641 = vset.pattern.permute.xlu0 0
        %4642 = vperm.xlu0 %4641, %v2891
        %v4643 = vpop.permute.xlu0 %4642
        %4646 = vset.pattern.permute.xlu0 0
        %4647 = vperm.xlu0 %4646, %v2893
        %v4648 = vpop.permute.xlu0 %4647
        %4651 = vset.pattern.permute.xlu0 0
        %4652 = vperm.xlu0 %4651, %v2895
        %v4653 = vpop.permute.xlu0 %4652
        %4656 = vset.pattern.permute.xlu0 0
        %4657 = vperm.xlu0 %4656, %v2897
        %v4658 = vpop.permute.xlu0 %4657
        %4661 = vset.pattern.permute.xlu0 0
        %4662 = vperm.xlu0 %4661, %v2899
        %v4663 = vpop.permute.xlu0 %4662
        %4666 = vset.pattern.permute.xlu0 0
        %4667 = vperm.xlu0 %4666, %v2901
        %v4668 = vpop.permute.xlu0 %4667
        %4671 = vset.pattern.permute.xlu0 0
        %4672 = vperm.xlu0 %4671, %v2903
        %v4673 = vpop.permute.xlu0 %4672
        %4676 = vset.pattern.permute.xlu0 0
        %4677 = vperm.xlu0 %4676, %v2905
        %v4678 = vpop.permute.xlu0 %4677
        %4681 = vset.pattern.permute.xlu0 0
        %4682 = vperm.xlu0 %4681, %v2907
        %v4683 = vpop.permute.xlu0 %4682
        %4686 = vset.pattern.permute.xlu0 0
        %4687 = vperm.xlu0 %4686, %v2909
        %v4688 = vpop.permute.xlu0 %4687
        %4691 = vset.pattern.permute.xlu0 0
        %4692 = vperm.xlu0 %4691, %v2911
        %v4693 = vpop.permute.xlu0 %4692
        %4696 = vset.pattern.permute.xlu0 0
        %4697 = vperm.xlu0 %4696, %v2913
        %v4698 = vpop.permute.xlu0 %4697
        %4701 = vset.pattern.permute.xlu0 0
        %4702 = vperm.xlu0 %4701, %v2915
        %v4703 = vpop.permute.xlu0 %4702
        %4706 = vset.pattern.permute.xlu0 0
        %4707 = vperm.xlu0 %4706, %v2917
        %v4708 = vpop.permute.xlu0 %4707
        %4711 = vset.pattern.permute.xlu0 0
        %4712 = vperm.xlu0 %4711, %v2919
        %v4713 = vpop.permute.xlu0 %4712
        %4716 = vset.pattern.permute.xlu0 0
        %4717 = vperm.xlu0 %4716, %v2921
        %v4718 = vpop.permute.xlu0 %4717
        %4721 = vset.pattern.permute.xlu0 0
        %4722 = vperm.xlu0 %4721, %v2923
        %v4723 = vpop.permute.xlu0 %4722
        %4726 = vset.pattern.permute.xlu0 0
        %4727 = vperm.xlu0 %4726, %v2925
        %v4728 = vpop.permute.xlu0 %4727
        %4731 = vset.pattern.permute.xlu0 0
        %4732 = vperm.xlu0 %4731, %v2927
        %v4733 = vpop.permute.xlu0 %4732
        %4736 = vset.pattern.permute.xlu0 0
        %4737 = vperm.xlu0 %4736, %v2929
        %v4738 = vpop.permute.xlu0 %4737
        %4741 = vset.pattern.permute.xlu0 0
        %4742 = vperm.xlu0 %4741, %v2931
        %v4743 = vpop.permute.xlu0 %4742
        %4746 = vset.pattern.permute.xlu0 0
        %4747 = vperm.xlu0 %4746, %v2933
        %v4748 = vpop.permute.xlu0 %4747
        %4751 = vset.pattern.permute.xlu0 0
        %4752 = vperm.xlu0 %4751, %v2935
        %v4753 = vpop.permute.xlu0 %4752
        %4756 = vset.pattern.permute.xlu0 0
        %4757 = vperm.xlu0 %4756, %v2937
        %v4758 = vpop.permute.xlu0 %4757
        %4761 = vset.pattern.permute.xlu0 0
        %4762 = vperm.xlu0 %4761, %v2939
        %v4763 = vpop.permute.xlu0 %4762
        %4766 = vset.pattern.permute.xlu0 0
        %4767 = vperm.xlu0 %4766, %v2941
        %v4768 = vpop.permute.xlu0 %4767
        %4771 = vset.pattern.permute.xlu0 0
        %4772 = vperm.xlu0 %4771, %v2943
        %v4773 = vpop.permute.xlu0 %4772
        %4776 = vset.pattern.permute.xlu0 0
        %4777 = vperm.xlu0 %4776, %v2945
        %v4778 = vpop.permute.xlu0 %4777
        %4781 = vset.pattern.permute.xlu0 0
        %4782 = vperm.xlu0 %4781, %v2947
        %v4783 = vpop.permute.xlu0 %4782
        %4786 = vset.pattern.permute.xlu0 0
        %4787 = vperm.xlu0 %4786, %v2949
        %v4788 = vpop.permute.xlu0 %4787
        %4791 = vset.pattern.permute.xlu0 0
        %4792 = vperm.xlu0 %4791, %v2951
        %v4793 = vpop.permute.xlu0 %4792
        %4796 = vset.pattern.permute.xlu0 0
        %4797 = vperm.xlu0 %4796, %v2953
        %v4798 = vpop.permute.xlu0 %4797
        %4801 = vset.pattern.permute.xlu0 0
        %4802 = vperm.xlu0 %4801, %v2955
        %v4803 = vpop.permute.xlu0 %4802
        %4806 = vset.pattern.permute.xlu0 0
        %4807 = vperm.xlu0 %4806, %v2957
        %v4808 = vpop.permute.xlu0 %4807
        %4811 = vset.pattern.permute.xlu0 0
        %4812 = vperm.xlu0 %4811, %v2959
        %v4813 = vpop.permute.xlu0 %4812
        %4816 = vset.pattern.permute.xlu0 0
        %4817 = vperm.xlu0 %4816, %v2961
        %v4818 = vpop.permute.xlu0 %4817
        %4821 = vset.pattern.permute.xlu0 0
        %4822 = vperm.xlu0 %4821, %v2963
        %v4823 = vpop.permute.xlu0 %4822
        %v4825 = vmul.f32 %v4508, %v4441
        %v4826 = vmul.f32 %v4513, %v4442
        %v4827 = vmul.f32 %v4518, %v4443
        %v4828 = vmul.f32 %v4523, %v4444
        %v4829 = vmul.f32 %v4528, %v4445
        %v4830 = vmul.f32 %v4533, %v4446
        %v4831 = vmul.f32 %v4538, %v4447
        %v4832 = vmul.f32 %v4543, %v4448
        %v4833 = vmul.f32 %v4548, %v4449
        %v4834 = vmul.f32 %v4553, %v4450
        %v4835 = vmul.f32 %v4558, %v4451
        %v4836 = vmul.f32 %v4563, %v4452
        %v4837 = vmul.f32 %v4568, %v4453
        %v4838 = vmul.f32 %v4573, %v4454
        %v4839 = vmul.f32 %v4578, %v4455
        %v4840 = vmul.f32 %v4583, %v4456
        %v4841 = vmul.f32 %v4588, %v4457
        %v4842 = vmul.f32 %v4593, %v4458
        %v4843 = vmul.f32 %v4598, %v4459
        %v4844 = vmul.f32 %v4603, %v4460
        %v4845 = vmul.f32 %v4608, %v4461
        %v4846 = vmul.f32 %v4613, %v4462
        %v4847 = vmul.f32 %v4618, %v4463
        %v4848 = vmul.f32 %v4623, %v4464
        %v4849 = vmul.f32 %v4628, %v4465
        %v4850 = vmul.f32 %v4633, %v4466
        %v4851 = vmul.f32 %v4638, %v4467
        %v4852 = vmul.f32 %v4643, %v4468
        %v4853 = vmul.f32 %v4648, %v4469
        %v4854 = vmul.f32 %v4653, %v4470
        %v4855 = vmul.f32 %v4658, %v4471
        %v4856 = vmul.f32 %v4663, %v4472
        %v4857 = vmul.f32 %v4668, %v4473
        %v4858 = vmul.f32 %v4673, %v4474
        %v4859 = vmul.f32 %v4678, %v4475
        %v4860 = vmul.f32 %v4683, %v4476
        %v4861 = vmul.f32 %v4688, %v4477
        %v4862 = vmul.f32 %v4693, %v4478
        %v4863 = vmul.f32 %v4698, %v4479
        %v4864 = vmul.f32 %v4703, %v4480
        %v4865 = vmul.f32 %v4708, %v4481
        %v4866 = vmul.f32 %v4713, %v4482
        %v4867 = vmul.f32 %v4718, %v4483
        %v4868 = vmul.f32 %v4723, %v4484
        %v4869 = vmul.f32 %v4728, %v4485
        %v4870 = vmul.f32 %v4733, %v4486
        %v4871 = vmul.f32 %v4738, %v4487
        %v4872 = vmul.f32 %v4743, %v4488
        %v4873 = vmul.f32 %v4748, %v4489
        %v4874 = vmul.f32 %v4753, %v4490
        %v4875 = vmul.f32 %v4758, %v4491
        %v4876 = vmul.f32 %v4763, %v4492
        %v4877 = vmul.f32 %v4768, %v4493
        %v4878 = vmul.f32 %v4773, %v4494
        %v4879 = vmul.f32 %v4778, %v4495
        %v4880 = vmul.f32 %v4783, %v4496
        %v4881 = vmul.f32 %v4788, %v4497
        %v4882 = vmul.f32 %v4793, %v4498
        %v4883 = vmul.f32 %v4798, %v4499
        %v4884 = vmul.f32 %v4803, %v4500
        %v4885 = vmul.f32 %v4808, %v4501
        %v4886 = vmul.f32 %v4813, %v4502
        %v4887 = vmul.f32 %v4818, %v4503
        %v4888 = vmul.f32 %v4823, %v4504
        %v4889 = vadd.f32 %v4825, %v3928
        %v4890 = vadd.f32 %v4826, %v3933
        %v4891 = vadd.f32 %v4827, %v3938
        %v4892 = vadd.f32 %v4828, %v3943
        %v4893 = vadd.f32 %v4829, %v3948
        %v4894 = vadd.f32 %v4830, %v3953
        %v4895 = vadd.f32 %v4831, %v3958
        %v4896 = vadd.f32 %v4832, %v3963
        %v4897 = vadd.f32 %v4833, %v3968
        %v4898 = vadd.f32 %v4834, %v3973
        %v4899 = vadd.f32 %v4835, %v3978
        %v4900 = vadd.f32 %v4836, %v3983
        %v4901 = vadd.f32 %v4837, %v3988
        %v4902 = vadd.f32 %v4838, %v3993
        %v4903 = vadd.f32 %v4839, %v3998
        %v4904 = vadd.f32 %v4840, %v4003
        %v4905 = vadd.f32 %v4841, %v4073
        %v4906 = vadd.f32 %v4842, %v4078
        %v4907 = vadd.f32 %v4843, %v4083
        %v4908 = vadd.f32 %v4844, %v4088
        %v4909 = vadd.f32 %v4845, %v4093
        %v4910 = vadd.f32 %v4846, %v4098
        %v4911 = vadd.f32 %v4847, %v4103
        %v4912 = vadd.f32 %v4848, %v4108
        %v4913 = vadd.f32 %v4849, %v4113
        %v4914 = vadd.f32 %v4850, %v4118
        %v4915 = vadd.f32 %v4851, %v4123
        %v4916 = vadd.f32 %v4852, %v4128
        %v4917 = vadd.f32 %v4853, %v4133
        %v4918 = vadd.f32 %v4854, %v4138
        %v4919 = vadd.f32 %v4855, %v4143
        %v4920 = vadd.f32 %v4856, %v4148
        %v4921 = vadd.f32 %v4857, %v4218
        %v4922 = vadd.f32 %v4858, %v4223
        %v4923 = vadd.f32 %v4859, %v4228
        %v4924 = vadd.f32 %v4860, %v4233
        %v4925 = vadd.f32 %v4861, %v4238
        %v4926 = vadd.f32 %v4862, %v4243
        %v4927 = vadd.f32 %v4863, %v4248
        %v4928 = vadd.f32 %v4864, %v4253
        %v4929 = vadd.f32 %v4865, %v4258
        %v4930 = vadd.f32 %v4866, %v4263
        %v4931 = vadd.f32 %v4867, %v4268
        %v4932 = vadd.f32 %v4868, %v4273
        %v4933 = vadd.f32 %v4869, %v4278
        %v4934 = vadd.f32 %v4870, %v4283
        %v4935 = vadd.f32 %v4871, %v4288
        %v4936 = vadd.f32 %v4872, %v4293
        %v4937 = vadd.f32 %v4873, %v4363
        %v4938 = vadd.f32 %v4874, %v4368
        %v4939 = vadd.f32 %v4875, %v4373
        %v4940 = vadd.f32 %v4876, %v4378
        %v4941 = vadd.f32 %v4877, %v4383
        %v4942 = vadd.f32 %v4878, %v4388
        %v4943 = vadd.f32 %v4879, %v4393
        %v4944 = vadd.f32 %v4880, %v4398
        %v4945 = vadd.f32 %v4881, %v4403
        %v4946 = vadd.f32 %v4882, %v4408
        %v4947 = vadd.f32 %v4883, %v4413
        %v4948 = vadd.f32 %v4884, %v4418
        %v4949 = vadd.f32 %v4885, %v4423
        %v4950 = vadd.f32 %v4886, %v4428
        %v4951 = vadd.f32 %v4887, %v4433
        %v4952 = vadd.f32 %v4888, %v4438
        %4953 = vst.msk [vmem:[#allocation4] sm:$0xff] %vm1551, %v4889
        %4954 = vst.msk [vmem:[#allocation4 + $0x8] sm:$0xff] %vm1551, %v4890
        %4955 = vst.msk [vmem:[#allocation4 + $0x10] sm:$0xff] %vm1551, %v4891
        %4956 = vst.msk [vmem:[#allocation4 + $0x18] sm:$0xff] %vm1551, %v4892
        %4957 = vst.msk [vmem:[#allocation4 + $0x20] sm:$0xff] %vm1551, %v4893
        %4958 = vst.msk [vmem:[#allocation4 + $0x28] sm:$0xff] %vm1551, %v4894
        %4959 = vst.msk [vmem:[#allocation4 + $0x30] sm:$0xff] %vm1551, %v4895
        %4960 = vst.msk [vmem:[#allocation4 + $0x38] sm:$0xff] %vm1551, %v4896
        %4961 = vst.msk [vmem:[#allocation4 + $0x40] sm:$0xff] %vm1551, %v4897
        %4962 = vst.msk [vmem:[#allocation4 + $0x48] sm:$0xff] %vm1551, %v4898
        %4963 = vst.msk [vmem:[#allocation4 + $0x50] sm:$0xff] %vm1551, %v4899
        %4964 = vst.msk [vmem:[#allocation4 + $0x58] sm:$0xff] %vm1551, %v4900
        %4965 = vst.msk [vmem:[#allocation4 + $0x60] sm:$0xff] %vm1551, %v4901
        %4966 = vst.msk [vmem:[#allocation4 + $0x68] sm:$0xff] %vm1551, %v4902
        %4967 = vst.msk [vmem:[#allocation4 + $0x70] sm:$0xff] %vm1551, %v4903
        %4968 = vst.msk [vmem:[#allocation4 + $0x78] sm:$0xff] %vm1551, %v4904
        %4969 = vst.msk [vmem:[#allocation4 + $0x80] sm:$0xff] %vm1551, %v4905
        %4970 = vst.msk [vmem:[#allocation4 + $0x88] sm:$0xff] %vm1551, %v4906
        %4971 = vst.msk [vmem:[#allocation4 + $0x90] sm:$0xff] %vm1551, %v4907
        %4972 = vst.msk [vmem:[#allocation4 + $0x98] sm:$0xff] %vm1551, %v4908
        %4973 = vst.msk [vmem:[#allocation4 + $0xa0] sm:$0xff] %vm1551, %v4909
        %4974 = vst.msk [vmem:[#allocation4 + $0xa8] sm:$0xff] %vm1551, %v4910
        %4975 = vst.msk [vmem:[#allocation4 + $0xb0] sm:$0xff] %vm1551, %v4911
        %4976 = vst.msk [vmem:[#allocation4 + $0xb8] sm:$0xff] %vm1551, %v4912
        %4977 = vst.msk [vmem:[#allocation4 + $0xc0] sm:$0xff] %vm1551, %v4913
        %4978 = vst.msk [vmem:[#allocation4 + $0xc8] sm:$0xff] %vm1551, %v4914
        %4979 = vst.msk [vmem:[#allocation4 + $0xd0] sm:$0xff] %vm1551, %v4915
        %4980 = vst.msk [vmem:[#allocation4 + $0xd8] sm:$0xff] %vm1551, %v4916
        %4981 = vst.msk [vmem:[#allocation4 + $0xe0] sm:$0xff] %vm1551, %v4917
        %4982 = vst.msk [vmem:[#allocation4 + $0xe8] sm:$0xff] %vm1551, %v4918
        %4983 = vst.msk [vmem:[#allocation4 + $0xf0] sm:$0xff] %vm1551, %v4919
        %4984 = vst.msk [vmem:[#allocation4 + $0xf8] sm:$0xff] %vm1551, %v4920
        %4985 = vst.msk [vmem:[#allocation4 + $0x100] sm:$0xff] %vm1551, %v4921
        %4986 = vst.msk [vmem:[#allocation4 + $0x108] sm:$0xff] %vm1551, %v4922
        %4987 = vst.msk [vmem:[#allocation4 + $0x110] sm:$0xff] %vm1551, %v4923
        %4988 = vst.msk [vmem:[#allocation4 + $0x118] sm:$0xff] %vm1551, %v4924
        %4989 = vst.msk [vmem:[#allocation4 + $0x120] sm:$0xff] %vm1551, %v4925
        %4990 = vst.msk [vmem:[#allocation4 + $0x128] sm:$0xff] %vm1551, %v4926
        %4991 = vst.msk [vmem:[#allocation4 + $0x130] sm:$0xff] %vm1551, %v4927
        %4992 = vst.msk [vmem:[#allocation4 + $0x138] sm:$0xff] %vm1551, %v4928
        %4993 = vst.msk [vmem:[#allocation4 + $0x140] sm:$0xff] %vm1551, %v4929
        %4994 = vst.msk [vmem:[#allocation4 + $0x148] sm:$0xff] %vm1551, %v4930
        %4995 = vst.msk [vmem:[#allocation4 + $0x150] sm:$0xff] %vm1551, %v4931
        %4996 = vst.msk [vmem:[#allocation4 + $0x158] sm:$0xff] %vm1551, %v4932
        %4997 = vst.msk [vmem:[#allocation4 + $0x160] sm:$0xff] %vm1551, %v4933
        %4998 = vst.msk [vmem:[#allocation4 + $0x168] sm:$0xff] %vm1551, %v4934
        %4999 = vst.msk [vmem:[#allocation4 + $0x170] sm:$0xff] %vm1551, %v4935
        %5000 = vst.msk [vmem:[#allocation4 + $0x178] sm:$0xff] %vm1551, %v4936
        %5001 = vst.msk [vmem:[#allocation4 + $0x180] sm:$0xff] %vm1551, %v4937
        %5002 = vst.msk [vmem:[#allocation4 + $0x188] sm:$0xff] %vm1551, %v4938
        %5003 = vst.msk [vmem:[#allocation4 + $0x190] sm:$0xff] %vm1551, %v4939
        %5004 = vst.msk [vmem:[#allocation4 + $0x198] sm:$0xff] %vm1551, %v4940
        %5005 = vst.msk [vmem:[#allocation4 + $0x1a0] sm:$0xff] %vm1551, %v4941
        %5006 = vst.msk [vmem:[#allocation4 + $0x1a8] sm:$0xff] %vm1551, %v4942
        %5007 = vst.msk [vmem:[#allocation4 + $0x1b0] sm:$0xff] %vm1551, %v4943
        %5008 = vst.msk [vmem:[#allocation4 + $0x1b8] sm:$0xff] %vm1551, %v4944
        %5009 = vst.msk [vmem:[#allocation4 + $0x1c0] sm:$0xff] %vm1551, %v4945
        %5010 = vst.msk [vmem:[#allocation4 + $0x1c8] sm:$0xff] %vm1551, %v4946
        %5011 = vst.msk [vmem:[#allocation4 + $0x1d0] sm:$0xff] %vm1551, %v4947
        %5012 = vst.msk [vmem:[#allocation4 + $0x1d8] sm:$0xff] %vm1551, %v4948
        %5013 = vst.msk [vmem:[#allocation4 + $0x1e0] sm:$0xff] %vm1551, %v4949
        %5014 = vst.msk [vmem:[#allocation4 + $0x1e8] sm:$0xff] %vm1551, %v4950
        %5015 = vst.msk [vmem:[#allocation4 + $0x1f0] sm:$0xff] %vm1551, %v4951
        %5016 = vst.msk [vmem:[#allocation4 + $0x1f8] sm:$0xff] %vm1551, %v4952
        %5017 = vst.msk [vmem:[#allocation2] sm:$0xff] %vm3796, %v2708
        %5018 = vst.msk [vmem:[#allocation2 + $0x8] sm:$0xff] %vm3796, %v2709
        %5019 = vst.msk [vmem:[#allocation2 + $0x10] sm:$0xff] %vm3796, %v2710
        %5020 = vst.msk [vmem:[#allocation2 + $0x18] sm:$0xff] %vm3796, %v2711
        %5021 = vst.msk [vmem:[#allocation2 + $0x20] sm:$0xff] %vm3796, %v2712
        %5022 = vst.msk [vmem:[#allocation2 + $0x28] sm:$0xff] %vm3796, %v2713
        %5023 = vst.msk [vmem:[#allocation2 + $0x30] sm:$0xff] %vm3796, %v2714
        %5024 = vst.msk [vmem:[#allocation2 + $0x38] sm:$0xff] %vm3796, %v2715
        %5025 = vst.msk [vmem:[#allocation2 + $0x40] sm:$0xff] %vm3796, %v2716
        %5026 = vst.msk [vmem:[#allocation2 + $0x48] sm:$0xff] %vm3796, %v2717
        %5027 = vst.msk [vmem:[#allocation2 + $0x50] sm:$0xff] %vm3796, %v2718
        %5028 = vst.msk [vmem:[#allocation2 + $0x58] sm:$0xff] %vm3796, %v2719
        %5029 = vst.msk [vmem:[#allocation2 + $0x60] sm:$0xff] %vm3796, %v2720
        %5030 = vst.msk [vmem:[#allocation2 + $0x68] sm:$0xff] %vm3796, %v2721
        %5031 = vst.msk [vmem:[#allocation2 + $0x70] sm:$0xff] %vm3796, %v2722
        %5032 = vst.msk [vmem:[#allocation2 + $0x78] sm:$0xff] %vm3796, %v2723
        %5033 = vst.msk [vmem:[#allocation2 + $0x80] sm:$0xff] %vm3796, %v2724
        %5034 = vst.msk [vmem:[#allocation2 + $0x88] sm:$0xff] %vm3796, %v2725
        %5035 = vst.msk [vmem:[#allocation2 + $0x90] sm:$0xff] %vm3796, %v2726
        %5036 = vst.msk [vmem:[#allocation2 + $0x98] sm:$0xff] %vm3796, %v2727
        %5037 = vst.msk [vmem:[#allocation2 + $0xa0] sm:$0xff] %vm3796, %v2728
        %5038 = vst.msk [vmem:[#allocation2 + $0xa8] sm:$0xff] %vm3796, %v2729
        %5039 = vst.msk [vmem:[#allocation2 + $0xb0] sm:$0xff] %vm3796, %v2730
        %5040 = vst.msk [vmem:[#allocation2 + $0xb8] sm:$0xff] %vm3796, %v2731
        %5041 = vst.msk [vmem:[#allocation2 + $0xc0] sm:$0xff] %vm3796, %v2732
        %5042 = vst.msk [vmem:[#allocation2 + $0xc8] sm:$0xff] %vm3796, %v2733
        %5043 = vst.msk [vmem:[#allocation2 + $0xd0] sm:$0xff] %vm3796, %v2734
        %5044 = vst.msk [vmem:[#allocation2 + $0xd8] sm:$0xff] %vm3796, %v2735
        %5045 = vst.msk [vmem:[#allocation2 + $0xe0] sm:$0xff] %vm3796, %v2736
        %5046 = vst.msk [vmem:[#allocation2 + $0xe8] sm:$0xff] %vm3796, %v2737
        %5047 = vst.msk [vmem:[#allocation2 + $0xf0] sm:$0xff] %vm3796, %v2738
        %5048 = vst.msk [vmem:[#allocation2 + $0xf8] sm:$0xff] %vm3796, %v2739
        %5049 = vst.msk [vmem:[#allocation2 + $0x100] sm:$0xff] %vm3796, %v2740
        %5050 = vst.msk [vmem:[#allocation2 + $0x108] sm:$0xff] %vm3796, %v2741
        %5051 = vst.msk [vmem:[#allocation2 + $0x110] sm:$0xff] %vm3796, %v2742
        %5052 = vst.msk [vmem:[#allocation2 + $0x118] sm:$0xff] %vm3796, %v2743
        %5053 = vst.msk [vmem:[#allocation2 + $0x120] sm:$0xff] %vm3796, %v2744
        %5054 = vst.msk [vmem:[#allocation2 + $0x128] sm:$0xff] %vm3796, %v2745
        %5055 = vst.msk [vmem:[#allocation2 + $0x130] sm:$0xff] %vm3796, %v2746
        %5056 = vst.msk [vmem:[#allocation2 + $0x138] sm:$0xff] %vm3796, %v2747
        %5057 = vst.msk [vmem:[#allocation2 + $0x140] sm:$0xff] %vm3796, %v2748
        %5058 = vst.msk [vmem:[#allocation2 + $0x148] sm:$0xff] %vm3796, %v2749
        %5059 = vst.msk [vmem:[#allocation2 + $0x150] sm:$0xff] %vm3796, %v2750
        %5060 = vst.msk [vmem:[#allocation2 + $0x158] sm:$0xff] %vm3796, %v2751
        %5061 = vst.msk [vmem:[#allocation2 + $0x160] sm:$0xff] %vm3796, %v2752
        %5062 = vst.msk [vmem:[#allocation2 + $0x168] sm:$0xff] %vm3796, %v2753
        %5063 = vst.msk [vmem:[#allocation2 + $0x170] sm:$0xff] %vm3796, %v2754
        %5064 = vst.msk [vmem:[#allocation2 + $0x178] sm:$0xff] %vm3796, %v2755
        %5065 = vst.msk [vmem:[#allocation2 + $0x180] sm:$0xff] %vm3796, %v2756
        %5066 = vst.msk [vmem:[#allocation2 + $0x188] sm:$0xff] %vm3796, %v2757
        %5067 = vst.msk [vmem:[#allocation2 + $0x190] sm:$0xff] %vm3796, %v2758
        %5068 = vst.msk [vmem:[#allocation2 + $0x198] sm:$0xff] %vm3796, %v2759
        %5069 = vst.msk [vmem:[#allocation2 + $0x1a0] sm:$0xff] %vm3796, %v2760
        %5070 = vst.msk [vmem:[#allocation2 + $0x1a8] sm:$0xff] %vm3796, %v2761
        %5071 = vst.msk [vmem:[#allocation2 + $0x1b0] sm:$0xff] %vm3796, %v2762
        %5072 = vst.msk [vmem:[#allocation2 + $0x1b8] sm:$0xff] %vm3796, %v2763
        %5073 = vst.msk [vmem:[#allocation2 + $0x1c0] sm:$0xff] %vm3796, %v2764
        %5074 = vst.msk [vmem:[#allocation2 + $0x1c8] sm:$0xff] %vm3796, %v2765
        %5075 = vst.msk [vmem:[#allocation2 + $0x1d0] sm:$0xff] %vm3796, %v2766
        %5076 = vst.msk [vmem:[#allocation2 + $0x1d8] sm:$0xff] %vm3796, %v2767
        %5077 = vst.msk [vmem:[#allocation2 + $0x1e0] sm:$0xff] %vm3796, %v2768
        %5078 = vst.msk [vmem:[#allocation2 + $0x1e8] sm:$0xff] %vm3796, %v2769
        %5079 = vst.msk [vmem:[#allocation2 + $0x1f0] sm:$0xff] %vm3796, %v2770
        %5080 = vst.msk [vmem:[#allocation2 + $0x1f8] sm:$0xff] %vm3796, %v2771
        %p5081 = scmp.eq.s32.totalorder %s26, 1
        // Predicated region
        $region159: #{multi_head_enc_dec_attention.5} parent=141 // pred_check
          %p5082 = pneg %p5081
        $region160: #{multi_head_enc_dec_attention.5} parent=141 // pred_check_branch
          %5084 = sbr.rel (%p5082) target = $region162
        $region161: #{multi_head_enc_dec_attention.5} parent=141 // pred_region
          %v5085 = vld [vmem:[#allocation4] sm:$0xff]
          %v5086 = vld [vmem:[#allocation4 + $0x8] sm:$0xff]
          %v5087 = vld [vmem:[#allocation4 + $0x10] sm:$0xff]
          %v5088 = vld [vmem:[#allocation4 + $0x18] sm:$0xff]
          %v5089 = vld [vmem:[#allocation4 + $0x20] sm:$0xff]
          %v5090 = vld [vmem:[#allocation4 + $0x28] sm:$0xff]
          %v5091 = vld [vmem:[#allocation4 + $0x30] sm:$0xff]
          %v5092 = vld [vmem:[#allocation4 + $0x38] sm:$0xff]
          %v5093 = vld [vmem:[#allocation4 + $0x40] sm:$0xff]
          %v5094 = vld [vmem:[#allocation4 + $0x48] sm:$0xff]
          %v5095 = vld [vmem:[#allocation4 + $0x50] sm:$0xff]
          %v5096 = vld [vmem:[#allocation4 + $0x58] sm:$0xff]
          %v5097 = vld [vmem:[#allocation4 + $0x60] sm:$0xff]
          %v5098 = vld [vmem:[#allocation4 + $0x68] sm:$0xff]
          %v5099 = vld [vmem:[#allocation4 + $0x70] sm:$0xff]
          %v5100 = vld [vmem:[#allocation4 + $0x78] sm:$0xff]
          %v5101 = vld [vmem:[#allocation4 + $0x80] sm:$0xff]
          %v5102 = vld [vmem:[#allocation4 + $0x88] sm:$0xff]
          %v5103 = vld [vmem:[#allocation4 + $0x90] sm:$0xff]
          %v5104 = vld [vmem:[#allocation4 + $0x98] sm:$0xff]
          %v5105 = vld [vmem:[#allocation4 + $0xa0] sm:$0xff]
          %v5106 = vld [vmem:[#allocation4 + $0xa8] sm:$0xff]
          %v5107 = vld [vmem:[#allocation4 + $0xb0] sm:$0xff]
          %v5108 = vld [vmem:[#allocation4 + $0xb8] sm:$0xff]
          %v5109 = vld [vmem:[#allocation4 + $0xc0] sm:$0xff]
          %v5110 = vld [vmem:[#allocation4 + $0xc8] sm:$0xff]
          %v5111 = vld [vmem:[#allocation4 + $0xd0] sm:$0xff]
          %v5112 = vld [vmem:[#allocation4 + $0xd8] sm:$0xff]
          %v5113 = vld [vmem:[#allocation4 + $0xe0] sm:$0xff]
          %v5114 = vld [vmem:[#allocation4 + $0xe8] sm:$0xff]
          %v5115 = vld [vmem:[#allocation4 + $0xf0] sm:$0xff]
          %v5116 = vld [vmem:[#allocation4 + $0xf8] sm:$0xff]
          %v5117 = vld [vmem:[#allocation4 + $0x100] sm:$0xff]
          %v5118 = vld [vmem:[#allocation4 + $0x108] sm:$0xff]
          %v5119 = vld [vmem:[#allocation4 + $0x110] sm:$0xff]
          %v5120 = vld [vmem:[#allocation4 + $0x118] sm:$0xff]
          %v5121 = vld [vmem:[#allocation4 + $0x120] sm:$0xff]
          %v5122 = vld [vmem:[#allocation4 + $0x128] sm:$0xff]
          %v5123 = vld [vmem:[#allocation4 + $0x130] sm:$0xff]
          %v5124 = vld [vmem:[#allocation4 + $0x138] sm:$0xff]
          %v5125 = vld [vmem:[#allocation4 + $0x140] sm:$0xff]
          %v5126 = vld [vmem:[#allocation4 + $0x148] sm:$0xff]
          %v5127 = vld [vmem:[#allocation4 + $0x150] sm:$0xff]
          %v5128 = vld [vmem:[#allocation4 + $0x158] sm:$0xff]
          %v5129 = vld [vmem:[#allocation4 + $0x160] sm:$0xff]
          %v5130 = vld [vmem:[#allocation4 + $0x168] sm:$0xff]
          %v5131 = vld [vmem:[#allocation4 + $0x170] sm:$0xff]
          %v5132 = vld [vmem:[#allocation4 + $0x178] sm:$0xff]
          %v5133 = vld [vmem:[#allocation4 + $0x180] sm:$0xff]
          %v5134 = vld [vmem:[#allocation4 + $0x188] sm:$0xff]
          %v5135 = vld [vmem:[#allocation4 + $0x190] sm:$0xff]
          %v5136 = vld [vmem:[#allocation4 + $0x198] sm:$0xff]
          %v5137 = vld [vmem:[#allocation4 + $0x1a0] sm:$0xff]
          %v5138 = vld [vmem:[#allocation4 + $0x1a8] sm:$0xff]
          %v5139 = vld [vmem:[#allocation4 + $0x1b0] sm:$0xff]
          %v5140 = vld [vmem:[#allocation4 + $0x1b8] sm:$0xff]
          %v5141 = vld [vmem:[#allocation4 + $0x1c0] sm:$0xff]
          %v5142 = vld [vmem:[#allocation4 + $0x1c8] sm:$0xff]
          %v5143 = vld [vmem:[#allocation4 + $0x1d0] sm:$0xff]
          %v5144 = vld [vmem:[#allocation4 + $0x1d8] sm:$0xff]
          %v5145 = vld [vmem:[#allocation4 + $0x1e0] sm:$0xff]
          %v5146 = vld [vmem:[#allocation4 + $0x1e8] sm:$0xff]
          %v5147 = vld [vmem:[#allocation4 + $0x1f0] sm:$0xff]
          %v5148 = vld [vmem:[#allocation4 + $0x1f8] sm:$0xff]
          %v5149 = vld [vmem:[#allocation3] sm:$0xff]
          %v5150 = vld [vmem:[#allocation3 + $0x8] sm:$0xff]
          %v5151 = vld [vmem:[#allocation3 + $0x10] sm:$0xff]
          %v5152 = vld [vmem:[#allocation3 + $0x18] sm:$0xff]
          %v5153 = vld [vmem:[#allocation3 + $0x20] sm:$0xff]
          %v5154 = vld [vmem:[#allocation3 + $0x28] sm:$0xff]
          %v5155 = vld [vmem:[#allocation3 + $0x30] sm:$0xff]
          %v5156 = vld [vmem:[#allocation3 + $0x38] sm:$0xff]
          %v5157 = vld [vmem:[#allocation3 + $0x40] sm:$0xff]
          %v5158 = vld [vmem:[#allocation3 + $0x48] sm:$0xff]
          %v5159 = vld [vmem:[#allocation3 + $0x50] sm:$0xff]
          %v5160 = vld [vmem:[#allocation3 + $0x58] sm:$0xff]
          %v5161 = vld [vmem:[#allocation3 + $0x60] sm:$0xff]
          %v5162 = vld [vmem:[#allocation3 + $0x68] sm:$0xff]
          %v5163 = vld [vmem:[#allocation3 + $0x70] sm:$0xff]
          %v5164 = vld [vmem:[#allocation3 + $0x78] sm:$0xff]
          %v5165 = vld [vmem:[#allocation3 + $0x80] sm:$0xff]
          %v5166 = vld [vmem:[#allocation3 + $0x88] sm:$0xff]
          %v5167 = vld [vmem:[#allocation3 + $0x90] sm:$0xff]
          %v5168 = vld [vmem:[#allocation3 + $0x98] sm:$0xff]
          %v5169 = vld [vmem:[#allocation3 + $0xa0] sm:$0xff]
          %v5170 = vld [vmem:[#allocation3 + $0xa8] sm:$0xff]
          %v5171 = vld [vmem:[#allocation3 + $0xb0] sm:$0xff]
          %v5172 = vld [vmem:[#allocation3 + $0xb8] sm:$0xff]
          %v5173 = vld [vmem:[#allocation3 + $0xc0] sm:$0xff]
          %v5174 = vld [vmem:[#allocation3 + $0xc8] sm:$0xff]
          %v5175 = vld [vmem:[#allocation3 + $0xd0] sm:$0xff]
          %v5176 = vld [vmem:[#allocation3 + $0xd8] sm:$0xff]
          %v5177 = vld [vmem:[#allocation3 + $0xe0] sm:$0xff]
          %v5178 = vld [vmem:[#allocation3 + $0xe8] sm:$0xff]
          %v5179 = vld [vmem:[#allocation3 + $0xf0] sm:$0xff]
          %v5180 = vld [vmem:[#allocation3 + $0xf8] sm:$0xff]
          %v5181 = vld [vmem:[#allocation3 + $0x100] sm:$0xff]
          %v5182 = vld [vmem:[#allocation3 + $0x108] sm:$0xff]
          %v5183 = vld [vmem:[#allocation3 + $0x110] sm:$0xff]
          %v5184 = vld [vmem:[#allocation3 + $0x118] sm:$0xff]
          %v5185 = vld [vmem:[#allocation3 + $0x120] sm:$0xff]
          %v5186 = vld [vmem:[#allocation3 + $0x128] sm:$0xff]
          %v5187 = vld [vmem:[#allocation3 + $0x130] sm:$0xff]
          %v5188 = vld [vmem:[#allocation3 + $0x138] sm:$0xff]
          %v5189 = vld [vmem:[#allocation3 + $0x140] sm:$0xff]
          %v5190 = vld [vmem:[#allocation3 + $0x148] sm:$0xff]
          %v5191 = vld [vmem:[#allocation3 + $0x150] sm:$0xff]
          %v5192 = vld [vmem:[#allocation3 + $0x158] sm:$0xff]
          %v5193 = vld [vmem:[#allocation3 + $0x160] sm:$0xff]
          %v5194 = vld [vmem:[#allocation3 + $0x168] sm:$0xff]
          %v5195 = vld [vmem:[#allocation3 + $0x170] sm:$0xff]
          %v5196 = vld [vmem:[#allocation3 + $0x178] sm:$0xff]
          %v5197 = vld [vmem:[#allocation3 + $0x180] sm:$0xff]
          %v5198 = vld [vmem:[#allocation3 + $0x188] sm:$0xff]
          %v5199 = vld [vmem:[#allocation3 + $0x190] sm:$0xff]
          %v5200 = vld [vmem:[#allocation3 + $0x198] sm:$0xff]
          %v5201 = vld [vmem:[#allocation3 + $0x1a0] sm:$0xff]
          %v5202 = vld [vmem:[#allocation3 + $0x1a8] sm:$0xff]
          %v5203 = vld [vmem:[#allocation3 + $0x1b0] sm:$0xff]
          %v5204 = vld [vmem:[#allocation3 + $0x1b8] sm:$0xff]
          %v5205 = vld [vmem:[#allocation3 + $0x1c0] sm:$0xff]
          %v5206 = vld [vmem:[#allocation3 + $0x1c8] sm:$0xff]
          %v5207 = vld [vmem:[#allocation3 + $0x1d0] sm:$0xff]
          %v5208 = vld [vmem:[#allocation3 + $0x1d8] sm:$0xff]
          %v5209 = vld [vmem:[#allocation3 + $0x1e0] sm:$0xff]
          %v5210 = vld [vmem:[#allocation3 + $0x1e8] sm:$0xff]
          %v5211 = vld [vmem:[#allocation3 + $0x1f0] sm:$0xff]
          %v5212 = vld [vmem:[#allocation3 + $0x1f8] sm:$0xff]
          %5214 = vset.pattern.permute.xlu0 0
          %5215 = vperm.xlu0 %5214, %v5149
          %v5216 = vpop.permute.xlu0 %5215
          %5219 = vset.pattern.permute.xlu0 0
          %5220 = vperm.xlu0 %5219, %v5150
          %v5221 = vpop.permute.xlu0 %5220
          %5224 = vset.pattern.permute.xlu0 0
          %5225 = vperm.xlu0 %5224, %v5151
          %v5226 = vpop.permute.xlu0 %5225
          %5229 = vset.pattern.permute.xlu0 0
          %5230 = vperm.xlu0 %5229, %v5152
          %v5231 = vpop.permute.xlu0 %5230
          %5234 = vset.pattern.permute.xlu0 0
          %5235 = vperm.xlu0 %5234, %v5153
          %v5236 = vpop.permute.xlu0 %5235
          %5239 = vset.pattern.permute.xlu0 0
          %5240 = vperm.xlu0 %5239, %v5154
          %v5241 = vpop.permute.xlu0 %5240
          %5244 = vset.pattern.permute.xlu0 0
          %5245 = vperm.xlu0 %5244, %v5155
          %v5246 = vpop.permute.xlu0 %5245
          %5249 = vset.pattern.permute.xlu0 0
          %5250 = vperm.xlu0 %5249, %v5156
          %v5251 = vpop.permute.xlu0 %5250
          %5254 = vset.pattern.permute.xlu0 0
          %5255 = vperm.xlu0 %5254, %v5157
          %v5256 = vpop.permute.xlu0 %5255
          %5259 = vset.pattern.permute.xlu0 0
          %5260 = vperm.xlu0 %5259, %v5158
          %v5261 = vpop.permute.xlu0 %5260
          %5264 = vset.pattern.permute.xlu0 0
          %5265 = vperm.xlu0 %5264, %v5159
          %v5266 = vpop.permute.xlu0 %5265
          %5269 = vset.pattern.permute.xlu0 0
          %5270 = vperm.xlu0 %5269, %v5160
          %v5271 = vpop.permute.xlu0 %5270
          %5274 = vset.pattern.permute.xlu0 0
          %5275 = vperm.xlu0 %5274, %v5161
          %v5276 = vpop.permute.xlu0 %5275
          %5279 = vset.pattern.permute.xlu0 0
          %5280 = vperm.xlu0 %5279, %v5162
          %v5281 = vpop.permute.xlu0 %5280
          %5284 = vset.pattern.permute.xlu0 0
          %5285 = vperm.xlu0 %5284, %v5163
          %v5286 = vpop.permute.xlu0 %5285
          %5289 = vset.pattern.permute.xlu0 0
          %5290 = vperm.xlu0 %5289, %v5164
          %v5291 = vpop.permute.xlu0 %5290
          %5294 = vset.pattern.permute.xlu0 0
          %5295 = vperm.xlu0 %5294, %v5165
          %v5296 = vpop.permute.xlu0 %5295
          %5299 = vset.pattern.permute.xlu0 0
          %5300 = vperm.xlu0 %5299, %v5166
          %v5301 = vpop.permute.xlu0 %5300
          %5304 = vset.pattern.permute.xlu0 0
          %5305 = vperm.xlu0 %5304, %v5167
          %v5306 = vpop.permute.xlu0 %5305
          %5309 = vset.pattern.permute.xlu0 0
          %5310 = vperm.xlu0 %5309, %v5168
          %v5311 = vpop.permute.xlu0 %5310
          %5314 = vset.pattern.permute.xlu0 0
          %5315 = vperm.xlu0 %5314, %v5169
          %v5316 = vpop.permute.xlu0 %5315
          %5319 = vset.pattern.permute.xlu0 0
          %5320 = vperm.xlu0 %5319, %v5170
          %v5321 = vpop.permute.xlu0 %5320
          %5324 = vset.pattern.permute.xlu0 0
          %5325 = vperm.xlu0 %5324, %v5171
          %v5326 = vpop.permute.xlu0 %5325
          %5329 = vset.pattern.permute.xlu0 0
          %5330 = vperm.xlu0 %5329, %v5172
          %v5331 = vpop.permute.xlu0 %5330
          %5334 = vset.pattern.permute.xlu0 0
          %5335 = vperm.xlu0 %5334, %v5173
          %v5336 = vpop.permute.xlu0 %5335
          %5339 = vset.pattern.permute.xlu0 0
          %5340 = vperm.xlu0 %5339, %v5174
          %v5341 = vpop.permute.xlu0 %5340
          %5344 = vset.pattern.permute.xlu0 0
          %5345 = vperm.xlu0 %5344, %v5175
          %v5346 = vpop.permute.xlu0 %5345
          %5349 = vset.pattern.permute.xlu0 0
          %5350 = vperm.xlu0 %5349, %v5176
          %v5351 = vpop.permute.xlu0 %5350
          %5354 = vset.pattern.permute.xlu0 0
          %5355 = vperm.xlu0 %5354, %v5177
          %v5356 = vpop.permute.xlu0 %5355
          %5359 = vset.pattern.permute.xlu0 0
          %5360 = vperm.xlu0 %5359, %v5178
          %v5361 = vpop.permute.xlu0 %5360
          %5364 = vset.pattern.permute.xlu0 0
          %5365 = vperm.xlu0 %5364, %v5179
          %v5366 = vpop.permute.xlu0 %5365
          %5369 = vset.pattern.permute.xlu0 0
          %5370 = vperm.xlu0 %5369, %v5180
          %v5371 = vpop.permute.xlu0 %5370
          %5374 = vset.pattern.permute.xlu0 0
          %5375 = vperm.xlu0 %5374, %v5181
          %v5376 = vpop.permute.xlu0 %5375
          %5379 = vset.pattern.permute.xlu0 0
          %5380 = vperm.xlu0 %5379, %v5182
          %v5381 = vpop.permute.xlu0 %5380
          %5384 = vset.pattern.permute.xlu0 0
          %5385 = vperm.xlu0 %5384, %v5183
          %v5386 = vpop.permute.xlu0 %5385
          %5389 = vset.pattern.permute.xlu0 0
          %5390 = vperm.xlu0 %5389, %v5184
          %v5391 = vpop.permute.xlu0 %5390
          %5394 = vset.pattern.permute.xlu0 0
          %5395 = vperm.xlu0 %5394, %v5185
          %v5396 = vpop.permute.xlu0 %5395
          %5399 = vset.pattern.permute.xlu0 0
          %5400 = vperm.xlu0 %5399, %v5186
          %v5401 = vpop.permute.xlu0 %5400
          %5404 = vset.pattern.permute.xlu0 0
          %5405 = vperm.xlu0 %5404, %v5187
          %v5406 = vpop.permute.xlu0 %5405
          %5409 = vset.pattern.permute.xlu0 0
          %5410 = vperm.xlu0 %5409, %v5188
          %v5411 = vpop.permute.xlu0 %5410
          %5414 = vset.pattern.permute.xlu0 0
          %5415 = vperm.xlu0 %5414, %v5189
          %v5416 = vpop.permute.xlu0 %5415
          %5419 = vset.pattern.permute.xlu0 0
          %5420 = vperm.xlu0 %5419, %v5190
          %v5421 = vpop.permute.xlu0 %5420
          %5424 = vset.pattern.permute.xlu0 0
          %5425 = vperm.xlu0 %5424, %v5191
          %v5426 = vpop.permute.xlu0 %5425
          %5429 = vset.pattern.permute.xlu0 0
          %5430 = vperm.xlu0 %5429, %v5192
          %v5431 = vpop.permute.xlu0 %5430
          %5434 = vset.pattern.permute.xlu0 0
          %5435 = vperm.xlu0 %5434, %v5193
          %v5436 = vpop.permute.xlu0 %5435
          %5439 = vset.pattern.permute.xlu0 0
          %5440 = vperm.xlu0 %5439, %v5194
          %v5441 = vpop.permute.xlu0 %5440
          %5444 = vset.pattern.permute.xlu0 0
          %5445 = vperm.xlu0 %5444, %v5195
          %v5446 = vpop.permute.xlu0 %5445
          %5449 = vset.pattern.permute.xlu0 0
          %5450 = vperm.xlu0 %5449, %v5196
          %v5451 = vpop.permute.xlu0 %5450
          %5454 = vset.pattern.permute.xlu0 0
          %5455 = vperm.xlu0 %5454, %v5197
          %v5456 = vpop.permute.xlu0 %5455
          %5459 = vset.pattern.permute.xlu0 0
          %5460 = vperm.xlu0 %5459, %v5198
          %v5461 = vpop.permute.xlu0 %5460
          %5464 = vset.pattern.permute.xlu0 0
          %5465 = vperm.xlu0 %5464, %v5199
          %v5466 = vpop.permute.xlu0 %5465
          %5469 = vset.pattern.permute.xlu0 0
          %5470 = vperm.xlu0 %5469, %v5200
          %v5471 = vpop.permute.xlu0 %5470
          %5474 = vset.pattern.permute.xlu0 0
          %5475 = vperm.xlu0 %5474, %v5201
          %v5476 = vpop.permute.xlu0 %5475
          %5479 = vset.pattern.permute.xlu0 0
          %5480 = vperm.xlu0 %5479, %v5202
          %v5481 = vpop.permute.xlu0 %5480
          %5484 = vset.pattern.permute.xlu0 0
          %5485 = vperm.xlu0 %5484, %v5203
          %v5486 = vpop.permute.xlu0 %5485
          %5489 = vset.pattern.permute.xlu0 0
          %5490 = vperm.xlu0 %5489, %v5204
          %v5491 = vpop.permute.xlu0 %5490
          %5494 = vset.pattern.permute.xlu0 0
          %5495 = vperm.xlu0 %5494, %v5205
          %v5496 = vpop.permute.xlu0 %5495
          %5499 = vset.pattern.permute.xlu0 0
          %5500 = vperm.xlu0 %5499, %v5206
          %v5501 = vpop.permute.xlu0 %5500
          %5504 = vset.pattern.permute.xlu0 0
          %5505 = vperm.xlu0 %5504, %v5207
          %v5506 = vpop.permute.xlu0 %5505
          %5509 = vset.pattern.permute.xlu0 0
          %5510 = vperm.xlu0 %5509, %v5208
          %v5511 = vpop.permute.xlu0 %5510
          %5514 = vset.pattern.permute.xlu0 0
          %5515 = vperm.xlu0 %5514, %v5209
          %v5516 = vpop.permute.xlu0 %5515
          %5519 = vset.pattern.permute.xlu0 0
          %5520 = vperm.xlu0 %5519, %v5210
          %v5521 = vpop.permute.xlu0 %5520
          %5524 = vset.pattern.permute.xlu0 0
          %5525 = vperm.xlu0 %5524, %v5211
          %v5526 = vpop.permute.xlu0 %5525
          %5529 = vset.pattern.permute.xlu0 0
          %5530 = vperm.xlu0 %5529, %v5212
          %v5531 = vpop.permute.xlu0 %5530
          %v5533 = vrcp.pop %v5216
          %v5534 = vmul.f32 %v5085, %v5533
          %v5535 = vrcp.pop %v5221
          %v5536 = vmul.f32 %v5086, %v5535
          %v5537 = vrcp.pop %v5226
          %v5538 = vmul.f32 %v5087, %v5537
          %v5539 = vrcp.pop %v5231
          %v5540 = vmul.f32 %v5088, %v5539
          %v5541 = vrcp.pop %v5236
          %v5542 = vmul.f32 %v5089, %v5541
          %v5543 = vrcp.pop %v5241
          %v5544 = vmul.f32 %v5090, %v5543
          %v5545 = vrcp.pop %v5246
          %v5546 = vmul.f32 %v5091, %v5545
          %v5547 = vrcp.pop %v5251
          %v5548 = vmul.f32 %v5092, %v5547
          %v5549 = vrcp.pop %v5256
          %v5550 = vmul.f32 %v5093, %v5549
          %v5551 = vrcp.pop %v5261
          %v5552 = vmul.f32 %v5094, %v5551
          %v5553 = vrcp.pop %v5266
          %v5554 = vmul.f32 %v5095, %v5553
          %v5555 = vrcp.pop %v5271
          %v5556 = vmul.f32 %v5096, %v5555
          %v5557 = vrcp.pop %v5276
          %v5558 = vmul.f32 %v5097, %v5557
          %v5559 = vrcp.pop %v5281
          %v5560 = vmul.f32 %v5098, %v5559
          %v5561 = vrcp.pop %v5286
          %v5562 = vmul.f32 %v5099, %v5561
          %v5563 = vrcp.pop %v5291
          %v5564 = vmul.f32 %v5100, %v5563
          %v5565 = vrcp.pop %v5296
          %v5566 = vmul.f32 %v5101, %v5565
          %v5567 = vrcp.pop %v5301
          %v5568 = vmul.f32 %v5102, %v5567
          %v5569 = vrcp.pop %v5306
          %v5570 = vmul.f32 %v5103, %v5569
          %v5571 = vrcp.pop %v5311
          %v5572 = vmul.f32 %v5104, %v5571
          %v5573 = vrcp.pop %v5316
          %v5574 = vmul.f32 %v5105, %v5573
          %v5575 = vrcp.pop %v5321
          %v5576 = vmul.f32 %v5106, %v5575
          %v5577 = vrcp.pop %v5326
          %v5578 = vmul.f32 %v5107, %v5577
          %v5579 = vrcp.pop %v5331
          %v5580 = vmul.f32 %v5108, %v5579
          %v5581 = vrcp.pop %v5336
          %v5582 = vmul.f32 %v5109, %v5581
          %v5583 = vrcp.pop %v5341
          %v5584 = vmul.f32 %v5110, %v5583
          %v5585 = vrcp.pop %v5346
          %v5586 = vmul.f32 %v5111, %v5585
          %v5587 = vrcp.pop %v5351
          %v5588 = vmul.f32 %v5112, %v5587
          %v5589 = vrcp.pop %v5356
          %v5590 = vmul.f32 %v5113, %v5589
          %v5591 = vrcp.pop %v5361
          %v5592 = vmul.f32 %v5114, %v5591
          %v5593 = vrcp.pop %v5366
          %v5594 = vmul.f32 %v5115, %v5593
          %v5595 = vrcp.pop %v5371
          %v5596 = vmul.f32 %v5116, %v5595
          %v5597 = vrcp.pop %v5376
          %v5598 = vmul.f32 %v5117, %v5597
          %v5599 = vrcp.pop %v5381
          %v5600 = vmul.f32 %v5118, %v5599
          %v5601 = vrcp.pop %v5386
          %v5602 = vmul.f32 %v5119, %v5601
          %v5603 = vrcp.pop %v5391
          %v5604 = vmul.f32 %v5120, %v5603
          %v5605 = vrcp.pop %v5396
          %v5606 = vmul.f32 %v5121, %v5605
          %v5607 = vrcp.pop %v5401
          %v5608 = vmul.f32 %v5122, %v5607
          %v5609 = vrcp.pop %v5406
          %v5610 = vmul.f32 %v5123, %v5609
          %v5611 = vrcp.pop %v5411
          %v5612 = vmul.f32 %v5124, %v5611
          %v5613 = vrcp.pop %v5416
          %v5614 = vmul.f32 %v5125, %v5613
          %v5615 = vrcp.pop %v5421
          %v5616 = vmul.f32 %v5126, %v5615
          %v5617 = vrcp.pop %v5426
          %v5618 = vmul.f32 %v5127, %v5617
          %v5619 = vrcp.pop %v5431
          %v5620 = vmul.f32 %v5128, %v5619
          %v5621 = vrcp.pop %v5436
          %v5622 = vmul.f32 %v5129, %v5621
          %v5623 = vrcp.pop %v5441
          %v5624 = vmul.f32 %v5130, %v5623
          %v5625 = vrcp.pop %v5446
          %v5626 = vmul.f32 %v5131, %v5625
          %v5627 = vrcp.pop %v5451
          %v5628 = vmul.f32 %v5132, %v5627
          %v5629 = vrcp.pop %v5456
          %v5630 = vmul.f32 %v5133, %v5629
          %v5631 = vrcp.pop %v5461
          %v5632 = vmul.f32 %v5134, %v5631
          %v5633 = vrcp.pop %v5466
          %v5634 = vmul.f32 %v5135, %v5633
          %v5635 = vrcp.pop %v5471
          %v5636 = vmul.f32 %v5136, %v5635
          %v5637 = vrcp.pop %v5476
          %v5638 = vmul.f32 %v5137, %v5637
          %v5639 = vrcp.pop %v5481
          %v5640 = vmul.f32 %v5138, %v5639
          %v5641 = vrcp.pop %v5486
          %v5642 = vmul.f32 %v5139, %v5641
          %v5643 = vrcp.pop %v5491
          %v5644 = vmul.f32 %v5140, %v5643
          %v5645 = vrcp.pop %v5496
          %v5646 = vmul.f32 %v5141, %v5645
          %v5647 = vrcp.pop %v5501
          %v5648 = vmul.f32 %v5142, %v5647
          %v5649 = vrcp.pop %v5506
          %v5650 = vmul.f32 %v5143, %v5649
          %v5651 = vrcp.pop %v5511
          %v5652 = vmul.f32 %v5144, %v5651
          %v5653 = vrcp.pop %v5516
          %v5654 = vmul.f32 %v5145, %v5653
          %v5655 = vrcp.pop %v5521
          %v5656 = vmul.f32 %v5146, %v5655
          %v5657 = vrcp.pop %v5526
          %v5658 = vmul.f32 %v5147, %v5657
          %v5659 = vrcp.pop %v5531
          %v5660 = vmul.f32 %v5148, %v5659
          %v5661 = vld [vmem:[%s3] sm:$0xff]
          %v5662 = vld [vmem:[%s3 + $0x8] sm:$0xff]
          %v5663 = vld [vmem:[%s3 + $0x10] sm:$0xff]
          %v5664 = vld [vmem:[%s3 + $0x18] sm:$0xff]
          %v5665 = vld [vmem:[%s3 + $0x20] sm:$0xff]
          %v5666 = vld [vmem:[%s3 + $0x28] sm:$0xff]
          %v5667 = vld [vmem:[%s3 + $0x30] sm:$0xff]
          %v5668 = vld [vmem:[%s3 + $0x38] sm:$0xff]
          %v5669 = vld [vmem:[%s3 + $0x40] sm:$0xff]
          %v5670 = vld [vmem:[%s3 + $0x48] sm:$0xff]
          %v5671 = vld [vmem:[%s3 + $0x50] sm:$0xff]
          %v5672 = vld [vmem:[%s3 + $0x58] sm:$0xff]
          %v5673 = vld [vmem:[%s3 + $0x60] sm:$0xff]
          %v5674 = vld [vmem:[%s3 + $0x68] sm:$0xff]
          %v5675 = vld [vmem:[%s3 + $0x70] sm:$0xff]
          %v5676 = vld [vmem:[%s3 + $0x78] sm:$0xff]
          %v5678 = vsel %vm1551, %v5534, 0
          %v5681 = vsel %vm1551, %v5536, 0
          %v5684 = vsel %vm1551, %v5538, 0
          %v5687 = vsel %vm1551, %v5540, 0
          %v5690 = vsel %vm1551, %v5542, 0
          %v5693 = vsel %vm1551, %v5544, 0
          %v5696 = vsel %vm1551, %v5546, 0
          %v5699 = vsel %vm1551, %v5548, 0
          %v5702 = vsel %vm1551, %v5550, 0
          %v5705 = vsel %vm1551, %v5552, 0
          %v5708 = vsel %vm1551, %v5554, 0
          %v5711 = vsel %vm1551, %v5556, 0
          %v5714 = vsel %vm1551, %v5558, 0
          %v5717 = vsel %vm1551, %v5560, 0
          %v5720 = vsel %vm1551, %v5562, 0
          %v5723 = vsel %vm1551, %v5564, 0
          %5725 = vmatprep.subr.mxu0 0.0
          %5726 = vmatpush1.msra.mxu0 %v5661
          %5727 = vmatprep.subr.mxu0 0.0
          %5728 = vmatpush1.msra.mxu0 %v5662
          %5729 = vmatprep.subr.mxu0 0.0
          %5730 = vmatpush1.msra.mxu0 %v5663
          %5731 = vmatprep.subr.mxu0 0.0
          %5732 = vmatpush1.msra.mxu0 %v5664
          %5733 = vmatprep.subr.mxu0 0.0
          %5734 = vmatpush1.msra.mxu0 0.0
          %5735 = vmatprep.subr.mxu0 0.0
          %5736 = vmatpush1.msra.mxu0 0.0
          %5737 = vmatprep.subr.mxu0 0.0
          %5738 = vmatpush1.msra.mxu0 0.0
          %5739 = vmatprep.subr.mxu0 0.0
          %5740 = vmatpush1.msra.mxu0 0.0
          %5741 = vmatprep.subr.mxu0 0.0
          %5742 = vmatpush1.msra.mxu0 0.0
          %5743 = vmatprep.subr.mxu0 0.0
          %5744 = vmatpush1.msra.mxu0 0.0
          %5745 = vmatprep.subr.mxu0 0.0
          %5746 = vmatpush1.msra.mxu0 0.0
          %5747 = vmatprep.subr.mxu0 0.0
          %5748 = vmatpush1.msra.mxu0 0.0
          %5749 = vmatprep.subr.mxu0 0.0
          %5750 = vmatpush1.msra.mxu0 0.0
          %5751 = vmatprep.subr.mxu0 0.0
          %5752 = vmatpush1.msra.mxu0 0.0
          %5753 = vmatprep.subr.mxu0 0.0
          %5754 = vmatpush1.msra.mxu0 0.0
          %5755 = vmatprep.subr.mxu0 0.0
          %5756 = vmatpush1.msra.mxu0 0.0
          %5757 = vmatprep.subr.mxu0 0.0
          %5758 = vmatpush1.msra.mxu0 0.0
          %5759 = vmatprep.subr.mxu0 0.0
          %5760 = vmatpush1.msra.mxu0 0.0
          %5761 = vmatprep.subr.mxu0 0.0
          %5762 = vmatpush1.msra.mxu0 0.0
          %5763 = vmatprep.subr.mxu0 0.0
          %5764 = vmatpush1.msra.mxu0 0.0
          %5765 = vmatprep.subr.mxu0 0.0
          %5766 = vmatpush1.msra.mxu0 0.0
          %5767 = vmatprep.subr.mxu0 0.0
          %5768 = vmatpush1.msra.mxu0 0.0
          %5769 = vmatprep.subr.mxu0 0.0
          %5770 = vmatpush1.msra.mxu0 0.0
          %5771 = vmatprep.subr.mxu0 0.0
          %5772 = vmatpush1.msra.mxu0 0.0
          %5773 = vmatprep.subr.mxu0 0.0
          %5774 = vmatpush1.msra.mxu0 0.0
          %5775 = vmatprep.subr.mxu0 0.0
          %5776 = vmatpush1.msra.mxu0 0.0
          %5777 = vmatprep.subr.mxu0 0.0
          %5778 = vmatpush1.msra.mxu0 0.0
          %5779 = vmatprep.subr.mxu0 0.0
          %5780 = vmatpush1.msra.mxu0 0.0
          %5781 = vmatprep.subr.mxu0 0.0
          %5782 = vmatpush1.msra.mxu0 0.0
          %5783 = vmatprep.subr.mxu0 0.0
          %5784 = vmatpush1.msra.mxu0 0.0
          %5785 = vmatprep.subr.mxu0 0.0
          %5786 = vmatpush1.msra.mxu0 0.0
          %5787 = vmatprep.subr.mxu0 0.0
          %5788 = vmatpush1.msra.mxu0 0.0
          %5789 = vmatprep.mubr.f32.mxu0 0.0
          %5790 = vmatmul.mubr.f32.gmra.mrb[0].mxu0 %v5678
          %v5791 = vpop.f32.mrb[0].mxu0
          %v5792 = vadd.f32 0.0, %v5791
          %v5793 = vpop.f32.mrb[0].mxu0
          %5794 = vmatprep.mubr.f32.mxu0 0.0
          %5795 = vmatmul.mubr.f32.gmra.mrb[0].mxu0 %v5681
          %v5796 = vpop.f32.mrb[0].mxu0
          %v5797 = vadd.f32 0.0, %v5796
          %v5798 = vpop.f32.mrb[0].mxu0
          %5799 = vmatprep.mubr.f32.mxu0 0.0
          %5800 = vmatmul.mubr.f32.gmra.mrb[0].mxu0 %v5684
          %v5801 = vpop.f32.mrb[0].mxu0
          %v5802 = vadd.f32 0.0, %v5801
          %v5803 = vpop.f32.mrb[0].mxu0
          %5804 = vmatprep.mubr.f32.mxu0 0.0
          %5805 = vmatmul.mubr.f32.gmra.mrb[0].mxu0 %v5687
          %v5806 = vpop.f32.mrb[0].mxu0
          %v5807 = vadd.f32 0.0, %v5806
          %v5808 = vpop.f32.mrb[0].mxu0
          %5809 = vmatprep.mubr.f32.mxu0 0.0
          %5810 = vmatmul.mubr.f32.gmra.mrb[0].mxu0 %v5690
          %v5811 = vpop.f32.mrb[0].mxu0
          %v5812 = vadd.f32 0.0, %v5811
          %v5813 = vpop.f32.mrb[0].mxu0
          %5814 = vmatprep.mubr.f32.mxu0 0.0
          %5815 = vmatmul.mubr.f32.gmra.mrb[0].mxu0 %v5693
          %v5816 = vpop.f32.mrb[0].mxu0
          %v5817 = vadd.f32 0.0, %v5816
          %v5818 = vpop.f32.mrb[0].mxu0
          %5819 = vmatprep.mubr.f32.mxu0 0.0
          %5820 = vmatmul.mubr.f32.gmra.mrb[0].mxu0 %v5696
          %v5821 = vpop.f32.mrb[0].mxu0
          %v5822 = vadd.f32 0.0, %v5821
          %v5823 = vpop.f32.mrb[0].mxu0
          %5824 = vmatprep.mubr.f32.mxu0 0.0
          %5825 = vmatmul.mubr.f32.gmra.mrb[0].mxu0 %v5699
          %v5826 = vpop.f32.mrb[0].mxu0
          %v5827 = vadd.f32 0.0, %v5826
          %v5828 = vpop.f32.mrb[0].mxu0
          %5829 = vmatprep.mubr.f32.mxu0 0.0
          %5830 = vmatmul.mubr.f32.gmra.mrb[0].mxu0 %v5702
          %v5831 = vpop.f32.mrb[0].mxu0
          %v5832 = vadd.f32 0.0, %v5831
          %v5833 = vpop.f32.mrb[0].mxu0
          %5834 = vmatprep.mubr.f32.mxu0 0.0
          %5835 = vmatmul.mubr.f32.gmra.mrb[0].mxu0 %v5705
          %v5836 = vpop.f32.mrb[0].mxu0
          %v5837 = vadd.f32 0.0, %v5836
          %v5838 = vpop.f32.mrb[0].mxu0
          %5839 = vmatprep.mubr.f32.mxu0 0.0
          %5840 = vmatmul.mubr.f32.gmra.mrb[0].mxu0 %v5708
          %v5841 = vpop.f32.mrb[0].mxu0
          %v5842 = vadd.f32 0.0, %v5841
          %v5843 = vpop.f32.mrb[0].mxu0
          %5844 = vmatprep.mubr.f32.mxu0 0.0
          %5845 = vmatmul.mubr.f32.gmra.mrb[0].mxu0 %v5711
          %v5846 = vpop.f32.mrb[0].mxu0
          %v5847 = vadd.f32 0.0, %v5846
          %v5848 = vpop.f32.mrb[0].mxu0
          %5849 = vmatprep.mubr.f32.mxu0 0.0
          %5850 = vmatmul.mubr.f32.gmra.mrb[0].mxu0 %v5714
          %v5851 = vpop.f32.mrb[0].mxu0
          %v5852 = vadd.f32 0.0, %v5851
          %v5853 = vpop.f32.mrb[0].mxu0
          %5854 = vmatprep.mubr.f32.mxu0 0.0
          %5855 = vmatmul.mubr.f32.gmra.mrb[0].mxu0 %v5717
          %v5856 = vpop.f32.mrb[0].mxu0
          %v5857 = vadd.f32 0.0, %v5856
          %v5858 = vpop.f32.mrb[0].mxu0
          %5859 = vmatprep.mubr.f32.mxu0 0.0
          %5860 = vmatmul.mubr.f32.gmra.mrb[0].mxu0 %v5720
          %v5861 = vpop.f32.mrb[0].mxu0
          %v5862 = vadd.f32 0.0, %v5861
          %v5863 = vpop.f32.mrb[0].mxu0
          %5864 = vmatprep.mubr.f32.mxu0 0.0
          %5865 = vmatmul.mubr.f32.gmra.mrb[0].mxu0 %v5723
          %v5866 = vpop.f32.mrb[0].mxu0
          %v5867 = vadd.f32 0.0, %v5866
          %v5868 = vpop.f32.mrb[0].mxu0
          %5869 = vdwg.mxu0
          %v5871 = vsel %vm1551, %v5566, 0
          %v5874 = vsel %vm1551, %v5568, 0
          %v5877 = vsel %vm1551, %v5570, 0
          %v5880 = vsel %vm1551, %v5572, 0
          %v5883 = vsel %vm1551, %v5574, 0
          %v5886 = vsel %vm1551, %v5576, 0
          %v5889 = vsel %vm1551, %v5578, 0
          %v5892 = vsel %vm1551, %v5580, 0
          %v5895 = vsel %vm1551, %v5582, 0
          %v5898 = vsel %vm1551, %v5584, 0
          %v5901 = vsel %vm1551, %v5586, 0
          %v5904 = vsel %vm1551, %v5588, 0
          %v5907 = vsel %vm1551, %v5590, 0
          %v5910 = vsel %vm1551, %v5592, 0
          %v5913 = vsel %vm1551, %v5594, 0
          %v5916 = vsel %vm1551, %v5596, 0
          %5918 = vmatprep.subr.mxu0 0.0
          %5919 = vmatpush1.msra.mxu0 %v5665
          %5920 = vmatprep.subr.mxu0 0.0
          %5921 = vmatpush1.msra.mxu0 %v5666
          %5922 = vmatprep.subr.mxu0 0.0
          %5923 = vmatpush1.msra.mxu0 %v5667
          %5924 = vmatprep.subr.mxu0 0.0
          %5925 = vmatpush1.msra.mxu0 %v5668
          %5926 = vmatprep.subr.mxu0 0.0
          %5927 = vmatpush1.msra.mxu0 0.0
          %5928 = vmatprep.subr.mxu0 0.0
          %5929 = vmatpush1.msra.mxu0 0.0
          %5930 = vmatprep.subr.mxu0 0.0
          %5931 = vmatpush1.msra.mxu0 0.0
          %5932 = vmatprep.subr.mxu0 0.0
          %5933 = vmatpush1.msra.mxu0 0.0
          %5934 = vmatprep.subr.mxu0 0.0
          %5935 = vmatpush1.msra.mxu0 0.0
          %5936 = vmatprep.subr.mxu0 0.0
          %5937 = vmatpush1.msra.mxu0 0.0
          %5938 = vmatprep.subr.mxu0 0.0
          %5939 = vmatpush1.msra.mxu0 0.0
          %5940 = vmatprep.subr.mxu0 0.0
          %5941 = vmatpush1.msra.mxu0 0.0
          %5942 = vmatprep.subr.mxu0 0.0
          %5943 = vmatpush1.msra.mxu0 0.0
          %5944 = vmatprep.subr.mxu0 0.0
          %5945 = vmatpush1.msra.mxu0 0.0
          %5946 = vmatprep.subr.mxu0 0.0
          %5947 = vmatpush1.msra.mxu0 0.0
          %5948 = vmatprep.subr.mxu0 0.0
          %5949 = vmatpush1.msra.mxu0 0.0
          %5950 = vmatprep.subr.mxu0 0.0
          %5951 = vmatpush1.msra.mxu0 0.0
          %5952 = vmatprep.subr.mxu0 0.0
          %5953 = vmatpush1.msra.mxu0 0.0
          %5954 = vmatprep.subr.mxu0 0.0
          %5955 = vmatpush1.msra.mxu0 0.0
          %5956 = vmatprep.subr.mxu0 0.0
          %5957 = vmatpush1.msra.mxu0 0.0
          %5958 = vmatprep.subr.mxu0 0.0
          %5959 = vmatpush1.msra.mxu0 0.0
          %5960 = vmatprep.subr.mxu0 0.0
          %5961 = vmatpush1.msra.mxu0 0.0
          %5962 = vmatprep.subr.mxu0 0.0
          %5963 = vmatpush1.msra.mxu0 0.0
          %5964 = vmatprep.subr.mxu0 0.0
          %5965 = vmatpush1.msra.mxu0 0.0
          %5966 = vmatprep.subr.mxu0 0.0
          %5967 = vmatpush1.msra.mxu0 0.0
          %5968 = vmatprep.subr.mxu0 0.0
          %5969 = vmatpush1.msra.mxu0 0.0
          %5970 = vmatprep.subr.mxu0 0.0
          %5971 = vmatpush1.msra.mxu0 0.0
          %5972 = vmatprep.subr.mxu0 0.0
          %5973 = vmatpush1.msra.mxu0 0.0
          %5974 = vmatprep.subr.mxu0 0.0
          %5975 = vmatpush1.msra.mxu0 0.0
          %5976 = vmatprep.subr.mxu0 0.0
          %5977 = vmatpush1.msra.mxu0 0.0
          %5978 = vmatprep.subr.mxu0 0.0
          %5979 = vmatpush1.msra.mxu0 0.0
          %5980 = vmatprep.subr.mxu0 0.0
          %5981 = vmatpush1.msra.mxu0 0.0
          %5982 = vmatprep.mubr.f32.mxu0 0.0
          %5983 = vmatmul.mubr.f32.gmra.mrb[0].mxu0 %v5871
          %v5984 = vpop.f32.mrb[0].mxu0
          %v5985 = vadd.f32 0.0, %v5984
          %v5986 = vpop.f32.mrb[0].mxu0
          %5987 = vmatprep.mubr.f32.mxu0 0.0
          %5988 = vmatmul.mubr.f32.gmra.mrb[0].mxu0 %v5874
          %v5989 = vpop.f32.mrb[0].mxu0
          %v5990 = vadd.f32 0.0, %v5989
          %v5991 = vpop.f32.mrb[0].mxu0
          %5992 = vmatprep.mubr.f32.mxu0 0.0
          %5993 = vmatmul.mubr.f32.gmra.mrb[0].mxu0 %v5877
          %v5994 = vpop.f32.mrb[0].mxu0
          %v5995 = vadd.f32 0.0, %v5994
          %v5996 = vpop.f32.mrb[0].mxu0
          %5997 = vmatprep.mubr.f32.mxu0 0.0
          %5998 = vmatmul.mubr.f32.gmra.mrb[0].mxu0 %v5880
          %v5999 = vpop.f32.mrb[0].mxu0
          %v6000 = vadd.f32 0.0, %v5999
          %v6001 = vpop.f32.mrb[0].mxu0
          %6002 = vmatprep.mubr.f32.mxu0 0.0
          %6003 = vmatmul.mubr.f32.gmra.mrb[0].mxu0 %v5883
          %v6004 = vpop.f32.mrb[0].mxu0
          %v6005 = vadd.f32 0.0, %v6004
          %v6006 = vpop.f32.mrb[0].mxu0
          %6007 = vmatprep.mubr.f32.mxu0 0.0
          %6008 = vmatmul.mubr.f32.gmra.mrb[0].mxu0 %v5886
          %v6009 = vpop.f32.mrb[0].mxu0
          %v6010 = vadd.f32 0.0, %v6009
          %v6011 = vpop.f32.mrb[0].mxu0
          %6012 = vmatprep.mubr.f32.mxu0 0.0
          %6013 = vmatmul.mubr.f32.gmra.mrb[0].mxu0 %v5889
          %v6014 = vpop.f32.mrb[0].mxu0
          %v6015 = vadd.f32 0.0, %v6014
          %v6016 = vpop.f32.mrb[0].mxu0
          %6017 = vmatprep.mubr.f32.mxu0 0.0
          %6018 = vmatmul.mubr.f32.gmra.mrb[0].mxu0 %v5892
          %v6019 = vpop.f32.mrb[0].mxu0
          %v6020 = vadd.f32 0.0, %v6019
          %v6021 = vpop.f32.mrb[0].mxu0
          %6022 = vmatprep.mubr.f32.mxu0 0.0
          %6023 = vmatmul.mubr.f32.gmra.mrb[0].mxu0 %v5895
          %v6024 = vpop.f32.mrb[0].mxu0
          %v6025 = vadd.f32 0.0, %v6024
          %v6026 = vpop.f32.mrb[0].mxu0
          %6027 = vmatprep.mubr.f32.mxu0 0.0
          %6028 = vmatmul.mubr.f32.gmra.mrb[0].mxu0 %v5898
          %v6029 = vpop.f32.mrb[0].mxu0
          %v6030 = vadd.f32 0.0, %v6029
          %v6031 = vpop.f32.mrb[0].mxu0
          %6032 = vmatprep.mubr.f32.mxu0 0.0
          %6033 = vmatmul.mubr.f32.gmra.mrb[0].mxu0 %v5901
          %v6034 = vpop.f32.mrb[0].mxu0
          %v6035 = vadd.f32 0.0, %v6034
          %v6036 = vpop.f32.mrb[0].mxu0
          %6037 = vmatprep.mubr.f32.mxu0 0.0
          %6038 = vmatmul.mubr.f32.gmra.mrb[0].mxu0 %v5904
          %v6039 = vpop.f32.mrb[0].mxu0
          %v6040 = vadd.f32 0.0, %v6039
          %v6041 = vpop.f32.mrb[0].mxu0
          %6042 = vmatprep.mubr.f32.mxu0 0.0
          %6043 = vmatmul.mubr.f32.gmra.mrb[0].mxu0 %v5907
          %v6044 = vpop.f32.mrb[0].mxu0
          %v6045 = vadd.f32 0.0, %v6044
          %v6046 = vpop.f32.mrb[0].mxu0
          %6047 = vmatprep.mubr.f32.mxu0 0.0
          %6048 = vmatmul.mubr.f32.gmra.mrb[0].mxu0 %v5910
          %v6049 = vpop.f32.mrb[0].mxu0
          %v6050 = vadd.f32 0.0, %v6049
          %v6051 = vpop.f32.mrb[0].mxu0
          %6052 = vmatprep.mubr.f32.mxu0 0.0
          %6053 = vmatmul.mubr.f32.gmra.mrb[0].mxu0 %v5913
          %v6054 = vpop.f32.mrb[0].mxu0
          %v6055 = vadd.f32 0.0, %v6054
          %v6056 = vpop.f32.mrb[0].mxu0
          %6057 = vmatprep.mubr.f32.mxu0 0.0
          %6058 = vmatmul.mubr.f32.gmra.mrb[0].mxu0 %v5916
          %v6059 = vpop.f32.mrb[0].mxu0
          %v6060 = vadd.f32 0.0, %v6059
          %v6061 = vpop.f32.mrb[0].mxu0
          %6062 = vdwg.mxu0
          %v6064 = vsel %vm1551, %v5598, 0
          %v6067 = vsel %vm1551, %v5600, 0
          %v6070 = vsel %vm1551, %v5602, 0
          %v6073 = vsel %vm1551, %v5604, 0
          %v6076 = vsel %vm1551, %v5606, 0
          %v6079 = vsel %vm1551, %v5608, 0
          %v6082 = vsel %vm1551, %v5610, 0
          %v6085 = vsel %vm1551, %v5612, 0
          %v6088 = vsel %vm1551, %v5614, 0
          %v6091 = vsel %vm1551, %v5616, 0
          %v6094 = vsel %vm1551, %v5618, 0
          %v6097 = vsel %vm1551, %v5620, 0
          %v6100 = vsel %vm1551, %v5622, 0
          %v6103 = vsel %vm1551, %v5624, 0
          %v6106 = vsel %vm1551, %v5626, 0
          %v6109 = vsel %vm1551, %v5628, 0
          %6111 = vmatprep.subr.mxu0 0.0
          %6112 = vmatpush1.msra.mxu0 %v5669
          %6113 = vmatprep.subr.mxu0 0.0
          %6114 = vmatpush1.msra.mxu0 %v5670
          %6115 = vmatprep.subr.mxu0 0.0
          %6116 = vmatpush1.msra.mxu0 %v5671
          %6117 = vmatprep.subr.mxu0 0.0
          %6118 = vmatpush1.msra.mxu0 %v5672
          %6119 = vmatprep.subr.mxu0 0.0
          %6120 = vmatpush1.msra.mxu0 0.0
          %6121 = vmatprep.subr.mxu0 0.0
          %6122 = vmatpush1.msra.mxu0 0.0
          %6123 = vmatprep.subr.mxu0 0.0
          %6124 = vmatpush1.msra.mxu0 0.0
          %6125 = vmatprep.subr.mxu0 0.0
          %6126 = vmatpush1.msra.mxu0 0.0
          %6127 = vmatprep.subr.mxu0 0.0
          %6128 = vmatpush1.msra.mxu0 0.0
          %6129 = vmatprep.subr.mxu0 0.0
          %6130 = vmatpush1.msra.mxu0 0.0
          %6131 = vmatprep.subr.mxu0 0.0
          %6132 = vmatpush1.msra.mxu0 0.0
          %6133 = vmatprep.subr.mxu0 0.0
          %6134 = vmatpush1.msra.mxu0 0.0
          %6135 = vmatprep.subr.mxu0 0.0
          %6136 = vmatpush1.msra.mxu0 0.0
          %6137 = vmatprep.subr.mxu0 0.0
          %6138 = vmatpush1.msra.mxu0 0.0
          %6139 = vmatprep.subr.mxu0 0.0
          %6140 = vmatpush1.msra.mxu0 0.0
          %6141 = vmatprep.subr.mxu0 0.0
          %6142 = vmatpush1.msra.mxu0 0.0
          %6143 = vmatprep.subr.mxu0 0.0
          %6144 = vmatpush1.msra.mxu0 0.0
          %6145 = vmatprep.subr.mxu0 0.0
          %6146 = vmatpush1.msra.mxu0 0.0
          %6147 = vmatprep.subr.mxu0 0.0
          %6148 = vmatpush1.msra.mxu0 0.0
          %6149 = vmatprep.subr.mxu0 0.0
          %6150 = vmatpush1.msra.mxu0 0.0
          %6151 = vmatprep.subr.mxu0 0.0
          %6152 = vmatpush1.msra.mxu0 0.0
          %6153 = vmatprep.subr.mxu0 0.0
          %6154 = vmatpush1.msra.mxu0 0.0
          %6155 = vmatprep.subr.mxu0 0.0
          %6156 = vmatpush1.msra.mxu0 0.0
          %6157 = vmatprep.subr.mxu0 0.0
          %6158 = vmatpush1.msra.mxu0 0.0
          %6159 = vmatprep.subr.mxu0 0.0
          %6160 = vmatpush1.msra.mxu0 0.0
          %6161 = vmatprep.subr.mxu0 0.0
          %6162 = vmatpush1.msra.mxu0 0.0
          %6163 = vmatprep.subr.mxu0 0.0
          %6164 = vmatpush1.msra.mxu0 0.0
          %6165 = vmatprep.subr.mxu0 0.0
          %6166 = vmatpush1.msra.mxu0 0.0
          %6167 = vmatprep.subr.mxu0 0.0
          %6168 = vmatpush1.msra.mxu0 0.0
          %6169 = vmatprep.subr.mxu0 0.0
          %6170 = vmatpush1.msra.mxu0 0.0
          %6171 = vmatprep.subr.mxu0 0.0
          %6172 = vmatpush1.msra.mxu0 0.0
          %6173 = vmatprep.subr.mxu0 0.0
          %6174 = vmatpush1.msra.mxu0 0.0
          %6175 = vmatprep.mubr.f32.mxu0 0.0
          %6176 = vmatmul.mubr.f32.gmra.mrb[0].mxu0 %v6064
          %v6177 = vpop.f32.mrb[0].mxu0
          %v6178 = vadd.f32 0.0, %v6177
          %v6179 = vpop.f32.mrb[0].mxu0
          %6180 = vmatprep.mubr.f32.mxu0 0.0
          %6181 = vmatmul.mubr.f32.gmra.mrb[0].mxu0 %v6067
          %v6182 = vpop.f32.mrb[0].mxu0
          %v6183 = vadd.f32 0.0, %v6182
          %v6184 = vpop.f32.mrb[0].mxu0
          %6185 = vmatprep.mubr.f32.mxu0 0.0
          %6186 = vmatmul.mubr.f32.gmra.mrb[0].mxu0 %v6070
          %v6187 = vpop.f32.mrb[0].mxu0
          %v6188 = vadd.f32 0.0, %v6187
          %v6189 = vpop.f32.mrb[0].mxu0
          %6190 = vmatprep.mubr.f32.mxu0 0.0
          %6191 = vmatmul.mubr.f32.gmra.mrb[0].mxu0 %v6073
          %v6192 = vpop.f32.mrb[0].mxu0
          %v6193 = vadd.f32 0.0, %v6192
          %v6194 = vpop.f32.mrb[0].mxu0
          %6195 = vmatprep.mubr.f32.mxu0 0.0
          %6196 = vmatmul.mubr.f32.gmra.mrb[0].mxu0 %v6076
          %v6197 = vpop.f32.mrb[0].mxu0
          %v6198 = vadd.f32 0.0, %v6197
          %v6199 = vpop.f32.mrb[0].mxu0
          %6200 = vmatprep.mubr.f32.mxu0 0.0
          %6201 = vmatmul.mubr.f32.gmra.mrb[0].mxu0 %v6079
          %v6202 = vpop.f32.mrb[0].mxu0
          %v6203 = vadd.f32 0.0, %v6202
          %v6204 = vpop.f32.mrb[0].mxu0
          %6205 = vmatprep.mubr.f32.mxu0 0.0
          %6206 = vmatmul.mubr.f32.gmra.mrb[0].mxu0 %v6082
          %v6207 = vpop.f32.mrb[0].mxu0
          %v6208 = vadd.f32 0.0, %v6207
          %v6209 = vpop.f32.mrb[0].mxu0
          %6210 = vmatprep.mubr.f32.mxu0 0.0
          %6211 = vmatmul.mubr.f32.gmra.mrb[0].mxu0 %v6085
          %v6212 = vpop.f32.mrb[0].mxu0
          %v6213 = vadd.f32 0.0, %v6212
          %v6214 = vpop.f32.mrb[0].mxu0
          %6215 = vmatprep.mubr.f32.mxu0 0.0
          %6216 = vmatmul.mubr.f32.gmra.mrb[0].mxu0 %v6088
          %v6217 = vpop.f32.mrb[0].mxu0
          %v6218 = vadd.f32 0.0, %v6217
          %v6219 = vpop.f32.mrb[0].mxu0
          %6220 = vmatprep.mubr.f32.mxu0 0.0
          %6221 = vmatmul.mubr.f32.gmra.mrb[0].mxu0 %v6091
          %v6222 = vpop.f32.mrb[0].mxu0
          %v6223 = vadd.f32 0.0, %v6222
          %v6224 = vpop.f32.mrb[0].mxu0
          %6225 = vmatprep.mubr.f32.mxu0 0.0
          %6226 = vmatmul.mubr.f32.gmra.mrb[0].mxu0 %v6094
          %v6227 = vpop.f32.mrb[0].mxu0
          %v6228 = vadd.f32 0.0, %v6227
          %v6229 = vpop.f32.mrb[0].mxu0
          %6230 = vmatprep.mubr.f32.mxu0 0.0
          %6231 = vmatmul.mubr.f32.gmra.mrb[0].mxu0 %v6097
          %v6232 = vpop.f32.mrb[0].mxu0
          %v6233 = vadd.f32 0.0, %v6232
          %v6234 = vpop.f32.mrb[0].mxu0
          %6235 = vmatprep.mubr.f32.mxu0 0.0
          %6236 = vmatmul.mubr.f32.gmra.mrb[0].mxu0 %v6100
          %v6237 = vpop.f32.mrb[0].mxu0
          %v6238 = vadd.f32 0.0, %v6237
          %v6239 = vpop.f32.mrb[0].mxu0
          %6240 = vmatprep.mubr.f32.mxu0 0.0
          %6241 = vmatmul.mubr.f32.gmra.mrb[0].mxu0 %v6103
          %v6242 = vpop.f32.mrb[0].mxu0
          %v6243 = vadd.f32 0.0, %v6242
          %v6244 = vpop.f32.mrb[0].mxu0
          %6245 = vmatprep.mubr.f32.mxu0 0.0
          %6246 = vmatmul.mubr.f32.gmra.mrb[0].mxu0 %v6106
          %v6247 = vpop.f32.mrb[0].mxu0
          %v6248 = vadd.f32 0.0, %v6247
          %v6249 = vpop.f32.mrb[0].mxu0
          %6250 = vmatprep.mubr.f32.mxu0 0.0
          %6251 = vmatmul.mubr.f32.gmra.mrb[0].mxu0 %v6109
          %v6252 = vpop.f32.mrb[0].mxu0
          %v6253 = vadd.f32 0.0, %v6252
          %v6254 = vpop.f32.mrb[0].mxu0
          %6255 = vdwg.mxu0
          %v6257 = vsel %vm1551, %v5630, 0
          %v6260 = vsel %vm1551, %v5632, 0
          %v6263 = vsel %vm1551, %v5634, 0
          %v6266 = vsel %vm1551, %v5636, 0
          %v6269 = vsel %vm1551, %v5638, 0
          %v6272 = vsel %vm1551, %v5640, 0
          %v6275 = vsel %vm1551, %v5642, 0
          %v6278 = vsel %vm1551, %v5644, 0
          %v6281 = vsel %vm1551, %v5646, 0
          %v6284 = vsel %vm1551, %v5648, 0
          %v6287 = vsel %vm1551, %v5650, 0
          %v6290 = vsel %vm1551, %v5652, 0
          %v6293 = vsel %vm1551, %v5654, 0
          %v6296 = vsel %vm1551, %v5656, 0
          %v6299 = vsel %vm1551, %v5658, 0
          %v6302 = vsel %vm1551, %v5660, 0
          %6304 = vmatprep.subr.mxu0 0.0
          %6305 = vmatpush1.msra.mxu0 %v5673
          %6306 = vmatprep.subr.mxu0 0.0
          %6307 = vmatpush1.msra.mxu0 %v5674
          %6308 = vmatprep.subr.mxu0 0.0
          %6309 = vmatpush1.msra.mxu0 %v5675
          %6310 = vmatprep.subr.mxu0 0.0
          %6311 = vmatpush1.msra.mxu0 %v5676
          %6312 = vmatprep.subr.mxu0 0.0
          %6313 = vmatpush1.msra.mxu0 0.0
          %6314 = vmatprep.subr.mxu0 0.0
          %6315 = vmatpush1.msra.mxu0 0.0
          %6316 = vmatprep.subr.mxu0 0.0
          %6317 = vmatpush1.msra.mxu0 0.0
          %6318 = vmatprep.subr.mxu0 0.0
          %6319 = vmatpush1.msra.mxu0 0.0
          %6320 = vmatprep.subr.mxu0 0.0
          %6321 = vmatpush1.msra.mxu0 0.0
          %6322 = vmatprep.subr.mxu0 0.0
          %6323 = vmatpush1.msra.mxu0 0.0
          %6324 = vmatprep.subr.mxu0 0.0
          %6325 = vmatpush1.msra.mxu0 0.0
          %6326 = vmatprep.subr.mxu0 0.0
          %6327 = vmatpush1.msra.mxu0 0.0
          %6328 = vmatprep.subr.mxu0 0.0
          %6329 = vmatpush1.msra.mxu0 0.0
          %6330 = vmatprep.subr.mxu0 0.0
          %6331 = vmatpush1.msra.mxu0 0.0
          %6332 = vmatprep.subr.mxu0 0.0
          %6333 = vmatpush1.msra.mxu0 0.0
          %6334 = vmatprep.subr.mxu0 0.0
          %6335 = vmatpush1.msra.mxu0 0.0
          %6336 = vmatprep.subr.mxu0 0.0
          %6337 = vmatpush1.msra.mxu0 0.0
          %6338 = vmatprep.subr.mxu0 0.0
          %6339 = vmatpush1.msra.mxu0 0.0
          %6340 = vmatprep.subr.mxu0 0.0
          %6341 = vmatpush1.msra.mxu0 0.0
          %6342 = vmatprep.subr.mxu0 0.0
          %6343 = vmatpush1.msra.mxu0 0.0
          %6344 = vmatprep.subr.mxu0 0.0
          %6345 = vmatpush1.msra.mxu0 0.0
          %6346 = vmatprep.subr.mxu0 0.0
          %6347 = vmatpush1.msra.mxu0 0.0
          %6348 = vmatprep.subr.mxu0 0.0
          %6349 = vmatpush1.msra.mxu0 0.0
          %6350 = vmatprep.subr.mxu0 0.0
          %6351 = vmatpush1.msra.mxu0 0.0
          %6352 = vmatprep.subr.mxu0 0.0
          %6353 = vmatpush1.msra.mxu0 0.0
          %6354 = vmatprep.subr.mxu0 0.0
          %6355 = vmatpush1.msra.mxu0 0.0
          %6356 = vmatprep.subr.mxu0 0.0
          %6357 = vmatpush1.msra.mxu0 0.0
          %6358 = vmatprep.subr.mxu0 0.0
          %6359 = vmatpush1.msra.mxu0 0.0
          %6360 = vmatprep.subr.mxu0 0.0
          %6361 = vmatpush1.msra.mxu0 0.0
          %6362 = vmatprep.subr.mxu0 0.0
          %6363 = vmatpush1.msra.mxu0 0.0
          %6364 = vmatprep.subr.mxu0 0.0
          %6365 = vmatpush1.msra.mxu0 0.0
          %6366 = vmatprep.subr.mxu0 0.0
          %6367 = vmatpush1.msra.mxu0 0.0
          %6368 = vmatprep.mubr.f32.mxu0 0.0
          %6369 = vmatmul.mubr.f32.gmra.mrb[0].mxu0 %v6257
          %v6370 = vpop.f32.mrb[0].mxu0
          %v6371 = vadd.f32 0.0, %v6370
          %v6372 = vpop.f32.mrb[0].mxu0
          %6373 = vmatprep.mubr.f32.mxu0 0.0
          %6374 = vmatmul.mubr.f32.gmra.mrb[0].mxu0 %v6260
          %v6375 = vpop.f32.mrb[0].mxu0
          %v6376 = vadd.f32 0.0, %v6375
          %v6377 = vpop.f32.mrb[0].mxu0
          %6378 = vmatprep.mubr.f32.mxu0 0.0
          %6379 = vmatmul.mubr.f32.gmra.mrb[0].mxu0 %v6263
          %v6380 = vpop.f32.mrb[0].mxu0
          %v6381 = vadd.f32 0.0, %v6380
          %v6382 = vpop.f32.mrb[0].mxu0
          %6383 = vmatprep.mubr.f32.mxu0 0.0
          %6384 = vmatmul.mubr.f32.gmra.mrb[0].mxu0 %v6266
          %v6385 = vpop.f32.mrb[0].mxu0
          %v6386 = vadd.f32 0.0, %v6385
          %v6387 = vpop.f32.mrb[0].mxu0
          %6388 = vmatprep.mubr.f32.mxu0 0.0
          %6389 = vmatmul.mubr.f32.gmra.mrb[0].mxu0 %v6269
          %v6390 = vpop.f32.mrb[0].mxu0
          %v6391 = vadd.f32 0.0, %v6390
          %v6392 = vpop.f32.mrb[0].mxu0
          %6393 = vmatprep.mubr.f32.mxu0 0.0
          %6394 = vmatmul.mubr.f32.gmra.mrb[0].mxu0 %v6272
          %v6395 = vpop.f32.mrb[0].mxu0
          %v6396 = vadd.f32 0.0, %v6395
          %v6397 = vpop.f32.mrb[0].mxu0
          %6398 = vmatprep.mubr.f32.mxu0 0.0
          %6399 = vmatmul.mubr.f32.gmra.mrb[0].mxu0 %v6275
          %v6400 = vpop.f32.mrb[0].mxu0
          %v6401 = vadd.f32 0.0, %v6400
          %v6402 = vpop.f32.mrb[0].mxu0
          %6403 = vmatprep.mubr.f32.mxu0 0.0
          %6404 = vmatmul.mubr.f32.gmra.mrb[0].mxu0 %v6278
          %v6405 = vpop.f32.mrb[0].mxu0
          %v6406 = vadd.f32 0.0, %v6405
          %v6407 = vpop.f32.mrb[0].mxu0
          %6408 = vmatprep.mubr.f32.mxu0 0.0
          %6409 = vmatmul.mubr.f32.gmra.mrb[0].mxu0 %v6281
          %v6410 = vpop.f32.mrb[0].mxu0
          %v6411 = vadd.f32 0.0, %v6410
          %v6412 = vpop.f32.mrb[0].mxu0
          %6413 = vmatprep.mubr.f32.mxu0 0.0
          %6414 = vmatmul.mubr.f32.gmra.mrb[0].mxu0 %v6284
          %v6415 = vpop.f32.mrb[0].mxu0
          %v6416 = vadd.f32 0.0, %v6415
          %v6417 = vpop.f32.mrb[0].mxu0
          %6418 = vmatprep.mubr.f32.mxu0 0.0
          %6419 = vmatmul.mubr.f32.gmra.mrb[0].mxu0 %v6287
          %v6420 = vpop.f32.mrb[0].mxu0
          %v6421 = vadd.f32 0.0, %v6420
          %v6422 = vpop.f32.mrb[0].mxu0
          %6423 = vmatprep.mubr.f32.mxu0 0.0
          %6424 = vmatmul.mubr.f32.gmra.mrb[0].mxu0 %v6290
          %v6425 = vpop.f32.mrb[0].mxu0
          %v6426 = vadd.f32 0.0, %v6425
          %v6427 = vpop.f32.mrb[0].mxu0
          %6428 = vmatprep.mubr.f32.mxu0 0.0
          %6429 = vmatmul.mubr.f32.gmra.mrb[0].mxu0 %v6293
          %v6430 = vpop.f32.mrb[0].mxu0
          %v6431 = vadd.f32 0.0, %v6430
          %v6432 = vpop.f32.mrb[0].mxu0
          %6433 = vmatprep.mubr.f32.mxu0 0.0
          %6434 = vmatmul.mubr.f32.gmra.mrb[0].mxu0 %v6296
          %v6435 = vpop.f32.mrb[0].mxu0
          %v6436 = vadd.f32 0.0, %v6435
          %v6437 = vpop.f32.mrb[0].mxu0
          %6438 = vmatprep.mubr.f32.mxu0 0.0
          %6439 = vmatmul.mubr.f32.gmra.mrb[0].mxu0 %v6299
          %v6440 = vpop.f32.mrb[0].mxu0
          %v6441 = vadd.f32 0.0, %v6440
          %v6442 = vpop.f32.mrb[0].mxu0
          %6443 = vmatprep.mubr.f32.mxu0 0.0
          %6444 = vmatmul.mubr.f32.gmra.mrb[0].mxu0 %v6302
          %v6445 = vpop.f32.mrb[0].mxu0
          %v6446 = vadd.f32 0.0, %v6445
          %v6447 = vpop.f32.mrb[0].mxu0
          %6448 = vdwg.mxu0
          %v6449 = vadd.f32 %v5792, %v5985
          %v6450 = vadd.f32 %v6449, %v6178
          %v6451 = vadd.f32 %v6450, %v6371
          %v6452 = vadd.f32 %v5797, %v5990
          %v6453 = vadd.f32 %v6452, %v6183
          %v6454 = vadd.f32 %v6453, %v6376
          %v6455 = vadd.f32 %v5802, %v5995
          %v6456 = vadd.f32 %v6455, %v6188
          %v6457 = vadd.f32 %v6456, %v6381
          %v6458 = vadd.f32 %v5807, %v6000
          %v6459 = vadd.f32 %v6458, %v6193
          %v6460 = vadd.f32 %v6459, %v6386
          %v6461 = vadd.f32 %v5812, %v6005
          %v6462 = vadd.f32 %v6461, %v6198
          %v6463 = vadd.f32 %v6462, %v6391
          %v6464 = vadd.f32 %v5817, %v6010
          %v6465 = vadd.f32 %v6464, %v6203
          %v6466 = vadd.f32 %v6465, %v6396
          %v6467 = vadd.f32 %v5822, %v6015
          %v6468 = vadd.f32 %v6467, %v6208
          %v6469 = vadd.f32 %v6468, %v6401
          %v6470 = vadd.f32 %v5827, %v6020
          %v6471 = vadd.f32 %v6470, %v6213
          %v6472 = vadd.f32 %v6471, %v6406
          %v6473 = vadd.f32 %v5832, %v6025
          %v6474 = vadd.f32 %v6473, %v6218
          %v6475 = vadd.f32 %v6474, %v6411
          %v6476 = vadd.f32 %v5837, %v6030
          %v6477 = vadd.f32 %v6476, %v6223
          %v6478 = vadd.f32 %v6477, %v6416
          %v6479 = vadd.f32 %v5842, %v6035
          %v6480 = vadd.f32 %v6479, %v6228
          %v6481 = vadd.f32 %v6480, %v6421
          %v6482 = vadd.f32 %v5847, %v6040
          %v6483 = vadd.f32 %v6482, %v6233
          %v6484 = vadd.f32 %v6483, %v6426
          %v6485 = vadd.f32 %v5852, %v6045
          %v6486 = vadd.f32 %v6485, %v6238
          %v6487 = vadd.f32 %v6486, %v6431
          %v6488 = vadd.f32 %v5857, %v6050
          %v6489 = vadd.f32 %v6488, %v6243
          %v6490 = vadd.f32 %v6489, %v6436
          %v6491 = vadd.f32 %v5862, %v6055
          %v6492 = vadd.f32 %v6491, %v6248
          %v6493 = vadd.f32 %v6492, %v6441
          %v6494 = vadd.f32 %v5867, %v6060
          %v6495 = vadd.f32 %v6494, %v6253
          %v6496 = vadd.f32 %v6495, %v6446
          %v6497 = vld [vmem:[%s4] sm:$0x1]
          %v6499 = vlaneseq
          %v6500 = vshrl.u32 %v6499, 7
          %v6501 = vsub.s32 0, %v6500
          %v6502 = vrot.slane %v6497, %v6501
          %v6504 = vadd.f32 %v6451, %v6502
          %v6505 = vadd.f32 %v6454, %v6502
          %v6506 = vadd.f32 %v6457, %v6502
          %v6507 = vadd.f32 %v6460, %v6502
          %v6508 = vadd.f32 %v6463, %v6502
          %v6509 = vadd.f32 %v6466, %v6502
          %v6510 = vadd.f32 %v6469, %v6502
          %v6511 = vadd.f32 %v6472, %v6502
          %v6512 = vadd.f32 %v6475, %v6502
          %v6513 = vadd.f32 %v6478, %v6502
          %v6514 = vadd.f32 %v6481, %v6502
          %v6515 = vadd.f32 %v6484, %v6502
          %v6516 = vadd.f32 %v6487, %v6502
          %v6517 = vadd.f32 %v6490, %v6502
          %v6518 = vadd.f32 %v6493, %v6502
          %v6519 = vadd.f32 %v6496, %v6502
          %6520 = vst [vmem:[%s1156] sm:$0xff] %v6504
          %6521 = vst [vmem:[%s1156 + $0x8] sm:$0xff] %v6505
          %6522 = vst [vmem:[%s1156 + $0x10] sm:$0xff] %v6506
          %6523 = vst [vmem:[%s1156 + $0x18] sm:$0xff] %v6507
          %6524 = vst [vmem:[%s1156 + $0x20] sm:$0xff] %v6508
          %6525 = vst [vmem:[%s1156 + $0x28] sm:$0xff] %v6509
          %6526 = vst [vmem:[%s1156 + $0x30] sm:$0xff] %v6510
          %6527 = vst [vmem:[%s1156 + $0x38] sm:$0xff] %v6511
          %6528 = vst [vmem:[%s1156 + $0x40] sm:$0xff] %v6512
          %6529 = vst [vmem:[%s1156 + $0x48] sm:$0xff] %v6513
          %6530 = vst [vmem:[%s1156 + $0x50] sm:$0xff] %v6514
          %6531 = vst [vmem:[%s1156 + $0x58] sm:$0xff] %v6515
          %6532 = vst [vmem:[%s1156 + $0x60] sm:$0xff] %v6516
          %6533 = vst [vmem:[%s1156 + $0x68] sm:$0xff] %v6517
          %6534 = vst [vmem:[%s1156 + $0x70] sm:$0xff] %v6518
          %6535 = vst [vmem:[%s1156 + $0x78] sm:$0xff] %v6519
        $region162: #{multi_head_enc_dec_attention.5} parent=141 // pred_fallthru
          _
        %s6536 = sand.u32 %s174, 1
        %s6537 = scalar_lea.sflag [#allocation9], %s6536
        %s6538 = sand.u32 %s174, 1
        %s6539 = smul.addr %s6538, 128
        %s6540 = scalar_lea.vmem [#allocation8], %s6539
        // Predicated region
        $region163: #{multi_head_enc_dec_attention.5} parent=141 // pred_check
          %p6541 = pneg %p184
        $region164: #{multi_head_enc_dec_attention.5} parent=141 // pred_check_branch
          %6543 = sbr.rel (%p6541) target = $region166
        $region165: #{multi_head_enc_dec_attention.5} parent=141 // pred_region
          %s6544 = smul.u32 16, %s25
          %s6546 = ssub.s32 2048, 2048
          %6547 = vsyncadd %s6537, %s6546
          %s6548 = smul.addr %s24, 32
          %s6549 = sadd.s32 %s6544, %s6548
          %s6550 = smul.addr %s6549, 128
          %s6551 = scalar_lea.hbm %s5, %s6550
          %s6552 = sshll.u32 %s6540, 4
          %s6553 = int_to_ptr.vmem [resolvable:$true] %s6552
          %6558 = dma.vmem_to_hbm [thread:$0]  %s6553, 2048, %s6551, %s6537, 128, 128, 8
        $region166: #{multi_head_enc_dec_attention.5} parent=141 // pred_fallthru
          _
      $region142: #{multi_head_enc_dec_attention.5} parent=5 // pred_fallthru
        _
      %p6559 = scmp.le.s32.totalorder 2, %s14
      // Predicated region
      $region167: #{multi_head_enc_dec_attention.5} parent=5 // pred_check
        %p6560 = pneg %p6559
      $region168: #{multi_head_enc_dec_attention.5} parent=5 // pred_check_branch
        %6562 = sbr.rel (%p6560) target = $region170
      $region169: #{multi_head_enc_dec_attention.5} parent=5 // pred_region
        %s6563 = ssub.s32 %s14, 2
        // Predicated region
        $region171: #{multi_head_enc_dec_attention.5} parent=169 // pred_check
          %p6564 = pneg %p190
        $region172: #{multi_head_enc_dec_attention.5} parent=169 // pred_check_branch
          %6566 = sbr.rel (%p6564) target = $region174
        $region173: #{multi_head_enc_dec_attention.5} parent=169 // pred_region
          %s6567 = sand.u32 %s175, 1
          %s6568 = scalar_lea.sflag [#allocation9], %s6567
          %s6569 = sand.u32 %s175, 1
          %s6570 = smul.addr %s6569, 128
          %s6571 = scalar_lea.vmem [#allocation8], %s6570
          %6572 = dma.done %s6568, 2048
        $region174: #{multi_head_enc_dec_attention.5} parent=169 // pred_fallthru
          _
      $region170: #{multi_head_enc_dec_attention.5} parent=5 // pred_fallthru
        _
    $region6: #{multi_head_enc_dec_attention.5} parent=1 // loop_footer
      %s18 = sadd.s32 1, %s14
    $region7: #{multi_head_enc_dec_attention.5} parent=1 // loop_footer_branch
      %13 = sbr.rel target = $region3
    $region8: #{multi_head_enc_dec_attention.5} parent=1 // loop_exit
      _
    %6573 = vsyncpa [#allocation9], 1
    %s6574 = scalar_lea.sflag [#allocation9], 1
    %6575 = vsyncpa %s6574, 1

</llo_original>
